<compile_context>
chip_gen: v6e
topology: v6e:2x2x1
jax: 0.10.0
libtpu: 0.0.40
codegen_flags: <defaults>
</compile_context>

<pallas_src>
import math
from functools import partial

import jax
import jax.numpy as jnp
from jax.experimental import pallas as pl
from jax.experimental.pallas import tpu as pltpu

LANES = 128


# ------------------------------------------------------------------ helpers

def _round_up(v, m):
    return ((v + m - 1) // m) * m


def _ln(x, g, b, eps=1e-5):
    # matches LayerNormalization / nn.LayerNorm (population variance); rsqrt -> EUP slot
    m = jnp.mean(x, axis=-1, keepdims=True)
    v = jnp.mean((x - m) ** 2, axis=-1, keepdims=True)
    return g * ((x - m) * jax.lax.rsqrt(v + eps)) + b


def positional_encoding(seq_len, d_model):
    # even columns = cos, odd columns = sin (as in the reference PositionalEncoding)
    pos = jnp.arange(seq_len, dtype=jnp.float32).reshape(-1, 1)
    w = 10000.0 ** (-2.0 * jnp.arange(d_model // 2, dtype=jnp.float32) / d_model)
    pe = jnp.zeros((seq_len, d_model), jnp.float32)
    pe = pe.at[:, 0::2].set(jnp.cos(pos * w))
    pe = pe.at[:, 1::2].set(jnp.sin(pos * w))
    return pe


class _SlabBuilder:
    """Packs many small (rows, cols<=128) f32 arrays into one 128-lane slab.

    Each entry starts at a sublane offset that is a multiple of 8 so in-kernel static
    slices are clean tile selections.  Returns (slab, {name: (row0, rows, cols)}).
    """

    def __init__(self, lanes=LANES):
        self.lanes = lanes
        self.pieces = []
        self.offsets = {}
        self.cur = 0

    def add(self, name, arr):
        arr = jnp.asarray(arr, jnp.float32)
        assert arr.ndim == 2 and arr.shape[1] <= self.lanes, (name, arr.shape)
        start = _round_up(self.cur, 8)
        if start > self.cur:
            self.pieces.append(jnp.zeros((start - self.cur, self.lanes), jnp.float32))
        r, c = arr.shape
        self.pieces.append(jnp.pad(arr, ((0, 0), (0, self.lanes - c))))
        self.offsets[name] = (start, r, c)
        self.cur = start + r

    def build(self):
        total = _round_up(self.cur, 8)
        if total > self.cur:
            self.pieces.append(jnp.zeros((total - self.cur, self.lanes), jnp.float32))
        return jnp.concatenate(self.pieces, axis=0), self.offsets


# ------------------------------------------------------------------ fused kernel
# One grid step = BB batch elements.  im2col-Conv1d+input_fc (folded) -> pos-enc ->
# (last) encoder layer (LN, fused-QKV 4-head attention, LN, FFN, residuals) -> masked
# mean pool -> CTTS head -> agent MLP -> fusion -> fused actor/critic -> (BB,128) slab.

def fused_kernel(x_ref, ag_ref, p_ref, out_ref, *,
                 BB, Lp, Lout, H, dh, dh_p, E, offs):
    HD = H * dh_p
    R = BB * Lp
    scale = 1.0 / math.sqrt(dh)      # true (unpadded) head dim
    inv_len = 1.0 / Lout             # true (unpadded) sequence length

    def W(name):                     # static slice of the packed parameter slab
        r0, nr, nc = offs[name]
        return p_ref[r0:r0 + nr, :nc]

    # --- CNNTokenizer (im2col) folded with Encoder.input_fc: one matmul ---
    h = jnp.dot(x_ref[...], W('CWF'), preferred_element_type=jnp.float32) + W('CBF')
    h = (h.reshape(BB, Lp, E) + W('PE')).reshape(R, E)      # positional encoding

    # --- EncoderLayer (Encoder.forward loop bug: only the last layer survives) ---
    n1 = _ln(h, W('LN1G'), W('LN1B'))

    # fused QKV projection: one (R, E) @ (E, 3*H*dh_p) matmul
    qkv = jnp.dot(n1, W('WQKV'), preferred_element_type=jnp.float32) + W('BQKV')
    qkv3 = qkv.reshape(BB, Lp, 3 * HD)

    # fold heads into the contraction batch -> ONE QK^T and ONE PV dot_general
    q_all = jnp.concatenate(
        [qkv3[:, :, hh * dh_p:(hh + 1) * dh_p] for hh in range(H)], axis=0)
    k_all = jnp.concatenate(
        [qkv3[:, :, HD + hh * dh_p:HD + (hh + 1) * dh_p] for hh in range(H)], axis=0)
    v_all = jnp.concatenate(
        [qkv3[:, :, 2 * HD + hh * dh_p:2 * HD + (hh + 1) * dh_p] for hh in range(H)],
        axis=0)                                              # each (H*BB, Lp, dh_p)

    col = jax.lax.broadcasted_iota(jnp.int32, (1, Lp), 1)
    kmask = jnp.where(col < Lout, 0.0, -1e30).astype(jnp.float32)  # padded key columns

    s = jnp.einsum('bld,bmd->blm', q_all, k_all,
                   preferred_element_type=jnp.float32) * scale
    s = s + kmask                                            # broadcast once (hoisted)
    s = s - jnp.max(s, axis=-1, keepdims=True)
    pw = jnp.exp(s)
    pw = pw / jnp.sum(pw, axis=-1, keepdims=True)            # exact softmax (parity)
    o_all = jnp.einsum('blm,bmd->bld', pw, v_all,
                       preferred_element_type=jnp.float32)   # (H*BB, Lp, dh_p)

    o_cat = jnp.concatenate(
        [o_all[hh * BB:(hh + 1) * BB] for hh in range(H)], axis=-1).reshape(R, HD)
    attn = jnp.dot(o_cat, W('WO'), preferred_element_type=jnp.float32) + W('BO')
    x1 = h + attn                                            # dropout = identity

    n2 = _ln(x1, W('LN2G'), W('LN2B'))
    f = jnp.maximum(
        jnp.dot(n2, W('F1W'), preferred_element_type=jnp.float32) + W('F1B'), 0.0)
    f = jnp.dot(f, W('F2W'), preferred_element_type=jnp.float32) + W('F2B')
    x2 = x1 + f                                              # dropout = identity

    # --- masked mean pool over the true Lout rows + CTTS head (LN -> Linear -> ReLU) ---
    row = jax.lax.broadcasted_iota(jnp.int32, (Lp, 1), 0)
    rmask = jnp.where(row < Lout, 1.0, 0.0).astype(jnp.float32)
    pooled = jnp.sum(x2.reshape(BB, Lp, E) * rmask, axis=1) * inv_len   # (BB, E)
    pn = _ln(pooled, W('HG'), W('HB'))
    ts_out = jnp.maximum(
        jnp.dot(pn, W('HW'), preferred_element_type=jnp.float32) + W('HBB'), 0.0)

    # --- AgentModel: Linear -> ReLU -> (Dropout=id) -> Linear -> ReLU ---
    a = jnp.maximum(
        jnp.dot(ag_ref[...], W('AW1'), preferred_element_type=jnp.float32) + W('AB1'),
        0.0)
    a = jnp.maximum(
        jnp.dot(a, W('AW2'), preferred_element_type=jnp.float32) + W('AB2'), 0.0)

    # --- fusion: cat([ts_out, agent_out]) @ W1 implemented as split matmul ---
    fu = jnp.maximum(
        jnp.dot(ts_out, W('FW1T'), preferred_element_type=jnp.float32)
        + jnp.dot(a, W('FW1A'), preferred_element_type=jnp.float32) + W('FB1'), 0.0)
    fu = jnp.dot(fu, W('FW2'), preferred_element_type=jnp.float32) + W('FB2')

    # --- fused actor+critic: 128-lane tanh matmul, block-diag second stage,
    #     single lane-dense (BB, 128) store (logits in lanes 0:ACT, value in lane ACT) ---
    hc = jnp.tanh(jnp.dot(fu, W('ACW1'), preferred_element_type=jnp.float32) + W('ACB1'))
    out_ref[...] = jnp.dot(hc, W('ACW2'),
                           preferred_element_type=jnp.float32) + W('ACB2')


# ------------------------------------------------------------------ parameter init

def init_params(key, cfg):
    E, Cin, K = cfg['embed_dim'], cfg['input_dim'], cfg['kernel_size']
    A, AH, AO = cfg['agent_input_dim'], cfg['agent_hidden_dim'], cfg['agent_out_dim']
    FH, ACT, DFF, NL = (cfg['fusion_hidden_dim'], cfg['action_size'],
                        cfg['d_ff'], cfg['num_layers'])

    keys = iter(jax.random.split(key, 64))

    def lin(in_d, out_d):
        s = 1.0 / math.sqrt(in_d)
        w = jax.random.uniform(next(keys), (in_d, out_d), jnp.float32, -s, s)
        b = jax.random.uniform(next(keys), (1, out_d), jnp.float32, -s, s)
        return w, b

    p = {}
    s = 1.0 / math.sqrt(Cin * K)
    p['conv_w'] = jax.random.uniform(next(keys), (K, Cin, E), jnp.float32, -s, s)
    p['conv_b'] = jax.random.uniform(next(keys), (1, E), jnp.float32, -s, s)
    p['input_fc_w'], p['input_fc_b'] = lin(E, E)

    layers = []
    for _ in range(NL):
        lyr = {'ln1_g': jnp.ones((1, E)), 'ln1_b': jnp.zeros((1, E)),
               'ln2_g': jnp.ones((1, E)), 'ln2_b': jnp.zeros((1, E))}
        lyr['wq'], lyr['bq'] = lin(E, E)
        lyr['wk'], lyr['bk'] = lin(E, E)
        lyr['wv'], lyr['bv'] = lin(E, E)
        lyr['wo'], lyr['bo'] = lin(E, E)
        lyr['ffn_w1'], lyr['ffn_b1'] = lin(E, DFF)
        lyr['ffn_w2'], lyr['ffn_b2'] = lin(DFF, E)
        layers.append(lyr)
    p['layers'] = layers

    p['head_ln_g'] = jnp.ones((1, E)); p['head_ln_b'] = jnp.zeros((1, E))
    p['head_w'], p['head_b'] = lin(E, E)

    p['agent_w1'], p['agent_b1'] = lin(A, AH)
    p['agent_w2'], p['agent_b2'] = lin(AH, AO)

    p['fusion_w1'], p['fusion_b1'] = lin(E + AO, FH)
    p['fusion_w2'], p['fusion_b2'] = lin(FH, FH)
    p['actor_w1'], p['actor_b1'] = lin(FH, FH)
    p['actor_w2'], p['actor_b2'] = lin(FH, ACT)
    p['critic_w1'], p['critic_b1'] = lin(FH, FH)
    p['critic_w2'], p['critic_b2'] = lin(FH, 1)
    return p


# ------------------------------------------------------------------ wrapper

def multistate_pv_forward(x, params, cfg):
    ts_state, agent_state = x
    B, L, Cin = ts_state.shape
    E, K, H = cfg['embed_dim'], cfg['kernel_size'], cfg['num_heads']
    stride = cfg['stride']
    A, ACT, FH = cfg['agent_input_dim'], cfg['action_size'], cfg['fusion_hidden_dim']

    dh = E // H
    dh_p = max(dh, 8)                       # zero-padded head dim (exact result)
    Lout = (L - K) // stride + 1
    Lp = _round_up(Lout, 8)                 # sublane-aligned padded sequence length
    KC = K * Cin
    assert 3 * H * dh_p <= LANES and 2 * FH <= LANES and ACT + 1 <= LANES

    # Batch blocking: big blocks (up to 128) amortise per-grid-step overhead; the
    # "parallel" axis still splits across TensorCores whenever nb >= 2 (large B / v7x).
    BB = min(128, _round_up(B, 8))
    nb = -(-_round_up(B, 8) // BB)
    Bp = nb * BB

    # ---- im2col in the wrapper: Conv1d becomes one matmul in-kernel ----
    idx = jnp.arange(Lout)[:, None] * stride + jnp.arange(K)[None, :]     # (Lout, K)
    x_unf = ts_state.astype(jnp.float32)[:, idx, :].reshape(B, Lout, KC)  # (B,Lout,K*Cin)
    x_unf = jnp.pad(x_unf, ((0, Bp - B), (0, Lp - Lout), (0, 0))).reshape(Bp * Lp, KC)
    ag = jnp.pad(agent_state.astype(jnp.float32), ((0, Bp - B), (0, 0)))

    lyr = params['layers'][-1]   # Encoder.forward loop: only the last layer survives

    def pack_heads(w, b):        # (E,E)/(1,E) -> per-head zero-padded (E,H*dh_p)/(1,H*dh_p)
        wh = jnp.pad(w.reshape(E, H, dh),
                     ((0, 0), (0, 0), (0, dh_p - dh))).reshape(E, H * dh_p)
        bh = jnp.pad(b.reshape(1, H, dh),
                     ((0, 0), (0, 0), (0, dh_p - dh))).reshape(1, H * dh_p)
        return wh, bh

    wq, bq = pack_heads(lyr['wq'], lyr['bq'])
    wk, bk = pack_heads(lyr['wk'], lyr['bk'])
    wv, bv = pack_heads(lyr['wv'], lyr['bv'])
    wqkv = jnp.concatenate([wq, wk, wv], axis=1)      # (E, 3*H*dh_p)
    bqkv = jnp.concatenate([bq, bk, bv], axis=1)      # (1, 3*H*dh_p)
    wo = jnp.pad(lyr['wo'].reshape(H, dh, E),
                 ((0, 0), (0, dh_p - dh), (0, 0))).reshape(H * dh_p, E)

    # Fold Conv1d (im2col) with input_fc: back-to-back linears, exact fusion.
    cwf = params['conv_w'].reshape(KC, E) @ params['input_fc_w']          # (KC, E)
    cbf = params['conv_b'] @ params['input_fc_w'] + params['input_fc_b']  # (1, E)

    # Fusion fc1 split == concat([ts, agent]) @ fusion_w1.
    fw1_ts, fw1_ag = params['fusion_w1'][:E, :], params['fusion_w1'][E:, :]

    # Actor/critic heads fused: concat fc1 weights (128-lane matmul) + block-diag fc2.
    acw1 = jnp.concatenate([params['actor_w1'], params['critic_w1']], axis=1)   # (FH,2FH)
    acb1 = jnp.concatenate([params['actor_b1'], params['critic_b1']], axis=1)   # (1,2FH)
    acw2 = jnp.zeros((2 * FH, LANES), jnp.float32)
    acw2 = acw2.at[:FH, :ACT].set(params['actor_w2'])
    acw2 = acw2.at[FH:, ACT:ACT + 1].set(params['critic_w2'])
    acb2 = jnp.zeros((1, LANES), jnp.float32)
    acb2 = acb2.at[:, :ACT].set(params['actor_b2'])
    acb2 = acb2.at[:, ACT:ACT + 1].set(params['critic_b2'])

    # ---- pack the entire parameter zoo into one 128-lane slab (3 input refs total) ----
    sb = _SlabBuilder()
    sb.add('CWF', cwf);                 sb.add('CBF', cbf)
    sb.add('PE', positional_encoding(Lp, E))
    sb.add('LN1G', lyr['ln1_g']);       sb.add('LN1B', lyr['ln1_b'])
    sb.add('WQKV', wqkv);               sb.add('BQKV', bqkv)
    sb.add('WO', wo);                   sb.add('BO', lyr['bo'])
    sb.add('LN2G', lyr['ln2_g']);       sb.add('LN2B', lyr['ln2_b'])
    sb.add('F1W', lyr['ffn_w1']);       sb.add('F1B', lyr['ffn_b1'])
    sb.add('F2W', lyr['ffn_w2']);       sb.add('F2B', lyr['ffn_b2'])
    sb.add('HG', params['head_ln_g']);  sb.add('HB', params['head_ln_b'])
    sb.add('HW', params['head_w']);     sb.add('HBB', params['head_b'])
    sb.add('AW1', params['agent_w1']);  sb.add('AB1', params['agent_b1'])
    sb.add('AW2', params['agent_w2']);  sb.add('AB2', params['agent_b2'])
    sb.add('FW1T', fw1_ts);             sb.add('FW1A', fw1_ag)
    sb.add('FB1', params['fusion_b1'])
    sb.add('FW2', params['fusion_w2']); sb.add('FB2', params['fusion_b2'])
    sb.add('ACW1', acw1);               sb.add('ACB1', acb1)
    sb.add('ACW2', acw2);               sb.add('ACB2', acb2)
    slab, offs = sb.build()

    out = pl.pallas_call(
        partial(fused_kernel, BB=BB, Lp=Lp, Lout=Lout, H=H, dh=dh, dh_p=dh_p,
                E=E, offs=offs),
        out_shape=jax.ShapeDtypeStruct((Bp, LANES), jnp.float32),
        grid=(nb,),
        in_specs=[pl.BlockSpec((BB * Lp, KC), lambda i: (i, 0)),
                  pl.BlockSpec((BB, A), lambda i: (i, 0)),
                  pl.BlockSpec(slab.shape, lambda i: (0, 0))],
        out_specs=pl.BlockSpec((BB, LANES), lambda i: (i, 0)),
        compiler_params=pltpu.CompilerParams(dimension_semantics=("parallel",)),
    )(x_unf, ag, slab)

    return out[:B, :ACT], out[:B, ACT:ACT + 1]


# ------------------------------------------------------------------ main

if __name__ == "__main__":
    cfg = dict(input_dim=4, agent_input_dim=8, embed_dim=16, kernel_size=4,
               stride=1, action_size=4, agent_hidden_dim=32, agent_out_dim=32,
               fusion_hidden_dim=64, num_layers=3, num_heads=4, d_ff=64)

    key = jax.random.PRNGKey(0)
    pkey, xkey, akey = jax.random.split(key, 3)
    params = init_params(pkey, cfg)

    B, L = 2, 16
    ts_state = jax.random.normal(xkey, (B, L, cfg['input_dim']), jnp.float32)
    agent_state = jax.random.normal(akey, (B, cfg['agent_input_dim']), jnp.float32)

    logits, value = multistate_pv_forward((ts_state, agent_state), params, cfg)
    jax.block_until_ready((logits, value))

    assert logits.shape == (B, cfg['action_size']) and value.shape == (B, 1)
    assert bool(jnp.all(jnp.isfinite(logits))) and bool(jnp.all(jnp.isfinite(value)))
    print("KERNEL_OK")
</pallas_src>

<mosaic_0001>
module attributes {stable_mosaic.version = 11 : i64} {
  func.func @fused_kernel(%arg0: i32, %arg1: memref<128x16xf32, #tpu.memory_space<vmem>>, %arg2: memref<8x8xf32, #tpu.memory_space<vmem>>, %arg3: memref<664x128xf32, #tpu.memory_space<vmem>>, %arg4: memref<8x128xf32, #tpu.memory_space<vmem>>) attributes {dimension_semantics = [#tpu.dimension_semantics<parallel>], iteration_bounds = array<i64: 1>, scalar_prefetch = 0 : i64, scratch_operands = 0 : i64, tpu.core_type = #tpu.core_type<tc>, window_params = [{transform_indices = @transform_0, window_bounds = array<i64: 128, 16>}, {transform_indices = @transform_1, window_bounds = array<i64: 8, 8>}, {pipeline_mode = #tpu.pipeline_mode<synchronous>, transform_indices = @transform_2, window_bounds = array<i64: 664, 128>}, {transform_indices = @transform_3, window_bounds = array<i64: 8, 128>}]} {
    %c0 = arith.constant 0 : index
    %c0_0 = arith.constant 0 : index
    %0 = vector.load %arg1[%c0, %c0_0] : memref<128x16xf32, #tpu.memory_space<vmem>>, vector<128x16xf32>
    %c0_1 = arith.constant 0 : index
    %c0_2 = arith.constant 0 : index
    %1 = vector.load %arg3[%c0_1, %c0_2] : memref<664x128xf32, #tpu.memory_space<vmem>>, vector<16x16xf32>
    %cst = arith.constant dense<0.000000e+00> : vector<128x16xf32>
    %2 = tpu.matmul %0, %1, %cst {dimension_numbers = #tpu.dot_dimension_numbers<[1], [0], [0], [1], [0, 0, 1, 1], [], []>} : vector<128x16xf32>, vector<16x16xf32>, vector<128x16xf32> -> vector<128x16xf32>
    %c16 = arith.constant 16 : index
    %c0_3 = arith.constant 0 : index
    %3 = vector.load %arg3[%c16, %c0_3] : memref<664x128xf32, #tpu.memory_space<vmem>>, vector<1x16xf32>
    %4 = vector.broadcast %3 : vector<1x16xf32> to vector<128x16xf32>
    %5 = arith.addf %2, %4 : vector<128x16xf32>
    %6 = vector.shape_cast %5 : vector<128x16xf32> to vector<8x16x16xf32>
    %c24 = arith.constant 24 : index
    %c0_4 = arith.constant 0 : index
    %7 = vector.load %arg3[%c24, %c0_4] : memref<664x128xf32, #tpu.memory_space<vmem>>, vector<16x16xf32>
    %8 = vector.shape_cast %7 : vector<16x16xf32> to vector<1x16x16xf32>
    %9 = vector.broadcast %8 : vector<1x16x16xf32> to vector<8x16x16xf32>
    %10 = arith.addf %6, %9 : vector<8x16x16xf32>
    %11 = vector.shape_cast %10 : vector<8x16x16xf32> to vector<128x16xf32>
    %c40 = arith.constant 40 : index
    %c0_5 = arith.constant 0 : index
    %12 = vector.load %arg3[%c40, %c0_5] : memref<664x128xf32, #tpu.memory_space<vmem>>, vector<1x16xf32>
    %c48 = arith.constant 48 : index
    %c0_6 = arith.constant 0 : index
    %13 = vector.load %arg3[%c48, %c0_6] : memref<664x128xf32, #tpu.memory_space<vmem>>, vector<1x16xf32>
    %cst_7 = arith.constant dense<0.000000e+00> : vector<128xf32>
    %14 = vector.multi_reduction <add>, %11, %cst_7 [1] : vector<128x16xf32> to vector<128xf32>
    %15 = vector.shape_cast %14 : vector<128xf32> to vector<128x1xf32>
    %cst_8 = arith.constant 1.600000e+01 : f32
    %16 = vector.broadcast %cst_8 : f32 to vector<128x1xf32>
    %17 = arith.divf %15, %16 : vector<128x1xf32>
    %18 = vector.broadcast %17 : vector<128x1xf32> to vector<128x16xf32>
    %19 = arith.subf %11, %18 : vector<128x16xf32>
    %20 = arith.mulf %19, %19 : vector<128x16xf32>
    %cst_9 = arith.constant dense<0.000000e+00> : vector<128xf32>
    %21 = vector.multi_reduction <add>, %20, %cst_9 [1] : vector<128x16xf32> to vector<128xf32>
    %22 = vector.shape_cast %21 : vector<128xf32> to vector<128x1xf32>
    %cst_10 = arith.constant 1.600000e+01 : f32
    %23 = vector.broadcast %cst_10 : f32 to vector<128x1xf32>
    %24 = arith.divf %22, %23 : vector<128x1xf32>
    %25 = vector.broadcast %17 : vector<128x1xf32> to vector<128x16xf32>
    %26 = arith.subf %11, %25 : vector<128x16xf32>
    %cst_11 = arith.constant 9.99999974E-6 : f32
    %27 = vector.broadcast %cst_11 : f32 to vector<128x1xf32>
    %28 = arith.addf %24, %27 : vector<128x1xf32>
    %29 = math.rsqrt %28 : vector<128x1xf32>
    %30 = vector.broadcast %29 : vector<128x1xf32> to vector<128x16xf32>
    %31 = arith.mulf %26, %30 : vector<128x16xf32>
    %32 = vector.broadcast %12 : vector<1x16xf32> to vector<128x16xf32>
    %33 = arith.mulf %32, %31 : vector<128x16xf32>
    %34 = vector.broadcast %13 : vector<1x16xf32> to vector<128x16xf32>
    %35 = arith.addf %33, %34 : vector<128x16xf32>
    %c56 = arith.constant 56 : index
    %c0_12 = arith.constant 0 : index
    %36 = vector.load %arg3[%c56, %c0_12] : memref<664x128xf32, #tpu.memory_space<vmem>>, vector<16x96xf32>
    %cst_13 = arith.constant dense<0.000000e+00> : vector<128x96xf32>
    %37 = tpu.matmul %35, %36, %cst_13 {dimension_numbers = #tpu.dot_dimension_numbers<[1], [0], [0], [1], [0, 0, 1, 1], [], []>} : vector<128x16xf32>, vector<16x96xf32>, vector<128x96xf32> -> vector<128x96xf32>
    %c72 = arith.constant 72 : index
    %c0_14 = arith.constant 0 : index
    %38 = vector.load %arg3[%c72, %c0_14] : memref<664x128xf32, #tpu.memory_space<vmem>>, vector<1x96xf32>
    %39 = vector.broadcast %38 : vector<1x96xf32> to vector<128x96xf32>
    %40 = arith.addf %37, %39 : vector<128x96xf32>
    %41 = vector.shape_cast %40 : vector<128x96xf32> to vector<8x16x96xf32>
    %42 = vector.extract_strided_slice %41 {offsets = [0, 0, 0], sizes = [8, 16, 8], strides = [1, 1, 1]} : vector<8x16x96xf32> to vector<8x16x8xf32>
    %43 = vector.extract_strided_slice %41 {offsets = [0, 0, 8], sizes = [8, 16, 8], strides = [1, 1, 1]} : vector<8x16x96xf32> to vector<8x16x8xf32>
    %44 = vector.extract_strided_slice %41 {offsets = [0, 0, 16], sizes = [8, 16, 8], strides = [1, 1, 1]} : vector<8x16x96xf32> to vector<8x16x8xf32>
    %45 = vector.extract_strided_slice %41 {offsets = [0, 0, 24], sizes = [8, 16, 8], strides = [1, 1, 1]} : vector<8x16x96xf32> to vector<8x16x8xf32>
    %46 = tpu.concatenate %42, %43, %44, %45 in 0 : vector<8x16x8xf32>, vector<8x16x8xf32>, vector<8x16x8xf32>, vector<8x16x8xf32> -> vector<32x16x8xf32>
    %47 = vector.extract_strided_slice %41 {offsets = [0, 0, 32], sizes = [8, 16, 8], strides = [1, 1, 1]} : vector<8x16x96xf32> to vector<8x16x8xf32>
    %48 = vector.extract_strided_slice %41 {offsets = [0, 0, 40], sizes = [8, 16, 8], strides = [1, 1, 1]} : vector<8x16x96xf32> to vector<8x16x8xf32>
    %49 = vector.extract_strided_slice %41 {offsets = [0, 0, 48], sizes = [8, 16, 8], strides = [1, 1, 1]} : vector<8x16x96xf32> to vector<8x16x8xf32>
    %50 = vector.extract_strided_slice %41 {offsets = [0, 0, 56], sizes = [8, 16, 8], strides = [1, 1, 1]} : vector<8x16x96xf32> to vector<8x16x8xf32>
    %51 = tpu.concatenate %47, %48, %49, %50 in 0 : vector<8x16x8xf32>, vector<8x16x8xf32>, vector<8x16x8xf32>, vector<8x16x8xf32> -> vector<32x16x8xf32>
    %52 = vector.extract_strided_slice %41 {offsets = [0, 0, 64], sizes = [8, 16, 8], strides = [1, 1, 1]} : vector<8x16x96xf32> to vector<8x16x8xf32>
    %53 = vector.extract_strided_slice %41 {offsets = [0, 0, 72], sizes = [8, 16, 8], strides = [1, 1, 1]} : vector<8x16x96xf32> to vector<8x16x8xf32>
    %54 = vector.extract_strided_slice %41 {offsets = [0, 0, 80], sizes = [8, 16, 8], strides = [1, 1, 1]} : vector<8x16x96xf32> to vector<8x16x8xf32>
    %55 = vector.extract_strided_slice %41 {offsets = [0, 0, 88], sizes = [8, 16, 8], strides = [1, 1, 1]} : vector<8x16x96xf32> to vector<8x16x8xf32>
    %56 = tpu.concatenate %52, %53, %54, %55 in 0 : vector<8x16x8xf32>, vector<8x16x8xf32>, vector<8x16x8xf32>, vector<8x16x8xf32> -> vector<32x16x8xf32>
    %57 = tpu.iota {dimensions = array<i32: 1>} : vector<1x16xi32>
    %c13_i32 = arith.constant 13 : i32
    %58 = vector.broadcast %c13_i32 : i32 to vector<1x16xi32>
    %59 = arith.cmpi slt, %57, %58 : vector<1x16xi32>
    %cst_15 = arith.constant 0.000000e+00 : f32
    %cst_16 = arith.constant -1.000000e+30 : f32
    %60 = vector.broadcast %cst_15 : f32 to vector<1x16xf32>
    %61 = vector.broadcast %cst_16 : f32 to vector<1x16xf32>
    %62 = arith.select %59, %60, %61 : vector<1x16xi1>, vector<1x16xf32>
    "tpu.trace_start"() <{level = 10 : i32, message = "bld,bmd->blm"}> : () -> ()
    %cst_17 = arith.constant dense<0.000000e+00> : vector<32x16x16xf32>
    %63 = tpu.matmul %46, %51, %cst_17 {dimension_numbers = #tpu.dot_dimension_numbers<[2], [2], [1], [1], [0, 0, 0, 1, 1, 1], [0], [0]>} : vector<32x16x8xf32>, vector<32x16x8xf32>, vector<32x16x16xf32> -> vector<32x16x16xf32>
    "tpu.trace_stop"() : () -> ()
    %cst_18 = arith.constant 5.000000e-01 : f32
    %64 = vector.broadcast %cst_18 : f32 to vector<32x16x16xf32>
    %65 = arith.mulf %63, %64 : vector<32x16x16xf32>
    %66 = vector.shape_cast %62 : vector<1x16xf32> to vector<1x1x16xf32>
    %67 = vector.broadcast %66 : vector<1x1x16xf32> to vector<32x16x16xf32>
    %68 = arith.addf %65, %67 : vector<32x16x16xf32>
    %cst_19 = arith.constant dense<0xFF800000> : vector<32x16xf32>
    %69 = vector.multi_reduction <maximumf>, %68, %cst_19 [2] : vector<32x16x16xf32> to vector<32x16xf32>
    %70 = vector.shape_cast %69 : vector<32x16xf32> to vector<32x16x1xf32>
    %71 = vector.broadcast %70 : vector<32x16x1xf32> to vector<32x16x16xf32>
    %72 = arith.subf %68, %71 : vector<32x16x16xf32>
    %73 = math.exp %72 : vector<32x16x16xf32>
    %cst_20 = arith.constant dense<0.000000e+00> : vector<32x16xf32>
    %74 = vector.multi_reduction <add>, %73, %cst_20 [2] : vector<32x16x16xf32> to vector<32x16xf32>
    %75 = vector.shape_cast %74 : vector<32x16xf32> to vector<32x16x1xf32>
    %76 = vector.broadcast %75 : vector<32x16x1xf32> to vector<32x16x16xf32>
    %77 = arith.divf %73, %76 : vector<32x16x16xf32>
    "tpu.trace_start"() <{level = 10 : i32, message = "blm,bmd->bld"}> : () -> ()
    %cst_21 = arith.constant dense<0.000000e+00> : vector<32x16x8xf32>
    %78 = tpu.matmul %77, %56, %cst_21 {dimension_numbers = #tpu.dot_dimension_numbers<[2], [1], [1], [2], [0, 0, 0, 1, 1, 2], [0], [0]>} : vector<32x16x16xf32>, vector<32x16x8xf32>, vector<32x16x8xf32> -> vector<32x16x8xf32>
    "tpu.trace_stop"() : () -> ()
    %79 = vector.extract_strided_slice %78 {offsets = [0, 0, 0], sizes = [8, 16, 8], strides = [1, 1, 1]} : vector<32x16x8xf32> to vector<8x16x8xf32>
    %80 = vector.extract_strided_slice %78 {offsets = [8, 0, 0], sizes = [8, 16, 8], strides = [1, 1, 1]} : vector<32x16x8xf32> to vector<8x16x8xf32>
    %81 = vector.extract_strided_slice %78 {offsets = [16, 0, 0], sizes = [8, 16, 8], strides = [1, 1, 1]} : vector<32x16x8xf32> to vector<8x16x8xf32>
    %82 = vector.extract_strided_slice %78 {offsets = [24, 0, 0], sizes = [8, 16, 8], strides = [1, 1, 1]} : vector<32x16x8xf32> to vector<8x16x8xf32>
    %83 = tpu.concatenate %79, %80, %81, %82 in 2 : vector<8x16x8xf32>, vector<8x16x8xf32>, vector<8x16x8xf32>, vector<8x16x8xf32> -> vector<8x16x32xf32>
    %84 = vector.shape_cast %83 : vector<8x16x32xf32> to vector<128x32xf32>
    %c80 = arith.constant 80 : index
    %c0_22 = arith.constant 0 : index
    %85 = vector.load %arg3[%c80, %c0_22] : memref<664x128xf32, #tpu.memory_space<vmem>>, vector<32x16xf32>
    %cst_23 = arith.constant dense<0.000000e+00> : vector<128x16xf32>
    %86 = tpu.matmul %84, %85, %cst_23 {dimension_numbers = #tpu.dot_dimension_numbers<[1], [0], [0], [1], [0, 0, 1, 1], [], []>} : vector<128x32xf32>, vector<32x16xf32>, vector<128x16xf32> -> vector<128x16xf32>
    %c112 = arith.constant 112 : index
    %c0_24 = arith.constant 0 : index
    %87 = vector.load %arg3[%c112, %c0_24] : memref<664x128xf32, #tpu.memory_space<vmem>>, vector<1x16xf32>
    %88 = vector.broadcast %87 : vector<1x16xf32> to vector<128x16xf32>
    %89 = arith.addf %86, %88 : vector<128x16xf32>
    %90 = arith.addf %11, %89 : vector<128x16xf32>
    %c120 = arith.constant 120 : index
    %c0_25 = arith.constant 0 : index
    %91 = vector.load %arg3[%c120, %c0_25] : memref<664x128xf32, #tpu.memory_space<vmem>>, vector<1x16xf32>
    %c128 = arith.constant 128 : index
    %c0_26 = arith.constant 0 : index
    %92 = vector.load %arg3[%c128, %c0_26] : memref<664x128xf32, #tpu.memory_space<vmem>>, vector<1x16xf32>
    %cst_27 = arith.constant dense<0.000000e+00> : vector<128xf32>
    %93 = vector.multi_reduction <add>, %90, %cst_27 [1] : vector<128x16xf32> to vector<128xf32>
    %94 = vector.shape_cast %93 : vector<128xf32> to vector<128x1xf32>
    %cst_28 = arith.constant 1.600000e+01 : f32
    %95 = vector.broadcast %cst_28 : f32 to vector<128x1xf32>
    %96 = arith.divf %94, %95 : vector<128x1xf32>
    %97 = vector.broadcast %96 : vector<128x1xf32> to vector<128x16xf32>
    %98 = arith.subf %90, %97 : vector<128x16xf32>
    %99 = arith.mulf %98, %98 : vector<128x16xf32>
    %cst_29 = arith.constant dense<0.000000e+00> : vector<128xf32>
    %100 = vector.multi_reduction <add>, %99, %cst_29 [1] : vector<128x16xf32> to vector<128xf32>
    %101 = vector.shape_cast %100 : vector<128xf32> to vector<128x1xf32>
    %cst_30 = arith.constant 1.600000e+01 : f32
    %102 = vector.broadcast %cst_30 : f32 to vector<128x1xf32>
    %103 = arith.divf %101, %102 : vector<128x1xf32>
    %104 = vector.broadcast %96 : vector<128x1xf32> to vector<128x16xf32>
    %105 = arith.subf %90, %104 : vector<128x16xf32>
    %cst_31 = arith.constant 9.99999974E-6 : f32
    %106 = vector.broadcast %cst_31 : f32 to vector<128x1xf32>
    %107 = arith.addf %103, %106 : vector<128x1xf32>
    %108 = math.rsqrt %107 : vector<128x1xf32>
    %109 = vector.broadcast %108 : vector<128x1xf32> to vector<128x16xf32>
    %110 = arith.mulf %105, %109 : vector<128x16xf32>
    %111 = vector.broadcast %91 : vector<1x16xf32> to vector<128x16xf32>
    %112 = arith.mulf %111, %110 : vector<128x16xf32>
    %113 = vector.broadcast %92 : vector<1x16xf32> to vector<128x16xf32>
    %114 = arith.addf %112, %113 : vector<128x16xf32>
    %c136 = arith.constant 136 : index
    %c0_32 = arith.constant 0 : index
    %115 = vector.load %arg3[%c136, %c0_32] : memref<664x128xf32, #tpu.memory_space<vmem>>, vector<16x64xf32>
    %cst_33 = arith.constant dense<0.000000e+00> : vector<128x64xf32>
    %116 = tpu.matmul %114, %115, %cst_33 {dimension_numbers = #tpu.dot_dimension_numbers<[1], [0], [0], [1], [0, 0, 1, 1], [], []>} : vector<128x16xf32>, vector<16x64xf32>, vector<128x64xf32> -> vector<128x64xf32>
    %c152 = arith.constant 152 : index
    %c0_34 = arith.constant 0 : index
    %117 = vector.load %arg3[%c152, %c0_34] : memref<664x128xf32, #tpu.memory_space<vmem>>, vector<1x64xf32>
    %118 = vector.broadcast %117 : vector<1x64xf32> to vector<128x64xf32>
    %119 = arith.addf %116, %118 : vector<128x64xf32>
    %cst_35 = arith.constant 0.000000e+00 : f32
    %120 = vector.broadcast %cst_35 : f32 to vector<128x64xf32>
    %121 = arith.maximumf %119, %120 : vector<128x64xf32>
    %c160 = arith.constant 160 : index
    %c0_36 = arith.constant 0 : index
    %122 = vector.load %arg3[%c160, %c0_36] : memref<664x128xf32, #tpu.memory_space<vmem>>, vector<64x16xf32>
    %cst_37 = arith.constant dense<0.000000e+00> : vector<128x16xf32>
    %123 = tpu.matmul %121, %122, %cst_37 {dimension_numbers = #tpu.dot_dimension_numbers<[1], [0], [0], [1], [0, 0, 1, 1], [], []>} : vector<128x64xf32>, vector<64x16xf32>, vector<128x16xf32> -> vector<128x16xf32>
    %c224 = arith.constant 224 : index
    %c0_38 = arith.constant 0 : index
    %124 = vector.load %arg3[%c224, %c0_38] : memref<664x128xf32, #tpu.memory_space<vmem>>, vector<1x16xf32>
    %125 = vector.broadcast %124 : vector<1x16xf32> to vector<128x16xf32>
    %126 = arith.addf %123, %125 : vector<128x16xf32>
    %127 = arith.addf %90, %126 : vector<128x16xf32>
    %128 = tpu.iota {dimensions = array<i32: 0>} : vector<16x1xi32>
    %c13_i32_39 = arith.constant 13 : i32
    %129 = vector.broadcast %c13_i32_39 : i32 to vector<16x1xi32>
    %130 = arith.cmpi slt, %128, %129 : vector<16x1xi32>
    %cst_40 = arith.constant 1.000000e+00 : f32
    %cst_41 = arith.constant 0.000000e+00 : f32
    %131 = vector.broadcast %cst_40 : f32 to vector<16x1xf32>
    %132 = vector.broadcast %cst_41 : f32 to vector<16x1xf32>
    %133 = arith.select %130, %131, %132 : vector<16x1xi1>, vector<16x1xf32>
    %134 = vector.shape_cast %127 : vector<128x16xf32> to vector<8x16x16xf32>
    %135 = vector.shape_cast %133 : vector<16x1xf32> to vector<1x16x1xf32>
    %136 = vector.broadcast %135 : vector<1x16x1xf32> to vector<8x16x16xf32>
    %137 = arith.mulf %134, %136 : vector<8x16x16xf32>
    %cst_42 = arith.constant dense<0.000000e+00> : vector<8x16xf32>
    %138 = vector.multi_reduction <add>, %137, %cst_42 [1] : vector<8x16x16xf32> to vector<8x16xf32>
    %cst_43 = arith.constant 0.0769230798 : f32
    %139 = vector.broadcast %cst_43 : f32 to vector<8x16xf32>
    %140 = arith.mulf %138, %139 : vector<8x16xf32>
    %c232 = arith.constant 232 : index
    %c0_44 = arith.constant 0 : index
    %141 = vector.load %arg3[%c232, %c0_44] : memref<664x128xf32, #tpu.memory_space<vmem>>, vector<1x16xf32>
    %c240 = arith.constant 240 : index
    %c0_45 = arith.constant 0 : index
    %142 = vector.load %arg3[%c240, %c0_45] : memref<664x128xf32, #tpu.memory_space<vmem>>, vector<1x16xf32>
    %cst_46 = arith.constant dense<0.000000e+00> : vector<8xf32>
    %143 = vector.multi_reduction <add>, %140, %cst_46 [1] : vector<8x16xf32> to vector<8xf32>
    %144 = vector.shape_cast %143 : vector<8xf32> to vector<8x1xf32>
    %cst_47 = arith.constant 1.600000e+01 : f32
    %145 = vector.broadcast %cst_47 : f32 to vector<8x1xf32>
    %146 = arith.divf %144, %145 : vector<8x1xf32>
    %147 = vector.broadcast %146 : vector<8x1xf32> to vector<8x16xf32>
    %148 = arith.subf %140, %147 : vector<8x16xf32>
    %149 = arith.mulf %148, %148 : vector<8x16xf32>
    %cst_48 = arith.constant dense<0.000000e+00> : vector<8xf32>
    %150 = vector.multi_reduction <add>, %149, %cst_48 [1] : vector<8x16xf32> to vector<8xf32>
    %151 = vector.shape_cast %150 : vector<8xf32> to vector<8x1xf32>
    %cst_49 = arith.constant 1.600000e+01 : f32
    %152 = vector.broadcast %cst_49 : f32 to vector<8x1xf32>
    %153 = arith.divf %151, %152 : vector<8x1xf32>
    %154 = vector.broadcast %146 : vector<8x1xf32> to vector<8x16xf32>
    %155 = arith.subf %140, %154 : vector<8x16xf32>
    %cst_50 = arith.constant 9.99999974E-6 : f32
    %156 = vector.broadcast %cst_50 : f32 to vector<8x1xf32>
    %157 = arith.addf %153, %156 : vector<8x1xf32>
    %158 = math.rsqrt %157 : vector<8x1xf32>
    %159 = vector.broadcast %158 : vector<8x1xf32> to vector<8x16xf32>
    %160 = arith.mulf %155, %159 : vector<8x16xf32>
    %161 = vector.broadcast %141 : vector<1x16xf32> to vector<8x16xf32>
    %162 = arith.mulf %161, %160 : vector<8x16xf32>
    %163 = vector.broadcast %142 : vector<1x16xf32> to vector<8x16xf32>
    %164 = arith.addf %162, %163 : vector<8x16xf32>
    %c248 = arith.constant 248 : index
    %c0_51 = arith.constant 0 : index
    %165 = vector.load %arg3[%c248, %c0_51] : memref<664x128xf32, #tpu.memory_space<vmem>>, vector<16x16xf32>
    %cst_52 = arith.constant dense<0.000000e+00> : vector<8x16xf32>
    %166 = tpu.matmul %164, %165, %cst_52 {dimension_numbers = #tpu.dot_dimension_numbers<[1], [0], [0], [1], [0, 0, 1, 1], [], []>} : vector<8x16xf32>, vector<16x16xf32>, vector<8x16xf32> -> vector<8x16xf32>
    %c264 = arith.constant 264 : index
    %c0_53 = arith.constant 0 : index
    %167 = vector.load %arg3[%c264, %c0_53] : memref<664x128xf32, #tpu.memory_space<vmem>>, vector<1x16xf32>
    %168 = vector.broadcast %167 : vector<1x16xf32> to vector<8x16xf32>
    %169 = arith.addf %166, %168 : vector<8x16xf32>
    %cst_54 = arith.constant 0.000000e+00 : f32
    %170 = vector.broadcast %cst_54 : f32 to vector<8x16xf32>
    %171 = arith.maximumf %169, %170 : vector<8x16xf32>
    %c0_55 = arith.constant 0 : index
    %c0_56 = arith.constant 0 : index
    %172 = vector.load %arg2[%c0_55, %c0_56] : memref<8x8xf32, #tpu.memory_space<vmem>>, vector<8x8xf32>
    %c272 = arith.constant 272 : index
    %c0_57 = arith.constant 0 : index
    %173 = vector.load %arg3[%c272, %c0_57] : memref<664x128xf32, #tpu.memory_space<vmem>>, vector<8x32xf32>
    %cst_58 = arith.constant dense<0.000000e+00> : vector<8x32xf32>
    %174 = tpu.matmul %172, %173, %cst_58 {dimension_numbers = #tpu.dot_dimension_numbers<[1], [0], [0], [1], [0, 0, 1, 1], [], []>} : vector<8x8xf32>, vector<8x32xf32>, vector<8x32xf32> -> vector<8x32xf32>
    %c280 = arith.constant 280 : index
    %c0_59 = arith.constant 0 : index
    %175 = vector.load %arg3[%c280, %c0_59] : memref<664x128xf32, #tpu.memory_space<vmem>>, vector<1x32xf32>
    %176 = vector.broadcast %175 : vector<1x32xf32> to vector<8x32xf32>
    %177 = arith.addf %174, %176 : vector<8x32xf32>
    %cst_60 = arith.constant 0.000000e+00 : f32
    %178 = vector.broadcast %cst_60 : f32 to vector<8x32xf32>
    %179 = arith.maximumf %177, %178 : vector<8x32xf32>
    %c288 = arith.constant 288 : index
    %c0_61 = arith.constant 0 : index
    %180 = vector.load %arg3[%c288, %c0_61] : memref<664x128xf32, #tpu.memory_space<vmem>>, vector<32x32xf32>
    %cst_62 = arith.constant dense<0.000000e+00> : vector<8x32xf32>
    %181 = tpu.matmul %179, %180, %cst_62 {dimension_numbers = #tpu.dot_dimension_numbers<[1], [0], [0], [1], [0, 0, 1, 1], [], []>} : vector<8x32xf32>, vector<32x32xf32>, vector<8x32xf32> -> vector<8x32xf32>
    %c320 = arith.constant 320 : index
    %c0_63 = arith.constant 0 : index
    %182 = vector.load %arg3[%c320, %c0_63] : memref<664x128xf32, #tpu.memory_space<vmem>>, vector<1x32xf32>
    %183 = vector.broadcast %182 : vector<1x32xf32> to vector<8x32xf32>
    %184 = arith.addf %181, %183 : vector<8x32xf32>
    %cst_64 = arith.constant 0.000000e+00 : f32
    %185 = vector.broadcast %cst_64 : f32 to vector<8x32xf32>
    %186 = arith.maximumf %184, %185 : vector<8x32xf32>
    %c328 = arith.constant 328 : index
    %c0_65 = arith.constant 0 : index
    %187 = vector.load %arg3[%c328, %c0_65] : memref<664x128xf32, #tpu.memory_space<vmem>>, vector<16x64xf32>
    %cst_66 = arith.constant dense<0.000000e+00> : vector<8x64xf32>
    %188 = tpu.matmul %171, %187, %cst_66 {dimension_numbers = #tpu.dot_dimension_numbers<[1], [0], [0], [1], [0, 0, 1, 1], [], []>} : vector<8x16xf32>, vector<16x64xf32>, vector<8x64xf32> -> vector<8x64xf32>
    %c344 = arith.constant 344 : index
    %c0_67 = arith.constant 0 : index
    %189 = vector.load %arg3[%c344, %c0_67] : memref<664x128xf32, #tpu.memory_space<vmem>>, vector<32x64xf32>
    %cst_68 = arith.constant dense<0.000000e+00> : vector<8x64xf32>
    %190 = tpu.matmul %186, %189, %cst_68 {dimension_numbers = #tpu.dot_dimension_numbers<[1], [0], [0], [1], [0, 0, 1, 1], [], []>} : vector<8x32xf32>, vector<32x64xf32>, vector<8x64xf32> -> vector<8x64xf32>
    %191 = arith.addf %188, %190 : vector<8x64xf32>
    %c376 = arith.constant 376 : index
    %c0_69 = arith.constant 0 : index
    %192 = vector.load %arg3[%c376, %c0_69] : memref<664x128xf32, #tpu.memory_space<vmem>>, vector<1x64xf32>
    %193 = vector.broadcast %192 : vector<1x64xf32> to vector<8x64xf32>
    %194 = arith.addf %191, %193 : vector<8x64xf32>
    %cst_70 = arith.constant 0.000000e+00 : f32
    %195 = vector.broadcast %cst_70 : f32 to vector<8x64xf32>
    %196 = arith.maximumf %194, %195 : vector<8x64xf32>
    %c384 = arith.constant 384 : index
    %c0_71 = arith.constant 0 : index
    %197 = vector.load %arg3[%c384, %c0_71] : memref<664x128xf32, #tpu.memory_space<vmem>>, vector<64x64xf32>
    %cst_72 = arith.constant dense<0.000000e+00> : vector<8x64xf32>
    %198 = tpu.matmul %196, %197, %cst_72 {dimension_numbers = #tpu.dot_dimension_numbers<[1], [0], [0], [1], [0, 0, 1, 1], [], []>} : vector<8x64xf32>, vector<64x64xf32>, vector<8x64xf32> -> vector<8x64xf32>
    %c448 = arith.constant 448 : index
    %c0_73 = arith.constant 0 : index
    %199 = vector.load %arg3[%c448, %c0_73] : memref<664x128xf32, #tpu.memory_space<vmem>>, vector<1x64xf32>
    %200 = vector.broadcast %199 : vector<1x64xf32> to vector<8x64xf32>
    %201 = arith.addf %198, %200 : vector<8x64xf32>
    %c456 = arith.constant 456 : index
    %c0_74 = arith.constant 0 : index
    %202 = vector.load %arg3[%c456, %c0_74] : memref<664x128xf32, #tpu.memory_space<vmem>>, vector<64x128xf32>
    %cst_75 = arith.constant dense<0.000000e+00> : vector<8x128xf32>
    %203 = tpu.matmul %201, %202, %cst_75 {dimension_numbers = #tpu.dot_dimension_numbers<[1], [0], [0], [1], [0, 0, 1, 1], [], []>} : vector<8x64xf32>, vector<64x128xf32>, vector<8x128xf32> -> vector<8x128xf32>
    %c520 = arith.constant 520 : index
    %c0_76 = arith.constant 0 : index
    %204 = vector.load %arg3[%c520, %c0_76] : memref<664x128xf32, #tpu.memory_space<vmem>>, vector<1x128xf32>
    %205 = vector.broadcast %204 : vector<1x128xf32> to vector<8x128xf32>
    %206 = arith.addf %203, %205 : vector<8x128xf32>
    %207 = math.tanh %206 : vector<8x128xf32>
    %c528 = arith.constant 528 : index
    %c0_77 = arith.constant 0 : index
    %208 = vector.load %arg3[%c528, %c0_77] : memref<664x128xf32, #tpu.memory_space<vmem>>, vector<128x128xf32>
    %cst_78 = arith.constant dense<0.000000e+00> : vector<8x128xf32>
    %209 = tpu.matmul %207, %208, %cst_78 {dimension_numbers = #tpu.dot_dimension_numbers<[1], [0], [0], [1], [0, 0, 1, 1], [], []>} : vector<8x128xf32>, vector<128x128xf32>, vector<8x128xf32> -> vector<8x128xf32>
    %c656 = arith.constant 656 : index
    %c0_79 = arith.constant 0 : index
    %210 = vector.load %arg3[%c656, %c0_79] : memref<664x128xf32, #tpu.memory_space<vmem>>, vector<1x128xf32>
    %211 = vector.broadcast %210 : vector<1x128xf32> to vector<8x128xf32>
    %212 = arith.addf %209, %211 : vector<8x128xf32>
    %c0_80 = arith.constant 0 : index
    %c0_81 = arith.constant 0 : index
    %213 = vector.load %arg4[%c0_80, %c0_81] : memref<8x128xf32, #tpu.memory_space<vmem>>, vector<8x128xf32>
    tpu.vector_store %arg4[%c0_80, %c0_81], %212 {strides = array<i32>} : memref<8x128xf32, #tpu.memory_space<vmem>>, vector<8x128xf32>,
    return
  }
  func.func @transform_0(%arg0: i32) -> (i32, i32) {
    %c0_i32 = arith.constant 0 : i32
    %c0_i32_0 = arith.constant 0 : i32
    return %arg0, %c0_i32 : i32, i32
  }
  func.func @transform_1(%arg0: i32) -> (i32, i32) {
    %c0_i32 = arith.constant 0 : i32
    %c0_i32_0 = arith.constant 0 : i32
    return %arg0, %c0_i32 : i32, i32
  }
  func.func @transform_2(%arg0: i32) -> (i32, i32) {
    %c0_i32 = arith.constant 0 : i32
    %c0_i32_0 = arith.constant 0 : i32
    %c0_i32_1 = arith.constant 0 : i32
    return %c0_i32, %c0_i32_0 : i32, i32
  }
  func.func @transform_3(%arg0: i32) -> (i32, i32) {
    %c0_i32 = arith.constant 0 : i32
    %c0_i32_0 = arith.constant 0 : i32
    return %arg0, %c0_i32 : i32, i32
  }
}

</mosaic_0001>

<llo_original>
// kernel: tpu_custom_call.1
$region0: #{tpu_custom_call.1}
  #allocation0 [shape = 'u32[]', space=smem, size = 0x4, offset = 0x4, fixed_abs, tag = 'smem constant byte address 0x4 - core index']
  #allocation1 [shape = 'u32[144,128]{1,0:T(1,128)}', space=vmem, size = 0x12000, scoped, tag = 'internal scratch']
  %s0 = inlined_call_operand.vmem [shape: f32[128,16], index: 0, kind: input, shape index: {}]
  %s1 = inlined_call_operand.vmem [shape: f32[8,8], index: 1, kind: input, shape index: {}]
  %s2 = inlined_call_operand.hbm [shape: f32[664,128], index: 2, kind: input, shape index: {}]
  %s3 = inlined_call_operand.hbm [shape: f32[8,128], index: 3, kind: output, shape index: {}]
  %s4 = sld [smem:[#allocation0]]
  $region26: #{tpu_custom_call.1} parent=0
    _
  %s6 = ssub.s32 1, %s4
  %s7 = scalar_select 0, %s6, %s4
  $region1: #{tpu_custom_call.1} parent=0
    #allocation2 [shape = 'u8[339968]{0}', space=vmem, size = 0x53000, scoped, tag = 'input window, operand 2, single buffered']
    #allocation3 [shape = 's32[1]{0}', space=sflag, size = 0x4, scoped, tag = 'scoped memory for tpu_custom_call.1']
    #allocation4 [shape = 's32[1]{0}', space=sflag, size = 0x4, scoped, tag = 'scoped memory for tpu_custom_call.1']
    #allocation5 [shape = 'u8[4096]{0}', space=vmem, size = 0x1000, scoped, tag = 'output window, operand 0, single buffered']
    %8 = vsyncpa [#allocation3], 0
    %9 = vsyncpa [#allocation4], 0
    // Predicated region
    $region2: #{tpu_custom_call.1} parent=1 // pred_check
      _
    $region3: #{tpu_custom_call.1} parent=1 // pred_check_branch
      %11 = sbr.rel (0) target = $region5
    $region4: #{tpu_custom_call.1} parent=1 // pred_region
      _
    $region5: #{tpu_custom_call.1} parent=1 // pred_fallthru
      _
    // Predicated region
    $region6: #{tpu_custom_call.1} parent=1 // pred_check
      _
    $region7: #{tpu_custom_call.1} parent=1 // pred_check_branch
      %13 = sbr.rel (0) target = $region9
    $region8: #{tpu_custom_call.1} parent=1 // pred_region
      _
    $region9: #{tpu_custom_call.1} parent=1 // pred_fallthru
      _
    // Predicated region
    $region10: #{tpu_custom_call.1} parent=1 // pred_check
      _
    $region11: #{tpu_custom_call.1} parent=1 // pred_check_branch
      %15 = sbr.rel (0) target = $region13
    $region12: #{tpu_custom_call.1} parent=1 // pred_region
      %s17 = ssub.s32 10624, 10624
      %18 = vsyncadd [#allocation3], %s17
      %s19 = sshll.u32 [#allocation2], 4
      %s20 = int_to_ptr.vmem [resolvable:$true] %s19
      %25 = dma.hbm_to_vmem [thread:$0]  %s2, 10624, %s20, [#allocation3], 128, 128, 8
    $region13: #{tpu_custom_call.1} parent=1 // pred_fallthru
      _
    // Predicated region
    $region14: #{tpu_custom_call.1} parent=1 // pred_check
      _
    $region15: #{tpu_custom_call.1} parent=1 // pred_check_branch
      %27 = sbr.rel (0) target = $region17
    $region16: #{tpu_custom_call.1} parent=1 // pred_region
      %28 = dma.done [#allocation3], 10624
    $region17: #{tpu_custom_call.1} parent=1 // pred_fallthru
      _
    %v29 = vld [vmem:[%s0] sm:$0xff]
    %v30 = vld [vmem:[%s0 + $0x8] sm:$0xff]
    %v31 = vld [vmem:[%s0 + $0x10] sm:$0xff]
    %v32 = vld [vmem:[%s0 + $0x18] sm:$0xff]
    %v33 = vld [vmem:[%s0 + $0x20] sm:$0xff]
    %v34 = vld [vmem:[%s0 + $0x28] sm:$0xff]
    %v35 = vld [vmem:[%s0 + $0x30] sm:$0xff]
    %v36 = vld [vmem:[%s0 + $0x38] sm:$0xff]
    %v37 = vld [vmem:[%s0 + $0x40] sm:$0xff]
    %v38 = vld [vmem:[%s0 + $0x48] sm:$0xff]
    %v39 = vld [vmem:[%s0 + $0x50] sm:$0xff]
    %v40 = vld [vmem:[%s0 + $0x58] sm:$0xff]
    %v41 = vld [vmem:[%s0 + $0x60] sm:$0xff]
    %v42 = vld [vmem:[%s0 + $0x68] sm:$0xff]
    %v43 = vld [vmem:[%s0 + $0x70] sm:$0xff]
    %v44 = vld [vmem:[%s0 + $0x78] sm:$0xff]
    %v45 = vld [vmem:[#allocation2] sm:$0xff]
    %v46 = vld [vmem:[#allocation2 + $0x8] sm:$0xff]
    %v47 = vld [vmem:[#allocation2 + $0x10] sm:$0x1]
    %v48 = vlaneseq
    %v49 = vshrl.u32 %v48, 7
    %v50 = vsub.s32 0, %v49
    %v51 = vrot.slane %v47, %v50
    %vm52 = vcmask 130048
    %v54 = vsel %vm52, %v29, 0
    %v57 = vsel %vm52, %v30, 0
    %v60 = vsel %vm52, %v31, 0
    %v63 = vsel %vm52, %v32, 0
    %v66 = vsel %vm52, %v33, 0
    %v69 = vsel %vm52, %v34, 0
    %v72 = vsel %vm52, %v35, 0
    %v75 = vsel %vm52, %v36, 0
    %v78 = vsel %vm52, %v37, 0
    %v81 = vsel %vm52, %v38, 0
    %v84 = vsel %vm52, %v39, 0
    %v87 = vsel %vm52, %v40, 0
    %v90 = vsel %vm52, %v41, 0
    %v93 = vsel %vm52, %v42, 0
    %v96 = vsel %vm52, %v43, 0
    %v99 = vsel %vm52, %v44, 0
    %101 = vmatprep.subr.mxu0 0.0
    %102 = vmatpush1.msra.mxu0 0.0
    %103 = vmatprep.subr.mxu0 0.0
    %104 = vmatpush1.msra.mxu0 0.0
    %105 = vmatprep.subr.mxu0 0.0
    %106 = vmatpush1.msra.mxu0 0.0
    %107 = vmatprep.subr.mxu0 0.0
    %108 = vmatpush1.msra.mxu0 0.0
    %109 = vmatprep.subr.mxu0 0.0
    %110 = vmatpush1.msra.mxu0 0.0
    %111 = vmatprep.subr.mxu0 0.0
    %112 = vmatpush1.msra.mxu0 0.0
    %113 = vmatprep.subr.mxu0 0.0
    %114 = vmatpush1.msra.mxu0 0.0
    %115 = vmatprep.subr.mxu0 0.0
    %116 = vmatpush1.msra.mxu0 0.0
    %117 = vmatprep.subr.mxu0 0.0
    %118 = vmatpush1.msra.mxu0 0.0
    %119 = vmatprep.subr.mxu0 0.0
    %120 = vmatpush1.msra.mxu0 0.0
    %121 = vmatprep.subr.mxu0 0.0
    %122 = vmatpush1.msra.mxu0 0.0
    %123 = vmatprep.subr.mxu0 0.0
    %124 = vmatpush1.msra.mxu0 0.0
    %125 = vmatprep.subr.mxu0 0.0
    %126 = vmatpush1.msra.mxu0 0.0
    %127 = vmatprep.subr.mxu0 0.0
    %128 = vmatpush1.msra.mxu0 0.0
    %129 = vmatprep.subr.mxu0 0.0
    %130 = vmatpush1.msra.mxu0 %v46
    %131 = vmatprep.subr.mxu0 0.0
    %132 = vmatpush1.msra.mxu0 %v45
    %133 = vmatprep.subr.mxu0 0.0
    %134 = vmatpush2.msra.mxu0 0.0
    %135 = vmatprep.subr.mxu0 0.0
    %136 = vmatpush2.msra.mxu0 0.0
    %137 = vmatprep.subr.mxu0 0.0
    %138 = vmatpush2.msra.mxu0 0.0
    %139 = vmatprep.subr.mxu0 0.0
    %140 = vmatpush2.msra.mxu0 0.0
    %141 = vmatprep.subr.mxu0 0.0
    %142 = vmatpush2.msra.mxu0 0.0
    %143 = vmatprep.subr.mxu0 0.0
    %144 = vmatpush2.msra.mxu0 0.0
    %145 = vmatprep.subr.mxu0 0.0
    %146 = vmatpush2.msra.mxu0 0.0
    %147 = vmatprep.subr.mxu0 0.0
    %148 = vmatpush2.msra.mxu0 0.0
    %149 = vmatprep.subr.mxu0 0.0
    %150 = vmatpush2.msra.mxu0 0.0
    %151 = vmatprep.subr.mxu0 0.0
    %152 = vmatpush2.msra.mxu0 0.0
    %153 = vmatprep.subr.mxu0 0.0
    %154 = vmatpush2.msra.mxu0 0.0
    %155 = vmatprep.subr.mxu0 0.0
    %156 = vmatpush2.msra.mxu0 0.0
    %157 = vmatprep.subr.mxu0 0.0
    %158 = vmatpush2.msra.mxu0 0.0
    %159 = vmatprep.subr.mxu0 0.0
    %160 = vmatpush2.msra.mxu0 0.0
    %161 = vmatprep.subr.mxu0 0.0
    %162 = vmatpush2.msra.mxu0 0.0
    %163 = vmatprep.subr.mxu0 0.0
    %164 = vmatpush2.msra.mxu0 0.0
    %165 = vmatprep.mubr.f32.mxu0 0.0
    %166 = vmatmul.mubr.f32.gmra.mxu0 %v54
    %v167 = vpop.f32.mrf.mxu0
    %v168 = vadd.f32 %v51, %v167
    %v169 = vpop.f32.mrf.mxu0
    %170 = vmatprep.mubr.f32.mxu0 0.0
    %171 = vmatmul.mubr.f32.gmra.mxu0 %v57
    %v172 = vpop.f32.mrf.mxu0
    %v173 = vadd.f32 %v51, %v172
    %v174 = vpop.f32.mrf.mxu0
    %175 = vmatprep.mubr.f32.mxu0 0.0
    %176 = vmatmul.mubr.f32.gmra.mxu0 %v60
    %v177 = vpop.f32.mrf.mxu0
    %v178 = vadd.f32 %v51, %v177
    %v179 = vpop.f32.mrf.mxu0
    %180 = vmatprep.mubr.f32.mxu0 0.0
    %181 = vmatmul.mubr.f32.gmra.mxu0 %v63
    %v182 = vpop.f32.mrf.mxu0
    %v183 = vadd.f32 %v51, %v182
    %v184 = vpop.f32.mrf.mxu0
    %185 = vmatprep.mubr.f32.mxu0 0.0
    %186 = vmatmul.mubr.f32.gmra.mxu0 %v66
    %v187 = vpop.f32.mrf.mxu0
    %v188 = vadd.f32 %v51, %v187
    %v189 = vpop.f32.mrf.mxu0
    %190 = vmatprep.mubr.f32.mxu0 0.0
    %191 = vmatmul.mubr.f32.gmra.mxu0 %v69
    %v192 = vpop.f32.mrf.mxu0
    %v193 = vadd.f32 %v51, %v192
    %v194 = vpop.f32.mrf.mxu0
    %195 = vmatprep.mubr.f32.mxu0 0.0
    %196 = vmatmul.mubr.f32.gmra.mxu0 %v72
    %v197 = vpop.f32.mrf.mxu0
    %v198 = vadd.f32 %v51, %v197
    %v199 = vpop.f32.mrf.mxu0
    %200 = vmatprep.mubr.f32.mxu0 0.0
    %201 = vmatmul.mubr.f32.gmra.mxu0 %v75
    %v202 = vpop.f32.mrf.mxu0
    %v203 = vadd.f32 %v51, %v202
    %v204 = vpop.f32.mrf.mxu0
    %205 = vmatprep.mubr.f32.mxu0 0.0
    %206 = vmatmul.mubr.f32.gmra.mxu0 %v78
    %v207 = vpop.f32.mrf.mxu0
    %v208 = vadd.f32 %v51, %v207
    %v209 = vpop.f32.mrf.mxu0
    %210 = vmatprep.mubr.f32.mxu0 0.0
    %211 = vmatmul.mubr.f32.gmra.mxu0 %v81
    %v212 = vpop.f32.mrf.mxu0
    %v213 = vadd.f32 %v51, %v212
    %v214 = vpop.f32.mrf.mxu0
    %215 = vmatprep.mubr.f32.mxu0 0.0
    %216 = vmatmul.mubr.f32.gmra.mxu0 %v84
    %v217 = vpop.f32.mrf.mxu0
    %v218 = vadd.f32 %v51, %v217
    %v219 = vpop.f32.mrf.mxu0
    %220 = vmatprep.mubr.f32.mxu0 0.0
    %221 = vmatmul.mubr.f32.gmra.mxu0 %v87
    %v222 = vpop.f32.mrf.mxu0
    %v223 = vadd.f32 %v51, %v222
    %v224 = vpop.f32.mrf.mxu0
    %225 = vmatprep.mubr.f32.mxu0 0.0
    %226 = vmatmul.mubr.f32.gmra.mxu0 %v90
    %v227 = vpop.f32.mrf.mxu0
    %v228 = vadd.f32 %v51, %v227
    %v229 = vpop.f32.mrf.mxu0
    %230 = vmatprep.mubr.f32.mxu0 0.0
    %231 = vmatmul.mubr.f32.gmra.mxu0 %v93
    %v232 = vpop.f32.mrf.mxu0
    %v233 = vadd.f32 %v51, %v232
    %v234 = vpop.f32.mrf.mxu0
    %235 = vmatprep.mubr.f32.mxu0 0.0
    %236 = vmatmul.mubr.f32.gmra.mxu0 %v96
    %v237 = vpop.f32.mrf.mxu0
    %v238 = vadd.f32 %v51, %v237
    %v239 = vpop.f32.mrf.mxu0
    %240 = vmatprep.mubr.f32.mxu0 0.0
    %241 = vmatmul.mubr.f32.gmra.mxu0 %v99
    %v242 = vpop.f32.mrf.mxu0
    %v243 = vadd.f32 %v51, %v242
    %v244 = vpop.f32.mrf.mxu0
    %245 = vdwg.mxu0
    %v246 = vld [vmem:[#allocation2 + $0x18] sm:$0xff]
    %v247 = vld [vmem:[#allocation2 + $0x20] sm:$0xff]
    %v248 = vadd.f32 %v168, %v246
    %v249 = vadd.f32 %v173, %v247
    %v250 = vadd.f32 %v178, %v246
    %v251 = vadd.f32 %v183, %v247
    %v252 = vadd.f32 %v188, %v246
    %v253 = vadd.f32 %v193, %v247
    %v254 = vadd.f32 %v198, %v246
    %v255 = vadd.f32 %v203, %v247
    %v256 = vadd.f32 %v208, %v246
    %v257 = vadd.f32 %v213, %v247
    %v258 = vadd.f32 %v218, %v246
    %v259 = vadd.f32 %v223, %v247
    %v260 = vadd.f32 %v228, %v246
    %v261 = vadd.f32 %v233, %v247
    %v262 = vadd.f32 %v238, %v246
    %v263 = vadd.f32 %v243, %v247
    %v264 = vld [vmem:[#allocation2 + $0x28] sm:$0x1]
    %v265 = vld [vmem:[#allocation2 + $0x30] sm:$0x1]
    %v266 = vsel %vm52, %v248, 0.0
    %267 = vadd.xlane.f32.xlu0 %v266
    %v268 = vpop.xlane.xlu0 %267
    %v269 = vsel %vm52, %v249, 0.0
    %270 = vadd.xlane.f32.xlu0 %v269
    %v271 = vpop.xlane.xlu0 %270
    %v272 = vsel %vm52, %v250, 0.0
    %273 = vadd.xlane.f32.xlu0 %v272
    %v274 = vpop.xlane.xlu0 %273
    %v275 = vsel %vm52, %v251, 0.0
    %276 = vadd.xlane.f32.xlu0 %v275
    %v277 = vpop.xlane.xlu0 %276
    %v278 = vsel %vm52, %v252, 0.0
    %279 = vadd.xlane.f32.xlu0 %v278
    %v280 = vpop.xlane.xlu0 %279
    %v281 = vsel %vm52, %v253, 0.0
    %282 = vadd.xlane.f32.xlu0 %v281
    %v283 = vpop.xlane.xlu0 %282
    %v284 = vsel %vm52, %v254, 0.0
    %285 = vadd.xlane.f32.xlu0 %v284
    %v286 = vpop.xlane.xlu0 %285
    %v287 = vsel %vm52, %v255, 0.0
    %288 = vadd.xlane.f32.xlu0 %v287
    %v289 = vpop.xlane.xlu0 %288
    %v290 = vsel %vm52, %v256, 0.0
    %291 = vadd.xlane.f32.xlu0 %v290
    %v292 = vpop.xlane.xlu0 %291
    %v293 = vsel %vm52, %v257, 0.0
    %294 = vadd.xlane.f32.xlu0 %v293
    %v295 = vpop.xlane.xlu0 %294
    %v296 = vsel %vm52, %v258, 0.0
    %297 = vadd.xlane.f32.xlu0 %v296
    %v298 = vpop.xlane.xlu0 %297
    %v299 = vsel %vm52, %v259, 0.0
    %300 = vadd.xlane.f32.xlu0 %v299
    %v301 = vpop.xlane.xlu0 %300
    %v302 = vsel %vm52, %v260, 0.0
    %303 = vadd.xlane.f32.xlu0 %v302
    %v304 = vpop.xlane.xlu0 %303
    %v305 = vsel %vm52, %v261, 0.0
    %306 = vadd.xlane.f32.xlu0 %v305
    %v307 = vpop.xlane.xlu0 %306
    %v308 = vsel %vm52, %v262, 0.0
    %309 = vadd.xlane.f32.xlu0 %v308
    %v310 = vpop.xlane.xlu0 %309
    %v311 = vsel %vm52, %v263, 0.0
    %312 = vadd.xlane.f32.xlu0 %v311
    %v313 = vpop.xlane.xlu0 %312
    %v314 = vrcp.pop 16.0
    %v315 = vmul.f32 %v268, %v314
    %v316 = vmul.f32 %v271, %v314
    %v317 = vmul.f32 %v274, %v314
    %v318 = vmul.f32 %v277, %v314
    %v319 = vmul.f32 %v280, %v314
    %v320 = vmul.f32 %v283, %v314
    %v321 = vmul.f32 %v286, %v314
    %v322 = vmul.f32 %v289, %v314
    %v323 = vmul.f32 %v292, %v314
    %v324 = vmul.f32 %v295, %v314
    %v325 = vmul.f32 %v298, %v314
    %v326 = vmul.f32 %v301, %v314
    %v327 = vmul.f32 %v304, %v314
    %v328 = vmul.f32 %v307, %v314
    %v329 = vmul.f32 %v310, %v314
    %v330 = vmul.f32 %v313, %v314
    %v331 = vsub.f32 %v248, %v315
    %v332 = vsub.f32 %v249, %v316
    %v333 = vsub.f32 %v250, %v317
    %v334 = vsub.f32 %v251, %v318
    %v335 = vsub.f32 %v252, %v319
    %v336 = vsub.f32 %v253, %v320
    %v337 = vsub.f32 %v254, %v321
    %v338 = vsub.f32 %v255, %v322
    %v339 = vsub.f32 %v256, %v323
    %v340 = vsub.f32 %v257, %v324
    %v341 = vsub.f32 %v258, %v325
    %v342 = vsub.f32 %v259, %v326
    %v343 = vsub.f32 %v260, %v327
    %v344 = vsub.f32 %v261, %v328
    %v345 = vsub.f32 %v262, %v329
    %v346 = vsub.f32 %v263, %v330
    %v347 = vmul.f32 %v331, %v331
    %v348 = vmul.f32 %v332, %v332
    %v349 = vmul.f32 %v333, %v333
    %v350 = vmul.f32 %v334, %v334
    %v351 = vmul.f32 %v335, %v335
    %v352 = vmul.f32 %v336, %v336
    %v353 = vmul.f32 %v337, %v337
    %v354 = vmul.f32 %v338, %v338
    %v355 = vmul.f32 %v339, %v339
    %v356 = vmul.f32 %v340, %v340
    %v357 = vmul.f32 %v341, %v341
    %v358 = vmul.f32 %v342, %v342
    %v359 = vmul.f32 %v343, %v343
    %v360 = vmul.f32 %v344, %v344
    %v361 = vmul.f32 %v345, %v345
    %v362 = vmul.f32 %v346, %v346
    %v363 = vsel %vm52, %v347, 0.0
    %364 = vadd.xlane.f32.xlu0 %v363
    %v365 = vpop.xlane.xlu0 %364
    %v366 = vsel %vm52, %v348, 0.0
    %367 = vadd.xlane.f32.xlu0 %v366
    %v368 = vpop.xlane.xlu0 %367
    %v369 = vsel %vm52, %v349, 0.0
    %370 = vadd.xlane.f32.xlu0 %v369
    %v371 = vpop.xlane.xlu0 %370
    %v372 = vsel %vm52, %v350, 0.0
    %373 = vadd.xlane.f32.xlu0 %v372
    %v374 = vpop.xlane.xlu0 %373
    %v375 = vsel %vm52, %v351, 0.0
    %376 = vadd.xlane.f32.xlu0 %v375
    %v377 = vpop.xlane.xlu0 %376
    %v378 = vsel %vm52, %v352, 0.0
    %379 = vadd.xlane.f32.xlu0 %v378
    %v380 = vpop.xlane.xlu0 %379
    %v381 = vsel %vm52, %v353, 0.0
    %382 = vadd.xlane.f32.xlu0 %v381
    %v383 = vpop.xlane.xlu0 %382
    %v384 = vsel %vm52, %v354, 0.0
    %385 = vadd.xlane.f32.xlu0 %v384
    %v386 = vpop.xlane.xlu0 %385
    %v387 = vsel %vm52, %v355, 0.0
    %388 = vadd.xlane.f32.xlu0 %v387
    %v389 = vpop.xlane.xlu0 %388
    %v390 = vsel %vm52, %v356, 0.0
    %391 = vadd.xlane.f32.xlu0 %v390
    %v392 = vpop.xlane.xlu0 %391
    %v393 = vsel %vm52, %v357, 0.0
    %394 = vadd.xlane.f32.xlu0 %v393
    %v395 = vpop.xlane.xlu0 %394
    %v396 = vsel %vm52, %v358, 0.0
    %397 = vadd.xlane.f32.xlu0 %v396
    %v398 = vpop.xlane.xlu0 %397
    %v399 = vsel %vm52, %v359, 0.0
    %400 = vadd.xlane.f32.xlu0 %v399
    %v401 = vpop.xlane.xlu0 %400
    %v402 = vsel %vm52, %v360, 0.0
    %403 = vadd.xlane.f32.xlu0 %v402
    %v404 = vpop.xlane.xlu0 %403
    %v405 = vsel %vm52, %v361, 0.0
    %406 = vadd.xlane.f32.xlu0 %v405
    %v407 = vpop.xlane.xlu0 %406
    %v408 = vsel %vm52, %v362, 0.0
    %409 = vadd.xlane.f32.xlu0 %v408
    %v410 = vpop.xlane.xlu0 %409
    %v411 = vmul.f32 %v365, %v314
    %v412 = vmul.f32 %v368, %v314
    %v413 = vmul.f32 %v371, %v314
    %v414 = vmul.f32 %v374, %v314
    %v415 = vmul.f32 %v377, %v314
    %v416 = vmul.f32 %v380, %v314
    %v417 = vmul.f32 %v383, %v314
    %v418 = vmul.f32 %v386, %v314
    %v419 = vmul.f32 %v389, %v314
    %v420 = vmul.f32 %v392, %v314
    %v421 = vmul.f32 %v395, %v314
    %v422 = vmul.f32 %v398, %v314
    %v423 = vmul.f32 %v401, %v314
    %v424 = vmul.f32 %v404, %v314
    %v425 = vmul.f32 %v407, %v314
    %v426 = vmul.f32 %v410, %v314
    %v427 = vadd.f32 %v411, 1e-05
    %v428 = vadd.f32 %v412, 1e-05
    %v429 = vadd.f32 %v413, 1e-05
    %v430 = vadd.f32 %v414, 1e-05
    %v431 = vadd.f32 %v415, 1e-05
    %v432 = vadd.f32 %v416, 1e-05
    %v433 = vadd.f32 %v417, 1e-05
    %v434 = vadd.f32 %v418, 1e-05
    %v435 = vadd.f32 %v419, 1e-05
    %v436 = vadd.f32 %v420, 1e-05
    %v437 = vadd.f32 %v421, 1e-05
    %v438 = vadd.f32 %v422, 1e-05
    %v439 = vadd.f32 %v423, 1e-05
    %v440 = vadd.f32 %v424, 1e-05
    %v441 = vadd.f32 %v425, 1e-05
    %v442 = vadd.f32 %v426, 1e-05
    %v443 = vrsqrt.pop %v427
    %v444 = vrsqrt.pop %v428
    %v445 = vrsqrt.pop %v429
    %v446 = vrsqrt.pop %v430
    %v447 = vrsqrt.pop %v431
    %v448 = vrsqrt.pop %v432
    %v449 = vrsqrt.pop %v433
    %v450 = vrsqrt.pop %v434
    %v451 = vrsqrt.pop %v435
    %v452 = vrsqrt.pop %v436
    %v453 = vrsqrt.pop %v437
    %v454 = vrsqrt.pop %v438
    %v455 = vrsqrt.pop %v439
    %v456 = vrsqrt.pop %v440
    %v457 = vrsqrt.pop %v441
    %v458 = vrsqrt.pop %v442
    %v459 = vmul.f32 %v331, %v443
    %v460 = vmul.f32 %v332, %v444
    %v461 = vmul.f32 %v333, %v445
    %v462 = vmul.f32 %v334, %v446
    %v463 = vmul.f32 %v335, %v447
    %v464 = vmul.f32 %v336, %v448
    %v465 = vmul.f32 %v337, %v449
    %v466 = vmul.f32 %v338, %v450
    %v467 = vmul.f32 %v339, %v451
    %v468 = vmul.f32 %v340, %v452
    %v469 = vmul.f32 %v341, %v453
    %v470 = vmul.f32 %v342, %v454
    %v471 = vmul.f32 %v343, %v455
    %v472 = vmul.f32 %v344, %v456
    %v473 = vmul.f32 %v345, %v457
    %v474 = vmul.f32 %v346, %v458
    %v475 = vlaneseq
    %v476 = vshrl.u32 %v475, 7
    %v477 = vsub.s32 0, %v476
    %v478 = vrot.slane %v264, %v477
    %v479 = vmul.f32 %v478, %v459
    %v480 = vmul.f32 %v478, %v460
    %v481 = vmul.f32 %v478, %v461
    %v482 = vmul.f32 %v478, %v462
    %v483 = vmul.f32 %v478, %v463
    %v484 = vmul.f32 %v478, %v464
    %v485 = vmul.f32 %v478, %v465
    %v486 = vmul.f32 %v478, %v466
    %v487 = vmul.f32 %v478, %v467
    %v488 = vmul.f32 %v478, %v468
    %v489 = vmul.f32 %v478, %v469
    %v490 = vmul.f32 %v478, %v470
    %v491 = vmul.f32 %v478, %v471
    %v492 = vmul.f32 %v478, %v472
    %v493 = vmul.f32 %v478, %v473
    %v494 = vmul.f32 %v478, %v474
    %v495 = vlaneseq
    %v496 = vshrl.u32 %v495, 7
    %v497 = vsub.s32 0, %v496
    %v498 = vrot.slane %v265, %v497
    %v499 = vadd.f32 %v479, %v498
    %v500 = vadd.f32 %v480, %v498
    %v501 = vadd.f32 %v481, %v498
    %v502 = vadd.f32 %v482, %v498
    %v503 = vadd.f32 %v483, %v498
    %v504 = vadd.f32 %v484, %v498
    %v505 = vadd.f32 %v485, %v498
    %v506 = vadd.f32 %v486, %v498
    %v507 = vadd.f32 %v487, %v498
    %v508 = vadd.f32 %v488, %v498
    %v509 = vadd.f32 %v489, %v498
    %v510 = vadd.f32 %v490, %v498
    %v511 = vadd.f32 %v491, %v498
    %v512 = vadd.f32 %v492, %v498
    %v513 = vadd.f32 %v493, %v498
    %v514 = vadd.f32 %v494, %v498
    %v515 = vld [vmem:[#allocation2 + $0x38] sm:$0xff]
    %v516 = vld [vmem:[#allocation2 + $0x40] sm:$0xff]
    %v517 = vld [vmem:[#allocation2 + $0x48] sm:$0x1]
    %v518 = vlaneseq
    %v519 = vshrl.u32 %v518, 7
    %v520 = vsub.s32 0, %v519
    %v521 = vrot.slane %v517, %v520
    %v523 = vsel %vm52, %v499, 0
    %v526 = vsel %vm52, %v500, 0
    %v529 = vsel %vm52, %v501, 0
    %v532 = vsel %vm52, %v502, 0
    %v535 = vsel %vm52, %v503, 0
    %v538 = vsel %vm52, %v504, 0
    %v541 = vsel %vm52, %v505, 0
    %v544 = vsel %vm52, %v506, 0
    %v547 = vsel %vm52, %v507, 0
    %v550 = vsel %vm52, %v508, 0
    %v553 = vsel %vm52, %v509, 0
    %v556 = vsel %vm52, %v510, 0
    %v559 = vsel %vm52, %v511, 0
    %v562 = vsel %vm52, %v512, 0
    %v565 = vsel %vm52, %v513, 0
    %v568 = vsel %vm52, %v514, 0
    %570 = vmatprep.subr.mxu0 0.0
    %571 = vmatpush1.msra.mxu0 0.0
    %572 = vmatprep.subr.mxu0 0.0
    %573 = vmatpush1.msra.mxu0 0.0
    %574 = vmatprep.subr.mxu0 0.0
    %575 = vmatpush1.msra.mxu0 0.0
    %576 = vmatprep.subr.mxu0 0.0
    %577 = vmatpush1.msra.mxu0 0.0
    %578 = vmatprep.subr.mxu0 0.0
    %579 = vmatpush1.msra.mxu0 0.0
    %580 = vmatprep.subr.mxu0 0.0
    %581 = vmatpush1.msra.mxu0 0.0
    %582 = vmatprep.subr.mxu0 0.0
    %583 = vmatpush1.msra.mxu0 0.0
    %584 = vmatprep.subr.mxu0 0.0
    %585 = vmatpush1.msra.mxu0 0.0
    %586 = vmatprep.subr.mxu0 0.0
    %587 = vmatpush1.msra.mxu0 0.0
    %588 = vmatprep.subr.mxu0 0.0
    %589 = vmatpush1.msra.mxu0 0.0
    %590 = vmatprep.subr.mxu0 0.0
    %591 = vmatpush1.msra.mxu0 0.0
    %592 = vmatprep.subr.mxu0 0.0
    %593 = vmatpush1.msra.mxu0 0.0
    %594 = vmatprep.subr.mxu0 0.0
    %595 = vmatpush1.msra.mxu0 0.0
    %596 = vmatprep.subr.mxu0 0.0
    %597 = vmatpush1.msra.mxu0 0.0
    %598 = vmatprep.subr.mxu0 0.0
    %599 = vmatpush1.msra.mxu0 %v516
    %600 = vmatprep.subr.mxu0 0.0
    %601 = vmatpush1.msra.mxu0 %v515
    %602 = vmatprep.subr.mxu0 0.0
    %603 = vmatpush2.msra.mxu0 0.0
    %604 = vmatprep.subr.mxu0 0.0
    %605 = vmatpush2.msra.mxu0 0.0
    %606 = vmatprep.subr.mxu0 0.0
    %607 = vmatpush2.msra.mxu0 0.0
    %608 = vmatprep.subr.mxu0 0.0
    %609 = vmatpush2.msra.mxu0 0.0
    %610 = vmatprep.subr.mxu0 0.0
    %611 = vmatpush2.msra.mxu0 0.0
    %612 = vmatprep.subr.mxu0 0.0
    %613 = vmatpush2.msra.mxu0 0.0
    %614 = vmatprep.subr.mxu0 0.0
    %615 = vmatpush2.msra.mxu0 0.0
    %616 = vmatprep.subr.mxu0 0.0
    %617 = vmatpush2.msra.mxu0 0.0
    %618 = vmatprep.subr.mxu0 0.0
    %619 = vmatpush2.msra.mxu0 0.0
    %620 = vmatprep.subr.mxu0 0.0
    %621 = vmatpush2.msra.mxu0 0.0
    %622 = vmatprep.subr.mxu0 0.0
    %623 = vmatpush2.msra.mxu0 0.0
    %624 = vmatprep.subr.mxu0 0.0
    %625 = vmatpush2.msra.mxu0 0.0
    %626 = vmatprep.subr.mxu0 0.0
    %627 = vmatpush2.msra.mxu0 0.0
    %628 = vmatprep.subr.mxu0 0.0
    %629 = vmatpush2.msra.mxu0 0.0
    %630 = vmatprep.subr.mxu0 0.0
    %631 = vmatpush2.msra.mxu0 0.0
    %632 = vmatprep.subr.mxu0 0.0
    %633 = vmatpush2.msra.mxu0 0.0
    %634 = vmatprep.mubr.f32.mxu0 0.0
    %635 = vmatmul.mubr.f32.gmra.mxu0 %v523
    %v636 = vpop.f32.mrf.mxu0
    %v637 = vadd.f32 %v521, %v636
    %v638 = vpop.f32.mrf.mxu0
    %639 = vmatprep.mubr.f32.mxu0 0.0
    %640 = vmatmul.mubr.f32.gmra.mxu0 %v526
    %v641 = vpop.f32.mrf.mxu0
    %v642 = vadd.f32 %v521, %v641
    %v643 = vpop.f32.mrf.mxu0
    %644 = vmatprep.mubr.f32.mxu0 0.0
    %645 = vmatmul.mubr.f32.gmra.mxu0 %v529
    %v646 = vpop.f32.mrf.mxu0
    %v647 = vadd.f32 %v521, %v646
    %v648 = vpop.f32.mrf.mxu0
    %649 = vmatprep.mubr.f32.mxu0 0.0
    %650 = vmatmul.mubr.f32.gmra.mxu0 %v532
    %v651 = vpop.f32.mrf.mxu0
    %v652 = vadd.f32 %v521, %v651
    %v653 = vpop.f32.mrf.mxu0
    %654 = vmatprep.mubr.f32.mxu0 0.0
    %655 = vmatmul.mubr.f32.gmra.mxu0 %v535
    %v656 = vpop.f32.mrf.mxu0
    %v657 = vadd.f32 %v521, %v656
    %v658 = vpop.f32.mrf.mxu0
    %659 = vmatprep.mubr.f32.mxu0 0.0
    %660 = vmatmul.mubr.f32.gmra.mxu0 %v538
    %v661 = vpop.f32.mrf.mxu0
    %v662 = vadd.f32 %v521, %v661
    %v663 = vpop.f32.mrf.mxu0
    %664 = vmatprep.mubr.f32.mxu0 0.0
    %665 = vmatmul.mubr.f32.gmra.mxu0 %v541
    %v666 = vpop.f32.mrf.mxu0
    %v667 = vadd.f32 %v521, %v666
    %v668 = vpop.f32.mrf.mxu0
    %669 = vmatprep.mubr.f32.mxu0 0.0
    %670 = vmatmul.mubr.f32.gmra.mxu0 %v544
    %v671 = vpop.f32.mrf.mxu0
    %v672 = vadd.f32 %v521, %v671
    %v673 = vpop.f32.mrf.mxu0
    %674 = vmatprep.mubr.f32.mxu0 0.0
    %675 = vmatmul.mubr.f32.gmra.mxu0 %v547
    %v676 = vpop.f32.mrf.mxu0
    %v677 = vadd.f32 %v521, %v676
    %v678 = vpop.f32.mrf.mxu0
    %679 = vmatprep.mubr.f32.mxu0 0.0
    %680 = vmatmul.mubr.f32.gmra.mxu0 %v550
    %v681 = vpop.f32.mrf.mxu0
    %v682 = vadd.f32 %v521, %v681
    %v683 = vpop.f32.mrf.mxu0
    %684 = vmatprep.mubr.f32.mxu0 0.0
    %685 = vmatmul.mubr.f32.gmra.mxu0 %v553
    %v686 = vpop.f32.mrf.mxu0
    %v687 = vadd.f32 %v521, %v686
    %v688 = vpop.f32.mrf.mxu0
    %689 = vmatprep.mubr.f32.mxu0 0.0
    %690 = vmatmul.mubr.f32.gmra.mxu0 %v556
    %v691 = vpop.f32.mrf.mxu0
    %v692 = vadd.f32 %v521, %v691
    %v693 = vpop.f32.mrf.mxu0
    %694 = vmatprep.mubr.f32.mxu0 0.0
    %695 = vmatmul.mubr.f32.gmra.mxu0 %v559
    %v696 = vpop.f32.mrf.mxu0
    %v697 = vadd.f32 %v521, %v696
    %v698 = vpop.f32.mrf.mxu0
    %699 = vmatprep.mubr.f32.mxu0 0.0
    %700 = vmatmul.mubr.f32.gmra.mxu0 %v562
    %v701 = vpop.f32.mrf.mxu0
    %v702 = vadd.f32 %v521, %v701
    %v703 = vpop.f32.mrf.mxu0
    %704 = vmatprep.mubr.f32.mxu0 0.0
    %705 = vmatmul.mubr.f32.gmra.mxu0 %v565
    %v706 = vpop.f32.mrf.mxu0
    %v707 = vadd.f32 %v521, %v706
    %v708 = vpop.f32.mrf.mxu0
    %709 = vmatprep.mubr.f32.mxu0 0.0
    %710 = vmatmul.mubr.f32.gmra.mxu0 %v568
    %v711 = vpop.f32.mrf.mxu0
    %v712 = vadd.f32 %v521, %v711
    %v713 = vpop.f32.mrf.mxu0
    %714 = vdwg.mxu0
    %731 = vrot.lane.b32.xlu0 %v637, 120
    %v732 = vpop.permute.xlu0 %731
    %733 = vrot.lane.b32.xlu0 %v642, 120
    %v734 = vpop.permute.xlu0 %733
    %735 = vrot.lane.b32.xlu0 %v647, 120
    %v736 = vpop.permute.xlu0 %735
    %737 = vrot.lane.b32.xlu0 %v652, 120
    %v738 = vpop.permute.xlu0 %737
    %739 = vrot.lane.b32.xlu0 %v657, 120
    %v740 = vpop.permute.xlu0 %739
    %741 = vrot.lane.b32.xlu0 %v662, 120
    %v742 = vpop.permute.xlu0 %741
    %743 = vrot.lane.b32.xlu0 %v667, 120
    %v744 = vpop.permute.xlu0 %743
    %745 = vrot.lane.b32.xlu0 %v672, 120
    %v746 = vpop.permute.xlu0 %745
    %747 = vrot.lane.b32.xlu0 %v677, 120
    %v748 = vpop.permute.xlu0 %747
    %749 = vrot.lane.b32.xlu0 %v682, 120
    %v750 = vpop.permute.xlu0 %749
    %751 = vrot.lane.b32.xlu0 %v687, 120
    %v752 = vpop.permute.xlu0 %751
    %753 = vrot.lane.b32.xlu0 %v692, 120
    %v754 = vpop.permute.xlu0 %753
    %755 = vrot.lane.b32.xlu0 %v697, 120
    %v756 = vpop.permute.xlu0 %755
    %757 = vrot.lane.b32.xlu0 %v702, 120
    %v758 = vpop.permute.xlu0 %757
    %759 = vrot.lane.b32.xlu0 %v707, 120
    %v760 = vpop.permute.xlu0 %759
    %761 = vrot.lane.b32.xlu0 %v712, 120
    %v762 = vpop.permute.xlu0 %761
    %763 = vrot.lane.b32.xlu0 %v637, 112
    %v764 = vpop.permute.xlu0 %763
    %765 = vrot.lane.b32.xlu0 %v642, 112
    %v766 = vpop.permute.xlu0 %765
    %767 = vrot.lane.b32.xlu0 %v647, 112
    %v768 = vpop.permute.xlu0 %767
    %769 = vrot.lane.b32.xlu0 %v652, 112
    %v770 = vpop.permute.xlu0 %769
    %771 = vrot.lane.b32.xlu0 %v657, 112
    %v772 = vpop.permute.xlu0 %771
    %773 = vrot.lane.b32.xlu0 %v662, 112
    %v774 = vpop.permute.xlu0 %773
    %775 = vrot.lane.b32.xlu0 %v667, 112
    %v776 = vpop.permute.xlu0 %775
    %777 = vrot.lane.b32.xlu0 %v672, 112
    %v778 = vpop.permute.xlu0 %777
    %779 = vrot.lane.b32.xlu0 %v677, 112
    %v780 = vpop.permute.xlu0 %779
    %781 = vrot.lane.b32.xlu0 %v682, 112
    %v782 = vpop.permute.xlu0 %781
    %783 = vrot.lane.b32.xlu0 %v687, 112
    %v784 = vpop.permute.xlu0 %783
    %785 = vrot.lane.b32.xlu0 %v692, 112
    %v786 = vpop.permute.xlu0 %785
    %787 = vrot.lane.b32.xlu0 %v697, 112
    %v788 = vpop.permute.xlu0 %787
    %789 = vrot.lane.b32.xlu0 %v702, 112
    %v790 = vpop.permute.xlu0 %789
    %791 = vrot.lane.b32.xlu0 %v707, 112
    %v792 = vpop.permute.xlu0 %791
    %793 = vrot.lane.b32.xlu0 %v712, 112
    %v794 = vpop.permute.xlu0 %793
    %795 = vrot.lane.b32.xlu0 %v637, 104
    %v796 = vpop.permute.xlu0 %795
    %797 = vrot.lane.b32.xlu0 %v642, 104
    %v798 = vpop.permute.xlu0 %797
    %799 = vrot.lane.b32.xlu0 %v647, 104
    %v800 = vpop.permute.xlu0 %799
    %801 = vrot.lane.b32.xlu0 %v652, 104
    %v802 = vpop.permute.xlu0 %801
    %803 = vrot.lane.b32.xlu0 %v657, 104
    %v804 = vpop.permute.xlu0 %803
    %805 = vrot.lane.b32.xlu0 %v662, 104
    %v806 = vpop.permute.xlu0 %805
    %807 = vrot.lane.b32.xlu0 %v667, 104
    %v808 = vpop.permute.xlu0 %807
    %809 = vrot.lane.b32.xlu0 %v672, 104
    %v810 = vpop.permute.xlu0 %809
    %811 = vrot.lane.b32.xlu0 %v677, 104
    %v812 = vpop.permute.xlu0 %811
    %813 = vrot.lane.b32.xlu0 %v682, 104
    %v814 = vpop.permute.xlu0 %813
    %815 = vrot.lane.b32.xlu0 %v687, 104
    %v816 = vpop.permute.xlu0 %815
    %817 = vrot.lane.b32.xlu0 %v692, 104
    %v818 = vpop.permute.xlu0 %817
    %819 = vrot.lane.b32.xlu0 %v697, 104
    %v820 = vpop.permute.xlu0 %819
    %821 = vrot.lane.b32.xlu0 %v702, 104
    %v822 = vpop.permute.xlu0 %821
    %823 = vrot.lane.b32.xlu0 %v707, 104
    %v824 = vpop.permute.xlu0 %823
    %825 = vrot.lane.b32.xlu0 %v712, 104
    %v826 = vpop.permute.xlu0 %825
    %v827 = vlaneseq
    %v828 = vand.u32 %v827, 127
    %vm829 = vcmp.lt.s32.totalorder %v828, 13
    %v830 = vsel %vm829, 0.0, -1e+30
    %831 = vrot.lane.b32.xlu0 %v637, 96
    %v832 = vpop.permute.xlu0 %831
    %833 = vrot.lane.b32.xlu0 %v642, 96
    %v834 = vpop.permute.xlu0 %833
    %vm835 = vcmask 64512
    %v836 = vsel %vm835, %v637, 0
    %v838 = vsel %vm835, %v642, 0
    %v840 = vsel %vm835, %v832, 0
    %v842 = vsel %vm835, %v834, 0
    %844 = vmatprep.subr.mxu0 0.0
    %845 = vmatpush1.xpose.msra.mxu0 0.0
    %846 = vmatprep.subr.mxu0 0.0
    %847 = vmatpush1.xpose.msra.mxu0 0.0
    %848 = vmatprep.subr.mxu0 0.0
    %849 = vmatpush1.xpose.msra.mxu0 0.0
    %850 = vmatprep.subr.mxu0 0.0
    %851 = vmatpush1.xpose.msra.mxu0 0.0
    %852 = vmatprep.subr.mxu0 0.0
    %853 = vmatpush1.xpose.msra.mxu0 0.0
    %854 = vmatprep.subr.mxu0 0.0
    %855 = vmatpush1.xpose.msra.mxu0 0.0
    %856 = vmatprep.subr.mxu0 0.0
    %857 = vmatpush1.xpose.msra.mxu0 0.0
    %858 = vmatprep.subr.mxu0 0.0
    %859 = vmatpush1.xpose.msra.mxu0 0.0
    %860 = vmatprep.subr.mxu0 0.0
    %861 = vmatpush1.xpose.msra.mxu0 0.0
    %862 = vmatprep.subr.mxu0 0.0
    %863 = vmatpush1.xpose.msra.mxu0 0.0
    %864 = vmatprep.subr.mxu0 0.0
    %865 = vmatpush1.xpose.msra.mxu0 0.0
    %866 = vmatprep.subr.mxu0 0.0
    %867 = vmatpush1.xpose.msra.mxu0 0.0
    %868 = vmatprep.subr.mxu0 0.0
    %869 = vmatpush1.xpose.msra.mxu0 0.0
    %870 = vmatprep.subr.mxu0 0.0
    %871 = vmatpush1.xpose.msra.mxu0 0.0
    %872 = vmatprep.subr.mxu0 0.0
    %873 = vmatpush1.xpose.msra.mxu0 %v842
    %874 = vmatprep.subr.mxu0 0.0
    %875 = vmatpush1.xpose.msra.mxu0 %v840
    %876 = vmatprep.subr.mxu0 0.0
    %877 = vmatpush2.xpose.msra.mxu0 0.0
    %878 = vmatprep.subr.mxu0 0.0
    %879 = vmatpush2.xpose.msra.mxu0 0.0
    %880 = vmatprep.subr.mxu0 0.0
    %881 = vmatpush2.xpose.msra.mxu0 0.0
    %882 = vmatprep.subr.mxu0 0.0
    %883 = vmatpush2.xpose.msra.mxu0 0.0
    %884 = vmatprep.subr.mxu0 0.0
    %885 = vmatpush2.xpose.msra.mxu0 0.0
    %886 = vmatprep.subr.mxu0 0.0
    %887 = vmatpush2.xpose.msra.mxu0 0.0
    %888 = vmatprep.subr.mxu0 0.0
    %889 = vmatpush2.xpose.msra.mxu0 0.0
    %890 = vmatprep.subr.mxu0 0.0
    %891 = vmatpush2.xpose.msra.mxu0 0.0
    %892 = vmatprep.subr.mxu0 0.0
    %893 = vmatpush2.xpose.msra.mxu0 0.0
    %894 = vmatprep.subr.mxu0 0.0
    %895 = vmatpush2.xpose.msra.mxu0 0.0
    %896 = vmatprep.subr.mxu0 0.0
    %897 = vmatpush2.xpose.msra.mxu0 0.0
    %898 = vmatprep.subr.mxu0 0.0
    %899 = vmatpush2.xpose.msra.mxu0 0.0
    %900 = vmatprep.subr.mxu0 0.0
    %901 = vmatpush2.xpose.msra.mxu0 0.0
    %902 = vmatprep.subr.mxu0 0.0
    %903 = vmatpush2.xpose.msra.mxu0 0.0
    %904 = vmatprep.subr.mxu0 0.0
    %905 = vmatpush2.xpose.msra.mxu0 0.0
    %906 = vmatprep.subr.mxu0 0.0
    %907 = vmatpush2.xpose.msra.mxu0 0.0
    %908 = vmatprep.mubr.f32.mxu0 0.0
    %909 = vmatmul.mubr.f32.gmra.mxu0 %v836
    %v910 = vpop.f32.mrf.mxu0
    %v911 = vadd.f32 0.0, %v910
    %v912 = vpop.f32.mrf.mxu0
    %913 = vmatprep.mubr.f32.mxu0 0.0
    %914 = vmatmul.mubr.f32.gmra.mxu0 %v838
    %v915 = vpop.f32.mrf.mxu0
    %v916 = vadd.f32 0.0, %v915
    %v917 = vpop.f32.mrf.mxu0
    %918 = vdwg.mxu0
    %919 = vrot.lane.b32.xlu0 %v647, 96
    %v920 = vpop.permute.xlu0 %919
    %921 = vrot.lane.b32.xlu0 %v652, 96
    %v922 = vpop.permute.xlu0 %921
    %v923 = vsel %vm835, %v647, 0
    %v925 = vsel %vm835, %v652, 0
    %v927 = vsel %vm835, %v920, 0
    %v929 = vsel %vm835, %v922, 0
    %931 = vmatprep.subr.mxu0 0.0
    %932 = vmatpush1.xpose.msra.mxu0 0.0
    %933 = vmatprep.subr.mxu0 0.0
    %934 = vmatpush1.xpose.msra.mxu0 0.0
    %935 = vmatprep.subr.mxu0 0.0
    %936 = vmatpush1.xpose.msra.mxu0 0.0
    %937 = vmatprep.subr.mxu0 0.0
    %938 = vmatpush1.xpose.msra.mxu0 0.0
    %939 = vmatprep.subr.mxu0 0.0
    %940 = vmatpush1.xpose.msra.mxu0 0.0
    %941 = vmatprep.subr.mxu0 0.0
    %942 = vmatpush1.xpose.msra.mxu0 0.0
    %943 = vmatprep.subr.mxu0 0.0
    %944 = vmatpush1.xpose.msra.mxu0 0.0
    %945 = vmatprep.subr.mxu0 0.0
    %946 = vmatpush1.xpose.msra.mxu0 0.0
    %947 = vmatprep.subr.mxu0 0.0
    %948 = vmatpush1.xpose.msra.mxu0 0.0
    %949 = vmatprep.subr.mxu0 0.0
    %950 = vmatpush1.xpose.msra.mxu0 0.0
    %951 = vmatprep.subr.mxu0 0.0
    %952 = vmatpush1.xpose.msra.mxu0 0.0
    %953 = vmatprep.subr.mxu0 0.0
    %954 = vmatpush1.xpose.msra.mxu0 0.0
    %955 = vmatprep.subr.mxu0 0.0
    %956 = vmatpush1.xpose.msra.mxu0 0.0
    %957 = vmatprep.subr.mxu0 0.0
    %958 = vmatpush1.xpose.msra.mxu0 0.0
    %959 = vmatprep.subr.mxu0 0.0
    %960 = vmatpush1.xpose.msra.mxu0 %v929
    %961 = vmatprep.subr.mxu0 0.0
    %962 = vmatpush1.xpose.msra.mxu0 %v927
    %963 = vmatprep.subr.mxu0 0.0
    %964 = vmatpush2.xpose.msra.mxu0 0.0
    %965 = vmatprep.subr.mxu0 0.0
    %966 = vmatpush2.xpose.msra.mxu0 0.0
    %967 = vmatprep.subr.mxu0 0.0
    %968 = vmatpush2.xpose.msra.mxu0 0.0
    %969 = vmatprep.subr.mxu0 0.0
    %970 = vmatpush2.xpose.msra.mxu0 0.0
    %971 = vmatprep.subr.mxu0 0.0
    %972 = vmatpush2.xpose.msra.mxu0 0.0
    %973 = vmatprep.subr.mxu0 0.0
    %974 = vmatpush2.xpose.msra.mxu0 0.0
    %975 = vmatprep.subr.mxu0 0.0
    %976 = vmatpush2.xpose.msra.mxu0 0.0
    %977 = vmatprep.subr.mxu0 0.0
    %978 = vmatpush2.xpose.msra.mxu0 0.0
    %979 = vmatprep.subr.mxu0 0.0
    %980 = vmatpush2.xpose.msra.mxu0 0.0
    %981 = vmatprep.subr.mxu0 0.0
    %982 = vmatpush2.xpose.msra.mxu0 0.0
    %983 = vmatprep.subr.mxu0 0.0
    %984 = vmatpush2.xpose.msra.mxu0 0.0
    %985 = vmatprep.subr.mxu0 0.0
    %986 = vmatpush2.xpose.msra.mxu0 0.0
    %987 = vmatprep.subr.mxu0 0.0
    %988 = vmatpush2.xpose.msra.mxu0 0.0
    %989 = vmatprep.subr.mxu0 0.0
    %990 = vmatpush2.xpose.msra.mxu0 0.0
    %991 = vmatprep.subr.mxu0 0.0
    %992 = vmatpush2.xpose.msra.mxu0 0.0
    %993 = vmatprep.subr.mxu0 0.0
    %994 = vmatpush2.xpose.msra.mxu0 0.0
    %995 = vmatprep.mubr.f32.mxu0 0.0
    %996 = vmatmul.mubr.f32.gmra.mxu0 %v923
    %v997 = vpop.f32.mrf.mxu0
    %v998 = vadd.f32 0.0, %v997
    %v999 = vpop.f32.mrf.mxu0
    %1000 = vmatprep.mubr.f32.mxu0 0.0
    %1001 = vmatmul.mubr.f32.gmra.mxu0 %v925
    %v1002 = vpop.f32.mrf.mxu0
    %v1003 = vadd.f32 0.0, %v1002
    %v1004 = vpop.f32.mrf.mxu0
    %1005 = vdwg.mxu0
    %1006 = vrot.lane.b32.xlu0 %v657, 96
    %v1007 = vpop.permute.xlu0 %1006
    %1008 = vrot.lane.b32.xlu0 %v662, 96
    %v1009 = vpop.permute.xlu0 %1008
    %v1010 = vsel %vm835, %v657, 0
    %v1012 = vsel %vm835, %v662, 0
    %v1014 = vsel %vm835, %v1007, 0
    %v1016 = vsel %vm835, %v1009, 0
    %1018 = vmatprep.subr.mxu0 0.0
    %1019 = vmatpush1.xpose.msra.mxu0 0.0
    %1020 = vmatprep.subr.mxu0 0.0
    %1021 = vmatpush1.xpose.msra.mxu0 0.0
    %1022 = vmatprep.subr.mxu0 0.0
    %1023 = vmatpush1.xpose.msra.mxu0 0.0
    %1024 = vmatprep.subr.mxu0 0.0
    %1025 = vmatpush1.xpose.msra.mxu0 0.0
    %1026 = vmatprep.subr.mxu0 0.0
    %1027 = vmatpush1.xpose.msra.mxu0 0.0
    %1028 = vmatprep.subr.mxu0 0.0
    %1029 = vmatpush1.xpose.msra.mxu0 0.0
    %1030 = vmatprep.subr.mxu0 0.0
    %1031 = vmatpush1.xpose.msra.mxu0 0.0
    %1032 = vmatprep.subr.mxu0 0.0
    %1033 = vmatpush1.xpose.msra.mxu0 0.0
    %1034 = vmatprep.subr.mxu0 0.0
    %1035 = vmatpush1.xpose.msra.mxu0 0.0
    %1036 = vmatprep.subr.mxu0 0.0
    %1037 = vmatpush1.xpose.msra.mxu0 0.0
    %1038 = vmatprep.subr.mxu0 0.0
    %1039 = vmatpush1.xpose.msra.mxu0 0.0
    %1040 = vmatprep.subr.mxu0 0.0
    %1041 = vmatpush1.xpose.msra.mxu0 0.0
    %1042 = vmatprep.subr.mxu0 0.0
    %1043 = vmatpush1.xpose.msra.mxu0 0.0
    %1044 = vmatprep.subr.mxu0 0.0
    %1045 = vmatpush1.xpose.msra.mxu0 0.0
    %1046 = vmatprep.subr.mxu0 0.0
    %1047 = vmatpush1.xpose.msra.mxu0 %v1016
    %1048 = vmatprep.subr.mxu0 0.0
    %1049 = vmatpush1.xpose.msra.mxu0 %v1014
    %1050 = vmatprep.subr.mxu0 0.0
    %1051 = vmatpush2.xpose.msra.mxu0 0.0
    %1052 = vmatprep.subr.mxu0 0.0
    %1053 = vmatpush2.xpose.msra.mxu0 0.0
    %1054 = vmatprep.subr.mxu0 0.0
    %1055 = vmatpush2.xpose.msra.mxu0 0.0
    %1056 = vmatprep.subr.mxu0 0.0
    %1057 = vmatpush2.xpose.msra.mxu0 0.0
    %1058 = vmatprep.subr.mxu0 0.0
    %1059 = vmatpush2.xpose.msra.mxu0 0.0
    %1060 = vmatprep.subr.mxu0 0.0
    %1061 = vmatpush2.xpose.msra.mxu0 0.0
    %1062 = vmatprep.subr.mxu0 0.0
    %1063 = vmatpush2.xpose.msra.mxu0 0.0
    %1064 = vmatprep.subr.mxu0 0.0
    %1065 = vmatpush2.xpose.msra.mxu0 0.0
    %1066 = vmatprep.subr.mxu0 0.0
    %1067 = vmatpush2.xpose.msra.mxu0 0.0
    %1068 = vmatprep.subr.mxu0 0.0
    %1069 = vmatpush2.xpose.msra.mxu0 0.0
    %1070 = vmatprep.subr.mxu0 0.0
    %1071 = vmatpush2.xpose.msra.mxu0 0.0
    %1072 = vmatprep.subr.mxu0 0.0
    %1073 = vmatpush2.xpose.msra.mxu0 0.0
    %1074 = vmatprep.subr.mxu0 0.0
    %1075 = vmatpush2.xpose.msra.mxu0 0.0
    %1076 = vmatprep.subr.mxu0 0.0
    %1077 = vmatpush2.xpose.msra.mxu0 0.0
    %1078 = vmatprep.subr.mxu0 0.0
    %1079 = vmatpush2.xpose.msra.mxu0 0.0
    %1080 = vmatprep.subr.mxu0 0.0
    %1081 = vmatpush2.xpose.msra.mxu0 0.0
    %1082 = vmatprep.mubr.f32.mxu0 0.0
    %1083 = vmatmul.mubr.f32.gmra.mxu0 %v1010
    %v1084 = vpop.f32.mrf.mxu0
    %v1085 = vadd.f32 0.0, %v1084
    %v1086 = vpop.f32.mrf.mxu0
    %1087 = vmatprep.mubr.f32.mxu0 0.0
    %1088 = vmatmul.mubr.f32.gmra.mxu0 %v1012
    %v1089 = vpop.f32.mrf.mxu0
    %v1090 = vadd.f32 0.0, %v1089
    %v1091 = vpop.f32.mrf.mxu0
    %1092 = vdwg.mxu0
    %1093 = vrot.lane.b32.xlu0 %v667, 96
    %v1094 = vpop.permute.xlu0 %1093
    %1095 = vrot.lane.b32.xlu0 %v672, 96
    %v1096 = vpop.permute.xlu0 %1095
    %v1097 = vsel %vm835, %v667, 0
    %v1099 = vsel %vm835, %v672, 0
    %v1101 = vsel %vm835, %v1094, 0
    %v1103 = vsel %vm835, %v1096, 0
    %1105 = vmatprep.subr.mxu0 0.0
    %1106 = vmatpush1.xpose.msra.mxu0 0.0
    %1107 = vmatprep.subr.mxu0 0.0
    %1108 = vmatpush1.xpose.msra.mxu0 0.0
    %1109 = vmatprep.subr.mxu0 0.0
    %1110 = vmatpush1.xpose.msra.mxu0 0.0
    %1111 = vmatprep.subr.mxu0 0.0
    %1112 = vmatpush1.xpose.msra.mxu0 0.0
    %1113 = vmatprep.subr.mxu0 0.0
    %1114 = vmatpush1.xpose.msra.mxu0 0.0
    %1115 = vmatprep.subr.mxu0 0.0
    %1116 = vmatpush1.xpose.msra.mxu0 0.0
    %1117 = vmatprep.subr.mxu0 0.0
    %1118 = vmatpush1.xpose.msra.mxu0 0.0
    %1119 = vmatprep.subr.mxu0 0.0
    %1120 = vmatpush1.xpose.msra.mxu0 0.0
    %1121 = vmatprep.subr.mxu0 0.0
    %1122 = vmatpush1.xpose.msra.mxu0 0.0
    %1123 = vmatprep.subr.mxu0 0.0
    %1124 = vmatpush1.xpose.msra.mxu0 0.0
    %1125 = vmatprep.subr.mxu0 0.0
    %1126 = vmatpush1.xpose.msra.mxu0 0.0
    %1127 = vmatprep.subr.mxu0 0.0
    %1128 = vmatpush1.xpose.msra.mxu0 0.0
    %1129 = vmatprep.subr.mxu0 0.0
    %1130 = vmatpush1.xpose.msra.mxu0 0.0
    %1131 = vmatprep.subr.mxu0 0.0
    %1132 = vmatpush1.xpose.msra.mxu0 0.0
    %1133 = vmatprep.subr.mxu0 0.0
    %1134 = vmatpush1.xpose.msra.mxu0 %v1103
    %1135 = vmatprep.subr.mxu0 0.0
    %1136 = vmatpush1.xpose.msra.mxu0 %v1101
    %1137 = vmatprep.subr.mxu0 0.0
    %1138 = vmatpush2.xpose.msra.mxu0 0.0
    %1139 = vmatprep.subr.mxu0 0.0
    %1140 = vmatpush2.xpose.msra.mxu0 0.0
    %1141 = vmatprep.subr.mxu0 0.0
    %1142 = vmatpush2.xpose.msra.mxu0 0.0
    %1143 = vmatprep.subr.mxu0 0.0
    %1144 = vmatpush2.xpose.msra.mxu0 0.0
    %1145 = vmatprep.subr.mxu0 0.0
    %1146 = vmatpush2.xpose.msra.mxu0 0.0
    %1147 = vmatprep.subr.mxu0 0.0
    %1148 = vmatpush2.xpose.msra.mxu0 0.0
    %1149 = vmatprep.subr.mxu0 0.0
    %1150 = vmatpush2.xpose.msra.mxu0 0.0
    %1151 = vmatprep.subr.mxu0 0.0
    %1152 = vmatpush2.xpose.msra.mxu0 0.0
    %1153 = vmatprep.subr.mxu0 0.0
    %1154 = vmatpush2.xpose.msra.mxu0 0.0
    %1155 = vmatprep.subr.mxu0 0.0
    %1156 = vmatpush2.xpose.msra.mxu0 0.0
    %1157 = vmatprep.subr.mxu0 0.0
    %1158 = vmatpush2.xpose.msra.mxu0 0.0
    %1159 = vmatprep.subr.mxu0 0.0
    %1160 = vmatpush2.xpose.msra.mxu0 0.0
    %1161 = vmatprep.subr.mxu0 0.0
    %1162 = vmatpush2.xpose.msra.mxu0 0.0
    %1163 = vmatprep.subr.mxu0 0.0
    %1164 = vmatpush2.xpose.msra.mxu0 0.0
    %1165 = vmatprep.subr.mxu0 0.0
    %1166 = vmatpush2.xpose.msra.mxu0 0.0
    %1167 = vmatprep.subr.mxu0 0.0
    %1168 = vmatpush2.xpose.msra.mxu0 0.0
    %1169 = vmatprep.mubr.f32.mxu0 0.0
    %1170 = vmatmul.mubr.f32.gmra.mxu0 %v1097
    %v1171 = vpop.f32.mrf.mxu0
    %v1172 = vadd.f32 0.0, %v1171
    %v1173 = vpop.f32.mrf.mxu0
    %1174 = vmatprep.mubr.f32.mxu0 0.0
    %1175 = vmatmul.mubr.f32.gmra.mxu0 %v1099
    %v1176 = vpop.f32.mrf.mxu0
    %v1177 = vadd.f32 0.0, %v1176
    %v1178 = vpop.f32.mrf.mxu0
    %1179 = vdwg.mxu0
    %1180 = vrot.lane.b32.xlu0 %v677, 96
    %v1181 = vpop.permute.xlu0 %1180
    %1182 = vrot.lane.b32.xlu0 %v682, 96
    %v1183 = vpop.permute.xlu0 %1182
    %v1184 = vsel %vm835, %v677, 0
    %v1186 = vsel %vm835, %v682, 0
    %v1188 = vsel %vm835, %v1181, 0
    %v1190 = vsel %vm835, %v1183, 0
    %1192 = vmatprep.subr.mxu0 0.0
    %1193 = vmatpush1.xpose.msra.mxu0 0.0
    %1194 = vmatprep.subr.mxu0 0.0
    %1195 = vmatpush1.xpose.msra.mxu0 0.0
    %1196 = vmatprep.subr.mxu0 0.0
    %1197 = vmatpush1.xpose.msra.mxu0 0.0
    %1198 = vmatprep.subr.mxu0 0.0
    %1199 = vmatpush1.xpose.msra.mxu0 0.0
    %1200 = vmatprep.subr.mxu0 0.0
    %1201 = vmatpush1.xpose.msra.mxu0 0.0
    %1202 = vmatprep.subr.mxu0 0.0
    %1203 = vmatpush1.xpose.msra.mxu0 0.0
    %1204 = vmatprep.subr.mxu0 0.0
    %1205 = vmatpush1.xpose.msra.mxu0 0.0
    %1206 = vmatprep.subr.mxu0 0.0
    %1207 = vmatpush1.xpose.msra.mxu0 0.0
    %1208 = vmatprep.subr.mxu0 0.0
    %1209 = vmatpush1.xpose.msra.mxu0 0.0
    %1210 = vmatprep.subr.mxu0 0.0
    %1211 = vmatpush1.xpose.msra.mxu0 0.0
    %1212 = vmatprep.subr.mxu0 0.0
    %1213 = vmatpush1.xpose.msra.mxu0 0.0
    %1214 = vmatprep.subr.mxu0 0.0
    %1215 = vmatpush1.xpose.msra.mxu0 0.0
    %1216 = vmatprep.subr.mxu0 0.0
    %1217 = vmatpush1.xpose.msra.mxu0 0.0
    %1218 = vmatprep.subr.mxu0 0.0
    %1219 = vmatpush1.xpose.msra.mxu0 0.0
    %1220 = vmatprep.subr.mxu0 0.0
    %1221 = vmatpush1.xpose.msra.mxu0 %v1190
    %1222 = vmatprep.subr.mxu0 0.0
    %1223 = vmatpush1.xpose.msra.mxu0 %v1188
    %1224 = vmatprep.subr.mxu0 0.0
    %1225 = vmatpush2.xpose.msra.mxu0 0.0
    %1226 = vmatprep.subr.mxu0 0.0
    %1227 = vmatpush2.xpose.msra.mxu0 0.0
    %1228 = vmatprep.subr.mxu0 0.0
    %1229 = vmatpush2.xpose.msra.mxu0 0.0
    %1230 = vmatprep.subr.mxu0 0.0
    %1231 = vmatpush2.xpose.msra.mxu0 0.0
    %1232 = vmatprep.subr.mxu0 0.0
    %1233 = vmatpush2.xpose.msra.mxu0 0.0
    %1234 = vmatprep.subr.mxu0 0.0
    %1235 = vmatpush2.xpose.msra.mxu0 0.0
    %1236 = vmatprep.subr.mxu0 0.0
    %1237 = vmatpush2.xpose.msra.mxu0 0.0
    %1238 = vmatprep.subr.mxu0 0.0
    %1239 = vmatpush2.xpose.msra.mxu0 0.0
    %1240 = vmatprep.subr.mxu0 0.0
    %1241 = vmatpush2.xpose.msra.mxu0 0.0
    %1242 = vmatprep.subr.mxu0 0.0
    %1243 = vmatpush2.xpose.msra.mxu0 0.0
    %1244 = vmatprep.subr.mxu0 0.0
    %1245 = vmatpush2.xpose.msra.mxu0 0.0
    %1246 = vmatprep.subr.mxu0 0.0
    %1247 = vmatpush2.xpose.msra.mxu0 0.0
    %1248 = vmatprep.subr.mxu0 0.0
    %1249 = vmatpush2.xpose.msra.mxu0 0.0
    %1250 = vmatprep.subr.mxu0 0.0
    %1251 = vmatpush2.xpose.msra.mxu0 0.0
    %1252 = vmatprep.subr.mxu0 0.0
    %1253 = vmatpush2.xpose.msra.mxu0 0.0
    %1254 = vmatprep.subr.mxu0 0.0
    %1255 = vmatpush2.xpose.msra.mxu0 0.0
    %1256 = vmatprep.mubr.f32.mxu0 0.0
    %1257 = vmatmul.mubr.f32.gmra.mxu0 %v1184
    %v1258 = vpop.f32.mrf.mxu0
    %v1259 = vadd.f32 0.0, %v1258
    %v1260 = vpop.f32.mrf.mxu0
    %1261 = vmatprep.mubr.f32.mxu0 0.0
    %1262 = vmatmul.mubr.f32.gmra.mxu0 %v1186
    %v1263 = vpop.f32.mrf.mxu0
    %v1264 = vadd.f32 0.0, %v1263
    %v1265 = vpop.f32.mrf.mxu0
    %1266 = vdwg.mxu0
    %1267 = vrot.lane.b32.xlu0 %v687, 96
    %v1268 = vpop.permute.xlu0 %1267
    %1269 = vrot.lane.b32.xlu0 %v692, 96
    %v1270 = vpop.permute.xlu0 %1269
    %v1271 = vsel %vm835, %v687, 0
    %v1273 = vsel %vm835, %v692, 0
    %v1275 = vsel %vm835, %v1268, 0
    %v1277 = vsel %vm835, %v1270, 0
    %1279 = vmatprep.subr.mxu0 0.0
    %1280 = vmatpush1.xpose.msra.mxu0 0.0
    %1281 = vmatprep.subr.mxu0 0.0
    %1282 = vmatpush1.xpose.msra.mxu0 0.0
    %1283 = vmatprep.subr.mxu0 0.0
    %1284 = vmatpush1.xpose.msra.mxu0 0.0
    %1285 = vmatprep.subr.mxu0 0.0
    %1286 = vmatpush1.xpose.msra.mxu0 0.0
    %1287 = vmatprep.subr.mxu0 0.0
    %1288 = vmatpush1.xpose.msra.mxu0 0.0
    %1289 = vmatprep.subr.mxu0 0.0
    %1290 = vmatpush1.xpose.msra.mxu0 0.0
    %1291 = vmatprep.subr.mxu0 0.0
    %1292 = vmatpush1.xpose.msra.mxu0 0.0
    %1293 = vmatprep.subr.mxu0 0.0
    %1294 = vmatpush1.xpose.msra.mxu0 0.0
    %1295 = vmatprep.subr.mxu0 0.0
    %1296 = vmatpush1.xpose.msra.mxu0 0.0
    %1297 = vmatprep.subr.mxu0 0.0
    %1298 = vmatpush1.xpose.msra.mxu0 0.0
    %1299 = vmatprep.subr.mxu0 0.0
    %1300 = vmatpush1.xpose.msra.mxu0 0.0
    %1301 = vmatprep.subr.mxu0 0.0
    %1302 = vmatpush1.xpose.msra.mxu0 0.0
    %1303 = vmatprep.subr.mxu0 0.0
    %1304 = vmatpush1.xpose.msra.mxu0 0.0
    %1305 = vmatprep.subr.mxu0 0.0
    %1306 = vmatpush1.xpose.msra.mxu0 0.0
    %1307 = vmatprep.subr.mxu0 0.0
    %1308 = vmatpush1.xpose.msra.mxu0 %v1277
    %1309 = vmatprep.subr.mxu0 0.0
    %1310 = vmatpush1.xpose.msra.mxu0 %v1275
    %1311 = vmatprep.subr.mxu0 0.0
    %1312 = vmatpush2.xpose.msra.mxu0 0.0
    %1313 = vmatprep.subr.mxu0 0.0
    %1314 = vmatpush2.xpose.msra.mxu0 0.0
    %1315 = vmatprep.subr.mxu0 0.0
    %1316 = vmatpush2.xpose.msra.mxu0 0.0
    %1317 = vmatprep.subr.mxu0 0.0
    %1318 = vmatpush2.xpose.msra.mxu0 0.0
    %1319 = vmatprep.subr.mxu0 0.0
    %1320 = vmatpush2.xpose.msra.mxu0 0.0
    %1321 = vmatprep.subr.mxu0 0.0
    %1322 = vmatpush2.xpose.msra.mxu0 0.0
    %1323 = vmatprep.subr.mxu0 0.0
    %1324 = vmatpush2.xpose.msra.mxu0 0.0
    %1325 = vmatprep.subr.mxu0 0.0
    %1326 = vmatpush2.xpose.msra.mxu0 0.0
    %1327 = vmatprep.subr.mxu0 0.0
    %1328 = vmatpush2.xpose.msra.mxu0 0.0
    %1329 = vmatprep.subr.mxu0 0.0
    %1330 = vmatpush2.xpose.msra.mxu0 0.0
    %1331 = vmatprep.subr.mxu0 0.0
    %1332 = vmatpush2.xpose.msra.mxu0 0.0
    %1333 = vmatprep.subr.mxu0 0.0
    %1334 = vmatpush2.xpose.msra.mxu0 0.0
    %1335 = vmatprep.subr.mxu0 0.0
    %1336 = vmatpush2.xpose.msra.mxu0 0.0
    %1337 = vmatprep.subr.mxu0 0.0
    %1338 = vmatpush2.xpose.msra.mxu0 0.0
    %1339 = vmatprep.subr.mxu0 0.0
    %1340 = vmatpush2.xpose.msra.mxu0 0.0
    %1341 = vmatprep.subr.mxu0 0.0
    %1342 = vmatpush2.xpose.msra.mxu0 0.0
    %1343 = vmatprep.mubr.f32.mxu0 0.0
    %1344 = vmatmul.mubr.f32.gmra.mxu0 %v1271
    %v1345 = vpop.f32.mrf.mxu0
    %v1346 = vadd.f32 0.0, %v1345
    %v1347 = vpop.f32.mrf.mxu0
    %1348 = vmatprep.mubr.f32.mxu0 0.0
    %1349 = vmatmul.mubr.f32.gmra.mxu0 %v1273
    %v1350 = vpop.f32.mrf.mxu0
    %v1351 = vadd.f32 0.0, %v1350
    %v1352 = vpop.f32.mrf.mxu0
    %1353 = vdwg.mxu0
    %1354 = vrot.lane.b32.xlu0 %v697, 96
    %v1355 = vpop.permute.xlu0 %1354
    %1356 = vrot.lane.b32.xlu0 %v702, 96
    %v1357 = vpop.permute.xlu0 %1356
    %v1358 = vsel %vm835, %v697, 0
    %v1360 = vsel %vm835, %v702, 0
    %v1362 = vsel %vm835, %v1355, 0
    %v1364 = vsel %vm835, %v1357, 0
    %1366 = vmatprep.subr.mxu0 0.0
    %1367 = vmatpush1.xpose.msra.mxu0 0.0
    %1368 = vmatprep.subr.mxu0 0.0
    %1369 = vmatpush1.xpose.msra.mxu0 0.0
    %1370 = vmatprep.subr.mxu0 0.0
    %1371 = vmatpush1.xpose.msra.mxu0 0.0
    %1372 = vmatprep.subr.mxu0 0.0
    %1373 = vmatpush1.xpose.msra.mxu0 0.0
    %1374 = vmatprep.subr.mxu0 0.0
    %1375 = vmatpush1.xpose.msra.mxu0 0.0
    %1376 = vmatprep.subr.mxu0 0.0
    %1377 = vmatpush1.xpose.msra.mxu0 0.0
    %1378 = vmatprep.subr.mxu0 0.0
    %1379 = vmatpush1.xpose.msra.mxu0 0.0
    %1380 = vmatprep.subr.mxu0 0.0
    %1381 = vmatpush1.xpose.msra.mxu0 0.0
    %1382 = vmatprep.subr.mxu0 0.0
    %1383 = vmatpush1.xpose.msra.mxu0 0.0
    %1384 = vmatprep.subr.mxu0 0.0
    %1385 = vmatpush1.xpose.msra.mxu0 0.0
    %1386 = vmatprep.subr.mxu0 0.0
    %1387 = vmatpush1.xpose.msra.mxu0 0.0
    %1388 = vmatprep.subr.mxu0 0.0
    %1389 = vmatpush1.xpose.msra.mxu0 0.0
    %1390 = vmatprep.subr.mxu0 0.0
    %1391 = vmatpush1.xpose.msra.mxu0 0.0
    %1392 = vmatprep.subr.mxu0 0.0
    %1393 = vmatpush1.xpose.msra.mxu0 0.0
    %1394 = vmatprep.subr.mxu0 0.0
    %1395 = vmatpush1.xpose.msra.mxu0 %v1364
    %1396 = vmatprep.subr.mxu0 0.0
    %1397 = vmatpush1.xpose.msra.mxu0 %v1362
    %1398 = vmatprep.subr.mxu0 0.0
    %1399 = vmatpush2.xpose.msra.mxu0 0.0
    %1400 = vmatprep.subr.mxu0 0.0
    %1401 = vmatpush2.xpose.msra.mxu0 0.0
    %1402 = vmatprep.subr.mxu0 0.0
    %1403 = vmatpush2.xpose.msra.mxu0 0.0
    %1404 = vmatprep.subr.mxu0 0.0
    %1405 = vmatpush2.xpose.msra.mxu0 0.0
    %1406 = vmatprep.subr.mxu0 0.0
    %1407 = vmatpush2.xpose.msra.mxu0 0.0
    %1408 = vmatprep.subr.mxu0 0.0
    %1409 = vmatpush2.xpose.msra.mxu0 0.0
    %1410 = vmatprep.subr.mxu0 0.0
    %1411 = vmatpush2.xpose.msra.mxu0 0.0
    %1412 = vmatprep.subr.mxu0 0.0
    %1413 = vmatpush2.xpose.msra.mxu0 0.0
    %1414 = vmatprep.subr.mxu0 0.0
    %1415 = vmatpush2.xpose.msra.mxu0 0.0
    %1416 = vmatprep.subr.mxu0 0.0
    %1417 = vmatpush2.xpose.msra.mxu0 0.0
    %1418 = vmatprep.subr.mxu0 0.0
    %1419 = vmatpush2.xpose.msra.mxu0 0.0
    %1420 = vmatprep.subr.mxu0 0.0
    %1421 = vmatpush2.xpose.msra.mxu0 0.0
    %1422 = vmatprep.subr.mxu0 0.0
    %1423 = vmatpush2.xpose.msra.mxu0 0.0
    %1424 = vmatprep.subr.mxu0 0.0
    %1425 = vmatpush2.xpose.msra.mxu0 0.0
    %1426 = vmatprep.subr.mxu0 0.0
    %1427 = vmatpush2.xpose.msra.mxu0 0.0
    %1428 = vmatprep.subr.mxu0 0.0
    %1429 = vmatpush2.xpose.msra.mxu0 0.0
    %1430 = vmatprep.mubr.f32.mxu0 0.0
    %1431 = vmatmul.mubr.f32.gmra.mxu0 %v1358
    %v1432 = vpop.f32.mrf.mxu0
    %v1433 = vadd.f32 0.0, %v1432
    %v1434 = vpop.f32.mrf.mxu0
    %1435 = vmatprep.mubr.f32.mxu0 0.0
    %1436 = vmatmul.mubr.f32.gmra.mxu0 %v1360
    %v1437 = vpop.f32.mrf.mxu0
    %v1438 = vadd.f32 0.0, %v1437
    %v1439 = vpop.f32.mrf.mxu0
    %1440 = vdwg.mxu0
    %1441 = vrot.lane.b32.xlu0 %v707, 96
    %v1442 = vpop.permute.xlu0 %1441
    %1443 = vrot.lane.b32.xlu0 %v712, 96
    %v1444 = vpop.permute.xlu0 %1443
    %v1445 = vsel %vm835, %v707, 0
    %v1447 = vsel %vm835, %v712, 0
    %v1449 = vsel %vm835, %v1442, 0
    %v1451 = vsel %vm835, %v1444, 0
    %1453 = vmatprep.subr.mxu0 0.0
    %1454 = vmatpush1.xpose.msra.mxu0 0.0
    %1455 = vmatprep.subr.mxu0 0.0
    %1456 = vmatpush1.xpose.msra.mxu0 0.0
    %1457 = vmatprep.subr.mxu0 0.0
    %1458 = vmatpush1.xpose.msra.mxu0 0.0
    %1459 = vmatprep.subr.mxu0 0.0
    %1460 = vmatpush1.xpose.msra.mxu0 0.0
    %1461 = vmatprep.subr.mxu0 0.0
    %1462 = vmatpush1.xpose.msra.mxu0 0.0
    %1463 = vmatprep.subr.mxu0 0.0
    %1464 = vmatpush1.xpose.msra.mxu0 0.0
    %1465 = vmatprep.subr.mxu0 0.0
    %1466 = vmatpush1.xpose.msra.mxu0 0.0
    %1467 = vmatprep.subr.mxu0 0.0
    %1468 = vmatpush1.xpose.msra.mxu0 0.0
    %1469 = vmatprep.subr.mxu0 0.0
    %1470 = vmatpush1.xpose.msra.mxu0 0.0
    %1471 = vmatprep.subr.mxu0 0.0
    %1472 = vmatpush1.xpose.msra.mxu0 0.0
    %1473 = vmatprep.subr.mxu0 0.0
    %1474 = vmatpush1.xpose.msra.mxu0 0.0
    %1475 = vmatprep.subr.mxu0 0.0
    %1476 = vmatpush1.xpose.msra.mxu0 0.0
    %1477 = vmatprep.subr.mxu0 0.0
    %1478 = vmatpush1.xpose.msra.mxu0 0.0
    %1479 = vmatprep.subr.mxu0 0.0
    %1480 = vmatpush1.xpose.msra.mxu0 0.0
    %1481 = vmatprep.subr.mxu0 0.0
    %1482 = vmatpush1.xpose.msra.mxu0 %v1451
    %1483 = vmatprep.subr.mxu0 0.0
    %1484 = vmatpush1.xpose.msra.mxu0 %v1449
    %1485 = vmatprep.subr.mxu0 0.0
    %1486 = vmatpush2.xpose.msra.mxu0 0.0
    %1487 = vmatprep.subr.mxu0 0.0
    %1488 = vmatpush2.xpose.msra.mxu0 0.0
    %1489 = vmatprep.subr.mxu0 0.0
    %1490 = vmatpush2.xpose.msra.mxu0 0.0
    %1491 = vmatprep.subr.mxu0 0.0
    %1492 = vmatpush2.xpose.msra.mxu0 0.0
    %1493 = vmatprep.subr.mxu0 0.0
    %1494 = vmatpush2.xpose.msra.mxu0 0.0
    %1495 = vmatprep.subr.mxu0 0.0
    %1496 = vmatpush2.xpose.msra.mxu0 0.0
    %1497 = vmatprep.subr.mxu0 0.0
    %1498 = vmatpush2.xpose.msra.mxu0 0.0
    %1499 = vmatprep.subr.mxu0 0.0
    %1500 = vmatpush2.xpose.msra.mxu0 0.0
    %1501 = vmatprep.subr.mxu0 0.0
    %1502 = vmatpush2.xpose.msra.mxu0 0.0
    %1503 = vmatprep.subr.mxu0 0.0
    %1504 = vmatpush2.xpose.msra.mxu0 0.0
    %1505 = vmatprep.subr.mxu0 0.0
    %1506 = vmatpush2.xpose.msra.mxu0 0.0
    %1507 = vmatprep.subr.mxu0 0.0
    %1508 = vmatpush2.xpose.msra.mxu0 0.0
    %1509 = vmatprep.subr.mxu0 0.0
    %1510 = vmatpush2.xpose.msra.mxu0 0.0
    %1511 = vmatprep.subr.mxu0 0.0
    %1512 = vmatpush2.xpose.msra.mxu0 0.0
    %1513 = vmatprep.subr.mxu0 0.0
    %1514 = vmatpush2.xpose.msra.mxu0 0.0
    %1515 = vmatprep.subr.mxu0 0.0
    %1516 = vmatpush2.xpose.msra.mxu0 0.0
    %1517 = vmatprep.mubr.f32.mxu0 0.0
    %1518 = vmatmul.mubr.f32.gmra.mxu0 %v1445
    %v1519 = vpop.f32.mrf.mxu0
    %v1520 = vadd.f32 0.0, %v1519
    %v1521 = vpop.f32.mrf.mxu0
    %1522 = vmatprep.mubr.f32.mxu0 0.0
    %1523 = vmatmul.mubr.f32.gmra.mxu0 %v1447
    %v1524 = vpop.f32.mrf.mxu0
    %v1525 = vadd.f32 0.0, %v1524
    %v1526 = vpop.f32.mrf.mxu0
    %1527 = vdwg.mxu0
    %1528 = vrot.lane.b32.xlu0 %v732, 96
    %v1529 = vpop.permute.xlu0 %1528
    %1530 = vrot.lane.b32.xlu0 %v734, 96
    %v1531 = vpop.permute.xlu0 %1530
    %v1532 = vsel %vm835, %v732, 0
    %v1534 = vsel %vm835, %v734, 0
    %v1536 = vsel %vm835, %v1529, 0
    %v1538 = vsel %vm835, %v1531, 0
    %1540 = vmatprep.subr.mxu0 0.0
    %1541 = vmatpush1.xpose.msra.mxu0 0.0
    %1542 = vmatprep.subr.mxu0 0.0
    %1543 = vmatpush1.xpose.msra.mxu0 0.0
    %1544 = vmatprep.subr.mxu0 0.0
    %1545 = vmatpush1.xpose.msra.mxu0 0.0
    %1546 = vmatprep.subr.mxu0 0.0
    %1547 = vmatpush1.xpose.msra.mxu0 0.0
    %1548 = vmatprep.subr.mxu0 0.0
    %1549 = vmatpush1.xpose.msra.mxu0 0.0
    %1550 = vmatprep.subr.mxu0 0.0
    %1551 = vmatpush1.xpose.msra.mxu0 0.0
    %1552 = vmatprep.subr.mxu0 0.0
    %1553 = vmatpush1.xpose.msra.mxu0 0.0
    %1554 = vmatprep.subr.mxu0 0.0
    %1555 = vmatpush1.xpose.msra.mxu0 0.0
    %1556 = vmatprep.subr.mxu0 0.0
    %1557 = vmatpush1.xpose.msra.mxu0 0.0
    %1558 = vmatprep.subr.mxu0 0.0
    %1559 = vmatpush1.xpose.msra.mxu0 0.0
    %1560 = vmatprep.subr.mxu0 0.0
    %1561 = vmatpush1.xpose.msra.mxu0 0.0
    %1562 = vmatprep.subr.mxu0 0.0
    %1563 = vmatpush1.xpose.msra.mxu0 0.0
    %1564 = vmatprep.subr.mxu0 0.0
    %1565 = vmatpush1.xpose.msra.mxu0 0.0
    %1566 = vmatprep.subr.mxu0 0.0
    %1567 = vmatpush1.xpose.msra.mxu0 0.0
    %1568 = vmatprep.subr.mxu0 0.0
    %1569 = vmatpush1.xpose.msra.mxu0 %v1538
    %1570 = vmatprep.subr.mxu0 0.0
    %1571 = vmatpush1.xpose.msra.mxu0 %v1536
    %1572 = vmatprep.subr.mxu0 0.0
    %1573 = vmatpush2.xpose.msra.mxu0 0.0
    %1574 = vmatprep.subr.mxu0 0.0
    %1575 = vmatpush2.xpose.msra.mxu0 0.0
    %1576 = vmatprep.subr.mxu0 0.0
    %1577 = vmatpush2.xpose.msra.mxu0 0.0
    %1578 = vmatprep.subr.mxu0 0.0
    %1579 = vmatpush2.xpose.msra.mxu0 0.0
    %1580 = vmatprep.subr.mxu0 0.0
    %1581 = vmatpush2.xpose.msra.mxu0 0.0
    %1582 = vmatprep.subr.mxu0 0.0
    %1583 = vmatpush2.xpose.msra.mxu0 0.0
    %1584 = vmatprep.subr.mxu0 0.0
    %1585 = vmatpush2.xpose.msra.mxu0 0.0
    %1586 = vmatprep.subr.mxu0 0.0
    %1587 = vmatpush2.xpose.msra.mxu0 0.0
    %1588 = vmatprep.subr.mxu0 0.0
    %1589 = vmatpush2.xpose.msra.mxu0 0.0
    %1590 = vmatprep.subr.mxu0 0.0
    %1591 = vmatpush2.xpose.msra.mxu0 0.0
    %1592 = vmatprep.subr.mxu0 0.0
    %1593 = vmatpush2.xpose.msra.mxu0 0.0
    %1594 = vmatprep.subr.mxu0 0.0
    %1595 = vmatpush2.xpose.msra.mxu0 0.0
    %1596 = vmatprep.subr.mxu0 0.0
    %1597 = vmatpush2.xpose.msra.mxu0 0.0
    %1598 = vmatprep.subr.mxu0 0.0
    %1599 = vmatpush2.xpose.msra.mxu0 0.0
    %1600 = vmatprep.subr.mxu0 0.0
    %1601 = vmatpush2.xpose.msra.mxu0 0.0
    %1602 = vmatprep.subr.mxu0 0.0
    %1603 = vmatpush2.xpose.msra.mxu0 0.0
    %1604 = vmatprep.mubr.f32.mxu0 0.0
    %1605 = vmatmul.mubr.f32.gmra.mxu0 %v1532
    %v1606 = vpop.f32.mrf.mxu0
    %v1607 = vadd.f32 0.0, %v1606
    %v1608 = vpop.f32.mrf.mxu0
    %1609 = vmatprep.mubr.f32.mxu0 0.0
    %1610 = vmatmul.mubr.f32.gmra.mxu0 %v1534
    %v1611 = vpop.f32.mrf.mxu0
    %v1612 = vadd.f32 0.0, %v1611
    %v1613 = vpop.f32.mrf.mxu0
    %1614 = vdwg.mxu0
    %1615 = vrot.lane.b32.xlu0 %v736, 96
    %v1616 = vpop.permute.xlu0 %1615
    %1617 = vrot.lane.b32.xlu0 %v738, 96
    %v1618 = vpop.permute.xlu0 %1617
    %v1619 = vsel %vm835, %v736, 0
    %v1621 = vsel %vm835, %v738, 0
    %v1623 = vsel %vm835, %v1616, 0
    %v1625 = vsel %vm835, %v1618, 0
    %1627 = vmatprep.subr.mxu0 0.0
    %1628 = vmatpush1.xpose.msra.mxu0 0.0
    %1629 = vmatprep.subr.mxu0 0.0
    %1630 = vmatpush1.xpose.msra.mxu0 0.0
    %1631 = vmatprep.subr.mxu0 0.0
    %1632 = vmatpush1.xpose.msra.mxu0 0.0
    %1633 = vmatprep.subr.mxu0 0.0
    %1634 = vmatpush1.xpose.msra.mxu0 0.0
    %1635 = vmatprep.subr.mxu0 0.0
    %1636 = vmatpush1.xpose.msra.mxu0 0.0
    %1637 = vmatprep.subr.mxu0 0.0
    %1638 = vmatpush1.xpose.msra.mxu0 0.0
    %1639 = vmatprep.subr.mxu0 0.0
    %1640 = vmatpush1.xpose.msra.mxu0 0.0
    %1641 = vmatprep.subr.mxu0 0.0
    %1642 = vmatpush1.xpose.msra.mxu0 0.0
    %1643 = vmatprep.subr.mxu0 0.0
    %1644 = vmatpush1.xpose.msra.mxu0 0.0
    %1645 = vmatprep.subr.mxu0 0.0
    %1646 = vmatpush1.xpose.msra.mxu0 0.0
    %1647 = vmatprep.subr.mxu0 0.0
    %1648 = vmatpush1.xpose.msra.mxu0 0.0
    %1649 = vmatprep.subr.mxu0 0.0
    %1650 = vmatpush1.xpose.msra.mxu0 0.0
    %1651 = vmatprep.subr.mxu0 0.0
    %1652 = vmatpush1.xpose.msra.mxu0 0.0
    %1653 = vmatprep.subr.mxu0 0.0
    %1654 = vmatpush1.xpose.msra.mxu0 0.0
    %1655 = vmatprep.subr.mxu0 0.0
    %1656 = vmatpush1.xpose.msra.mxu0 %v1625
    %1657 = vmatprep.subr.mxu0 0.0
    %1658 = vmatpush1.xpose.msra.mxu0 %v1623
    %1659 = vmatprep.subr.mxu0 0.0
    %1660 = vmatpush2.xpose.msra.mxu0 0.0
    %1661 = vmatprep.subr.mxu0 0.0
    %1662 = vmatpush2.xpose.msra.mxu0 0.0
    %1663 = vmatprep.subr.mxu0 0.0
    %1664 = vmatpush2.xpose.msra.mxu0 0.0
    %1665 = vmatprep.subr.mxu0 0.0
    %1666 = vmatpush2.xpose.msra.mxu0 0.0
    %1667 = vmatprep.subr.mxu0 0.0
    %1668 = vmatpush2.xpose.msra.mxu0 0.0
    %1669 = vmatprep.subr.mxu0 0.0
    %1670 = vmatpush2.xpose.msra.mxu0 0.0
    %1671 = vmatprep.subr.mxu0 0.0
    %1672 = vmatpush2.xpose.msra.mxu0 0.0
    %1673 = vmatprep.subr.mxu0 0.0
    %1674 = vmatpush2.xpose.msra.mxu0 0.0
    %1675 = vmatprep.subr.mxu0 0.0
    %1676 = vmatpush2.xpose.msra.mxu0 0.0
    %1677 = vmatprep.subr.mxu0 0.0
    %1678 = vmatpush2.xpose.msra.mxu0 0.0
    %1679 = vmatprep.subr.mxu0 0.0
    %1680 = vmatpush2.xpose.msra.mxu0 0.0
    %1681 = vmatprep.subr.mxu0 0.0
    %1682 = vmatpush2.xpose.msra.mxu0 0.0
    %1683 = vmatprep.subr.mxu0 0.0
    %1684 = vmatpush2.xpose.msra.mxu0 0.0
    %1685 = vmatprep.subr.mxu0 0.0
    %1686 = vmatpush2.xpose.msra.mxu0 0.0
    %1687 = vmatprep.subr.mxu0 0.0
    %1688 = vmatpush2.xpose.msra.mxu0 0.0
    %1689 = vmatprep.subr.mxu0 0.0
    %1690 = vmatpush2.xpose.msra.mxu0 0.0
    %1691 = vmatprep.mubr.f32.mxu0 0.0
    %1692 = vmatmul.mubr.f32.gmra.mxu0 %v1619
    %v1693 = vpop.f32.mrf.mxu0
    %v1694 = vadd.f32 0.0, %v1693
    %v1695 = vpop.f32.mrf.mxu0
    %1696 = vmatprep.mubr.f32.mxu0 0.0
    %1697 = vmatmul.mubr.f32.gmra.mxu0 %v1621
    %v1698 = vpop.f32.mrf.mxu0
    %v1699 = vadd.f32 0.0, %v1698
    %v1700 = vpop.f32.mrf.mxu0
    %1701 = vdwg.mxu0
    %1702 = vrot.lane.b32.xlu0 %v740, 96
    %v1703 = vpop.permute.xlu0 %1702
    %1704 = vrot.lane.b32.xlu0 %v742, 96
    %v1705 = vpop.permute.xlu0 %1704
    %v1706 = vsel %vm835, %v740, 0
    %v1708 = vsel %vm835, %v742, 0
    %v1710 = vsel %vm835, %v1703, 0
    %v1712 = vsel %vm835, %v1705, 0
    %1714 = vmatprep.subr.mxu0 0.0
    %1715 = vmatpush1.xpose.msra.mxu0 0.0
    %1716 = vmatprep.subr.mxu0 0.0
    %1717 = vmatpush1.xpose.msra.mxu0 0.0
    %1718 = vmatprep.subr.mxu0 0.0
    %1719 = vmatpush1.xpose.msra.mxu0 0.0
    %1720 = vmatprep.subr.mxu0 0.0
    %1721 = vmatpush1.xpose.msra.mxu0 0.0
    %1722 = vmatprep.subr.mxu0 0.0
    %1723 = vmatpush1.xpose.msra.mxu0 0.0
    %1724 = vmatprep.subr.mxu0 0.0
    %1725 = vmatpush1.xpose.msra.mxu0 0.0
    %1726 = vmatprep.subr.mxu0 0.0
    %1727 = vmatpush1.xpose.msra.mxu0 0.0
    %1728 = vmatprep.subr.mxu0 0.0
    %1729 = vmatpush1.xpose.msra.mxu0 0.0
    %1730 = vmatprep.subr.mxu0 0.0
    %1731 = vmatpush1.xpose.msra.mxu0 0.0
    %1732 = vmatprep.subr.mxu0 0.0
    %1733 = vmatpush1.xpose.msra.mxu0 0.0
    %1734 = vmatprep.subr.mxu0 0.0
    %1735 = vmatpush1.xpose.msra.mxu0 0.0
    %1736 = vmatprep.subr.mxu0 0.0
    %1737 = vmatpush1.xpose.msra.mxu0 0.0
    %1738 = vmatprep.subr.mxu0 0.0
    %1739 = vmatpush1.xpose.msra.mxu0 0.0
    %1740 = vmatprep.subr.mxu0 0.0
    %1741 = vmatpush1.xpose.msra.mxu0 0.0
    %1742 = vmatprep.subr.mxu0 0.0
    %1743 = vmatpush1.xpose.msra.mxu0 %v1712
    %1744 = vmatprep.subr.mxu0 0.0
    %1745 = vmatpush1.xpose.msra.mxu0 %v1710
    %1746 = vmatprep.subr.mxu0 0.0
    %1747 = vmatpush2.xpose.msra.mxu0 0.0
    %1748 = vmatprep.subr.mxu0 0.0
    %1749 = vmatpush2.xpose.msra.mxu0 0.0
    %1750 = vmatprep.subr.mxu0 0.0
    %1751 = vmatpush2.xpose.msra.mxu0 0.0
    %1752 = vmatprep.subr.mxu0 0.0
    %1753 = vmatpush2.xpose.msra.mxu0 0.0
    %1754 = vmatprep.subr.mxu0 0.0
    %1755 = vmatpush2.xpose.msra.mxu0 0.0
    %1756 = vmatprep.subr.mxu0 0.0
    %1757 = vmatpush2.xpose.msra.mxu0 0.0
    %1758 = vmatprep.subr.mxu0 0.0
    %1759 = vmatpush2.xpose.msra.mxu0 0.0
    %1760 = vmatprep.subr.mxu0 0.0
    %1761 = vmatpush2.xpose.msra.mxu0 0.0
    %1762 = vmatprep.subr.mxu0 0.0
    %1763 = vmatpush2.xpose.msra.mxu0 0.0
    %1764 = vmatprep.subr.mxu0 0.0
    %1765 = vmatpush2.xpose.msra.mxu0 0.0
    %1766 = vmatprep.subr.mxu0 0.0
    %1767 = vmatpush2.xpose.msra.mxu0 0.0
    %1768 = vmatprep.subr.mxu0 0.0
    %1769 = vmatpush2.xpose.msra.mxu0 0.0
    %1770 = vmatprep.subr.mxu0 0.0
    %1771 = vmatpush2.xpose.msra.mxu0 0.0
    %1772 = vmatprep.subr.mxu0 0.0
    %1773 = vmatpush2.xpose.msra.mxu0 0.0
    %1774 = vmatprep.subr.mxu0 0.0
    %1775 = vmatpush2.xpose.msra.mxu0 0.0
    %1776 = vmatprep.subr.mxu0 0.0
    %1777 = vmatpush2.xpose.msra.mxu0 0.0
    %1778 = vmatprep.mubr.f32.mxu0 0.0
    %1779 = vmatmul.mubr.f32.gmra.mxu0 %v1706
    %v1780 = vpop.f32.mrf.mxu0
    %v1781 = vadd.f32 0.0, %v1780
    %v1782 = vpop.f32.mrf.mxu0
    %1783 = vmatprep.mubr.f32.mxu0 0.0
    %1784 = vmatmul.mubr.f32.gmra.mxu0 %v1708
    %v1785 = vpop.f32.mrf.mxu0
    %v1786 = vadd.f32 0.0, %v1785
    %v1787 = vpop.f32.mrf.mxu0
    %1788 = vdwg.mxu0
    %1789 = vrot.lane.b32.xlu0 %v744, 96
    %v1790 = vpop.permute.xlu0 %1789
    %1791 = vrot.lane.b32.xlu0 %v746, 96
    %v1792 = vpop.permute.xlu0 %1791
    %v1793 = vsel %vm835, %v744, 0
    %v1795 = vsel %vm835, %v746, 0
    %v1797 = vsel %vm835, %v1790, 0
    %v1799 = vsel %vm835, %v1792, 0
    %1801 = vmatprep.subr.mxu0 0.0
    %1802 = vmatpush1.xpose.msra.mxu0 0.0
    %1803 = vmatprep.subr.mxu0 0.0
    %1804 = vmatpush1.xpose.msra.mxu0 0.0
    %1805 = vmatprep.subr.mxu0 0.0
    %1806 = vmatpush1.xpose.msra.mxu0 0.0
    %1807 = vmatprep.subr.mxu0 0.0
    %1808 = vmatpush1.xpose.msra.mxu0 0.0
    %1809 = vmatprep.subr.mxu0 0.0
    %1810 = vmatpush1.xpose.msra.mxu0 0.0
    %1811 = vmatprep.subr.mxu0 0.0
    %1812 = vmatpush1.xpose.msra.mxu0 0.0
    %1813 = vmatprep.subr.mxu0 0.0
    %1814 = vmatpush1.xpose.msra.mxu0 0.0
    %1815 = vmatprep.subr.mxu0 0.0
    %1816 = vmatpush1.xpose.msra.mxu0 0.0
    %1817 = vmatprep.subr.mxu0 0.0
    %1818 = vmatpush1.xpose.msra.mxu0 0.0
    %1819 = vmatprep.subr.mxu0 0.0
    %1820 = vmatpush1.xpose.msra.mxu0 0.0
    %1821 = vmatprep.subr.mxu0 0.0
    %1822 = vmatpush1.xpose.msra.mxu0 0.0
    %1823 = vmatprep.subr.mxu0 0.0
    %1824 = vmatpush1.xpose.msra.mxu0 0.0
    %1825 = vmatprep.subr.mxu0 0.0
    %1826 = vmatpush1.xpose.msra.mxu0 0.0
    %1827 = vmatprep.subr.mxu0 0.0
    %1828 = vmatpush1.xpose.msra.mxu0 0.0
    %1829 = vmatprep.subr.mxu0 0.0
    %1830 = vmatpush1.xpose.msra.mxu0 %v1799
    %1831 = vmatprep.subr.mxu0 0.0
    %1832 = vmatpush1.xpose.msra.mxu0 %v1797
    %1833 = vmatprep.subr.mxu0 0.0
    %1834 = vmatpush2.xpose.msra.mxu0 0.0
    %1835 = vmatprep.subr.mxu0 0.0
    %1836 = vmatpush2.xpose.msra.mxu0 0.0
    %1837 = vmatprep.subr.mxu0 0.0
    %1838 = vmatpush2.xpose.msra.mxu0 0.0
    %1839 = vmatprep.subr.mxu0 0.0
    %1840 = vmatpush2.xpose.msra.mxu0 0.0
    %1841 = vmatprep.subr.mxu0 0.0
    %1842 = vmatpush2.xpose.msra.mxu0 0.0
    %1843 = vmatprep.subr.mxu0 0.0
    %1844 = vmatpush2.xpose.msra.mxu0 0.0
    %1845 = vmatprep.subr.mxu0 0.0
    %1846 = vmatpush2.xpose.msra.mxu0 0.0
    %1847 = vmatprep.subr.mxu0 0.0
    %1848 = vmatpush2.xpose.msra.mxu0 0.0
    %1849 = vmatprep.subr.mxu0 0.0
    %1850 = vmatpush2.xpose.msra.mxu0 0.0
    %1851 = vmatprep.subr.mxu0 0.0
    %1852 = vmatpush2.xpose.msra.mxu0 0.0
    %1853 = vmatprep.subr.mxu0 0.0
    %1854 = vmatpush2.xpose.msra.mxu0 0.0
    %1855 = vmatprep.subr.mxu0 0.0
    %1856 = vmatpush2.xpose.msra.mxu0 0.0
    %1857 = vmatprep.subr.mxu0 0.0
    %1858 = vmatpush2.xpose.msra.mxu0 0.0
    %1859 = vmatprep.subr.mxu0 0.0
    %1860 = vmatpush2.xpose.msra.mxu0 0.0
    %1861 = vmatprep.subr.mxu0 0.0
    %1862 = vmatpush2.xpose.msra.mxu0 0.0
    %1863 = vmatprep.subr.mxu0 0.0
    %1864 = vmatpush2.xpose.msra.mxu0 0.0
    %1865 = vmatprep.mubr.f32.mxu0 0.0
    %1866 = vmatmul.mubr.f32.gmra.mxu0 %v1793
    %v1867 = vpop.f32.mrf.mxu0
    %v1868 = vadd.f32 0.0, %v1867
    %v1869 = vpop.f32.mrf.mxu0
    %1870 = vmatprep.mubr.f32.mxu0 0.0
    %1871 = vmatmul.mubr.f32.gmra.mxu0 %v1795
    %v1872 = vpop.f32.mrf.mxu0
    %v1873 = vadd.f32 0.0, %v1872
    %v1874 = vpop.f32.mrf.mxu0
    %1875 = vdwg.mxu0
    %1876 = vrot.lane.b32.xlu0 %v748, 96
    %v1877 = vpop.permute.xlu0 %1876
    %1878 = vrot.lane.b32.xlu0 %v750, 96
    %v1879 = vpop.permute.xlu0 %1878
    %v1880 = vsel %vm835, %v748, 0
    %v1882 = vsel %vm835, %v750, 0
    %v1884 = vsel %vm835, %v1877, 0
    %v1886 = vsel %vm835, %v1879, 0
    %1888 = vmatprep.subr.mxu0 0.0
    %1889 = vmatpush1.xpose.msra.mxu0 0.0
    %1890 = vmatprep.subr.mxu0 0.0
    %1891 = vmatpush1.xpose.msra.mxu0 0.0
    %1892 = vmatprep.subr.mxu0 0.0
    %1893 = vmatpush1.xpose.msra.mxu0 0.0
    %1894 = vmatprep.subr.mxu0 0.0
    %1895 = vmatpush1.xpose.msra.mxu0 0.0
    %1896 = vmatprep.subr.mxu0 0.0
    %1897 = vmatpush1.xpose.msra.mxu0 0.0
    %1898 = vmatprep.subr.mxu0 0.0
    %1899 = vmatpush1.xpose.msra.mxu0 0.0
    %1900 = vmatprep.subr.mxu0 0.0
    %1901 = vmatpush1.xpose.msra.mxu0 0.0
    %1902 = vmatprep.subr.mxu0 0.0
    %1903 = vmatpush1.xpose.msra.mxu0 0.0
    %1904 = vmatprep.subr.mxu0 0.0
    %1905 = vmatpush1.xpose.msra.mxu0 0.0
    %1906 = vmatprep.subr.mxu0 0.0
    %1907 = vmatpush1.xpose.msra.mxu0 0.0
    %1908 = vmatprep.subr.mxu0 0.0
    %1909 = vmatpush1.xpose.msra.mxu0 0.0
    %1910 = vmatprep.subr.mxu0 0.0
    %1911 = vmatpush1.xpose.msra.mxu0 0.0
    %1912 = vmatprep.subr.mxu0 0.0
    %1913 = vmatpush1.xpose.msra.mxu0 0.0
    %1914 = vmatprep.subr.mxu0 0.0
    %1915 = vmatpush1.xpose.msra.mxu0 0.0
    %1916 = vmatprep.subr.mxu0 0.0
    %1917 = vmatpush1.xpose.msra.mxu0 %v1886
    %1918 = vmatprep.subr.mxu0 0.0
    %1919 = vmatpush1.xpose.msra.mxu0 %v1884
    %1920 = vmatprep.subr.mxu0 0.0
    %1921 = vmatpush2.xpose.msra.mxu0 0.0
    %1922 = vmatprep.subr.mxu0 0.0
    %1923 = vmatpush2.xpose.msra.mxu0 0.0
    %1924 = vmatprep.subr.mxu0 0.0
    %1925 = vmatpush2.xpose.msra.mxu0 0.0
    %1926 = vmatprep.subr.mxu0 0.0
    %1927 = vmatpush2.xpose.msra.mxu0 0.0
    %1928 = vmatprep.subr.mxu0 0.0
    %1929 = vmatpush2.xpose.msra.mxu0 0.0
    %1930 = vmatprep.subr.mxu0 0.0
    %1931 = vmatpush2.xpose.msra.mxu0 0.0
    %1932 = vmatprep.subr.mxu0 0.0
    %1933 = vmatpush2.xpose.msra.mxu0 0.0
    %1934 = vmatprep.subr.mxu0 0.0
    %1935 = vmatpush2.xpose.msra.mxu0 0.0
    %1936 = vmatprep.subr.mxu0 0.0
    %1937 = vmatpush2.xpose.msra.mxu0 0.0
    %1938 = vmatprep.subr.mxu0 0.0
    %1939 = vmatpush2.xpose.msra.mxu0 0.0
    %1940 = vmatprep.subr.mxu0 0.0
    %1941 = vmatpush2.xpose.msra.mxu0 0.0
    %1942 = vmatprep.subr.mxu0 0.0
    %1943 = vmatpush2.xpose.msra.mxu0 0.0
    %1944 = vmatprep.subr.mxu0 0.0
    %1945 = vmatpush2.xpose.msra.mxu0 0.0
    %1946 = vmatprep.subr.mxu0 0.0
    %1947 = vmatpush2.xpose.msra.mxu0 0.0
    %1948 = vmatprep.subr.mxu0 0.0
    %1949 = vmatpush2.xpose.msra.mxu0 0.0
    %1950 = vmatprep.subr.mxu0 0.0
    %1951 = vmatpush2.xpose.msra.mxu0 0.0
    %1952 = vmatprep.mubr.f32.mxu0 0.0
    %1953 = vmatmul.mubr.f32.gmra.mxu0 %v1880
    %v1954 = vpop.f32.mrf.mxu0
    %v1955 = vadd.f32 0.0, %v1954
    %v1956 = vpop.f32.mrf.mxu0
    %1957 = vmatprep.mubr.f32.mxu0 0.0
    %1958 = vmatmul.mubr.f32.gmra.mxu0 %v1882
    %v1959 = vpop.f32.mrf.mxu0
    %v1960 = vadd.f32 0.0, %v1959
    %v1961 = vpop.f32.mrf.mxu0
    %1962 = vdwg.mxu0
    %1963 = vrot.lane.b32.xlu0 %v752, 96
    %v1964 = vpop.permute.xlu0 %1963
    %1965 = vrot.lane.b32.xlu0 %v754, 96
    %v1966 = vpop.permute.xlu0 %1965
    %v1967 = vsel %vm835, %v752, 0
    %v1969 = vsel %vm835, %v754, 0
    %v1971 = vsel %vm835, %v1964, 0
    %v1973 = vsel %vm835, %v1966, 0
    %1975 = vmatprep.subr.mxu0 0.0
    %1976 = vmatpush1.xpose.msra.mxu0 0.0
    %1977 = vmatprep.subr.mxu0 0.0
    %1978 = vmatpush1.xpose.msra.mxu0 0.0
    %1979 = vmatprep.subr.mxu0 0.0
    %1980 = vmatpush1.xpose.msra.mxu0 0.0
    %1981 = vmatprep.subr.mxu0 0.0
    %1982 = vmatpush1.xpose.msra.mxu0 0.0
    %1983 = vmatprep.subr.mxu0 0.0
    %1984 = vmatpush1.xpose.msra.mxu0 0.0
    %1985 = vmatprep.subr.mxu0 0.0
    %1986 = vmatpush1.xpose.msra.mxu0 0.0
    %1987 = vmatprep.subr.mxu0 0.0
    %1988 = vmatpush1.xpose.msra.mxu0 0.0
    %1989 = vmatprep.subr.mxu0 0.0
    %1990 = vmatpush1.xpose.msra.mxu0 0.0
    %1991 = vmatprep.subr.mxu0 0.0
    %1992 = vmatpush1.xpose.msra.mxu0 0.0
    %1993 = vmatprep.subr.mxu0 0.0
    %1994 = vmatpush1.xpose.msra.mxu0 0.0
    %1995 = vmatprep.subr.mxu0 0.0
    %1996 = vmatpush1.xpose.msra.mxu0 0.0
    %1997 = vmatprep.subr.mxu0 0.0
    %1998 = vmatpush1.xpose.msra.mxu0 0.0
    %1999 = vmatprep.subr.mxu0 0.0
    %2000 = vmatpush1.xpose.msra.mxu0 0.0
    %2001 = vmatprep.subr.mxu0 0.0
    %2002 = vmatpush1.xpose.msra.mxu0 0.0
    %2003 = vmatprep.subr.mxu0 0.0
    %2004 = vmatpush1.xpose.msra.mxu0 %v1973
    %2005 = vmatprep.subr.mxu0 0.0
    %2006 = vmatpush1.xpose.msra.mxu0 %v1971
    %2007 = vmatprep.subr.mxu0 0.0
    %2008 = vmatpush2.xpose.msra.mxu0 0.0
    %2009 = vmatprep.subr.mxu0 0.0
    %2010 = vmatpush2.xpose.msra.mxu0 0.0
    %2011 = vmatprep.subr.mxu0 0.0
    %2012 = vmatpush2.xpose.msra.mxu0 0.0
    %2013 = vmatprep.subr.mxu0 0.0
    %2014 = vmatpush2.xpose.msra.mxu0 0.0
    %2015 = vmatprep.subr.mxu0 0.0
    %2016 = vmatpush2.xpose.msra.mxu0 0.0
    %2017 = vmatprep.subr.mxu0 0.0
    %2018 = vmatpush2.xpose.msra.mxu0 0.0
    %2019 = vmatprep.subr.mxu0 0.0
    %2020 = vmatpush2.xpose.msra.mxu0 0.0
    %2021 = vmatprep.subr.mxu0 0.0
    %2022 = vmatpush2.xpose.msra.mxu0 0.0
    %2023 = vmatprep.subr.mxu0 0.0
    %2024 = vmatpush2.xpose.msra.mxu0 0.0
    %2025 = vmatprep.subr.mxu0 0.0
    %2026 = vmatpush2.xpose.msra.mxu0 0.0
    %2027 = vmatprep.subr.mxu0 0.0
    %2028 = vmatpush2.xpose.msra.mxu0 0.0
    %2029 = vmatprep.subr.mxu0 0.0
    %2030 = vmatpush2.xpose.msra.mxu0 0.0
    %2031 = vmatprep.subr.mxu0 0.0
    %2032 = vmatpush2.xpose.msra.mxu0 0.0
    %2033 = vmatprep.subr.mxu0 0.0
    %2034 = vmatpush2.xpose.msra.mxu0 0.0
    %2035 = vmatprep.subr.mxu0 0.0
    %2036 = vmatpush2.xpose.msra.mxu0 0.0
    %2037 = vmatprep.subr.mxu0 0.0
    %2038 = vmatpush2.xpose.msra.mxu0 0.0
    %2039 = vmatprep.mubr.f32.mxu0 0.0
    %2040 = vmatmul.mubr.f32.gmra.mxu0 %v1967
    %v2041 = vpop.f32.mrf.mxu0
    %v2042 = vadd.f32 0.0, %v2041
    %v2043 = vpop.f32.mrf.mxu0
    %2044 = vmatprep.mubr.f32.mxu0 0.0
    %2045 = vmatmul.mubr.f32.gmra.mxu0 %v1969
    %v2046 = vpop.f32.mrf.mxu0
    %v2047 = vadd.f32 0.0, %v2046
    %v2048 = vpop.f32.mrf.mxu0
    %2049 = vdwg.mxu0
    %2050 = vrot.lane.b32.xlu0 %v756, 96
    %v2051 = vpop.permute.xlu0 %2050
    %2052 = vrot.lane.b32.xlu0 %v758, 96
    %v2053 = vpop.permute.xlu0 %2052
    %v2054 = vsel %vm835, %v756, 0
    %v2056 = vsel %vm835, %v758, 0
    %v2058 = vsel %vm835, %v2051, 0
    %v2060 = vsel %vm835, %v2053, 0
    %2062 = vmatprep.subr.mxu0 0.0
    %2063 = vmatpush1.xpose.msra.mxu0 0.0
    %2064 = vmatprep.subr.mxu0 0.0
    %2065 = vmatpush1.xpose.msra.mxu0 0.0
    %2066 = vmatprep.subr.mxu0 0.0
    %2067 = vmatpush1.xpose.msra.mxu0 0.0
    %2068 = vmatprep.subr.mxu0 0.0
    %2069 = vmatpush1.xpose.msra.mxu0 0.0
    %2070 = vmatprep.subr.mxu0 0.0
    %2071 = vmatpush1.xpose.msra.mxu0 0.0
    %2072 = vmatprep.subr.mxu0 0.0
    %2073 = vmatpush1.xpose.msra.mxu0 0.0
    %2074 = vmatprep.subr.mxu0 0.0
    %2075 = vmatpush1.xpose.msra.mxu0 0.0
    %2076 = vmatprep.subr.mxu0 0.0
    %2077 = vmatpush1.xpose.msra.mxu0 0.0
    %2078 = vmatprep.subr.mxu0 0.0
    %2079 = vmatpush1.xpose.msra.mxu0 0.0
    %2080 = vmatprep.subr.mxu0 0.0
    %2081 = vmatpush1.xpose.msra.mxu0 0.0
    %2082 = vmatprep.subr.mxu0 0.0
    %2083 = vmatpush1.xpose.msra.mxu0 0.0
    %2084 = vmatprep.subr.mxu0 0.0
    %2085 = vmatpush1.xpose.msra.mxu0 0.0
    %2086 = vmatprep.subr.mxu0 0.0
    %2087 = vmatpush1.xpose.msra.mxu0 0.0
    %2088 = vmatprep.subr.mxu0 0.0
    %2089 = vmatpush1.xpose.msra.mxu0 0.0
    %2090 = vmatprep.subr.mxu0 0.0
    %2091 = vmatpush1.xpose.msra.mxu0 %v2060
    %2092 = vmatprep.subr.mxu0 0.0
    %2093 = vmatpush1.xpose.msra.mxu0 %v2058
    %2094 = vmatprep.subr.mxu0 0.0
    %2095 = vmatpush2.xpose.msra.mxu0 0.0
    %2096 = vmatprep.subr.mxu0 0.0
    %2097 = vmatpush2.xpose.msra.mxu0 0.0
    %2098 = vmatprep.subr.mxu0 0.0
    %2099 = vmatpush2.xpose.msra.mxu0 0.0
    %2100 = vmatprep.subr.mxu0 0.0
    %2101 = vmatpush2.xpose.msra.mxu0 0.0
    %2102 = vmatprep.subr.mxu0 0.0
    %2103 = vmatpush2.xpose.msra.mxu0 0.0
    %2104 = vmatprep.subr.mxu0 0.0
    %2105 = vmatpush2.xpose.msra.mxu0 0.0
    %2106 = vmatprep.subr.mxu0 0.0
    %2107 = vmatpush2.xpose.msra.mxu0 0.0
    %2108 = vmatprep.subr.mxu0 0.0
    %2109 = vmatpush2.xpose.msra.mxu0 0.0
    %2110 = vmatprep.subr.mxu0 0.0
    %2111 = vmatpush2.xpose.msra.mxu0 0.0
    %2112 = vmatprep.subr.mxu0 0.0
    %2113 = vmatpush2.xpose.msra.mxu0 0.0
    %2114 = vmatprep.subr.mxu0 0.0
    %2115 = vmatpush2.xpose.msra.mxu0 0.0
    %2116 = vmatprep.subr.mxu0 0.0
    %2117 = vmatpush2.xpose.msra.mxu0 0.0
    %2118 = vmatprep.subr.mxu0 0.0
    %2119 = vmatpush2.xpose.msra.mxu0 0.0
    %2120 = vmatprep.subr.mxu0 0.0
    %2121 = vmatpush2.xpose.msra.mxu0 0.0
    %2122 = vmatprep.subr.mxu0 0.0
    %2123 = vmatpush2.xpose.msra.mxu0 0.0
    %2124 = vmatprep.subr.mxu0 0.0
    %2125 = vmatpush2.xpose.msra.mxu0 0.0
    %2126 = vmatprep.mubr.f32.mxu0 0.0
    %2127 = vmatmul.mubr.f32.gmra.mxu0 %v2054
    %v2128 = vpop.f32.mrf.mxu0
    %v2129 = vadd.f32 0.0, %v2128
    %v2130 = vpop.f32.mrf.mxu0
    %2131 = vmatprep.mubr.f32.mxu0 0.0
    %2132 = vmatmul.mubr.f32.gmra.mxu0 %v2056
    %v2133 = vpop.f32.mrf.mxu0
    %v2134 = vadd.f32 0.0, %v2133
    %v2135 = vpop.f32.mrf.mxu0
    %2136 = vdwg.mxu0
    %2137 = vrot.lane.b32.xlu0 %v760, 96
    %v2138 = vpop.permute.xlu0 %2137
    %2139 = vrot.lane.b32.xlu0 %v762, 96
    %v2140 = vpop.permute.xlu0 %2139
    %v2141 = vsel %vm835, %v760, 0
    %v2143 = vsel %vm835, %v762, 0
    %v2145 = vsel %vm835, %v2138, 0
    %v2147 = vsel %vm835, %v2140, 0
    %2149 = vmatprep.subr.mxu0 0.0
    %2150 = vmatpush1.xpose.msra.mxu0 0.0
    %2151 = vmatprep.subr.mxu0 0.0
    %2152 = vmatpush1.xpose.msra.mxu0 0.0
    %2153 = vmatprep.subr.mxu0 0.0
    %2154 = vmatpush1.xpose.msra.mxu0 0.0
    %2155 = vmatprep.subr.mxu0 0.0
    %2156 = vmatpush1.xpose.msra.mxu0 0.0
    %2157 = vmatprep.subr.mxu0 0.0
    %2158 = vmatpush1.xpose.msra.mxu0 0.0
    %2159 = vmatprep.subr.mxu0 0.0
    %2160 = vmatpush1.xpose.msra.mxu0 0.0
    %2161 = vmatprep.subr.mxu0 0.0
    %2162 = vmatpush1.xpose.msra.mxu0 0.0
    %2163 = vmatprep.subr.mxu0 0.0
    %2164 = vmatpush1.xpose.msra.mxu0 0.0
    %2165 = vmatprep.subr.mxu0 0.0
    %2166 = vmatpush1.xpose.msra.mxu0 0.0
    %2167 = vmatprep.subr.mxu0 0.0
    %2168 = vmatpush1.xpose.msra.mxu0 0.0
    %2169 = vmatprep.subr.mxu0 0.0
    %2170 = vmatpush1.xpose.msra.mxu0 0.0
    %2171 = vmatprep.subr.mxu0 0.0
    %2172 = vmatpush1.xpose.msra.mxu0 0.0
    %2173 = vmatprep.subr.mxu0 0.0
    %2174 = vmatpush1.xpose.msra.mxu0 0.0
    %2175 = vmatprep.subr.mxu0 0.0
    %2176 = vmatpush1.xpose.msra.mxu0 0.0
    %2177 = vmatprep.subr.mxu0 0.0
    %2178 = vmatpush1.xpose.msra.mxu0 %v2147
    %2179 = vmatprep.subr.mxu0 0.0
    %2180 = vmatpush1.xpose.msra.mxu0 %v2145
    %2181 = vmatprep.subr.mxu0 0.0
    %2182 = vmatpush2.xpose.msra.mxu0 0.0
    %2183 = vmatprep.subr.mxu0 0.0
    %2184 = vmatpush2.xpose.msra.mxu0 0.0
    %2185 = vmatprep.subr.mxu0 0.0
    %2186 = vmatpush2.xpose.msra.mxu0 0.0
    %2187 = vmatprep.subr.mxu0 0.0
    %2188 = vmatpush2.xpose.msra.mxu0 0.0
    %2189 = vmatprep.subr.mxu0 0.0
    %2190 = vmatpush2.xpose.msra.mxu0 0.0
    %2191 = vmatprep.subr.mxu0 0.0
    %2192 = vmatpush2.xpose.msra.mxu0 0.0
    %2193 = vmatprep.subr.mxu0 0.0
    %2194 = vmatpush2.xpose.msra.mxu0 0.0
    %2195 = vmatprep.subr.mxu0 0.0
    %2196 = vmatpush2.xpose.msra.mxu0 0.0
    %2197 = vmatprep.subr.mxu0 0.0
    %2198 = vmatpush2.xpose.msra.mxu0 0.0
    %2199 = vmatprep.subr.mxu0 0.0
    %2200 = vmatpush2.xpose.msra.mxu0 0.0
    %2201 = vmatprep.subr.mxu0 0.0
    %2202 = vmatpush2.xpose.msra.mxu0 0.0
    %2203 = vmatprep.subr.mxu0 0.0
    %2204 = vmatpush2.xpose.msra.mxu0 0.0
    %2205 = vmatprep.subr.mxu0 0.0
    %2206 = vmatpush2.xpose.msra.mxu0 0.0
    %2207 = vmatprep.subr.mxu0 0.0
    %2208 = vmatpush2.xpose.msra.mxu0 0.0
    %2209 = vmatprep.subr.mxu0 0.0
    %2210 = vmatpush2.xpose.msra.mxu0 0.0
    %2211 = vmatprep.subr.mxu0 0.0
    %2212 = vmatpush2.xpose.msra.mxu0 0.0
    %2213 = vmatprep.mubr.f32.mxu0 0.0
    %2214 = vmatmul.mubr.f32.gmra.mxu0 %v2141
    %v2215 = vpop.f32.mrf.mxu0
    %v2216 = vadd.f32 0.0, %v2215
    %v2217 = vpop.f32.mrf.mxu0
    %2218 = vmatprep.mubr.f32.mxu0 0.0
    %2219 = vmatmul.mubr.f32.gmra.mxu0 %v2143
    %v2220 = vpop.f32.mrf.mxu0
    %v2221 = vadd.f32 0.0, %v2220
    %v2222 = vpop.f32.mrf.mxu0
    %2223 = vdwg.mxu0
    %2224 = vrot.lane.b32.xlu0 %v764, 96
    %v2225 = vpop.permute.xlu0 %2224
    %2226 = vrot.lane.b32.xlu0 %v766, 96
    %v2227 = vpop.permute.xlu0 %2226
    %v2228 = vsel %vm835, %v764, 0
    %v2230 = vsel %vm835, %v766, 0
    %v2232 = vsel %vm835, %v2225, 0
    %v2234 = vsel %vm835, %v2227, 0
    %2236 = vmatprep.subr.mxu0 0.0
    %2237 = vmatpush1.xpose.msra.mxu0 0.0
    %2238 = vmatprep.subr.mxu0 0.0
    %2239 = vmatpush1.xpose.msra.mxu0 0.0
    %2240 = vmatprep.subr.mxu0 0.0
    %2241 = vmatpush1.xpose.msra.mxu0 0.0
    %2242 = vmatprep.subr.mxu0 0.0
    %2243 = vmatpush1.xpose.msra.mxu0 0.0
    %2244 = vmatprep.subr.mxu0 0.0
    %2245 = vmatpush1.xpose.msra.mxu0 0.0
    %2246 = vmatprep.subr.mxu0 0.0
    %2247 = vmatpush1.xpose.msra.mxu0 0.0
    %2248 = vmatprep.subr.mxu0 0.0
    %2249 = vmatpush1.xpose.msra.mxu0 0.0
    %2250 = vmatprep.subr.mxu0 0.0
    %2251 = vmatpush1.xpose.msra.mxu0 0.0
    %2252 = vmatprep.subr.mxu0 0.0
    %2253 = vmatpush1.xpose.msra.mxu0 0.0
    %2254 = vmatprep.subr.mxu0 0.0
    %2255 = vmatpush1.xpose.msra.mxu0 0.0
    %2256 = vmatprep.subr.mxu0 0.0
    %2257 = vmatpush1.xpose.msra.mxu0 0.0
    %2258 = vmatprep.subr.mxu0 0.0
    %2259 = vmatpush1.xpose.msra.mxu0 0.0
    %2260 = vmatprep.subr.mxu0 0.0
    %2261 = vmatpush1.xpose.msra.mxu0 0.0
    %2262 = vmatprep.subr.mxu0 0.0
    %2263 = vmatpush1.xpose.msra.mxu0 0.0
    %2264 = vmatprep.subr.mxu0 0.0
    %2265 = vmatpush1.xpose.msra.mxu0 %v2234
    %2266 = vmatprep.subr.mxu0 0.0
    %2267 = vmatpush1.xpose.msra.mxu0 %v2232
    %2268 = vmatprep.subr.mxu0 0.0
    %2269 = vmatpush2.xpose.msra.mxu0 0.0
    %2270 = vmatprep.subr.mxu0 0.0
    %2271 = vmatpush2.xpose.msra.mxu0 0.0
    %2272 = vmatprep.subr.mxu0 0.0
    %2273 = vmatpush2.xpose.msra.mxu0 0.0
    %2274 = vmatprep.subr.mxu0 0.0
    %2275 = vmatpush2.xpose.msra.mxu0 0.0
    %2276 = vmatprep.subr.mxu0 0.0
    %2277 = vmatpush2.xpose.msra.mxu0 0.0
    %2278 = vmatprep.subr.mxu0 0.0
    %2279 = vmatpush2.xpose.msra.mxu0 0.0
    %2280 = vmatprep.subr.mxu0 0.0
    %2281 = vmatpush2.xpose.msra.mxu0 0.0
    %2282 = vmatprep.subr.mxu0 0.0
    %2283 = vmatpush2.xpose.msra.mxu0 0.0
    %2284 = vmatprep.subr.mxu0 0.0
    %2285 = vmatpush2.xpose.msra.mxu0 0.0
    %2286 = vmatprep.subr.mxu0 0.0
    %2287 = vmatpush2.xpose.msra.mxu0 0.0
    %2288 = vmatprep.subr.mxu0 0.0
    %2289 = vmatpush2.xpose.msra.mxu0 0.0
    %2290 = vmatprep.subr.mxu0 0.0
    %2291 = vmatpush2.xpose.msra.mxu0 0.0
    %2292 = vmatprep.subr.mxu0 0.0
    %2293 = vmatpush2.xpose.msra.mxu0 0.0
    %2294 = vmatprep.subr.mxu0 0.0
    %2295 = vmatpush2.xpose.msra.mxu0 0.0
    %2296 = vmatprep.subr.mxu0 0.0
    %2297 = vmatpush2.xpose.msra.mxu0 0.0
    %2298 = vmatprep.subr.mxu0 0.0
    %2299 = vmatpush2.xpose.msra.mxu0 0.0
    %2300 = vmatprep.mubr.f32.mxu0 0.0
    %2301 = vmatmul.mubr.f32.gmra.mxu0 %v2228
    %v2302 = vpop.f32.mrf.mxu0
    %v2303 = vadd.f32 0.0, %v2302
    %v2304 = vpop.f32.mrf.mxu0
    %2305 = vmatprep.mubr.f32.mxu0 0.0
    %2306 = vmatmul.mubr.f32.gmra.mxu0 %v2230
    %v2307 = vpop.f32.mrf.mxu0
    %v2308 = vadd.f32 0.0, %v2307
    %v2309 = vpop.f32.mrf.mxu0
    %2310 = vdwg.mxu0
    %2311 = vrot.lane.b32.xlu0 %v768, 96
    %v2312 = vpop.permute.xlu0 %2311
    %2313 = vrot.lane.b32.xlu0 %v770, 96
    %v2314 = vpop.permute.xlu0 %2313
    %v2315 = vsel %vm835, %v768, 0
    %v2317 = vsel %vm835, %v770, 0
    %v2319 = vsel %vm835, %v2312, 0
    %v2321 = vsel %vm835, %v2314, 0
    %2323 = vmatprep.subr.mxu0 0.0
    %2324 = vmatpush1.xpose.msra.mxu0 0.0
    %2325 = vmatprep.subr.mxu0 0.0
    %2326 = vmatpush1.xpose.msra.mxu0 0.0
    %2327 = vmatprep.subr.mxu0 0.0
    %2328 = vmatpush1.xpose.msra.mxu0 0.0
    %2329 = vmatprep.subr.mxu0 0.0
    %2330 = vmatpush1.xpose.msra.mxu0 0.0
    %2331 = vmatprep.subr.mxu0 0.0
    %2332 = vmatpush1.xpose.msra.mxu0 0.0
    %2333 = vmatprep.subr.mxu0 0.0
    %2334 = vmatpush1.xpose.msra.mxu0 0.0
    %2335 = vmatprep.subr.mxu0 0.0
    %2336 = vmatpush1.xpose.msra.mxu0 0.0
    %2337 = vmatprep.subr.mxu0 0.0
    %2338 = vmatpush1.xpose.msra.mxu0 0.0
    %2339 = vmatprep.subr.mxu0 0.0
    %2340 = vmatpush1.xpose.msra.mxu0 0.0
    %2341 = vmatprep.subr.mxu0 0.0
    %2342 = vmatpush1.xpose.msra.mxu0 0.0
    %2343 = vmatprep.subr.mxu0 0.0
    %2344 = vmatpush1.xpose.msra.mxu0 0.0
    %2345 = vmatprep.subr.mxu0 0.0
    %2346 = vmatpush1.xpose.msra.mxu0 0.0
    %2347 = vmatprep.subr.mxu0 0.0
    %2348 = vmatpush1.xpose.msra.mxu0 0.0
    %2349 = vmatprep.subr.mxu0 0.0
    %2350 = vmatpush1.xpose.msra.mxu0 0.0
    %2351 = vmatprep.subr.mxu0 0.0
    %2352 = vmatpush1.xpose.msra.mxu0 %v2321
    %2353 = vmatprep.subr.mxu0 0.0
    %2354 = vmatpush1.xpose.msra.mxu0 %v2319
    %2355 = vmatprep.subr.mxu0 0.0
    %2356 = vmatpush2.xpose.msra.mxu0 0.0
    %2357 = vmatprep.subr.mxu0 0.0
    %2358 = vmatpush2.xpose.msra.mxu0 0.0
    %2359 = vmatprep.subr.mxu0 0.0
    %2360 = vmatpush2.xpose.msra.mxu0 0.0
    %2361 = vmatprep.subr.mxu0 0.0
    %2362 = vmatpush2.xpose.msra.mxu0 0.0
    %2363 = vmatprep.subr.mxu0 0.0
    %2364 = vmatpush2.xpose.msra.mxu0 0.0
    %2365 = vmatprep.subr.mxu0 0.0
    %2366 = vmatpush2.xpose.msra.mxu0 0.0
    %2367 = vmatprep.subr.mxu0 0.0
    %2368 = vmatpush2.xpose.msra.mxu0 0.0
    %2369 = vmatprep.subr.mxu0 0.0
    %2370 = vmatpush2.xpose.msra.mxu0 0.0
    %2371 = vmatprep.subr.mxu0 0.0
    %2372 = vmatpush2.xpose.msra.mxu0 0.0
    %2373 = vmatprep.subr.mxu0 0.0
    %2374 = vmatpush2.xpose.msra.mxu0 0.0
    %2375 = vmatprep.subr.mxu0 0.0
    %2376 = vmatpush2.xpose.msra.mxu0 0.0
    %2377 = vmatprep.subr.mxu0 0.0
    %2378 = vmatpush2.xpose.msra.mxu0 0.0
    %2379 = vmatprep.subr.mxu0 0.0
    %2380 = vmatpush2.xpose.msra.mxu0 0.0
    %2381 = vmatprep.subr.mxu0 0.0
    %2382 = vmatpush2.xpose.msra.mxu0 0.0
    %2383 = vmatprep.subr.mxu0 0.0
    %2384 = vmatpush2.xpose.msra.mxu0 0.0
    %2385 = vmatprep.subr.mxu0 0.0
    %2386 = vmatpush2.xpose.msra.mxu0 0.0
    %2387 = vmatprep.mubr.f32.mxu0 0.0
    %2388 = vmatmul.mubr.f32.gmra.mxu0 %v2315
    %v2389 = vpop.f32.mrf.mxu0
    %v2390 = vadd.f32 0.0, %v2389
    %v2391 = vpop.f32.mrf.mxu0
    %2392 = vmatprep.mubr.f32.mxu0 0.0
    %2393 = vmatmul.mubr.f32.gmra.mxu0 %v2317
    %v2394 = vpop.f32.mrf.mxu0
    %v2395 = vadd.f32 0.0, %v2394
    %v2396 = vpop.f32.mrf.mxu0
    %2397 = vdwg.mxu0
    %2398 = vrot.lane.b32.xlu0 %v772, 96
    %v2399 = vpop.permute.xlu0 %2398
    %2400 = vrot.lane.b32.xlu0 %v774, 96
    %v2401 = vpop.permute.xlu0 %2400
    %v2402 = vsel %vm835, %v772, 0
    %v2404 = vsel %vm835, %v774, 0
    %v2406 = vsel %vm835, %v2399, 0
    %v2408 = vsel %vm835, %v2401, 0
    %2410 = vmatprep.subr.mxu0 0.0
    %2411 = vmatpush1.xpose.msra.mxu0 0.0
    %2412 = vmatprep.subr.mxu0 0.0
    %2413 = vmatpush1.xpose.msra.mxu0 0.0
    %2414 = vmatprep.subr.mxu0 0.0
    %2415 = vmatpush1.xpose.msra.mxu0 0.0
    %2416 = vmatprep.subr.mxu0 0.0
    %2417 = vmatpush1.xpose.msra.mxu0 0.0
    %2418 = vmatprep.subr.mxu0 0.0
    %2419 = vmatpush1.xpose.msra.mxu0 0.0
    %2420 = vmatprep.subr.mxu0 0.0
    %2421 = vmatpush1.xpose.msra.mxu0 0.0
    %2422 = vmatprep.subr.mxu0 0.0
    %2423 = vmatpush1.xpose.msra.mxu0 0.0
    %2424 = vmatprep.subr.mxu0 0.0
    %2425 = vmatpush1.xpose.msra.mxu0 0.0
    %2426 = vmatprep.subr.mxu0 0.0
    %2427 = vmatpush1.xpose.msra.mxu0 0.0
    %2428 = vmatprep.subr.mxu0 0.0
    %2429 = vmatpush1.xpose.msra.mxu0 0.0
    %2430 = vmatprep.subr.mxu0 0.0
    %2431 = vmatpush1.xpose.msra.mxu0 0.0
    %2432 = vmatprep.subr.mxu0 0.0
    %2433 = vmatpush1.xpose.msra.mxu0 0.0
    %2434 = vmatprep.subr.mxu0 0.0
    %2435 = vmatpush1.xpose.msra.mxu0 0.0
    %2436 = vmatprep.subr.mxu0 0.0
    %2437 = vmatpush1.xpose.msra.mxu0 0.0
    %2438 = vmatprep.subr.mxu0 0.0
    %2439 = vmatpush1.xpose.msra.mxu0 %v2408
    %2440 = vmatprep.subr.mxu0 0.0
    %2441 = vmatpush1.xpose.msra.mxu0 %v2406
    %2442 = vmatprep.subr.mxu0 0.0
    %2443 = vmatpush2.xpose.msra.mxu0 0.0
    %2444 = vmatprep.subr.mxu0 0.0
    %2445 = vmatpush2.xpose.msra.mxu0 0.0
    %2446 = vmatprep.subr.mxu0 0.0
    %2447 = vmatpush2.xpose.msra.mxu0 0.0
    %2448 = vmatprep.subr.mxu0 0.0
    %2449 = vmatpush2.xpose.msra.mxu0 0.0
    %2450 = vmatprep.subr.mxu0 0.0
    %2451 = vmatpush2.xpose.msra.mxu0 0.0
    %2452 = vmatprep.subr.mxu0 0.0
    %2453 = vmatpush2.xpose.msra.mxu0 0.0
    %2454 = vmatprep.subr.mxu0 0.0
    %2455 = vmatpush2.xpose.msra.mxu0 0.0
    %2456 = vmatprep.subr.mxu0 0.0
    %2457 = vmatpush2.xpose.msra.mxu0 0.0
    %2458 = vmatprep.subr.mxu0 0.0
    %2459 = vmatpush2.xpose.msra.mxu0 0.0
    %2460 = vmatprep.subr.mxu0 0.0
    %2461 = vmatpush2.xpose.msra.mxu0 0.0
    %2462 = vmatprep.subr.mxu0 0.0
    %2463 = vmatpush2.xpose.msra.mxu0 0.0
    %2464 = vmatprep.subr.mxu0 0.0
    %2465 = vmatpush2.xpose.msra.mxu0 0.0
    %2466 = vmatprep.subr.mxu0 0.0
    %2467 = vmatpush2.xpose.msra.mxu0 0.0
    %2468 = vmatprep.subr.mxu0 0.0
    %2469 = vmatpush2.xpose.msra.mxu0 0.0
    %2470 = vmatprep.subr.mxu0 0.0
    %2471 = vmatpush2.xpose.msra.mxu0 0.0
    %2472 = vmatprep.subr.mxu0 0.0
    %2473 = vmatpush2.xpose.msra.mxu0 0.0
    %2474 = vmatprep.mubr.f32.mxu0 0.0
    %2475 = vmatmul.mubr.f32.gmra.mxu0 %v2402
    %v2476 = vpop.f32.mrf.mxu0
    %v2477 = vadd.f32 0.0, %v2476
    %v2478 = vpop.f32.mrf.mxu0
    %2479 = vmatprep.mubr.f32.mxu0 0.0
    %2480 = vmatmul.mubr.f32.gmra.mxu0 %v2404
    %v2481 = vpop.f32.mrf.mxu0
    %v2482 = vadd.f32 0.0, %v2481
    %v2483 = vpop.f32.mrf.mxu0
    %2484 = vdwg.mxu0
    %2485 = vrot.lane.b32.xlu0 %v776, 96
    %v2486 = vpop.permute.xlu0 %2485
    %2487 = vrot.lane.b32.xlu0 %v778, 96
    %v2488 = vpop.permute.xlu0 %2487
    %v2489 = vsel %vm835, %v776, 0
    %v2491 = vsel %vm835, %v778, 0
    %v2493 = vsel %vm835, %v2486, 0
    %v2495 = vsel %vm835, %v2488, 0
    %2497 = vmatprep.subr.mxu0 0.0
    %2498 = vmatpush1.xpose.msra.mxu0 0.0
    %2499 = vmatprep.subr.mxu0 0.0
    %2500 = vmatpush1.xpose.msra.mxu0 0.0
    %2501 = vmatprep.subr.mxu0 0.0
    %2502 = vmatpush1.xpose.msra.mxu0 0.0
    %2503 = vmatprep.subr.mxu0 0.0
    %2504 = vmatpush1.xpose.msra.mxu0 0.0
    %2505 = vmatprep.subr.mxu0 0.0
    %2506 = vmatpush1.xpose.msra.mxu0 0.0
    %2507 = vmatprep.subr.mxu0 0.0
    %2508 = vmatpush1.xpose.msra.mxu0 0.0
    %2509 = vmatprep.subr.mxu0 0.0
    %2510 = vmatpush1.xpose.msra.mxu0 0.0
    %2511 = vmatprep.subr.mxu0 0.0
    %2512 = vmatpush1.xpose.msra.mxu0 0.0
    %2513 = vmatprep.subr.mxu0 0.0
    %2514 = vmatpush1.xpose.msra.mxu0 0.0
    %2515 = vmatprep.subr.mxu0 0.0
    %2516 = vmatpush1.xpose.msra.mxu0 0.0
    %2517 = vmatprep.subr.mxu0 0.0
    %2518 = vmatpush1.xpose.msra.mxu0 0.0
    %2519 = vmatprep.subr.mxu0 0.0
    %2520 = vmatpush1.xpose.msra.mxu0 0.0
    %2521 = vmatprep.subr.mxu0 0.0
    %2522 = vmatpush1.xpose.msra.mxu0 0.0
    %2523 = vmatprep.subr.mxu0 0.0
    %2524 = vmatpush1.xpose.msra.mxu0 0.0
    %2525 = vmatprep.subr.mxu0 0.0
    %2526 = vmatpush1.xpose.msra.mxu0 %v2495
    %2527 = vmatprep.subr.mxu0 0.0
    %2528 = vmatpush1.xpose.msra.mxu0 %v2493
    %2529 = vmatprep.subr.mxu0 0.0
    %2530 = vmatpush2.xpose.msra.mxu0 0.0
    %2531 = vmatprep.subr.mxu0 0.0
    %2532 = vmatpush2.xpose.msra.mxu0 0.0
    %2533 = vmatprep.subr.mxu0 0.0
    %2534 = vmatpush2.xpose.msra.mxu0 0.0
    %2535 = vmatprep.subr.mxu0 0.0
    %2536 = vmatpush2.xpose.msra.mxu0 0.0
    %2537 = vmatprep.subr.mxu0 0.0
    %2538 = vmatpush2.xpose.msra.mxu0 0.0
    %2539 = vmatprep.subr.mxu0 0.0
    %2540 = vmatpush2.xpose.msra.mxu0 0.0
    %2541 = vmatprep.subr.mxu0 0.0
    %2542 = vmatpush2.xpose.msra.mxu0 0.0
    %2543 = vmatprep.subr.mxu0 0.0
    %2544 = vmatpush2.xpose.msra.mxu0 0.0
    %2545 = vmatprep.subr.mxu0 0.0
    %2546 = vmatpush2.xpose.msra.mxu0 0.0
    %2547 = vmatprep.subr.mxu0 0.0
    %2548 = vmatpush2.xpose.msra.mxu0 0.0
    %2549 = vmatprep.subr.mxu0 0.0
    %2550 = vmatpush2.xpose.msra.mxu0 0.0
    %2551 = vmatprep.subr.mxu0 0.0
    %2552 = vmatpush2.xpose.msra.mxu0 0.0
    %2553 = vmatprep.subr.mxu0 0.0
    %2554 = vmatpush2.xpose.msra.mxu0 0.0
    %2555 = vmatprep.subr.mxu0 0.0
    %2556 = vmatpush2.xpose.msra.mxu0 0.0
    %2557 = vmatprep.subr.mxu0 0.0
    %2558 = vmatpush2.xpose.msra.mxu0 0.0
    %2559 = vmatprep.subr.mxu0 0.0
    %2560 = vmatpush2.xpose.msra.mxu0 0.0
    %2561 = vmatprep.mubr.f32.mxu0 0.0
    %2562 = vmatmul.mubr.f32.gmra.mxu0 %v2489
    %v2563 = vpop.f32.mrf.mxu0
    %v2564 = vadd.f32 0.0, %v2563
    %v2565 = vpop.f32.mrf.mxu0
    %2566 = vmatprep.mubr.f32.mxu0 0.0
    %2567 = vmatmul.mubr.f32.gmra.mxu0 %v2491
    %v2568 = vpop.f32.mrf.mxu0
    %v2569 = vadd.f32 0.0, %v2568
    %v2570 = vpop.f32.mrf.mxu0
    %2571 = vdwg.mxu0
    %2572 = vrot.lane.b32.xlu0 %v780, 96
    %v2573 = vpop.permute.xlu0 %2572
    %2574 = vrot.lane.b32.xlu0 %v782, 96
    %v2575 = vpop.permute.xlu0 %2574
    %v2576 = vsel %vm835, %v780, 0
    %v2578 = vsel %vm835, %v782, 0
    %v2580 = vsel %vm835, %v2573, 0
    %v2582 = vsel %vm835, %v2575, 0
    %2584 = vmatprep.subr.mxu0 0.0
    %2585 = vmatpush1.xpose.msra.mxu0 0.0
    %2586 = vmatprep.subr.mxu0 0.0
    %2587 = vmatpush1.xpose.msra.mxu0 0.0
    %2588 = vmatprep.subr.mxu0 0.0
    %2589 = vmatpush1.xpose.msra.mxu0 0.0
    %2590 = vmatprep.subr.mxu0 0.0
    %2591 = vmatpush1.xpose.msra.mxu0 0.0
    %2592 = vmatprep.subr.mxu0 0.0
    %2593 = vmatpush1.xpose.msra.mxu0 0.0
    %2594 = vmatprep.subr.mxu0 0.0
    %2595 = vmatpush1.xpose.msra.mxu0 0.0
    %2596 = vmatprep.subr.mxu0 0.0
    %2597 = vmatpush1.xpose.msra.mxu0 0.0
    %2598 = vmatprep.subr.mxu0 0.0
    %2599 = vmatpush1.xpose.msra.mxu0 0.0
    %2600 = vmatprep.subr.mxu0 0.0
    %2601 = vmatpush1.xpose.msra.mxu0 0.0
    %2602 = vmatprep.subr.mxu0 0.0
    %2603 = vmatpush1.xpose.msra.mxu0 0.0
    %2604 = vmatprep.subr.mxu0 0.0
    %2605 = vmatpush1.xpose.msra.mxu0 0.0
    %2606 = vmatprep.subr.mxu0 0.0
    %2607 = vmatpush1.xpose.msra.mxu0 0.0
    %2608 = vmatprep.subr.mxu0 0.0
    %2609 = vmatpush1.xpose.msra.mxu0 0.0
    %2610 = vmatprep.subr.mxu0 0.0
    %2611 = vmatpush1.xpose.msra.mxu0 0.0
    %2612 = vmatprep.subr.mxu0 0.0
    %2613 = vmatpush1.xpose.msra.mxu0 %v2582
    %2614 = vmatprep.subr.mxu0 0.0
    %2615 = vmatpush1.xpose.msra.mxu0 %v2580
    %2616 = vmatprep.subr.mxu0 0.0
    %2617 = vmatpush2.xpose.msra.mxu0 0.0
    %2618 = vmatprep.subr.mxu0 0.0
    %2619 = vmatpush2.xpose.msra.mxu0 0.0
    %2620 = vmatprep.subr.mxu0 0.0
    %2621 = vmatpush2.xpose.msra.mxu0 0.0
    %2622 = vmatprep.subr.mxu0 0.0
    %2623 = vmatpush2.xpose.msra.mxu0 0.0
    %2624 = vmatprep.subr.mxu0 0.0
    %2625 = vmatpush2.xpose.msra.mxu0 0.0
    %2626 = vmatprep.subr.mxu0 0.0
    %2627 = vmatpush2.xpose.msra.mxu0 0.0
    %2628 = vmatprep.subr.mxu0 0.0
    %2629 = vmatpush2.xpose.msra.mxu0 0.0
    %2630 = vmatprep.subr.mxu0 0.0
    %2631 = vmatpush2.xpose.msra.mxu0 0.0
    %2632 = vmatprep.subr.mxu0 0.0
    %2633 = vmatpush2.xpose.msra.mxu0 0.0
    %2634 = vmatprep.subr.mxu0 0.0
    %2635 = vmatpush2.xpose.msra.mxu0 0.0
    %2636 = vmatprep.subr.mxu0 0.0
    %2637 = vmatpush2.xpose.msra.mxu0 0.0
    %2638 = vmatprep.subr.mxu0 0.0
    %2639 = vmatpush2.xpose.msra.mxu0 0.0
    %2640 = vmatprep.subr.mxu0 0.0
    %2641 = vmatpush2.xpose.msra.mxu0 0.0
    %2642 = vmatprep.subr.mxu0 0.0
    %2643 = vmatpush2.xpose.msra.mxu0 0.0
    %2644 = vmatprep.subr.mxu0 0.0
    %2645 = vmatpush2.xpose.msra.mxu0 0.0
    %2646 = vmatprep.subr.mxu0 0.0
    %2647 = vmatpush2.xpose.msra.mxu0 0.0
    %2648 = vmatprep.mubr.f32.mxu0 0.0
    %2649 = vmatmul.mubr.f32.gmra.mxu0 %v2576
    %v2650 = vpop.f32.mrf.mxu0
    %v2651 = vadd.f32 0.0, %v2650
    %v2652 = vpop.f32.mrf.mxu0
    %2653 = vmatprep.mubr.f32.mxu0 0.0
    %2654 = vmatmul.mubr.f32.gmra.mxu0 %v2578
    %v2655 = vpop.f32.mrf.mxu0
    %v2656 = vadd.f32 0.0, %v2655
    %v2657 = vpop.f32.mrf.mxu0
    %2658 = vdwg.mxu0
    %2659 = vrot.lane.b32.xlu0 %v784, 96
    %v2660 = vpop.permute.xlu0 %2659
    %2661 = vrot.lane.b32.xlu0 %v786, 96
    %v2662 = vpop.permute.xlu0 %2661
    %v2663 = vsel %vm835, %v784, 0
    %v2665 = vsel %vm835, %v786, 0
    %v2667 = vsel %vm835, %v2660, 0
    %v2669 = vsel %vm835, %v2662, 0
    %2671 = vmatprep.subr.mxu0 0.0
    %2672 = vmatpush1.xpose.msra.mxu0 0.0
    %2673 = vmatprep.subr.mxu0 0.0
    %2674 = vmatpush1.xpose.msra.mxu0 0.0
    %2675 = vmatprep.subr.mxu0 0.0
    %2676 = vmatpush1.xpose.msra.mxu0 0.0
    %2677 = vmatprep.subr.mxu0 0.0
    %2678 = vmatpush1.xpose.msra.mxu0 0.0
    %2679 = vmatprep.subr.mxu0 0.0
    %2680 = vmatpush1.xpose.msra.mxu0 0.0
    %2681 = vmatprep.subr.mxu0 0.0
    %2682 = vmatpush1.xpose.msra.mxu0 0.0
    %2683 = vmatprep.subr.mxu0 0.0
    %2684 = vmatpush1.xpose.msra.mxu0 0.0
    %2685 = vmatprep.subr.mxu0 0.0
    %2686 = vmatpush1.xpose.msra.mxu0 0.0
    %2687 = vmatprep.subr.mxu0 0.0
    %2688 = vmatpush1.xpose.msra.mxu0 0.0
    %2689 = vmatprep.subr.mxu0 0.0
    %2690 = vmatpush1.xpose.msra.mxu0 0.0
    %2691 = vmatprep.subr.mxu0 0.0
    %2692 = vmatpush1.xpose.msra.mxu0 0.0
    %2693 = vmatprep.subr.mxu0 0.0
    %2694 = vmatpush1.xpose.msra.mxu0 0.0
    %2695 = vmatprep.subr.mxu0 0.0
    %2696 = vmatpush1.xpose.msra.mxu0 0.0
    %2697 = vmatprep.subr.mxu0 0.0
    %2698 = vmatpush1.xpose.msra.mxu0 0.0
    %2699 = vmatprep.subr.mxu0 0.0
    %2700 = vmatpush1.xpose.msra.mxu0 %v2669
    %2701 = vmatprep.subr.mxu0 0.0
    %2702 = vmatpush1.xpose.msra.mxu0 %v2667
    %2703 = vmatprep.subr.mxu0 0.0
    %2704 = vmatpush2.xpose.msra.mxu0 0.0
    %2705 = vmatprep.subr.mxu0 0.0
    %2706 = vmatpush2.xpose.msra.mxu0 0.0
    %2707 = vmatprep.subr.mxu0 0.0
    %2708 = vmatpush2.xpose.msra.mxu0 0.0
    %2709 = vmatprep.subr.mxu0 0.0
    %2710 = vmatpush2.xpose.msra.mxu0 0.0
    %2711 = vmatprep.subr.mxu0 0.0
    %2712 = vmatpush2.xpose.msra.mxu0 0.0
    %2713 = vmatprep.subr.mxu0 0.0
    %2714 = vmatpush2.xpose.msra.mxu0 0.0
    %2715 = vmatprep.subr.mxu0 0.0
    %2716 = vmatpush2.xpose.msra.mxu0 0.0
    %2717 = vmatprep.subr.mxu0 0.0
    %2718 = vmatpush2.xpose.msra.mxu0 0.0
    %2719 = vmatprep.subr.mxu0 0.0
    %2720 = vmatpush2.xpose.msra.mxu0 0.0
    %2721 = vmatprep.subr.mxu0 0.0
    %2722 = vmatpush2.xpose.msra.mxu0 0.0
    %2723 = vmatprep.subr.mxu0 0.0
    %2724 = vmatpush2.xpose.msra.mxu0 0.0
    %2725 = vmatprep.subr.mxu0 0.0
    %2726 = vmatpush2.xpose.msra.mxu0 0.0
    %2727 = vmatprep.subr.mxu0 0.0
    %2728 = vmatpush2.xpose.msra.mxu0 0.0
    %2729 = vmatprep.subr.mxu0 0.0
    %2730 = vmatpush2.xpose.msra.mxu0 0.0
    %2731 = vmatprep.subr.mxu0 0.0
    %2732 = vmatpush2.xpose.msra.mxu0 0.0
    %2733 = vmatprep.subr.mxu0 0.0
    %2734 = vmatpush2.xpose.msra.mxu0 0.0
    %2735 = vmatprep.mubr.f32.mxu0 0.0
    %2736 = vmatmul.mubr.f32.gmra.mxu0 %v2663
    %v2737 = vpop.f32.mrf.mxu0
    %v2738 = vadd.f32 0.0, %v2737
    %v2739 = vpop.f32.mrf.mxu0
    %2740 = vmatprep.mubr.f32.mxu0 0.0
    %2741 = vmatmul.mubr.f32.gmra.mxu0 %v2665
    %v2742 = vpop.f32.mrf.mxu0
    %v2743 = vadd.f32 0.0, %v2742
    %v2744 = vpop.f32.mrf.mxu0
    %2745 = vdwg.mxu0
    %2746 = vrot.lane.b32.xlu0 %v788, 96
    %v2747 = vpop.permute.xlu0 %2746
    %2748 = vrot.lane.b32.xlu0 %v790, 96
    %v2749 = vpop.permute.xlu0 %2748
    %v2750 = vsel %vm835, %v788, 0
    %v2752 = vsel %vm835, %v790, 0
    %v2754 = vsel %vm835, %v2747, 0
    %v2756 = vsel %vm835, %v2749, 0
    %2758 = vmatprep.subr.mxu0 0.0
    %2759 = vmatpush1.xpose.msra.mxu0 0.0
    %2760 = vmatprep.subr.mxu0 0.0
    %2761 = vmatpush1.xpose.msra.mxu0 0.0
    %2762 = vmatprep.subr.mxu0 0.0
    %2763 = vmatpush1.xpose.msra.mxu0 0.0
    %2764 = vmatprep.subr.mxu0 0.0
    %2765 = vmatpush1.xpose.msra.mxu0 0.0
    %2766 = vmatprep.subr.mxu0 0.0
    %2767 = vmatpush1.xpose.msra.mxu0 0.0
    %2768 = vmatprep.subr.mxu0 0.0
    %2769 = vmatpush1.xpose.msra.mxu0 0.0
    %2770 = vmatprep.subr.mxu0 0.0
    %2771 = vmatpush1.xpose.msra.mxu0 0.0
    %2772 = vmatprep.subr.mxu0 0.0
    %2773 = vmatpush1.xpose.msra.mxu0 0.0
    %2774 = vmatprep.subr.mxu0 0.0
    %2775 = vmatpush1.xpose.msra.mxu0 0.0
    %2776 = vmatprep.subr.mxu0 0.0
    %2777 = vmatpush1.xpose.msra.mxu0 0.0
    %2778 = vmatprep.subr.mxu0 0.0
    %2779 = vmatpush1.xpose.msra.mxu0 0.0
    %2780 = vmatprep.subr.mxu0 0.0
    %2781 = vmatpush1.xpose.msra.mxu0 0.0
    %2782 = vmatprep.subr.mxu0 0.0
    %2783 = vmatpush1.xpose.msra.mxu0 0.0
    %2784 = vmatprep.subr.mxu0 0.0
    %2785 = vmatpush1.xpose.msra.mxu0 0.0
    %2786 = vmatprep.subr.mxu0 0.0
    %2787 = vmatpush1.xpose.msra.mxu0 %v2756
    %2788 = vmatprep.subr.mxu0 0.0
    %2789 = vmatpush1.xpose.msra.mxu0 %v2754
    %2790 = vmatprep.subr.mxu0 0.0
    %2791 = vmatpush2.xpose.msra.mxu0 0.0
    %2792 = vmatprep.subr.mxu0 0.0
    %2793 = vmatpush2.xpose.msra.mxu0 0.0
    %2794 = vmatprep.subr.mxu0 0.0
    %2795 = vmatpush2.xpose.msra.mxu0 0.0
    %2796 = vmatprep.subr.mxu0 0.0
    %2797 = vmatpush2.xpose.msra.mxu0 0.0
    %2798 = vmatprep.subr.mxu0 0.0
    %2799 = vmatpush2.xpose.msra.mxu0 0.0
    %2800 = vmatprep.subr.mxu0 0.0
    %2801 = vmatpush2.xpose.msra.mxu0 0.0
    %2802 = vmatprep.subr.mxu0 0.0
    %2803 = vmatpush2.xpose.msra.mxu0 0.0
    %2804 = vmatprep.subr.mxu0 0.0
    %2805 = vmatpush2.xpose.msra.mxu0 0.0
    %2806 = vmatprep.subr.mxu0 0.0
    %2807 = vmatpush2.xpose.msra.mxu0 0.0
    %2808 = vmatprep.subr.mxu0 0.0
    %2809 = vmatpush2.xpose.msra.mxu0 0.0
    %2810 = vmatprep.subr.mxu0 0.0
    %2811 = vmatpush2.xpose.msra.mxu0 0.0
    %2812 = vmatprep.subr.mxu0 0.0
    %2813 = vmatpush2.xpose.msra.mxu0 0.0
    %2814 = vmatprep.subr.mxu0 0.0
    %2815 = vmatpush2.xpose.msra.mxu0 0.0
    %2816 = vmatprep.subr.mxu0 0.0
    %2817 = vmatpush2.xpose.msra.mxu0 0.0
    %2818 = vmatprep.subr.mxu0 0.0
    %2819 = vmatpush2.xpose.msra.mxu0 0.0
    %2820 = vmatprep.subr.mxu0 0.0
    %2821 = vmatpush2.xpose.msra.mxu0 0.0
    %2822 = vmatprep.mubr.f32.mxu0 0.0
    %2823 = vmatmul.mubr.f32.gmra.mxu0 %v2750
    %v2824 = vpop.f32.mrf.mxu0
    %v2825 = vadd.f32 0.0, %v2824
    %v2826 = vpop.f32.mrf.mxu0
    %2827 = vmatprep.mubr.f32.mxu0 0.0
    %2828 = vmatmul.mubr.f32.gmra.mxu0 %v2752
    %v2829 = vpop.f32.mrf.mxu0
    %v2830 = vadd.f32 0.0, %v2829
    %v2831 = vpop.f32.mrf.mxu0
    %2832 = vdwg.mxu0
    %2833 = vrot.lane.b32.xlu0 %v792, 96
    %v2834 = vpop.permute.xlu0 %2833
    %2835 = vrot.lane.b32.xlu0 %v794, 96
    %v2836 = vpop.permute.xlu0 %2835
    %v2837 = vsel %vm835, %v792, 0
    %v2839 = vsel %vm835, %v794, 0
    %v2841 = vsel %vm835, %v2834, 0
    %v2843 = vsel %vm835, %v2836, 0
    %2845 = vmatprep.subr.mxu0 0.0
    %2846 = vmatpush1.xpose.msra.mxu0 0.0
    %2847 = vmatprep.subr.mxu0 0.0
    %2848 = vmatpush1.xpose.msra.mxu0 0.0
    %2849 = vmatprep.subr.mxu0 0.0
    %2850 = vmatpush1.xpose.msra.mxu0 0.0
    %2851 = vmatprep.subr.mxu0 0.0
    %2852 = vmatpush1.xpose.msra.mxu0 0.0
    %2853 = vmatprep.subr.mxu0 0.0
    %2854 = vmatpush1.xpose.msra.mxu0 0.0
    %2855 = vmatprep.subr.mxu0 0.0
    %2856 = vmatpush1.xpose.msra.mxu0 0.0
    %2857 = vmatprep.subr.mxu0 0.0
    %2858 = vmatpush1.xpose.msra.mxu0 0.0
    %2859 = vmatprep.subr.mxu0 0.0
    %2860 = vmatpush1.xpose.msra.mxu0 0.0
    %2861 = vmatprep.subr.mxu0 0.0
    %2862 = vmatpush1.xpose.msra.mxu0 0.0
    %2863 = vmatprep.subr.mxu0 0.0
    %2864 = vmatpush1.xpose.msra.mxu0 0.0
    %2865 = vmatprep.subr.mxu0 0.0
    %2866 = vmatpush1.xpose.msra.mxu0 0.0
    %2867 = vmatprep.subr.mxu0 0.0
    %2868 = vmatpush1.xpose.msra.mxu0 0.0
    %2869 = vmatprep.subr.mxu0 0.0
    %2870 = vmatpush1.xpose.msra.mxu0 0.0
    %2871 = vmatprep.subr.mxu0 0.0
    %2872 = vmatpush1.xpose.msra.mxu0 0.0
    %2873 = vmatprep.subr.mxu0 0.0
    %2874 = vmatpush1.xpose.msra.mxu0 %v2843
    %2875 = vmatprep.subr.mxu0 0.0
    %2876 = vmatpush1.xpose.msra.mxu0 %v2841
    %2877 = vmatprep.subr.mxu0 0.0
    %2878 = vmatpush2.xpose.msra.mxu0 0.0
    %2879 = vmatprep.subr.mxu0 0.0
    %2880 = vmatpush2.xpose.msra.mxu0 0.0
    %2881 = vmatprep.subr.mxu0 0.0
    %2882 = vmatpush2.xpose.msra.mxu0 0.0
    %2883 = vmatprep.subr.mxu0 0.0
    %2884 = vmatpush2.xpose.msra.mxu0 0.0
    %2885 = vmatprep.subr.mxu0 0.0
    %2886 = vmatpush2.xpose.msra.mxu0 0.0
    %2887 = vmatprep.subr.mxu0 0.0
    %2888 = vmatpush2.xpose.msra.mxu0 0.0
    %2889 = vmatprep.subr.mxu0 0.0
    %2890 = vmatpush2.xpose.msra.mxu0 0.0
    %2891 = vmatprep.subr.mxu0 0.0
    %2892 = vmatpush2.xpose.msra.mxu0 0.0
    %2893 = vmatprep.subr.mxu0 0.0
    %2894 = vmatpush2.xpose.msra.mxu0 0.0
    %2895 = vmatprep.subr.mxu0 0.0
    %2896 = vmatpush2.xpose.msra.mxu0 0.0
    %2897 = vmatprep.subr.mxu0 0.0
    %2898 = vmatpush2.xpose.msra.mxu0 0.0
    %2899 = vmatprep.subr.mxu0 0.0
    %2900 = vmatpush2.xpose.msra.mxu0 0.0
    %2901 = vmatprep.subr.mxu0 0.0
    %2902 = vmatpush2.xpose.msra.mxu0 0.0
    %2903 = vmatprep.subr.mxu0 0.0
    %2904 = vmatpush2.xpose.msra.mxu0 0.0
    %2905 = vmatprep.subr.mxu0 0.0
    %2906 = vmatpush2.xpose.msra.mxu0 0.0
    %2907 = vmatprep.subr.mxu0 0.0
    %2908 = vmatpush2.xpose.msra.mxu0 0.0
    %2909 = vmatprep.mubr.f32.mxu0 0.0
    %2910 = vmatmul.mubr.f32.gmra.mxu0 %v2837
    %v2911 = vpop.f32.mrf.mxu0
    %v2912 = vadd.f32 0.0, %v2911
    %v2913 = vpop.f32.mrf.mxu0
    %2914 = vmatprep.mubr.f32.mxu0 0.0
    %2915 = vmatmul.mubr.f32.gmra.mxu0 %v2839
    %v2916 = vpop.f32.mrf.mxu0
    %v2917 = vadd.f32 0.0, %v2916
    %v2918 = vpop.f32.mrf.mxu0
    %2919 = vdwg.mxu0
    %2920 = vrot.lane.b32.xlu0 %v796, 96
    %v2921 = vpop.permute.xlu0 %2920
    %2922 = vrot.lane.b32.xlu0 %v798, 96
    %v2923 = vpop.permute.xlu0 %2922
    %v2924 = vsel %vm835, %v796, 0
    %v2926 = vsel %vm835, %v798, 0
    %v2928 = vsel %vm835, %v2921, 0
    %v2930 = vsel %vm835, %v2923, 0
    %2932 = vmatprep.subr.mxu0 0.0
    %2933 = vmatpush1.xpose.msra.mxu0 0.0
    %2934 = vmatprep.subr.mxu0 0.0
    %2935 = vmatpush1.xpose.msra.mxu0 0.0
    %2936 = vmatprep.subr.mxu0 0.0
    %2937 = vmatpush1.xpose.msra.mxu0 0.0
    %2938 = vmatprep.subr.mxu0 0.0
    %2939 = vmatpush1.xpose.msra.mxu0 0.0
    %2940 = vmatprep.subr.mxu0 0.0
    %2941 = vmatpush1.xpose.msra.mxu0 0.0
    %2942 = vmatprep.subr.mxu0 0.0
    %2943 = vmatpush1.xpose.msra.mxu0 0.0
    %2944 = vmatprep.subr.mxu0 0.0
    %2945 = vmatpush1.xpose.msra.mxu0 0.0
    %2946 = vmatprep.subr.mxu0 0.0
    %2947 = vmatpush1.xpose.msra.mxu0 0.0
    %2948 = vmatprep.subr.mxu0 0.0
    %2949 = vmatpush1.xpose.msra.mxu0 0.0
    %2950 = vmatprep.subr.mxu0 0.0
    %2951 = vmatpush1.xpose.msra.mxu0 0.0
    %2952 = vmatprep.subr.mxu0 0.0
    %2953 = vmatpush1.xpose.msra.mxu0 0.0
    %2954 = vmatprep.subr.mxu0 0.0
    %2955 = vmatpush1.xpose.msra.mxu0 0.0
    %2956 = vmatprep.subr.mxu0 0.0
    %2957 = vmatpush1.xpose.msra.mxu0 0.0
    %2958 = vmatprep.subr.mxu0 0.0
    %2959 = vmatpush1.xpose.msra.mxu0 0.0
    %2960 = vmatprep.subr.mxu0 0.0
    %2961 = vmatpush1.xpose.msra.mxu0 %v2930
    %2962 = vmatprep.subr.mxu0 0.0
    %2963 = vmatpush1.xpose.msra.mxu0 %v2928
    %2964 = vmatprep.subr.mxu0 0.0
    %2965 = vmatpush2.xpose.msra.mxu0 0.0
    %2966 = vmatprep.subr.mxu0 0.0
    %2967 = vmatpush2.xpose.msra.mxu0 0.0
    %2968 = vmatprep.subr.mxu0 0.0
    %2969 = vmatpush2.xpose.msra.mxu0 0.0
    %2970 = vmatprep.subr.mxu0 0.0
    %2971 = vmatpush2.xpose.msra.mxu0 0.0
    %2972 = vmatprep.subr.mxu0 0.0
    %2973 = vmatpush2.xpose.msra.mxu0 0.0
    %2974 = vmatprep.subr.mxu0 0.0
    %2975 = vmatpush2.xpose.msra.mxu0 0.0
    %2976 = vmatprep.subr.mxu0 0.0
    %2977 = vmatpush2.xpose.msra.mxu0 0.0
    %2978 = vmatprep.subr.mxu0 0.0
    %2979 = vmatpush2.xpose.msra.mxu0 0.0
    %2980 = vmatprep.subr.mxu0 0.0
    %2981 = vmatpush2.xpose.msra.mxu0 0.0
    %2982 = vmatprep.subr.mxu0 0.0
    %2983 = vmatpush2.xpose.msra.mxu0 0.0
    %2984 = vmatprep.subr.mxu0 0.0
    %2985 = vmatpush2.xpose.msra.mxu0 0.0
    %2986 = vmatprep.subr.mxu0 0.0
    %2987 = vmatpush2.xpose.msra.mxu0 0.0
    %2988 = vmatprep.subr.mxu0 0.0
    %2989 = vmatpush2.xpose.msra.mxu0 0.0
    %2990 = vmatprep.subr.mxu0 0.0
    %2991 = vmatpush2.xpose.msra.mxu0 0.0
    %2992 = vmatprep.subr.mxu0 0.0
    %2993 = vmatpush2.xpose.msra.mxu0 0.0
    %2994 = vmatprep.subr.mxu0 0.0
    %2995 = vmatpush2.xpose.msra.mxu0 0.0
    %2996 = vmatprep.mubr.f32.mxu0 0.0
    %2997 = vmatmul.mubr.f32.gmra.mxu0 %v2924
    %v2998 = vpop.f32.mrf.mxu0
    %v2999 = vadd.f32 0.0, %v2998
    %v3000 = vpop.f32.mrf.mxu0
    %3001 = vmatprep.mubr.f32.mxu0 0.0
    %3002 = vmatmul.mubr.f32.gmra.mxu0 %v2926
    %v3003 = vpop.f32.mrf.mxu0
    %v3004 = vadd.f32 0.0, %v3003
    %v3005 = vpop.f32.mrf.mxu0
    %3006 = vdwg.mxu0
    %3007 = vrot.lane.b32.xlu0 %v800, 96
    %v3008 = vpop.permute.xlu0 %3007
    %3009 = vrot.lane.b32.xlu0 %v802, 96
    %v3010 = vpop.permute.xlu0 %3009
    %v3011 = vsel %vm835, %v800, 0
    %v3013 = vsel %vm835, %v802, 0
    %v3015 = vsel %vm835, %v3008, 0
    %v3017 = vsel %vm835, %v3010, 0
    %3019 = vmatprep.subr.mxu0 0.0
    %3020 = vmatpush1.xpose.msra.mxu0 0.0
    %3021 = vmatprep.subr.mxu0 0.0
    %3022 = vmatpush1.xpose.msra.mxu0 0.0
    %3023 = vmatprep.subr.mxu0 0.0
    %3024 = vmatpush1.xpose.msra.mxu0 0.0
    %3025 = vmatprep.subr.mxu0 0.0
    %3026 = vmatpush1.xpose.msra.mxu0 0.0
    %3027 = vmatprep.subr.mxu0 0.0
    %3028 = vmatpush1.xpose.msra.mxu0 0.0
    %3029 = vmatprep.subr.mxu0 0.0
    %3030 = vmatpush1.xpose.msra.mxu0 0.0
    %3031 = vmatprep.subr.mxu0 0.0
    %3032 = vmatpush1.xpose.msra.mxu0 0.0
    %3033 = vmatprep.subr.mxu0 0.0
    %3034 = vmatpush1.xpose.msra.mxu0 0.0
    %3035 = vmatprep.subr.mxu0 0.0
    %3036 = vmatpush1.xpose.msra.mxu0 0.0
    %3037 = vmatprep.subr.mxu0 0.0
    %3038 = vmatpush1.xpose.msra.mxu0 0.0
    %3039 = vmatprep.subr.mxu0 0.0
    %3040 = vmatpush1.xpose.msra.mxu0 0.0
    %3041 = vmatprep.subr.mxu0 0.0
    %3042 = vmatpush1.xpose.msra.mxu0 0.0
    %3043 = vmatprep.subr.mxu0 0.0
    %3044 = vmatpush1.xpose.msra.mxu0 0.0
    %3045 = vmatprep.subr.mxu0 0.0
    %3046 = vmatpush1.xpose.msra.mxu0 0.0
    %3047 = vmatprep.subr.mxu0 0.0
    %3048 = vmatpush1.xpose.msra.mxu0 %v3017
    %3049 = vmatprep.subr.mxu0 0.0
    %3050 = vmatpush1.xpose.msra.mxu0 %v3015
    %3051 = vmatprep.subr.mxu0 0.0
    %3052 = vmatpush2.xpose.msra.mxu0 0.0
    %3053 = vmatprep.subr.mxu0 0.0
    %3054 = vmatpush2.xpose.msra.mxu0 0.0
    %3055 = vmatprep.subr.mxu0 0.0
    %3056 = vmatpush2.xpose.msra.mxu0 0.0
    %3057 = vmatprep.subr.mxu0 0.0
    %3058 = vmatpush2.xpose.msra.mxu0 0.0
    %3059 = vmatprep.subr.mxu0 0.0
    %3060 = vmatpush2.xpose.msra.mxu0 0.0
    %3061 = vmatprep.subr.mxu0 0.0
    %3062 = vmatpush2.xpose.msra.mxu0 0.0
    %3063 = vmatprep.subr.mxu0 0.0
    %3064 = vmatpush2.xpose.msra.mxu0 0.0
    %3065 = vmatprep.subr.mxu0 0.0
    %3066 = vmatpush2.xpose.msra.mxu0 0.0
    %3067 = vmatprep.subr.mxu0 0.0
    %3068 = vmatpush2.xpose.msra.mxu0 0.0
    %3069 = vmatprep.subr.mxu0 0.0
    %3070 = vmatpush2.xpose.msra.mxu0 0.0
    %3071 = vmatprep.subr.mxu0 0.0
    %3072 = vmatpush2.xpose.msra.mxu0 0.0
    %3073 = vmatprep.subr.mxu0 0.0
    %3074 = vmatpush2.xpose.msra.mxu0 0.0
    %3075 = vmatprep.subr.mxu0 0.0
    %3076 = vmatpush2.xpose.msra.mxu0 0.0
    %3077 = vmatprep.subr.mxu0 0.0
    %3078 = vmatpush2.xpose.msra.mxu0 0.0
    %3079 = vmatprep.subr.mxu0 0.0
    %3080 = vmatpush2.xpose.msra.mxu0 0.0
    %3081 = vmatprep.subr.mxu0 0.0
    %3082 = vmatpush2.xpose.msra.mxu0 0.0
    %3083 = vmatprep.mubr.f32.mxu0 0.0
    %3084 = vmatmul.mubr.f32.gmra.mxu0 %v3011
    %v3085 = vpop.f32.mrf.mxu0
    %v3086 = vadd.f32 0.0, %v3085
    %v3087 = vpop.f32.mrf.mxu0
    %3088 = vmatprep.mubr.f32.mxu0 0.0
    %3089 = vmatmul.mubr.f32.gmra.mxu0 %v3013
    %v3090 = vpop.f32.mrf.mxu0
    %v3091 = vadd.f32 0.0, %v3090
    %v3092 = vpop.f32.mrf.mxu0
    %3093 = vdwg.mxu0
    %3094 = vrot.lane.b32.xlu0 %v804, 96
    %v3095 = vpop.permute.xlu0 %3094
    %3096 = vrot.lane.b32.xlu0 %v806, 96
    %v3097 = vpop.permute.xlu0 %3096
    %v3098 = vsel %vm835, %v804, 0
    %v3100 = vsel %vm835, %v806, 0
    %v3102 = vsel %vm835, %v3095, 0
    %v3104 = vsel %vm835, %v3097, 0
    %3106 = vmatprep.subr.mxu0 0.0
    %3107 = vmatpush1.xpose.msra.mxu0 0.0
    %3108 = vmatprep.subr.mxu0 0.0
    %3109 = vmatpush1.xpose.msra.mxu0 0.0
    %3110 = vmatprep.subr.mxu0 0.0
    %3111 = vmatpush1.xpose.msra.mxu0 0.0
    %3112 = vmatprep.subr.mxu0 0.0
    %3113 = vmatpush1.xpose.msra.mxu0 0.0
    %3114 = vmatprep.subr.mxu0 0.0
    %3115 = vmatpush1.xpose.msra.mxu0 0.0
    %3116 = vmatprep.subr.mxu0 0.0
    %3117 = vmatpush1.xpose.msra.mxu0 0.0
    %3118 = vmatprep.subr.mxu0 0.0
    %3119 = vmatpush1.xpose.msra.mxu0 0.0
    %3120 = vmatprep.subr.mxu0 0.0
    %3121 = vmatpush1.xpose.msra.mxu0 0.0
    %3122 = vmatprep.subr.mxu0 0.0
    %3123 = vmatpush1.xpose.msra.mxu0 0.0
    %3124 = vmatprep.subr.mxu0 0.0
    %3125 = vmatpush1.xpose.msra.mxu0 0.0
    %3126 = vmatprep.subr.mxu0 0.0
    %3127 = vmatpush1.xpose.msra.mxu0 0.0
    %3128 = vmatprep.subr.mxu0 0.0
    %3129 = vmatpush1.xpose.msra.mxu0 0.0
    %3130 = vmatprep.subr.mxu0 0.0
    %3131 = vmatpush1.xpose.msra.mxu0 0.0
    %3132 = vmatprep.subr.mxu0 0.0
    %3133 = vmatpush1.xpose.msra.mxu0 0.0
    %3134 = vmatprep.subr.mxu0 0.0
    %3135 = vmatpush1.xpose.msra.mxu0 %v3104
    %3136 = vmatprep.subr.mxu0 0.0
    %3137 = vmatpush1.xpose.msra.mxu0 %v3102
    %3138 = vmatprep.subr.mxu0 0.0
    %3139 = vmatpush2.xpose.msra.mxu0 0.0
    %3140 = vmatprep.subr.mxu0 0.0
    %3141 = vmatpush2.xpose.msra.mxu0 0.0
    %3142 = vmatprep.subr.mxu0 0.0
    %3143 = vmatpush2.xpose.msra.mxu0 0.0
    %3144 = vmatprep.subr.mxu0 0.0
    %3145 = vmatpush2.xpose.msra.mxu0 0.0
    %3146 = vmatprep.subr.mxu0 0.0
    %3147 = vmatpush2.xpose.msra.mxu0 0.0
    %3148 = vmatprep.subr.mxu0 0.0
    %3149 = vmatpush2.xpose.msra.mxu0 0.0
    %3150 = vmatprep.subr.mxu0 0.0
    %3151 = vmatpush2.xpose.msra.mxu0 0.0
    %3152 = vmatprep.subr.mxu0 0.0
    %3153 = vmatpush2.xpose.msra.mxu0 0.0
    %3154 = vmatprep.subr.mxu0 0.0
    %3155 = vmatpush2.xpose.msra.mxu0 0.0
    %3156 = vmatprep.subr.mxu0 0.0
    %3157 = vmatpush2.xpose.msra.mxu0 0.0
    %3158 = vmatprep.subr.mxu0 0.0
    %3159 = vmatpush2.xpose.msra.mxu0 0.0
    %3160 = vmatprep.subr.mxu0 0.0
    %3161 = vmatpush2.xpose.msra.mxu0 0.0
    %3162 = vmatprep.subr.mxu0 0.0
    %3163 = vmatpush2.xpose.msra.mxu0 0.0
    %3164 = vmatprep.subr.mxu0 0.0
    %3165 = vmatpush2.xpose.msra.mxu0 0.0
    %3166 = vmatprep.subr.mxu0 0.0
    %3167 = vmatpush2.xpose.msra.mxu0 0.0
    %3168 = vmatprep.subr.mxu0 0.0
    %3169 = vmatpush2.xpose.msra.mxu0 0.0
    %3170 = vmatprep.mubr.f32.mxu0 0.0
    %3171 = vmatmul.mubr.f32.gmra.mxu0 %v3098
    %v3172 = vpop.f32.mrf.mxu0
    %v3173 = vadd.f32 0.0, %v3172
    %v3174 = vpop.f32.mrf.mxu0
    %3175 = vmatprep.mubr.f32.mxu0 0.0
    %3176 = vmatmul.mubr.f32.gmra.mxu0 %v3100
    %v3177 = vpop.f32.mrf.mxu0
    %v3178 = vadd.f32 0.0, %v3177
    %v3179 = vpop.f32.mrf.mxu0
    %3180 = vdwg.mxu0
    %3181 = vrot.lane.b32.xlu0 %v808, 96
    %v3182 = vpop.permute.xlu0 %3181
    %3183 = vrot.lane.b32.xlu0 %v810, 96
    %v3184 = vpop.permute.xlu0 %3183
    %v3185 = vsel %vm835, %v808, 0
    %v3187 = vsel %vm835, %v810, 0
    %v3189 = vsel %vm835, %v3182, 0
    %v3191 = vsel %vm835, %v3184, 0
    %3193 = vmatprep.subr.mxu0 0.0
    %3194 = vmatpush1.xpose.msra.mxu0 0.0
    %3195 = vmatprep.subr.mxu0 0.0
    %3196 = vmatpush1.xpose.msra.mxu0 0.0
    %3197 = vmatprep.subr.mxu0 0.0
    %3198 = vmatpush1.xpose.msra.mxu0 0.0
    %3199 = vmatprep.subr.mxu0 0.0
    %3200 = vmatpush1.xpose.msra.mxu0 0.0
    %3201 = vmatprep.subr.mxu0 0.0
    %3202 = vmatpush1.xpose.msra.mxu0 0.0
    %3203 = vmatprep.subr.mxu0 0.0
    %3204 = vmatpush1.xpose.msra.mxu0 0.0
    %3205 = vmatprep.subr.mxu0 0.0
    %3206 = vmatpush1.xpose.msra.mxu0 0.0
    %3207 = vmatprep.subr.mxu0 0.0
    %3208 = vmatpush1.xpose.msra.mxu0 0.0
    %3209 = vmatprep.subr.mxu0 0.0
    %3210 = vmatpush1.xpose.msra.mxu0 0.0
    %3211 = vmatprep.subr.mxu0 0.0
    %3212 = vmatpush1.xpose.msra.mxu0 0.0
    %3213 = vmatprep.subr.mxu0 0.0
    %3214 = vmatpush1.xpose.msra.mxu0 0.0
    %3215 = vmatprep.subr.mxu0 0.0
    %3216 = vmatpush1.xpose.msra.mxu0 0.0
    %3217 = vmatprep.subr.mxu0 0.0
    %3218 = vmatpush1.xpose.msra.mxu0 0.0
    %3219 = vmatprep.subr.mxu0 0.0
    %3220 = vmatpush1.xpose.msra.mxu0 0.0
    %3221 = vmatprep.subr.mxu0 0.0
    %3222 = vmatpush1.xpose.msra.mxu0 %v3191
    %3223 = vmatprep.subr.mxu0 0.0
    %3224 = vmatpush1.xpose.msra.mxu0 %v3189
    %3225 = vmatprep.subr.mxu0 0.0
    %3226 = vmatpush2.xpose.msra.mxu0 0.0
    %3227 = vmatprep.subr.mxu0 0.0
    %3228 = vmatpush2.xpose.msra.mxu0 0.0
    %3229 = vmatprep.subr.mxu0 0.0
    %3230 = vmatpush2.xpose.msra.mxu0 0.0
    %3231 = vmatprep.subr.mxu0 0.0
    %3232 = vmatpush2.xpose.msra.mxu0 0.0
    %3233 = vmatprep.subr.mxu0 0.0
    %3234 = vmatpush2.xpose.msra.mxu0 0.0
    %3235 = vmatprep.subr.mxu0 0.0
    %3236 = vmatpush2.xpose.msra.mxu0 0.0
    %3237 = vmatprep.subr.mxu0 0.0
    %3238 = vmatpush2.xpose.msra.mxu0 0.0
    %3239 = vmatprep.subr.mxu0 0.0
    %3240 = vmatpush2.xpose.msra.mxu0 0.0
    %3241 = vmatprep.subr.mxu0 0.0
    %3242 = vmatpush2.xpose.msra.mxu0 0.0
    %3243 = vmatprep.subr.mxu0 0.0
    %3244 = vmatpush2.xpose.msra.mxu0 0.0
    %3245 = vmatprep.subr.mxu0 0.0
    %3246 = vmatpush2.xpose.msra.mxu0 0.0
    %3247 = vmatprep.subr.mxu0 0.0
    %3248 = vmatpush2.xpose.msra.mxu0 0.0
    %3249 = vmatprep.subr.mxu0 0.0
    %3250 = vmatpush2.xpose.msra.mxu0 0.0
    %3251 = vmatprep.subr.mxu0 0.0
    %3252 = vmatpush2.xpose.msra.mxu0 0.0
    %3253 = vmatprep.subr.mxu0 0.0
    %3254 = vmatpush2.xpose.msra.mxu0 0.0
    %3255 = vmatprep.subr.mxu0 0.0
    %3256 = vmatpush2.xpose.msra.mxu0 0.0
    %3257 = vmatprep.mubr.f32.mxu0 0.0
    %3258 = vmatmul.mubr.f32.gmra.mxu0 %v3185
    %v3259 = vpop.f32.mrf.mxu0
    %v3260 = vadd.f32 0.0, %v3259
    %v3261 = vpop.f32.mrf.mxu0
    %3262 = vmatprep.mubr.f32.mxu0 0.0
    %3263 = vmatmul.mubr.f32.gmra.mxu0 %v3187
    %v3264 = vpop.f32.mrf.mxu0
    %v3265 = vadd.f32 0.0, %v3264
    %v3266 = vpop.f32.mrf.mxu0
    %3267 = vdwg.mxu0
    %3268 = vrot.lane.b32.xlu0 %v812, 96
    %v3269 = vpop.permute.xlu0 %3268
    %3270 = vrot.lane.b32.xlu0 %v814, 96
    %v3271 = vpop.permute.xlu0 %3270
    %v3272 = vsel %vm835, %v812, 0
    %v3274 = vsel %vm835, %v814, 0
    %v3276 = vsel %vm835, %v3269, 0
    %v3278 = vsel %vm835, %v3271, 0
    %3280 = vmatprep.subr.mxu0 0.0
    %3281 = vmatpush1.xpose.msra.mxu0 0.0
    %3282 = vmatprep.subr.mxu0 0.0
    %3283 = vmatpush1.xpose.msra.mxu0 0.0
    %3284 = vmatprep.subr.mxu0 0.0
    %3285 = vmatpush1.xpose.msra.mxu0 0.0
    %3286 = vmatprep.subr.mxu0 0.0
    %3287 = vmatpush1.xpose.msra.mxu0 0.0
    %3288 = vmatprep.subr.mxu0 0.0
    %3289 = vmatpush1.xpose.msra.mxu0 0.0
    %3290 = vmatprep.subr.mxu0 0.0
    %3291 = vmatpush1.xpose.msra.mxu0 0.0
    %3292 = vmatprep.subr.mxu0 0.0
    %3293 = vmatpush1.xpose.msra.mxu0 0.0
    %3294 = vmatprep.subr.mxu0 0.0
    %3295 = vmatpush1.xpose.msra.mxu0 0.0
    %3296 = vmatprep.subr.mxu0 0.0
    %3297 = vmatpush1.xpose.msra.mxu0 0.0
    %3298 = vmatprep.subr.mxu0 0.0
    %3299 = vmatpush1.xpose.msra.mxu0 0.0
    %3300 = vmatprep.subr.mxu0 0.0
    %3301 = vmatpush1.xpose.msra.mxu0 0.0
    %3302 = vmatprep.subr.mxu0 0.0
    %3303 = vmatpush1.xpose.msra.mxu0 0.0
    %3304 = vmatprep.subr.mxu0 0.0
    %3305 = vmatpush1.xpose.msra.mxu0 0.0
    %3306 = vmatprep.subr.mxu0 0.0
    %3307 = vmatpush1.xpose.msra.mxu0 0.0
    %3308 = vmatprep.subr.mxu0 0.0
    %3309 = vmatpush1.xpose.msra.mxu0 %v3278
    %3310 = vmatprep.subr.mxu0 0.0
    %3311 = vmatpush1.xpose.msra.mxu0 %v3276
    %3312 = vmatprep.subr.mxu0 0.0
    %3313 = vmatpush2.xpose.msra.mxu0 0.0
    %3314 = vmatprep.subr.mxu0 0.0
    %3315 = vmatpush2.xpose.msra.mxu0 0.0
    %3316 = vmatprep.subr.mxu0 0.0
    %3317 = vmatpush2.xpose.msra.mxu0 0.0
    %3318 = vmatprep.subr.mxu0 0.0
    %3319 = vmatpush2.xpose.msra.mxu0 0.0
    %3320 = vmatprep.subr.mxu0 0.0
    %3321 = vmatpush2.xpose.msra.mxu0 0.0
    %3322 = vmatprep.subr.mxu0 0.0
    %3323 = vmatpush2.xpose.msra.mxu0 0.0
    %3324 = vmatprep.subr.mxu0 0.0
    %3325 = vmatpush2.xpose.msra.mxu0 0.0
    %3326 = vmatprep.subr.mxu0 0.0
    %3327 = vmatpush2.xpose.msra.mxu0 0.0
    %3328 = vmatprep.subr.mxu0 0.0
    %3329 = vmatpush2.xpose.msra.mxu0 0.0
    %3330 = vmatprep.subr.mxu0 0.0
    %3331 = vmatpush2.xpose.msra.mxu0 0.0
    %3332 = vmatprep.subr.mxu0 0.0
    %3333 = vmatpush2.xpose.msra.mxu0 0.0
    %3334 = vmatprep.subr.mxu0 0.0
    %3335 = vmatpush2.xpose.msra.mxu0 0.0
    %3336 = vmatprep.subr.mxu0 0.0
    %3337 = vmatpush2.xpose.msra.mxu0 0.0
    %3338 = vmatprep.subr.mxu0 0.0
    %3339 = vmatpush2.xpose.msra.mxu0 0.0
    %3340 = vmatprep.subr.mxu0 0.0
    %3341 = vmatpush2.xpose.msra.mxu0 0.0
    %3342 = vmatprep.subr.mxu0 0.0
    %3343 = vmatpush2.xpose.msra.mxu0 0.0
    %3344 = vmatprep.mubr.f32.mxu0 0.0
    %3345 = vmatmul.mubr.f32.gmra.mxu0 %v3272
    %v3346 = vpop.f32.mrf.mxu0
    %v3347 = vadd.f32 0.0, %v3346
    %v3348 = vpop.f32.mrf.mxu0
    %3349 = vmatprep.mubr.f32.mxu0 0.0
    %3350 = vmatmul.mubr.f32.gmra.mxu0 %v3274
    %v3351 = vpop.f32.mrf.mxu0
    %v3352 = vadd.f32 0.0, %v3351
    %v3353 = vpop.f32.mrf.mxu0
    %3354 = vdwg.mxu0
    %3355 = vrot.lane.b32.xlu0 %v816, 96
    %v3356 = vpop.permute.xlu0 %3355
    %3357 = vrot.lane.b32.xlu0 %v818, 96
    %v3358 = vpop.permute.xlu0 %3357
    %v3359 = vsel %vm835, %v816, 0
    %v3361 = vsel %vm835, %v818, 0
    %v3363 = vsel %vm835, %v3356, 0
    %v3365 = vsel %vm835, %v3358, 0
    %3367 = vmatprep.subr.mxu0 0.0
    %3368 = vmatpush1.xpose.msra.mxu0 0.0
    %3369 = vmatprep.subr.mxu0 0.0
    %3370 = vmatpush1.xpose.msra.mxu0 0.0
    %3371 = vmatprep.subr.mxu0 0.0
    %3372 = vmatpush1.xpose.msra.mxu0 0.0
    %3373 = vmatprep.subr.mxu0 0.0
    %3374 = vmatpush1.xpose.msra.mxu0 0.0
    %3375 = vmatprep.subr.mxu0 0.0
    %3376 = vmatpush1.xpose.msra.mxu0 0.0
    %3377 = vmatprep.subr.mxu0 0.0
    %3378 = vmatpush1.xpose.msra.mxu0 0.0
    %3379 = vmatprep.subr.mxu0 0.0
    %3380 = vmatpush1.xpose.msra.mxu0 0.0
    %3381 = vmatprep.subr.mxu0 0.0
    %3382 = vmatpush1.xpose.msra.mxu0 0.0
    %3383 = vmatprep.subr.mxu0 0.0
    %3384 = vmatpush1.xpose.msra.mxu0 0.0
    %3385 = vmatprep.subr.mxu0 0.0
    %3386 = vmatpush1.xpose.msra.mxu0 0.0
    %3387 = vmatprep.subr.mxu0 0.0
    %3388 = vmatpush1.xpose.msra.mxu0 0.0
    %3389 = vmatprep.subr.mxu0 0.0
    %3390 = vmatpush1.xpose.msra.mxu0 0.0
    %3391 = vmatprep.subr.mxu0 0.0
    %3392 = vmatpush1.xpose.msra.mxu0 0.0
    %3393 = vmatprep.subr.mxu0 0.0
    %3394 = vmatpush1.xpose.msra.mxu0 0.0
    %3395 = vmatprep.subr.mxu0 0.0
    %3396 = vmatpush1.xpose.msra.mxu0 %v3365
    %3397 = vmatprep.subr.mxu0 0.0
    %3398 = vmatpush1.xpose.msra.mxu0 %v3363
    %3399 = vmatprep.subr.mxu0 0.0
    %3400 = vmatpush2.xpose.msra.mxu0 0.0
    %3401 = vmatprep.subr.mxu0 0.0
    %3402 = vmatpush2.xpose.msra.mxu0 0.0
    %3403 = vmatprep.subr.mxu0 0.0
    %3404 = vmatpush2.xpose.msra.mxu0 0.0
    %3405 = vmatprep.subr.mxu0 0.0
    %3406 = vmatpush2.xpose.msra.mxu0 0.0
    %3407 = vmatprep.subr.mxu0 0.0
    %3408 = vmatpush2.xpose.msra.mxu0 0.0
    %3409 = vmatprep.subr.mxu0 0.0
    %3410 = vmatpush2.xpose.msra.mxu0 0.0
    %3411 = vmatprep.subr.mxu0 0.0
    %3412 = vmatpush2.xpose.msra.mxu0 0.0
    %3413 = vmatprep.subr.mxu0 0.0
    %3414 = vmatpush2.xpose.msra.mxu0 0.0
    %3415 = vmatprep.subr.mxu0 0.0
    %3416 = vmatpush2.xpose.msra.mxu0 0.0
    %3417 = vmatprep.subr.mxu0 0.0
    %3418 = vmatpush2.xpose.msra.mxu0 0.0
    %3419 = vmatprep.subr.mxu0 0.0
    %3420 = vmatpush2.xpose.msra.mxu0 0.0
    %3421 = vmatprep.subr.mxu0 0.0
    %3422 = vmatpush2.xpose.msra.mxu0 0.0
    %3423 = vmatprep.subr.mxu0 0.0
    %3424 = vmatpush2.xpose.msra.mxu0 0.0
    %3425 = vmatprep.subr.mxu0 0.0
    %3426 = vmatpush2.xpose.msra.mxu0 0.0
    %3427 = vmatprep.subr.mxu0 0.0
    %3428 = vmatpush2.xpose.msra.mxu0 0.0
    %3429 = vmatprep.subr.mxu0 0.0
    %3430 = vmatpush2.xpose.msra.mxu0 0.0
    %3431 = vmatprep.mubr.f32.mxu0 0.0
    %3432 = vmatmul.mubr.f32.gmra.mxu0 %v3359
    %v3433 = vpop.f32.mrf.mxu0
    %v3434 = vadd.f32 0.0, %v3433
    %v3435 = vpop.f32.mrf.mxu0
    %3436 = vmatprep.mubr.f32.mxu0 0.0
    %3437 = vmatmul.mubr.f32.gmra.mxu0 %v3361
    %v3438 = vpop.f32.mrf.mxu0
    %v3439 = vadd.f32 0.0, %v3438
    %v3440 = vpop.f32.mrf.mxu0
    %3441 = vdwg.mxu0
    %3442 = vrot.lane.b32.xlu0 %v820, 96
    %v3443 = vpop.permute.xlu0 %3442
    %3444 = vrot.lane.b32.xlu0 %v822, 96
    %v3445 = vpop.permute.xlu0 %3444
    %v3446 = vsel %vm835, %v820, 0
    %v3448 = vsel %vm835, %v822, 0
    %v3450 = vsel %vm835, %v3443, 0
    %v3452 = vsel %vm835, %v3445, 0
    %3454 = vmatprep.subr.mxu0 0.0
    %3455 = vmatpush1.xpose.msra.mxu0 0.0
    %3456 = vmatprep.subr.mxu0 0.0
    %3457 = vmatpush1.xpose.msra.mxu0 0.0
    %3458 = vmatprep.subr.mxu0 0.0
    %3459 = vmatpush1.xpose.msra.mxu0 0.0
    %3460 = vmatprep.subr.mxu0 0.0
    %3461 = vmatpush1.xpose.msra.mxu0 0.0
    %3462 = vmatprep.subr.mxu0 0.0
    %3463 = vmatpush1.xpose.msra.mxu0 0.0
    %3464 = vmatprep.subr.mxu0 0.0
    %3465 = vmatpush1.xpose.msra.mxu0 0.0
    %3466 = vmatprep.subr.mxu0 0.0
    %3467 = vmatpush1.xpose.msra.mxu0 0.0
    %3468 = vmatprep.subr.mxu0 0.0
    %3469 = vmatpush1.xpose.msra.mxu0 0.0
    %3470 = vmatprep.subr.mxu0 0.0
    %3471 = vmatpush1.xpose.msra.mxu0 0.0
    %3472 = vmatprep.subr.mxu0 0.0
    %3473 = vmatpush1.xpose.msra.mxu0 0.0
    %3474 = vmatprep.subr.mxu0 0.0
    %3475 = vmatpush1.xpose.msra.mxu0 0.0
    %3476 = vmatprep.subr.mxu0 0.0
    %3477 = vmatpush1.xpose.msra.mxu0 0.0
    %3478 = vmatprep.subr.mxu0 0.0
    %3479 = vmatpush1.xpose.msra.mxu0 0.0
    %3480 = vmatprep.subr.mxu0 0.0
    %3481 = vmatpush1.xpose.msra.mxu0 0.0
    %3482 = vmatprep.subr.mxu0 0.0
    %3483 = vmatpush1.xpose.msra.mxu0 %v3452
    %3484 = vmatprep.subr.mxu0 0.0
    %3485 = vmatpush1.xpose.msra.mxu0 %v3450
    %3486 = vmatprep.subr.mxu0 0.0
    %3487 = vmatpush2.xpose.msra.mxu0 0.0
    %3488 = vmatprep.subr.mxu0 0.0
    %3489 = vmatpush2.xpose.msra.mxu0 0.0
    %3490 = vmatprep.subr.mxu0 0.0
    %3491 = vmatpush2.xpose.msra.mxu0 0.0
    %3492 = vmatprep.subr.mxu0 0.0
    %3493 = vmatpush2.xpose.msra.mxu0 0.0
    %3494 = vmatprep.subr.mxu0 0.0
    %3495 = vmatpush2.xpose.msra.mxu0 0.0
    %3496 = vmatprep.subr.mxu0 0.0
    %3497 = vmatpush2.xpose.msra.mxu0 0.0
    %3498 = vmatprep.subr.mxu0 0.0
    %3499 = vmatpush2.xpose.msra.mxu0 0.0
    %3500 = vmatprep.subr.mxu0 0.0
    %3501 = vmatpush2.xpose.msra.mxu0 0.0
    %3502 = vmatprep.subr.mxu0 0.0
    %3503 = vmatpush2.xpose.msra.mxu0 0.0
    %3504 = vmatprep.subr.mxu0 0.0
    %3505 = vmatpush2.xpose.msra.mxu0 0.0
    %3506 = vmatprep.subr.mxu0 0.0
    %3507 = vmatpush2.xpose.msra.mxu0 0.0
    %3508 = vmatprep.subr.mxu0 0.0
    %3509 = vmatpush2.xpose.msra.mxu0 0.0
    %3510 = vmatprep.subr.mxu0 0.0
    %3511 = vmatpush2.xpose.msra.mxu0 0.0
    %3512 = vmatprep.subr.mxu0 0.0
    %3513 = vmatpush2.xpose.msra.mxu0 0.0
    %3514 = vmatprep.subr.mxu0 0.0
    %3515 = vmatpush2.xpose.msra.mxu0 0.0
    %3516 = vmatprep.subr.mxu0 0.0
    %3517 = vmatpush2.xpose.msra.mxu0 0.0
    %3518 = vmatprep.mubr.f32.mxu0 0.0
    %3519 = vmatmul.mubr.f32.gmra.mxu0 %v3446
    %v3520 = vpop.f32.mrf.mxu0
    %v3521 = vadd.f32 0.0, %v3520
    %v3522 = vpop.f32.mrf.mxu0
    %3523 = vmatprep.mubr.f32.mxu0 0.0
    %3524 = vmatmul.mubr.f32.gmra.mxu0 %v3448
    %v3525 = vpop.f32.mrf.mxu0
    %v3526 = vadd.f32 0.0, %v3525
    %v3527 = vpop.f32.mrf.mxu0
    %3528 = vdwg.mxu0
    %3529 = vrot.lane.b32.xlu0 %v824, 96
    %v3530 = vpop.permute.xlu0 %3529
    %3531 = vrot.lane.b32.xlu0 %v826, 96
    %v3532 = vpop.permute.xlu0 %3531
    %v3533 = vsel %vm835, %v824, 0
    %v3535 = vsel %vm835, %v826, 0
    %v3537 = vsel %vm835, %v3530, 0
    %v3539 = vsel %vm835, %v3532, 0
    %3541 = vmatprep.subr.mxu0 0.0
    %3542 = vmatpush1.xpose.msra.mxu0 0.0
    %3543 = vmatprep.subr.mxu0 0.0
    %3544 = vmatpush1.xpose.msra.mxu0 0.0
    %3545 = vmatprep.subr.mxu0 0.0
    %3546 = vmatpush1.xpose.msra.mxu0 0.0
    %3547 = vmatprep.subr.mxu0 0.0
    %3548 = vmatpush1.xpose.msra.mxu0 0.0
    %3549 = vmatprep.subr.mxu0 0.0
    %3550 = vmatpush1.xpose.msra.mxu0 0.0
    %3551 = vmatprep.subr.mxu0 0.0
    %3552 = vmatpush1.xpose.msra.mxu0 0.0
    %3553 = vmatprep.subr.mxu0 0.0
    %3554 = vmatpush1.xpose.msra.mxu0 0.0
    %3555 = vmatprep.subr.mxu0 0.0
    %3556 = vmatpush1.xpose.msra.mxu0 0.0
    %3557 = vmatprep.subr.mxu0 0.0
    %3558 = vmatpush1.xpose.msra.mxu0 0.0
    %3559 = vmatprep.subr.mxu0 0.0
    %3560 = vmatpush1.xpose.msra.mxu0 0.0
    %3561 = vmatprep.subr.mxu0 0.0
    %3562 = vmatpush1.xpose.msra.mxu0 0.0
    %3563 = vmatprep.subr.mxu0 0.0
    %3564 = vmatpush1.xpose.msra.mxu0 0.0
    %3565 = vmatprep.subr.mxu0 0.0
    %3566 = vmatpush1.xpose.msra.mxu0 0.0
    %3567 = vmatprep.subr.mxu0 0.0
    %3568 = vmatpush1.xpose.msra.mxu0 0.0
    %3569 = vmatprep.subr.mxu0 0.0
    %3570 = vmatpush1.xpose.msra.mxu0 %v3539
    %3571 = vmatprep.subr.mxu0 0.0
    %3572 = vmatpush1.xpose.msra.mxu0 %v3537
    %3573 = vmatprep.subr.mxu0 0.0
    %3574 = vmatpush2.xpose.msra.mxu0 0.0
    %3575 = vmatprep.subr.mxu0 0.0
    %3576 = vmatpush2.xpose.msra.mxu0 0.0
    %3577 = vmatprep.subr.mxu0 0.0
    %3578 = vmatpush2.xpose.msra.mxu0 0.0
    %3579 = vmatprep.subr.mxu0 0.0
    %3580 = vmatpush2.xpose.msra.mxu0 0.0
    %3581 = vmatprep.subr.mxu0 0.0
    %3582 = vmatpush2.xpose.msra.mxu0 0.0
    %3583 = vmatprep.subr.mxu0 0.0
    %3584 = vmatpush2.xpose.msra.mxu0 0.0
    %3585 = vmatprep.subr.mxu0 0.0
    %3586 = vmatpush2.xpose.msra.mxu0 0.0
    %3587 = vmatprep.subr.mxu0 0.0
    %3588 = vmatpush2.xpose.msra.mxu0 0.0
    %3589 = vmatprep.subr.mxu0 0.0
    %3590 = vmatpush2.xpose.msra.mxu0 0.0
    %3591 = vmatprep.subr.mxu0 0.0
    %3592 = vmatpush2.xpose.msra.mxu0 0.0
    %3593 = vmatprep.subr.mxu0 0.0
    %3594 = vmatpush2.xpose.msra.mxu0 0.0
    %3595 = vmatprep.subr.mxu0 0.0
    %3596 = vmatpush2.xpose.msra.mxu0 0.0
    %3597 = vmatprep.subr.mxu0 0.0
    %3598 = vmatpush2.xpose.msra.mxu0 0.0
    %3599 = vmatprep.subr.mxu0 0.0
    %3600 = vmatpush2.xpose.msra.mxu0 0.0
    %3601 = vmatprep.subr.mxu0 0.0
    %3602 = vmatpush2.xpose.msra.mxu0 0.0
    %3603 = vmatprep.subr.mxu0 0.0
    %3604 = vmatpush2.xpose.msra.mxu0 0.0
    %3605 = vmatprep.mubr.f32.mxu0 0.0
    %3606 = vmatmul.mubr.f32.gmra.mxu0 %v3533
    %v3607 = vpop.f32.mrf.mxu0
    %v3608 = vadd.f32 0.0, %v3607
    %v3609 = vpop.f32.mrf.mxu0
    %3610 = vmatprep.mubr.f32.mxu0 0.0
    %3611 = vmatmul.mubr.f32.gmra.mxu0 %v3535
    %v3612 = vpop.f32.mrf.mxu0
    %v3613 = vadd.f32 0.0, %v3612
    %v3614 = vpop.f32.mrf.mxu0
    %3615 = vdwg.mxu0
    %v3616 = vmul.f32 %v911, 0.5
    %v3617 = vmul.f32 %v916, 0.5
    %v3618 = vmul.f32 %v998, 0.5
    %v3619 = vmul.f32 %v1003, 0.5
    %v3620 = vmul.f32 %v1085, 0.5
    %v3621 = vmul.f32 %v1090, 0.5
    %v3622 = vmul.f32 %v1172, 0.5
    %v3623 = vmul.f32 %v1177, 0.5
    %v3624 = vmul.f32 %v1259, 0.5
    %v3625 = vmul.f32 %v1264, 0.5
    %v3626 = vmul.f32 %v1346, 0.5
    %v3627 = vmul.f32 %v1351, 0.5
    %v3628 = vmul.f32 %v1433, 0.5
    %v3629 = vmul.f32 %v1438, 0.5
    %v3630 = vmul.f32 %v1520, 0.5
    %v3631 = vmul.f32 %v1525, 0.5
    %v3632 = vmul.f32 %v1607, 0.5
    %v3633 = vmul.f32 %v1612, 0.5
    %v3634 = vmul.f32 %v1694, 0.5
    %v3635 = vmul.f32 %v1699, 0.5
    %v3636 = vmul.f32 %v1781, 0.5
    %v3637 = vmul.f32 %v1786, 0.5
    %v3638 = vmul.f32 %v1868, 0.5
    %v3639 = vmul.f32 %v1873, 0.5
    %v3640 = vmul.f32 %v1955, 0.5
    %v3641 = vmul.f32 %v1960, 0.5
    %v3642 = vmul.f32 %v2042, 0.5
    %v3643 = vmul.f32 %v2047, 0.5
    %v3644 = vmul.f32 %v2129, 0.5
    %v3645 = vmul.f32 %v2134, 0.5
    %v3646 = vmul.f32 %v2216, 0.5
    %v3647 = vmul.f32 %v2221, 0.5
    %v3648 = vmul.f32 %v2303, 0.5
    %v3649 = vmul.f32 %v2308, 0.5
    %v3650 = vmul.f32 %v2390, 0.5
    %v3651 = vmul.f32 %v2395, 0.5
    %v3652 = vmul.f32 %v2477, 0.5
    %v3653 = vmul.f32 %v2482, 0.5
    %v3654 = vmul.f32 %v2564, 0.5
    %v3655 = vmul.f32 %v2569, 0.5
    %v3656 = vmul.f32 %v2651, 0.5
    %v3657 = vmul.f32 %v2656, 0.5
    %v3658 = vmul.f32 %v2738, 0.5
    %v3659 = vmul.f32 %v2743, 0.5
    %v3660 = vmul.f32 %v2825, 0.5
    %v3661 = vmul.f32 %v2830, 0.5
    %v3662 = vmul.f32 %v2912, 0.5
    %v3663 = vmul.f32 %v2917, 0.5
    %v3664 = vmul.f32 %v2999, 0.5
    %v3665 = vmul.f32 %v3004, 0.5
    %v3666 = vmul.f32 %v3086, 0.5
    %v3667 = vmul.f32 %v3091, 0.5
    %v3668 = vmul.f32 %v3173, 0.5
    %v3669 = vmul.f32 %v3178, 0.5
    %v3670 = vmul.f32 %v3260, 0.5
    %v3671 = vmul.f32 %v3265, 0.5
    %v3672 = vmul.f32 %v3347, 0.5
    %v3673 = vmul.f32 %v3352, 0.5
    %v3674 = vmul.f32 %v3434, 0.5
    %v3675 = vmul.f32 %v3439, 0.5
    %v3676 = vmul.f32 %v3521, 0.5
    %v3677 = vmul.f32 %v3526, 0.5
    %v3678 = vmul.f32 %v3608, 0.5
    %v3679 = vmul.f32 %v3613, 0.5
    %v3680 = vadd.f32 %v3616, %v830
    %v3681 = vadd.f32 %v3617, %v830
    %v3682 = vadd.f32 %v3618, %v830
    %v3683 = vadd.f32 %v3619, %v830
    %v3684 = vadd.f32 %v3620, %v830
    %v3685 = vadd.f32 %v3621, %v830
    %v3686 = vadd.f32 %v3622, %v830
    %v3687 = vadd.f32 %v3623, %v830
    %v3688 = vadd.f32 %v3624, %v830
    %v3689 = vadd.f32 %v3625, %v830
    %v3690 = vadd.f32 %v3626, %v830
    %v3691 = vadd.f32 %v3627, %v830
    %v3692 = vadd.f32 %v3628, %v830
    %v3693 = vadd.f32 %v3629, %v830
    %v3694 = vadd.f32 %v3630, %v830
    %v3695 = vadd.f32 %v3631, %v830
    %v3696 = vadd.f32 %v3632, %v830
    %v3697 = vadd.f32 %v3633, %v830
    %v3698 = vadd.f32 %v3634, %v830
    %v3699 = vadd.f32 %v3635, %v830
    %v3700 = vadd.f32 %v3636, %v830
    %v3701 = vadd.f32 %v3637, %v830
    %v3702 = vadd.f32 %v3638, %v830
    %v3703 = vadd.f32 %v3639, %v830
    %v3704 = vadd.f32 %v3640, %v830
    %v3705 = vadd.f32 %v3641, %v830
    %v3706 = vadd.f32 %v3642, %v830
    %v3707 = vadd.f32 %v3643, %v830
    %v3708 = vadd.f32 %v3644, %v830
    %v3709 = vadd.f32 %v3645, %v830
    %v3710 = vadd.f32 %v3646, %v830
    %v3711 = vadd.f32 %v3647, %v830
    %v3712 = vadd.f32 %v3648, %v830
    %v3713 = vadd.f32 %v3649, %v830
    %v3714 = vadd.f32 %v3650, %v830
    %v3715 = vadd.f32 %v3651, %v830
    %v3716 = vadd.f32 %v3652, %v830
    %v3717 = vadd.f32 %v3653, %v830
    %v3718 = vadd.f32 %v3654, %v830
    %v3719 = vadd.f32 %v3655, %v830
    %v3720 = vadd.f32 %v3656, %v830
    %v3721 = vadd.f32 %v3657, %v830
    %v3722 = vadd.f32 %v3658, %v830
    %v3723 = vadd.f32 %v3659, %v830
    %v3724 = vadd.f32 %v3660, %v830
    %v3725 = vadd.f32 %v3661, %v830
    %v3726 = vadd.f32 %v3662, %v830
    %v3727 = vadd.f32 %v3663, %v830
    %v3728 = vadd.f32 %v3664, %v830
    %v3729 = vadd.f32 %v3665, %v830
    %v3730 = vadd.f32 %v3666, %v830
    %v3731 = vadd.f32 %v3667, %v830
    %v3732 = vadd.f32 %v3668, %v830
    %v3733 = vadd.f32 %v3669, %v830
    %v3734 = vadd.f32 %v3670, %v830
    %v3735 = vadd.f32 %v3671, %v830
    %v3736 = vadd.f32 %v3672, %v830
    %v3737 = vadd.f32 %v3673, %v830
    %v3738 = vadd.f32 %v3674, %v830
    %v3739 = vadd.f32 %v3675, %v830
    %v3740 = vadd.f32 %v3676, %v830
    %v3741 = vadd.f32 %v3677, %v830
    %v3742 = vadd.f32 %v3678, %v830
    %v3743 = vadd.f32 %v3679, %v830
    %v3744 = vsel %vm52, %v3680, -inf
    %3745 = vmax.xlane.f32.xlu0 %v3744
    %v3746 = vpop.xlane.xlu0 %3745
    %v3747 = vsel %vm52, %v3681, -inf
    %3748 = vmax.xlane.f32.xlu0 %v3747
    %v3749 = vpop.xlane.xlu0 %3748
    %v3750 = vsel %vm52, %v3682, -inf
    %3751 = vmax.xlane.f32.xlu0 %v3750
    %v3752 = vpop.xlane.xlu0 %3751
    %v3753 = vsel %vm52, %v3683, -inf
    %3754 = vmax.xlane.f32.xlu0 %v3753
    %v3755 = vpop.xlane.xlu0 %3754
    %v3756 = vsel %vm52, %v3684, -inf
    %3757 = vmax.xlane.f32.xlu0 %v3756
    %v3758 = vpop.xlane.xlu0 %3757
    %v3759 = vsel %vm52, %v3685, -inf
    %3760 = vmax.xlane.f32.xlu0 %v3759
    %v3761 = vpop.xlane.xlu0 %3760
    %v3762 = vsel %vm52, %v3686, -inf
    %3763 = vmax.xlane.f32.xlu0 %v3762
    %v3764 = vpop.xlane.xlu0 %3763
    %v3765 = vsel %vm52, %v3687, -inf
    %3766 = vmax.xlane.f32.xlu0 %v3765
    %v3767 = vpop.xlane.xlu0 %3766
    %v3768 = vsel %vm52, %v3688, -inf
    %3769 = vmax.xlane.f32.xlu0 %v3768
    %v3770 = vpop.xlane.xlu0 %3769
    %v3771 = vsel %vm52, %v3689, -inf
    %3772 = vmax.xlane.f32.xlu0 %v3771
    %v3773 = vpop.xlane.xlu0 %3772
    %v3774 = vsel %vm52, %v3690, -inf
    %3775 = vmax.xlane.f32.xlu0 %v3774
    %v3776 = vpop.xlane.xlu0 %3775
    %v3777 = vsel %vm52, %v3691, -inf
    %3778 = vmax.xlane.f32.xlu0 %v3777
    %v3779 = vpop.xlane.xlu0 %3778
    %v3780 = vsel %vm52, %v3692, -inf
    %3781 = vmax.xlane.f32.xlu0 %v3780
    %v3782 = vpop.xlane.xlu0 %3781
    %v3783 = vsel %vm52, %v3693, -inf
    %3784 = vmax.xlane.f32.xlu0 %v3783
    %v3785 = vpop.xlane.xlu0 %3784
    %v3786 = vsel %vm52, %v3694, -inf
    %3787 = vmax.xlane.f32.xlu0 %v3786
    %v3788 = vpop.xlane.xlu0 %3787
    %v3789 = vsel %vm52, %v3695, -inf
    %3790 = vmax.xlane.f32.xlu0 %v3789
    %v3791 = vpop.xlane.xlu0 %3790
    %v3792 = vsel %vm52, %v3696, -inf
    %3793 = vmax.xlane.f32.xlu0 %v3792
    %v3794 = vpop.xlane.xlu0 %3793
    %v3795 = vsel %vm52, %v3697, -inf
    %3796 = vmax.xlane.f32.xlu0 %v3795
    %v3797 = vpop.xlane.xlu0 %3796
    %v3798 = vsel %vm52, %v3698, -inf
    %3799 = vmax.xlane.f32.xlu0 %v3798
    %v3800 = vpop.xlane.xlu0 %3799
    %v3801 = vsel %vm52, %v3699, -inf
    %3802 = vmax.xlane.f32.xlu0 %v3801
    %v3803 = vpop.xlane.xlu0 %3802
    %v3804 = vsel %vm52, %v3700, -inf
    %3805 = vmax.xlane.f32.xlu0 %v3804
    %v3806 = vpop.xlane.xlu0 %3805
    %v3807 = vsel %vm52, %v3701, -inf
    %3808 = vmax.xlane.f32.xlu0 %v3807
    %v3809 = vpop.xlane.xlu0 %3808
    %v3810 = vsel %vm52, %v3702, -inf
    %3811 = vmax.xlane.f32.xlu0 %v3810
    %v3812 = vpop.xlane.xlu0 %3811
    %v3813 = vsel %vm52, %v3703, -inf
    %3814 = vmax.xlane.f32.xlu0 %v3813
    %v3815 = vpop.xlane.xlu0 %3814
    %v3816 = vsel %vm52, %v3704, -inf
    %3817 = vmax.xlane.f32.xlu0 %v3816
    %v3818 = vpop.xlane.xlu0 %3817
    %v3819 = vsel %vm52, %v3705, -inf
    %3820 = vmax.xlane.f32.xlu0 %v3819
    %v3821 = vpop.xlane.xlu0 %3820
    %v3822 = vsel %vm52, %v3706, -inf
    %3823 = vmax.xlane.f32.xlu0 %v3822
    %v3824 = vpop.xlane.xlu0 %3823
    %v3825 = vsel %vm52, %v3707, -inf
    %3826 = vmax.xlane.f32.xlu0 %v3825
    %v3827 = vpop.xlane.xlu0 %3826
    %v3828 = vsel %vm52, %v3708, -inf
    %3829 = vmax.xlane.f32.xlu0 %v3828
    %v3830 = vpop.xlane.xlu0 %3829
    %v3831 = vsel %vm52, %v3709, -inf
    %3832 = vmax.xlane.f32.xlu0 %v3831
    %v3833 = vpop.xlane.xlu0 %3832
    %v3834 = vsel %vm52, %v3710, -inf
    %3835 = vmax.xlane.f32.xlu0 %v3834
    %v3836 = vpop.xlane.xlu0 %3835
    %v3837 = vsel %vm52, %v3711, -inf
    %3838 = vmax.xlane.f32.xlu0 %v3837
    %v3839 = vpop.xlane.xlu0 %3838
    %v3840 = vsel %vm52, %v3712, -inf
    %3841 = vmax.xlane.f32.xlu0 %v3840
    %v3842 = vpop.xlane.xlu0 %3841
    %v3843 = vsel %vm52, %v3713, -inf
    %3844 = vmax.xlane.f32.xlu0 %v3843
    %v3845 = vpop.xlane.xlu0 %3844
    %v3846 = vsel %vm52, %v3714, -inf
    %3847 = vmax.xlane.f32.xlu0 %v3846
    %v3848 = vpop.xlane.xlu0 %3847
    %v3849 = vsel %vm52, %v3715, -inf
    %3850 = vmax.xlane.f32.xlu0 %v3849
    %v3851 = vpop.xlane.xlu0 %3850
    %v3852 = vsel %vm52, %v3716, -inf
    %3853 = vmax.xlane.f32.xlu0 %v3852
    %v3854 = vpop.xlane.xlu0 %3853
    %v3855 = vsel %vm52, %v3717, -inf
    %3856 = vmax.xlane.f32.xlu0 %v3855
    %v3857 = vpop.xlane.xlu0 %3856
    %v3858 = vsel %vm52, %v3718, -inf
    %3859 = vmax.xlane.f32.xlu0 %v3858
    %v3860 = vpop.xlane.xlu0 %3859
    %v3861 = vsel %vm52, %v3719, -inf
    %3862 = vmax.xlane.f32.xlu0 %v3861
    %v3863 = vpop.xlane.xlu0 %3862
    %v3864 = vsel %vm52, %v3720, -inf
    %3865 = vmax.xlane.f32.xlu0 %v3864
    %v3866 = vpop.xlane.xlu0 %3865
    %v3867 = vsel %vm52, %v3721, -inf
    %3868 = vmax.xlane.f32.xlu0 %v3867
    %v3869 = vpop.xlane.xlu0 %3868
    %v3870 = vsel %vm52, %v3722, -inf
    %3871 = vmax.xlane.f32.xlu0 %v3870
    %v3872 = vpop.xlane.xlu0 %3871
    %v3873 = vsel %vm52, %v3723, -inf
    %3874 = vmax.xlane.f32.xlu0 %v3873
    %v3875 = vpop.xlane.xlu0 %3874
    %v3876 = vsel %vm52, %v3724, -inf
    %3877 = vmax.xlane.f32.xlu0 %v3876
    %v3878 = vpop.xlane.xlu0 %3877
    %v3879 = vsel %vm52, %v3725, -inf
    %3880 = vmax.xlane.f32.xlu0 %v3879
    %v3881 = vpop.xlane.xlu0 %3880
    %v3882 = vsel %vm52, %v3726, -inf
    %3883 = vmax.xlane.f32.xlu0 %v3882
    %v3884 = vpop.xlane.xlu0 %3883
    %v3885 = vsel %vm52, %v3727, -inf
    %3886 = vmax.xlane.f32.xlu0 %v3885
    %v3887 = vpop.xlane.xlu0 %3886
    %v3888 = vsel %vm52, %v3728, -inf
    %3889 = vmax.xlane.f32.xlu0 %v3888
    %v3890 = vpop.xlane.xlu0 %3889
    %v3891 = vsel %vm52, %v3729, -inf
    %3892 = vmax.xlane.f32.xlu0 %v3891
    %v3893 = vpop.xlane.xlu0 %3892
    %v3894 = vsel %vm52, %v3730, -inf
    %3895 = vmax.xlane.f32.xlu0 %v3894
    %v3896 = vpop.xlane.xlu0 %3895
    %v3897 = vsel %vm52, %v3731, -inf
    %3898 = vmax.xlane.f32.xlu0 %v3897
    %v3899 = vpop.xlane.xlu0 %3898
    %v3900 = vsel %vm52, %v3732, -inf
    %3901 = vmax.xlane.f32.xlu0 %v3900
    %v3902 = vpop.xlane.xlu0 %3901
    %v3903 = vsel %vm52, %v3733, -inf
    %3904 = vmax.xlane.f32.xlu0 %v3903
    %v3905 = vpop.xlane.xlu0 %3904
    %v3906 = vsel %vm52, %v3734, -inf
    %3907 = vmax.xlane.f32.xlu0 %v3906
    %v3908 = vpop.xlane.xlu0 %3907
    %v3909 = vsel %vm52, %v3735, -inf
    %3910 = vmax.xlane.f32.xlu0 %v3909
    %v3911 = vpop.xlane.xlu0 %3910
    %v3912 = vsel %vm52, %v3736, -inf
    %3913 = vmax.xlane.f32.xlu0 %v3912
    %v3914 = vpop.xlane.xlu0 %3913
    %v3915 = vsel %vm52, %v3737, -inf
    %3916 = vmax.xlane.f32.xlu0 %v3915
    %v3917 = vpop.xlane.xlu0 %3916
    %v3918 = vsel %vm52, %v3738, -inf
    %3919 = vmax.xlane.f32.xlu0 %v3918
    %v3920 = vpop.xlane.xlu0 %3919
    %v3921 = vsel %vm52, %v3739, -inf
    %3922 = vmax.xlane.f32.xlu0 %v3921
    %v3923 = vpop.xlane.xlu0 %3922
    %v3924 = vsel %vm52, %v3740, -inf
    %3925 = vmax.xlane.f32.xlu0 %v3924
    %v3926 = vpop.xlane.xlu0 %3925
    %v3927 = vsel %vm52, %v3741, -inf
    %3928 = vmax.xlane.f32.xlu0 %v3927
    %v3929 = vpop.xlane.xlu0 %3928
    %v3930 = vsel %vm52, %v3742, -inf
    %3931 = vmax.xlane.f32.xlu0 %v3930
    %v3932 = vpop.xlane.xlu0 %3931
    %v3933 = vsel %vm52, %v3743, -inf
    %3934 = vmax.xlane.f32.xlu0 %v3933
    %v3935 = vpop.xlane.xlu0 %3934
    %v3936 = vsub.f32 %v3680, %v3746
    %v3937 = vsub.f32 %v3681, %v3749
    %v3938 = vsub.f32 %v3682, %v3752
    %v3939 = vsub.f32 %v3683, %v3755
    %v3940 = vsub.f32 %v3684, %v3758
    %v3941 = vsub.f32 %v3685, %v3761
    %v3942 = vsub.f32 %v3686, %v3764
    %v3943 = vsub.f32 %v3687, %v3767
    %v3944 = vsub.f32 %v3688, %v3770
    %v3945 = vsub.f32 %v3689, %v3773
    %v3946 = vsub.f32 %v3690, %v3776
    %v3947 = vsub.f32 %v3691, %v3779
    %v3948 = vsub.f32 %v3692, %v3782
    %v3949 = vsub.f32 %v3693, %v3785
    %v3950 = vsub.f32 %v3694, %v3788
    %v3951 = vsub.f32 %v3695, %v3791
    %v3952 = vsub.f32 %v3696, %v3794
    %v3953 = vsub.f32 %v3697, %v3797
    %v3954 = vsub.f32 %v3698, %v3800
    %v3955 = vsub.f32 %v3699, %v3803
    %v3956 = vsub.f32 %v3700, %v3806
    %v3957 = vsub.f32 %v3701, %v3809
    %v3958 = vsub.f32 %v3702, %v3812
    %v3959 = vsub.f32 %v3703, %v3815
    %v3960 = vsub.f32 %v3704, %v3818
    %v3961 = vsub.f32 %v3705, %v3821
    %v3962 = vsub.f32 %v3706, %v3824
    %v3963 = vsub.f32 %v3707, %v3827
    %v3964 = vsub.f32 %v3708, %v3830
    %v3965 = vsub.f32 %v3709, %v3833
    %v3966 = vsub.f32 %v3710, %v3836
    %v3967 = vsub.f32 %v3711, %v3839
    %v3968 = vsub.f32 %v3712, %v3842
    %v3969 = vsub.f32 %v3713, %v3845
    %v3970 = vsub.f32 %v3714, %v3848
    %v3971 = vsub.f32 %v3715, %v3851
    %v3972 = vsub.f32 %v3716, %v3854
    %v3973 = vsub.f32 %v3717, %v3857
    %v3974 = vsub.f32 %v3718, %v3860
    %v3975 = vsub.f32 %v3719, %v3863
    %v3976 = vsub.f32 %v3720, %v3866
    %v3977 = vsub.f32 %v3721, %v3869
    %v3978 = vsub.f32 %v3722, %v3872
    %v3979 = vsub.f32 %v3723, %v3875
    %v3980 = vsub.f32 %v3724, %v3878
    %v3981 = vsub.f32 %v3725, %v3881
    %v3982 = vsub.f32 %v3726, %v3884
    %v3983 = vsub.f32 %v3727, %v3887
    %v3984 = vsub.f32 %v3728, %v3890
    %v3985 = vsub.f32 %v3729, %v3893
    %v3986 = vsub.f32 %v3730, %v3896
    %v3987 = vsub.f32 %v3731, %v3899
    %v3988 = vsub.f32 %v3732, %v3902
    %v3989 = vsub.f32 %v3733, %v3905
    %v3990 = vsub.f32 %v3734, %v3908
    %v3991 = vsub.f32 %v3735, %v3911
    %v3992 = vsub.f32 %v3736, %v3914
    %v3993 = vsub.f32 %v3737, %v3917
    %v3994 = vsub.f32 %v3738, %v3920
    %v3995 = vsub.f32 %v3739, %v3923
    %v3996 = vsub.f32 %v3740, %v3926
    %v3997 = vsub.f32 %v3741, %v3929
    %v3998 = vsub.f32 %v3742, %v3932
    %v3999 = vsub.f32 %v3743, %v3935
    %v4000 = vmul.f32 %v3936, 1.442695
    %v4001 = vpow.pop %v4000
    %v4002 = vmul.f32 %v3937, 1.442695
    %v4003 = vpow.pop %v4002
    %v4004 = vmul.f32 %v3938, 1.442695
    %v4005 = vpow.pop %v4004
    %v4006 = vmul.f32 %v3939, 1.442695
    %v4007 = vpow.pop %v4006
    %v4008 = vmul.f32 %v3940, 1.442695
    %v4009 = vpow.pop %v4008
    %v4010 = vmul.f32 %v3941, 1.442695
    %v4011 = vpow.pop %v4010
    %v4012 = vmul.f32 %v3942, 1.442695
    %v4013 = vpow.pop %v4012
    %v4014 = vmul.f32 %v3943, 1.442695
    %v4015 = vpow.pop %v4014
    %v4016 = vmul.f32 %v3944, 1.442695
    %v4017 = vpow.pop %v4016
    %v4018 = vmul.f32 %v3945, 1.442695
    %v4019 = vpow.pop %v4018
    %v4020 = vmul.f32 %v3946, 1.442695
    %v4021 = vpow.pop %v4020
    %v4022 = vmul.f32 %v3947, 1.442695
    %v4023 = vpow.pop %v4022
    %v4024 = vmul.f32 %v3948, 1.442695
    %v4025 = vpow.pop %v4024
    %v4026 = vmul.f32 %v3949, 1.442695
    %v4027 = vpow.pop %v4026
    %v4028 = vmul.f32 %v3950, 1.442695
    %v4029 = vpow.pop %v4028
    %v4030 = vmul.f32 %v3951, 1.442695
    %v4031 = vpow.pop %v4030
    %v4032 = vmul.f32 %v3952, 1.442695
    %v4033 = vpow.pop %v4032
    %v4034 = vmul.f32 %v3953, 1.442695
    %v4035 = vpow.pop %v4034
    %v4036 = vmul.f32 %v3954, 1.442695
    %v4037 = vpow.pop %v4036
    %v4038 = vmul.f32 %v3955, 1.442695
    %v4039 = vpow.pop %v4038
    %v4040 = vmul.f32 %v3956, 1.442695
    %v4041 = vpow.pop %v4040
    %v4042 = vmul.f32 %v3957, 1.442695
    %v4043 = vpow.pop %v4042
    %v4044 = vmul.f32 %v3958, 1.442695
    %v4045 = vpow.pop %v4044
    %v4046 = vmul.f32 %v3959, 1.442695
    %v4047 = vpow.pop %v4046
    %v4048 = vmul.f32 %v3960, 1.442695
    %v4049 = vpow.pop %v4048
    %v4050 = vmul.f32 %v3961, 1.442695
    %v4051 = vpow.pop %v4050
    %v4052 = vmul.f32 %v3962, 1.442695
    %v4053 = vpow.pop %v4052
    %v4054 = vmul.f32 %v3963, 1.442695
    %v4055 = vpow.pop %v4054
    %v4056 = vmul.f32 %v3964, 1.442695
    %v4057 = vpow.pop %v4056
    %v4058 = vmul.f32 %v3965, 1.442695
    %v4059 = vpow.pop %v4058
    %v4060 = vmul.f32 %v3966, 1.442695
    %v4061 = vpow.pop %v4060
    %v4062 = vmul.f32 %v3967, 1.442695
    %v4063 = vpow.pop %v4062
    %v4064 = vmul.f32 %v3968, 1.442695
    %v4065 = vpow.pop %v4064
    %v4066 = vmul.f32 %v3969, 1.442695
    %v4067 = vpow.pop %v4066
    %v4068 = vmul.f32 %v3970, 1.442695
    %v4069 = vpow.pop %v4068
    %v4070 = vmul.f32 %v3971, 1.442695
    %v4071 = vpow.pop %v4070
    %v4072 = vmul.f32 %v3972, 1.442695
    %v4073 = vpow.pop %v4072
    %v4074 = vmul.f32 %v3973, 1.442695
    %v4075 = vpow.pop %v4074
    %v4076 = vmul.f32 %v3974, 1.442695
    %v4077 = vpow.pop %v4076
    %v4078 = vmul.f32 %v3975, 1.442695
    %v4079 = vpow.pop %v4078
    %v4080 = vmul.f32 %v3976, 1.442695
    %v4081 = vpow.pop %v4080
    %v4082 = vmul.f32 %v3977, 1.442695
    %v4083 = vpow.pop %v4082
    %v4084 = vmul.f32 %v3978, 1.442695
    %v4085 = vpow.pop %v4084
    %v4086 = vmul.f32 %v3979, 1.442695
    %v4087 = vpow.pop %v4086
    %v4088 = vmul.f32 %v3980, 1.442695
    %v4089 = vpow.pop %v4088
    %v4090 = vmul.f32 %v3981, 1.442695
    %v4091 = vpow.pop %v4090
    %v4092 = vmul.f32 %v3982, 1.442695
    %v4093 = vpow.pop %v4092
    %v4094 = vmul.f32 %v3983, 1.442695
    %v4095 = vpow.pop %v4094
    %v4096 = vmul.f32 %v3984, 1.442695
    %v4097 = vpow.pop %v4096
    %v4098 = vmul.f32 %v3985, 1.442695
    %v4099 = vpow.pop %v4098
    %v4100 = vmul.f32 %v3986, 1.442695
    %v4101 = vpow.pop %v4100
    %v4102 = vmul.f32 %v3987, 1.442695
    %v4103 = vpow.pop %v4102
    %v4104 = vmul.f32 %v3988, 1.442695
    %v4105 = vpow.pop %v4104
    %v4106 = vmul.f32 %v3989, 1.442695
    %v4107 = vpow.pop %v4106
    %v4108 = vmul.f32 %v3990, 1.442695
    %v4109 = vpow.pop %v4108
    %v4110 = vmul.f32 %v3991, 1.442695
    %v4111 = vpow.pop %v4110
    %v4112 = vmul.f32 %v3992, 1.442695
    %v4113 = vpow.pop %v4112
    %v4114 = vmul.f32 %v3993, 1.442695
    %v4115 = vpow.pop %v4114
    %v4116 = vmul.f32 %v3994, 1.442695
    %v4117 = vpow.pop %v4116
    %v4118 = vmul.f32 %v3995, 1.442695
    %v4119 = vpow.pop %v4118
    %v4120 = vmul.f32 %v3996, 1.442695
    %v4121 = vpow.pop %v4120
    %v4122 = vmul.f32 %v3997, 1.442695
    %v4123 = vpow.pop %v4122
    %v4124 = vmul.f32 %v3998, 1.442695
    %v4125 = vpow.pop %v4124
    %v4126 = vmul.f32 %v3999, 1.442695
    %v4127 = vpow.pop %v4126
    %v4128 = vsel %vm52, %v4001, 0.0
    %4129 = vadd.xlane.f32.xlu0 %v4128
    %v4130 = vpop.xlane.xlu0 %4129
    %v4131 = vsel %vm52, %v4003, 0.0
    %4132 = vadd.xlane.f32.xlu0 %v4131
    %v4133 = vpop.xlane.xlu0 %4132
    %v4134 = vsel %vm52, %v4005, 0.0
    %4135 = vadd.xlane.f32.xlu0 %v4134
    %v4136 = vpop.xlane.xlu0 %4135
    %v4137 = vsel %vm52, %v4007, 0.0
    %4138 = vadd.xlane.f32.xlu0 %v4137
    %v4139 = vpop.xlane.xlu0 %4138
    %v4140 = vsel %vm52, %v4009, 0.0
    %4141 = vadd.xlane.f32.xlu0 %v4140
    %v4142 = vpop.xlane.xlu0 %4141
    %v4143 = vsel %vm52, %v4011, 0.0
    %4144 = vadd.xlane.f32.xlu0 %v4143
    %v4145 = vpop.xlane.xlu0 %4144
    %v4146 = vsel %vm52, %v4013, 0.0
    %4147 = vadd.xlane.f32.xlu0 %v4146
    %v4148 = vpop.xlane.xlu0 %4147
    %v4149 = vsel %vm52, %v4015, 0.0
    %4150 = vadd.xlane.f32.xlu0 %v4149
    %v4151 = vpop.xlane.xlu0 %4150
    %v4152 = vsel %vm52, %v4017, 0.0
    %4153 = vadd.xlane.f32.xlu0 %v4152
    %v4154 = vpop.xlane.xlu0 %4153
    %v4155 = vsel %vm52, %v4019, 0.0
    %4156 = vadd.xlane.f32.xlu0 %v4155
    %v4157 = vpop.xlane.xlu0 %4156
    %v4158 = vsel %vm52, %v4021, 0.0
    %4159 = vadd.xlane.f32.xlu0 %v4158
    %v4160 = vpop.xlane.xlu0 %4159
    %v4161 = vsel %vm52, %v4023, 0.0
    %4162 = vadd.xlane.f32.xlu0 %v4161
    %v4163 = vpop.xlane.xlu0 %4162
    %v4164 = vsel %vm52, %v4025, 0.0
    %4165 = vadd.xlane.f32.xlu0 %v4164
    %v4166 = vpop.xlane.xlu0 %4165
    %v4167 = vsel %vm52, %v4027, 0.0
    %4168 = vadd.xlane.f32.xlu0 %v4167
    %v4169 = vpop.xlane.xlu0 %4168
    %v4170 = vsel %vm52, %v4029, 0.0
    %4171 = vadd.xlane.f32.xlu0 %v4170
    %v4172 = vpop.xlane.xlu0 %4171
    %v4173 = vsel %vm52, %v4031, 0.0
    %4174 = vadd.xlane.f32.xlu0 %v4173
    %v4175 = vpop.xlane.xlu0 %4174
    %v4176 = vsel %vm52, %v4033, 0.0
    %4177 = vadd.xlane.f32.xlu0 %v4176
    %v4178 = vpop.xlane.xlu0 %4177
    %v4179 = vsel %vm52, %v4035, 0.0
    %4180 = vadd.xlane.f32.xlu0 %v4179
    %v4181 = vpop.xlane.xlu0 %4180
    %v4182 = vsel %vm52, %v4037, 0.0
    %4183 = vadd.xlane.f32.xlu0 %v4182
    %v4184 = vpop.xlane.xlu0 %4183
    %v4185 = vsel %vm52, %v4039, 0.0
    %4186 = vadd.xlane.f32.xlu0 %v4185
    %v4187 = vpop.xlane.xlu0 %4186
    %v4188 = vsel %vm52, %v4041, 0.0
    %4189 = vadd.xlane.f32.xlu0 %v4188
    %v4190 = vpop.xlane.xlu0 %4189
    %v4191 = vsel %vm52, %v4043, 0.0
    %4192 = vadd.xlane.f32.xlu0 %v4191
    %v4193 = vpop.xlane.xlu0 %4192
    %v4194 = vsel %vm52, %v4045, 0.0
    %4195 = vadd.xlane.f32.xlu0 %v4194
    %v4196 = vpop.xlane.xlu0 %4195
    %v4197 = vsel %vm52, %v4047, 0.0
    %4198 = vadd.xlane.f32.xlu0 %v4197
    %v4199 = vpop.xlane.xlu0 %4198
    %v4200 = vsel %vm52, %v4049, 0.0
    %4201 = vadd.xlane.f32.xlu0 %v4200
    %v4202 = vpop.xlane.xlu0 %4201
    %v4203 = vsel %vm52, %v4051, 0.0
    %4204 = vadd.xlane.f32.xlu0 %v4203
    %v4205 = vpop.xlane.xlu0 %4204
    %v4206 = vsel %vm52, %v4053, 0.0
    %4207 = vadd.xlane.f32.xlu0 %v4206
    %v4208 = vpop.xlane.xlu0 %4207
    %v4209 = vsel %vm52, %v4055, 0.0
    %4210 = vadd.xlane.f32.xlu0 %v4209
    %v4211 = vpop.xlane.xlu0 %4210
    %v4212 = vsel %vm52, %v4057, 0.0
    %4213 = vadd.xlane.f32.xlu0 %v4212
    %v4214 = vpop.xlane.xlu0 %4213
    %v4215 = vsel %vm52, %v4059, 0.0
    %4216 = vadd.xlane.f32.xlu0 %v4215
    %v4217 = vpop.xlane.xlu0 %4216
    %v4218 = vsel %vm52, %v4061, 0.0
    %4219 = vadd.xlane.f32.xlu0 %v4218
    %v4220 = vpop.xlane.xlu0 %4219
    %v4221 = vsel %vm52, %v4063, 0.0
    %4222 = vadd.xlane.f32.xlu0 %v4221
    %v4223 = vpop.xlane.xlu0 %4222
    %v4224 = vsel %vm52, %v4065, 0.0
    %4225 = vadd.xlane.f32.xlu0 %v4224
    %v4226 = vpop.xlane.xlu0 %4225
    %v4227 = vsel %vm52, %v4067, 0.0
    %4228 = vadd.xlane.f32.xlu0 %v4227
    %v4229 = vpop.xlane.xlu0 %4228
    %v4230 = vsel %vm52, %v4069, 0.0
    %4231 = vadd.xlane.f32.xlu0 %v4230
    %v4232 = vpop.xlane.xlu0 %4231
    %v4233 = vsel %vm52, %v4071, 0.0
    %4234 = vadd.xlane.f32.xlu0 %v4233
    %v4235 = vpop.xlane.xlu0 %4234
    %v4236 = vsel %vm52, %v4073, 0.0
    %4237 = vadd.xlane.f32.xlu0 %v4236
    %v4238 = vpop.xlane.xlu0 %4237
    %v4239 = vsel %vm52, %v4075, 0.0
    %4240 = vadd.xlane.f32.xlu0 %v4239
    %v4241 = vpop.xlane.xlu0 %4240
    %v4242 = vsel %vm52, %v4077, 0.0
    %4243 = vadd.xlane.f32.xlu0 %v4242
    %v4244 = vpop.xlane.xlu0 %4243
    %v4245 = vsel %vm52, %v4079, 0.0
    %4246 = vadd.xlane.f32.xlu0 %v4245
    %v4247 = vpop.xlane.xlu0 %4246
    %v4248 = vsel %vm52, %v4081, 0.0
    %4249 = vadd.xlane.f32.xlu0 %v4248
    %v4250 = vpop.xlane.xlu0 %4249
    %v4251 = vsel %vm52, %v4083, 0.0
    %4252 = vadd.xlane.f32.xlu0 %v4251
    %v4253 = vpop.xlane.xlu0 %4252
    %v4254 = vsel %vm52, %v4085, 0.0
    %4255 = vadd.xlane.f32.xlu0 %v4254
    %v4256 = vpop.xlane.xlu0 %4255
    %v4257 = vsel %vm52, %v4087, 0.0
    %4258 = vadd.xlane.f32.xlu0 %v4257
    %v4259 = vpop.xlane.xlu0 %4258
    %v4260 = vsel %vm52, %v4089, 0.0
    %4261 = vadd.xlane.f32.xlu0 %v4260
    %v4262 = vpop.xlane.xlu0 %4261
    %v4263 = vsel %vm52, %v4091, 0.0
    %4264 = vadd.xlane.f32.xlu0 %v4263
    %v4265 = vpop.xlane.xlu0 %4264
    %v4266 = vsel %vm52, %v4093, 0.0
    %4267 = vadd.xlane.f32.xlu0 %v4266
    %v4268 = vpop.xlane.xlu0 %4267
    %v4269 = vsel %vm52, %v4095, 0.0
    %4270 = vadd.xlane.f32.xlu0 %v4269
    %v4271 = vpop.xlane.xlu0 %4270
    %v4272 = vsel %vm52, %v4097, 0.0
    %4273 = vadd.xlane.f32.xlu0 %v4272
    %v4274 = vpop.xlane.xlu0 %4273
    %v4275 = vsel %vm52, %v4099, 0.0
    %4276 = vadd.xlane.f32.xlu0 %v4275
    %v4277 = vpop.xlane.xlu0 %4276
    %v4278 = vsel %vm52, %v4101, 0.0
    %4279 = vadd.xlane.f32.xlu0 %v4278
    %v4280 = vpop.xlane.xlu0 %4279
    %v4281 = vsel %vm52, %v4103, 0.0
    %4282 = vadd.xlane.f32.xlu0 %v4281
    %v4283 = vpop.xlane.xlu0 %4282
    %v4284 = vsel %vm52, %v4105, 0.0
    %4285 = vadd.xlane.f32.xlu0 %v4284
    %v4286 = vpop.xlane.xlu0 %4285
    %v4287 = vsel %vm52, %v4107, 0.0
    %4288 = vadd.xlane.f32.xlu0 %v4287
    %v4289 = vpop.xlane.xlu0 %4288
    %v4290 = vsel %vm52, %v4109, 0.0
    %4291 = vadd.xlane.f32.xlu0 %v4290
    %v4292 = vpop.xlane.xlu0 %4291
    %v4293 = vsel %vm52, %v4111, 0.0
    %4294 = vadd.xlane.f32.xlu0 %v4293
    %v4295 = vpop.xlane.xlu0 %4294
    %v4296 = vsel %vm52, %v4113, 0.0
    %4297 = vadd.xlane.f32.xlu0 %v4296
    %v4298 = vpop.xlane.xlu0 %4297
    %v4299 = vsel %vm52, %v4115, 0.0
    %4300 = vadd.xlane.f32.xlu0 %v4299
    %v4301 = vpop.xlane.xlu0 %4300
    %v4302 = vsel %vm52, %v4117, 0.0
    %4303 = vadd.xlane.f32.xlu0 %v4302
    %v4304 = vpop.xlane.xlu0 %4303
    %v4305 = vsel %vm52, %v4119, 0.0
    %4306 = vadd.xlane.f32.xlu0 %v4305
    %v4307 = vpop.xlane.xlu0 %4306
    %v4308 = vsel %vm52, %v4121, 0.0
    %4309 = vadd.xlane.f32.xlu0 %v4308
    %v4310 = vpop.xlane.xlu0 %4309
    %v4311 = vsel %vm52, %v4123, 0.0
    %4312 = vadd.xlane.f32.xlu0 %v4311
    %v4313 = vpop.xlane.xlu0 %4312
    %v4314 = vsel %vm52, %v4125, 0.0
    %4315 = vadd.xlane.f32.xlu0 %v4314
    %v4316 = vpop.xlane.xlu0 %4315
    %v4317 = vsel %vm52, %v4127, 0.0
    %4318 = vadd.xlane.f32.xlu0 %v4317
    %v4319 = vpop.xlane.xlu0 %4318
    %v4320 = vrcp.pop %v4130
    %v4321 = vmul.f32 %v4001, %v4320
    %v4322 = vrcp.pop %v4133
    %v4323 = vmul.f32 %v4003, %v4322
    %v4324 = vrcp.pop %v4136
    %v4325 = vmul.f32 %v4005, %v4324
    %v4326 = vrcp.pop %v4139
    %v4327 = vmul.f32 %v4007, %v4326
    %v4328 = vrcp.pop %v4142
    %v4329 = vmul.f32 %v4009, %v4328
    %v4330 = vrcp.pop %v4145
    %v4331 = vmul.f32 %v4011, %v4330
    %v4332 = vrcp.pop %v4148
    %v4333 = vmul.f32 %v4013, %v4332
    %v4334 = vrcp.pop %v4151
    %v4335 = vmul.f32 %v4015, %v4334
    %v4336 = vrcp.pop %v4154
    %v4337 = vmul.f32 %v4017, %v4336
    %v4338 = vrcp.pop %v4157
    %v4339 = vmul.f32 %v4019, %v4338
    %v4340 = vrcp.pop %v4160
    %v4341 = vmul.f32 %v4021, %v4340
    %v4342 = vrcp.pop %v4163
    %v4343 = vmul.f32 %v4023, %v4342
    %v4344 = vrcp.pop %v4166
    %v4345 = vmul.f32 %v4025, %v4344
    %v4346 = vrcp.pop %v4169
    %v4347 = vmul.f32 %v4027, %v4346
    %v4348 = vrcp.pop %v4172
    %v4349 = vmul.f32 %v4029, %v4348
    %v4350 = vrcp.pop %v4175
    %v4351 = vmul.f32 %v4031, %v4350
    %v4352 = vrcp.pop %v4178
    %v4353 = vmul.f32 %v4033, %v4352
    %v4354 = vrcp.pop %v4181
    %v4355 = vmul.f32 %v4035, %v4354
    %v4356 = vrcp.pop %v4184
    %v4357 = vmul.f32 %v4037, %v4356
    %v4358 = vrcp.pop %v4187
    %v4359 = vmul.f32 %v4039, %v4358
    %v4360 = vrcp.pop %v4190
    %v4361 = vmul.f32 %v4041, %v4360
    %v4362 = vrcp.pop %v4193
    %v4363 = vmul.f32 %v4043, %v4362
    %v4364 = vrcp.pop %v4196
    %v4365 = vmul.f32 %v4045, %v4364
    %v4366 = vrcp.pop %v4199
    %v4367 = vmul.f32 %v4047, %v4366
    %v4368 = vrcp.pop %v4202
    %v4369 = vmul.f32 %v4049, %v4368
    %v4370 = vrcp.pop %v4205
    %v4371 = vmul.f32 %v4051, %v4370
    %v4372 = vrcp.pop %v4208
    %v4373 = vmul.f32 %v4053, %v4372
    %v4374 = vrcp.pop %v4211
    %v4375 = vmul.f32 %v4055, %v4374
    %v4376 = vrcp.pop %v4214
    %v4377 = vmul.f32 %v4057, %v4376
    %v4378 = vrcp.pop %v4217
    %v4379 = vmul.f32 %v4059, %v4378
    %v4380 = vrcp.pop %v4220
    %v4381 = vmul.f32 %v4061, %v4380
    %v4382 = vrcp.pop %v4223
    %v4383 = vmul.f32 %v4063, %v4382
    %v4384 = vrcp.pop %v4226
    %v4385 = vmul.f32 %v4065, %v4384
    %v4386 = vrcp.pop %v4229
    %v4387 = vmul.f32 %v4067, %v4386
    %v4388 = vrcp.pop %v4232
    %v4389 = vmul.f32 %v4069, %v4388
    %v4390 = vrcp.pop %v4235
    %v4391 = vmul.f32 %v4071, %v4390
    %v4392 = vrcp.pop %v4238
    %v4393 = vmul.f32 %v4073, %v4392
    %v4394 = vrcp.pop %v4241
    %v4395 = vmul.f32 %v4075, %v4394
    %v4396 = vrcp.pop %v4244
    %v4397 = vmul.f32 %v4077, %v4396
    %v4398 = vrcp.pop %v4247
    %v4399 = vmul.f32 %v4079, %v4398
    %v4400 = vrcp.pop %v4250
    %v4401 = vmul.f32 %v4081, %v4400
    %v4402 = vrcp.pop %v4253
    %v4403 = vmul.f32 %v4083, %v4402
    %v4404 = vrcp.pop %v4256
    %v4405 = vmul.f32 %v4085, %v4404
    %v4406 = vrcp.pop %v4259
    %v4407 = vmul.f32 %v4087, %v4406
    %v4408 = vrcp.pop %v4262
    %v4409 = vmul.f32 %v4089, %v4408
    %v4410 = vrcp.pop %v4265
    %v4411 = vmul.f32 %v4091, %v4410
    %v4412 = vrcp.pop %v4268
    %v4413 = vmul.f32 %v4093, %v4412
    %v4414 = vrcp.pop %v4271
    %v4415 = vmul.f32 %v4095, %v4414
    %v4416 = vrcp.pop %v4274
    %v4417 = vmul.f32 %v4097, %v4416
    %v4418 = vrcp.pop %v4277
    %v4419 = vmul.f32 %v4099, %v4418
    %v4420 = vrcp.pop %v4280
    %v4421 = vmul.f32 %v4101, %v4420
    %v4422 = vrcp.pop %v4283
    %v4423 = vmul.f32 %v4103, %v4422
    %v4424 = vrcp.pop %v4286
    %v4425 = vmul.f32 %v4105, %v4424
    %v4426 = vrcp.pop %v4289
    %v4427 = vmul.f32 %v4107, %v4426
    %v4428 = vrcp.pop %v4292
    %v4429 = vmul.f32 %v4109, %v4428
    %v4430 = vrcp.pop %v4295
    %v4431 = vmul.f32 %v4111, %v4430
    %v4432 = vrcp.pop %v4298
    %v4433 = vmul.f32 %v4113, %v4432
    %v4434 = vrcp.pop %v4301
    %v4435 = vmul.f32 %v4115, %v4434
    %v4436 = vrcp.pop %v4304
    %v4437 = vmul.f32 %v4117, %v4436
    %v4438 = vrcp.pop %v4307
    %v4439 = vmul.f32 %v4119, %v4438
    %v4440 = vrcp.pop %v4310
    %v4441 = vmul.f32 %v4121, %v4440
    %v4442 = vrcp.pop %v4313
    %v4443 = vmul.f32 %v4123, %v4442
    %v4444 = vrcp.pop %v4316
    %v4445 = vmul.f32 %v4125, %v4444
    %v4446 = vrcp.pop %v4319
    %v4447 = vmul.f32 %v4127, %v4446
    %4448 = vrot.lane.b32.xlu0 %v637, 64
    %v4449 = vpop.permute.xlu0 %4448
    %4450 = vrot.lane.b32.xlu0 %v642, 64
    %v4451 = vpop.permute.xlu0 %4450
    %v4455 = vsel %vm52, %v4321, 0
    %v4458 = vsel %vm52, %v4323, 0
    %4460 = vmatprep.subr.mxu0 0.0
    %4461 = vmatpush1.msra.mxu0 0.0
    %4462 = vmatprep.subr.mxu0 0.0
    %4463 = vmatpush1.msra.mxu0 0.0
    %4464 = vmatprep.subr.mxu0 0.0
    %4465 = vmatpush1.msra.mxu0 0.0
    %4466 = vmatprep.subr.mxu0 0.0
    %4467 = vmatpush1.msra.mxu0 0.0
    %4468 = vmatprep.subr.mxu0 0.0
    %4469 = vmatpush1.msra.mxu0 0.0
    %4470 = vmatprep.subr.mxu0 0.0
    %4471 = vmatpush1.msra.mxu0 0.0
    %4472 = vmatprep.subr.mxu0 0.0
    %4473 = vmatpush1.msra.mxu0 0.0
    %4474 = vmatprep.subr.mxu0 0.0
    %4475 = vmatpush1.msra.mxu0 0.0
    %4476 = vmatprep.subr.mxu0 0.0
    %4477 = vmatpush1.msra.mxu0 0.0
    %4478 = vmatprep.subr.mxu0 0.0
    %4479 = vmatpush1.msra.mxu0 0.0
    %4480 = vmatprep.subr.mxu0 0.0
    %4481 = vmatpush1.msra.mxu0 0.0
    %4482 = vmatprep.subr.mxu0 0.0
    %4483 = vmatpush1.msra.mxu0 0.0
    %4484 = vmatprep.subr.mxu0 0.0
    %4485 = vmatpush1.msra.mxu0 0.0
    %4486 = vmatprep.subr.mxu0 0.0
    %4487 = vmatpush1.msra.mxu0 0.0
    %4488 = vmatprep.subr.mxu0 0.0
    %4489 = vmatpush1.msra.mxu0 %v4451
    %4490 = vmatprep.subr.mxu0 0.0
    %4491 = vmatpush1.msra.mxu0 %v4449
    %4492 = vmatprep.subr.mxu0 0.0
    %4493 = vmatpush2.msra.mxu0 0.0
    %4494 = vmatprep.subr.mxu0 0.0
    %4495 = vmatpush2.msra.mxu0 0.0
    %4496 = vmatprep.subr.mxu0 0.0
    %4497 = vmatpush2.msra.mxu0 0.0
    %4498 = vmatprep.subr.mxu0 0.0
    %4499 = vmatpush2.msra.mxu0 0.0
    %4500 = vmatprep.subr.mxu0 0.0
    %4501 = vmatpush2.msra.mxu0 0.0
    %4502 = vmatprep.subr.mxu0 0.0
    %4503 = vmatpush2.msra.mxu0 0.0
    %4504 = vmatprep.subr.mxu0 0.0
    %4505 = vmatpush2.msra.mxu0 0.0
    %4506 = vmatprep.subr.mxu0 0.0
    %4507 = vmatpush2.msra.mxu0 0.0
    %4508 = vmatprep.subr.mxu0 0.0
    %4509 = vmatpush2.msra.mxu0 0.0
    %4510 = vmatprep.subr.mxu0 0.0
    %4511 = vmatpush2.msra.mxu0 0.0
    %4512 = vmatprep.subr.mxu0 0.0
    %4513 = vmatpush2.msra.mxu0 0.0
    %4514 = vmatprep.subr.mxu0 0.0
    %4515 = vmatpush2.msra.mxu0 0.0
    %4516 = vmatprep.subr.mxu0 0.0
    %4517 = vmatpush2.msra.mxu0 0.0
    %4518 = vmatprep.subr.mxu0 0.0
    %4519 = vmatpush2.msra.mxu0 0.0
    %4520 = vmatprep.subr.mxu0 0.0
    %4521 = vmatpush2.msra.mxu0 0.0
    %4522 = vmatprep.subr.mxu0 0.0
    %4523 = vmatpush2.msra.mxu0 0.0
    %4524 = vmatprep.mubr.f32.mxu0 0.0
    %4525 = vmatmul.mubr.f32.gmra.mxu0 %v4455
    %v4526 = vpop.f32.mrf.mxu0
    %v4527 = vadd.f32 0.0, %v4526
    %v4528 = vpop.f32.mrf.mxu0
    %4529 = vmatprep.mubr.f32.mxu0 0.0
    %4530 = vmatmul.mubr.f32.gmra.mxu0 %v4458
    %v4531 = vpop.f32.mrf.mxu0
    %v4532 = vadd.f32 0.0, %v4531
    %v4533 = vpop.f32.mrf.mxu0
    %4534 = vdwg.mxu0
    %4535 = vrot.lane.b32.xlu0 %v647, 64
    %v4536 = vpop.permute.xlu0 %4535
    %4537 = vrot.lane.b32.xlu0 %v652, 64
    %v4538 = vpop.permute.xlu0 %4537
    %v4542 = vsel %vm52, %v4325, 0
    %v4545 = vsel %vm52, %v4327, 0
    %4547 = vmatprep.subr.mxu0 0.0
    %4548 = vmatpush1.msra.mxu0 0.0
    %4549 = vmatprep.subr.mxu0 0.0
    %4550 = vmatpush1.msra.mxu0 0.0
    %4551 = vmatprep.subr.mxu0 0.0
    %4552 = vmatpush1.msra.mxu0 0.0
    %4553 = vmatprep.subr.mxu0 0.0
    %4554 = vmatpush1.msra.mxu0 0.0
    %4555 = vmatprep.subr.mxu0 0.0
    %4556 = vmatpush1.msra.mxu0 0.0
    %4557 = vmatprep.subr.mxu0 0.0
    %4558 = vmatpush1.msra.mxu0 0.0
    %4559 = vmatprep.subr.mxu0 0.0
    %4560 = vmatpush1.msra.mxu0 0.0
    %4561 = vmatprep.subr.mxu0 0.0
    %4562 = vmatpush1.msra.mxu0 0.0
    %4563 = vmatprep.subr.mxu0 0.0
    %4564 = vmatpush1.msra.mxu0 0.0
    %4565 = vmatprep.subr.mxu0 0.0
    %4566 = vmatpush1.msra.mxu0 0.0
    %4567 = vmatprep.subr.mxu0 0.0
    %4568 = vmatpush1.msra.mxu0 0.0
    %4569 = vmatprep.subr.mxu0 0.0
    %4570 = vmatpush1.msra.mxu0 0.0
    %4571 = vmatprep.subr.mxu0 0.0
    %4572 = vmatpush1.msra.mxu0 0.0
    %4573 = vmatprep.subr.mxu0 0.0
    %4574 = vmatpush1.msra.mxu0 0.0
    %4575 = vmatprep.subr.mxu0 0.0
    %4576 = vmatpush1.msra.mxu0 %v4538
    %4577 = vmatprep.subr.mxu0 0.0
    %4578 = vmatpush1.msra.mxu0 %v4536
    %4579 = vmatprep.subr.mxu0 0.0
    %4580 = vmatpush2.msra.mxu0 0.0
    %4581 = vmatprep.subr.mxu0 0.0
    %4582 = vmatpush2.msra.mxu0 0.0
    %4583 = vmatprep.subr.mxu0 0.0
    %4584 = vmatpush2.msra.mxu0 0.0
    %4585 = vmatprep.subr.mxu0 0.0
    %4586 = vmatpush2.msra.mxu0 0.0
    %4587 = vmatprep.subr.mxu0 0.0
    %4588 = vmatpush2.msra.mxu0 0.0
    %4589 = vmatprep.subr.mxu0 0.0
    %4590 = vmatpush2.msra.mxu0 0.0
    %4591 = vmatprep.subr.mxu0 0.0
    %4592 = vmatpush2.msra.mxu0 0.0
    %4593 = vmatprep.subr.mxu0 0.0
    %4594 = vmatpush2.msra.mxu0 0.0
    %4595 = vmatprep.subr.mxu0 0.0
    %4596 = vmatpush2.msra.mxu0 0.0
    %4597 = vmatprep.subr.mxu0 0.0
    %4598 = vmatpush2.msra.mxu0 0.0
    %4599 = vmatprep.subr.mxu0 0.0
    %4600 = vmatpush2.msra.mxu0 0.0
    %4601 = vmatprep.subr.mxu0 0.0
    %4602 = vmatpush2.msra.mxu0 0.0
    %4603 = vmatprep.subr.mxu0 0.0
    %4604 = vmatpush2.msra.mxu0 0.0
    %4605 = vmatprep.subr.mxu0 0.0
    %4606 = vmatpush2.msra.mxu0 0.0
    %4607 = vmatprep.subr.mxu0 0.0
    %4608 = vmatpush2.msra.mxu0 0.0
    %4609 = vmatprep.subr.mxu0 0.0
    %4610 = vmatpush2.msra.mxu0 0.0
    %4611 = vmatprep.mubr.f32.mxu0 0.0
    %4612 = vmatmul.mubr.f32.gmra.mxu0 %v4542
    %v4613 = vpop.f32.mrf.mxu0
    %v4614 = vadd.f32 0.0, %v4613
    %v4615 = vpop.f32.mrf.mxu0
    %4616 = vmatprep.mubr.f32.mxu0 0.0
    %4617 = vmatmul.mubr.f32.gmra.mxu0 %v4545
    %v4618 = vpop.f32.mrf.mxu0
    %v4619 = vadd.f32 0.0, %v4618
    %v4620 = vpop.f32.mrf.mxu0
    %4621 = vdwg.mxu0
    %4622 = vrot.lane.b32.xlu0 %v657, 64
    %v4623 = vpop.permute.xlu0 %4622
    %4624 = vrot.lane.b32.xlu0 %v662, 64
    %v4625 = vpop.permute.xlu0 %4624
    %v4629 = vsel %vm52, %v4329, 0
    %v4632 = vsel %vm52, %v4331, 0
    %4634 = vmatprep.subr.mxu0 0.0
    %4635 = vmatpush1.msra.mxu0 0.0
    %4636 = vmatprep.subr.mxu0 0.0
    %4637 = vmatpush1.msra.mxu0 0.0
    %4638 = vmatprep.subr.mxu0 0.0
    %4639 = vmatpush1.msra.mxu0 0.0
    %4640 = vmatprep.subr.mxu0 0.0
    %4641 = vmatpush1.msra.mxu0 0.0
    %4642 = vmatprep.subr.mxu0 0.0
    %4643 = vmatpush1.msra.mxu0 0.0
    %4644 = vmatprep.subr.mxu0 0.0
    %4645 = vmatpush1.msra.mxu0 0.0
    %4646 = vmatprep.subr.mxu0 0.0
    %4647 = vmatpush1.msra.mxu0 0.0
    %4648 = vmatprep.subr.mxu0 0.0
    %4649 = vmatpush1.msra.mxu0 0.0
    %4650 = vmatprep.subr.mxu0 0.0
    %4651 = vmatpush1.msra.mxu0 0.0
    %4652 = vmatprep.subr.mxu0 0.0
    %4653 = vmatpush1.msra.mxu0 0.0
    %4654 = vmatprep.subr.mxu0 0.0
    %4655 = vmatpush1.msra.mxu0 0.0
    %4656 = vmatprep.subr.mxu0 0.0
    %4657 = vmatpush1.msra.mxu0 0.0
    %4658 = vmatprep.subr.mxu0 0.0
    %4659 = vmatpush1.msra.mxu0 0.0
    %4660 = vmatprep.subr.mxu0 0.0
    %4661 = vmatpush1.msra.mxu0 0.0
    %4662 = vmatprep.subr.mxu0 0.0
    %4663 = vmatpush1.msra.mxu0 %v4625
    %4664 = vmatprep.subr.mxu0 0.0
    %4665 = vmatpush1.msra.mxu0 %v4623
    %4666 = vmatprep.subr.mxu0 0.0
    %4667 = vmatpush2.msra.mxu0 0.0
    %4668 = vmatprep.subr.mxu0 0.0
    %4669 = vmatpush2.msra.mxu0 0.0
    %4670 = vmatprep.subr.mxu0 0.0
    %4671 = vmatpush2.msra.mxu0 0.0
    %4672 = vmatprep.subr.mxu0 0.0
    %4673 = vmatpush2.msra.mxu0 0.0
    %4674 = vmatprep.subr.mxu0 0.0
    %4675 = vmatpush2.msra.mxu0 0.0
    %4676 = vmatprep.subr.mxu0 0.0
    %4677 = vmatpush2.msra.mxu0 0.0
    %4678 = vmatprep.subr.mxu0 0.0
    %4679 = vmatpush2.msra.mxu0 0.0
    %4680 = vmatprep.subr.mxu0 0.0
    %4681 = vmatpush2.msra.mxu0 0.0
    %4682 = vmatprep.subr.mxu0 0.0
    %4683 = vmatpush2.msra.mxu0 0.0
    %4684 = vmatprep.subr.mxu0 0.0
    %4685 = vmatpush2.msra.mxu0 0.0
    %4686 = vmatprep.subr.mxu0 0.0
    %4687 = vmatpush2.msra.mxu0 0.0
    %4688 = vmatprep.subr.mxu0 0.0
    %4689 = vmatpush2.msra.mxu0 0.0
    %4690 = vmatprep.subr.mxu0 0.0
    %4691 = vmatpush2.msra.mxu0 0.0
    %4692 = vmatprep.subr.mxu0 0.0
    %4693 = vmatpush2.msra.mxu0 0.0
    %4694 = vmatprep.subr.mxu0 0.0
    %4695 = vmatpush2.msra.mxu0 0.0
    %4696 = vmatprep.subr.mxu0 0.0
    %4697 = vmatpush2.msra.mxu0 0.0
    %4698 = vmatprep.mubr.f32.mxu0 0.0
    %4699 = vmatmul.mubr.f32.gmra.mxu0 %v4629
    %v4700 = vpop.f32.mrf.mxu0
    %v4701 = vadd.f32 0.0, %v4700
    %v4702 = vpop.f32.mrf.mxu0
    %4703 = vmatprep.mubr.f32.mxu0 0.0
    %4704 = vmatmul.mubr.f32.gmra.mxu0 %v4632
    %v4705 = vpop.f32.mrf.mxu0
    %v4706 = vadd.f32 0.0, %v4705
    %v4707 = vpop.f32.mrf.mxu0
    %4708 = vdwg.mxu0
    %4709 = vrot.lane.b32.xlu0 %v667, 64
    %v4710 = vpop.permute.xlu0 %4709
    %4711 = vrot.lane.b32.xlu0 %v672, 64
    %v4712 = vpop.permute.xlu0 %4711
    %v4716 = vsel %vm52, %v4333, 0
    %v4719 = vsel %vm52, %v4335, 0
    %4721 = vmatprep.subr.mxu0 0.0
    %4722 = vmatpush1.msra.mxu0 0.0
    %4723 = vmatprep.subr.mxu0 0.0
    %4724 = vmatpush1.msra.mxu0 0.0
    %4725 = vmatprep.subr.mxu0 0.0
    %4726 = vmatpush1.msra.mxu0 0.0
    %4727 = vmatprep.subr.mxu0 0.0
    %4728 = vmatpush1.msra.mxu0 0.0
    %4729 = vmatprep.subr.mxu0 0.0
    %4730 = vmatpush1.msra.mxu0 0.0
    %4731 = vmatprep.subr.mxu0 0.0
    %4732 = vmatpush1.msra.mxu0 0.0
    %4733 = vmatprep.subr.mxu0 0.0
    %4734 = vmatpush1.msra.mxu0 0.0
    %4735 = vmatprep.subr.mxu0 0.0
    %4736 = vmatpush1.msra.mxu0 0.0
    %4737 = vmatprep.subr.mxu0 0.0
    %4738 = vmatpush1.msra.mxu0 0.0
    %4739 = vmatprep.subr.mxu0 0.0
    %4740 = vmatpush1.msra.mxu0 0.0
    %4741 = vmatprep.subr.mxu0 0.0
    %4742 = vmatpush1.msra.mxu0 0.0
    %4743 = vmatprep.subr.mxu0 0.0
    %4744 = vmatpush1.msra.mxu0 0.0
    %4745 = vmatprep.subr.mxu0 0.0
    %4746 = vmatpush1.msra.mxu0 0.0
    %4747 = vmatprep.subr.mxu0 0.0
    %4748 = vmatpush1.msra.mxu0 0.0
    %4749 = vmatprep.subr.mxu0 0.0
    %4750 = vmatpush1.msra.mxu0 %v4712
    %4751 = vmatprep.subr.mxu0 0.0
    %4752 = vmatpush1.msra.mxu0 %v4710
    %4753 = vmatprep.subr.mxu0 0.0
    %4754 = vmatpush2.msra.mxu0 0.0
    %4755 = vmatprep.subr.mxu0 0.0
    %4756 = vmatpush2.msra.mxu0 0.0
    %4757 = vmatprep.subr.mxu0 0.0
    %4758 = vmatpush2.msra.mxu0 0.0
    %4759 = vmatprep.subr.mxu0 0.0
    %4760 = vmatpush2.msra.mxu0 0.0
    %4761 = vmatprep.subr.mxu0 0.0
    %4762 = vmatpush2.msra.mxu0 0.0
    %4763 = vmatprep.subr.mxu0 0.0
    %4764 = vmatpush2.msra.mxu0 0.0
    %4765 = vmatprep.subr.mxu0 0.0
    %4766 = vmatpush2.msra.mxu0 0.0
    %4767 = vmatprep.subr.mxu0 0.0
    %4768 = vmatpush2.msra.mxu0 0.0
    %4769 = vmatprep.subr.mxu0 0.0
    %4770 = vmatpush2.msra.mxu0 0.0
    %4771 = vmatprep.subr.mxu0 0.0
    %4772 = vmatpush2.msra.mxu0 0.0
    %4773 = vmatprep.subr.mxu0 0.0
    %4774 = vmatpush2.msra.mxu0 0.0
    %4775 = vmatprep.subr.mxu0 0.0
    %4776 = vmatpush2.msra.mxu0 0.0
    %4777 = vmatprep.subr.mxu0 0.0
    %4778 = vmatpush2.msra.mxu0 0.0
    %4779 = vmatprep.subr.mxu0 0.0
    %4780 = vmatpush2.msra.mxu0 0.0
    %4781 = vmatprep.subr.mxu0 0.0
    %4782 = vmatpush2.msra.mxu0 0.0
    %4783 = vmatprep.subr.mxu0 0.0
    %4784 = vmatpush2.msra.mxu0 0.0
    %4785 = vmatprep.mubr.f32.mxu0 0.0
    %4786 = vmatmul.mubr.f32.gmra.mxu0 %v4716
    %v4787 = vpop.f32.mrf.mxu0
    %v4788 = vadd.f32 0.0, %v4787
    %v4789 = vpop.f32.mrf.mxu0
    %4790 = vmatprep.mubr.f32.mxu0 0.0
    %4791 = vmatmul.mubr.f32.gmra.mxu0 %v4719
    %v4792 = vpop.f32.mrf.mxu0
    %v4793 = vadd.f32 0.0, %v4792
    %v4794 = vpop.f32.mrf.mxu0
    %4795 = vdwg.mxu0
    %4796 = vrot.lane.b32.xlu0 %v677, 64
    %v4797 = vpop.permute.xlu0 %4796
    %4798 = vrot.lane.b32.xlu0 %v682, 64
    %v4799 = vpop.permute.xlu0 %4798
    %v4803 = vsel %vm52, %v4337, 0
    %v4806 = vsel %vm52, %v4339, 0
    %4808 = vmatprep.subr.mxu0 0.0
    %4809 = vmatpush1.msra.mxu0 0.0
    %4810 = vmatprep.subr.mxu0 0.0
    %4811 = vmatpush1.msra.mxu0 0.0
    %4812 = vmatprep.subr.mxu0 0.0
    %4813 = vmatpush1.msra.mxu0 0.0
    %4814 = vmatprep.subr.mxu0 0.0
    %4815 = vmatpush1.msra.mxu0 0.0
    %4816 = vmatprep.subr.mxu0 0.0
    %4817 = vmatpush1.msra.mxu0 0.0
    %4818 = vmatprep.subr.mxu0 0.0
    %4819 = vmatpush1.msra.mxu0 0.0
    %4820 = vmatprep.subr.mxu0 0.0
    %4821 = vmatpush1.msra.mxu0 0.0
    %4822 = vmatprep.subr.mxu0 0.0
    %4823 = vmatpush1.msra.mxu0 0.0
    %4824 = vmatprep.subr.mxu0 0.0
    %4825 = vmatpush1.msra.mxu0 0.0
    %4826 = vmatprep.subr.mxu0 0.0
    %4827 = vmatpush1.msra.mxu0 0.0
    %4828 = vmatprep.subr.mxu0 0.0
    %4829 = vmatpush1.msra.mxu0 0.0
    %4830 = vmatprep.subr.mxu0 0.0
    %4831 = vmatpush1.msra.mxu0 0.0
    %4832 = vmatprep.subr.mxu0 0.0
    %4833 = vmatpush1.msra.mxu0 0.0
    %4834 = vmatprep.subr.mxu0 0.0
    %4835 = vmatpush1.msra.mxu0 0.0
    %4836 = vmatprep.subr.mxu0 0.0
    %4837 = vmatpush1.msra.mxu0 %v4799
    %4838 = vmatprep.subr.mxu0 0.0
    %4839 = vmatpush1.msra.mxu0 %v4797
    %4840 = vmatprep.subr.mxu0 0.0
    %4841 = vmatpush2.msra.mxu0 0.0
    %4842 = vmatprep.subr.mxu0 0.0
    %4843 = vmatpush2.msra.mxu0 0.0
    %4844 = vmatprep.subr.mxu0 0.0
    %4845 = vmatpush2.msra.mxu0 0.0
    %4846 = vmatprep.subr.mxu0 0.0
    %4847 = vmatpush2.msra.mxu0 0.0
    %4848 = vmatprep.subr.mxu0 0.0
    %4849 = vmatpush2.msra.mxu0 0.0
    %4850 = vmatprep.subr.mxu0 0.0
    %4851 = vmatpush2.msra.mxu0 0.0
    %4852 = vmatprep.subr.mxu0 0.0
    %4853 = vmatpush2.msra.mxu0 0.0
    %4854 = vmatprep.subr.mxu0 0.0
    %4855 = vmatpush2.msra.mxu0 0.0
    %4856 = vmatprep.subr.mxu0 0.0
    %4857 = vmatpush2.msra.mxu0 0.0
    %4858 = vmatprep.subr.mxu0 0.0
    %4859 = vmatpush2.msra.mxu0 0.0
    %4860 = vmatprep.subr.mxu0 0.0
    %4861 = vmatpush2.msra.mxu0 0.0
    %4862 = vmatprep.subr.mxu0 0.0
    %4863 = vmatpush2.msra.mxu0 0.0
    %4864 = vmatprep.subr.mxu0 0.0
    %4865 = vmatpush2.msra.mxu0 0.0
    %4866 = vmatprep.subr.mxu0 0.0
    %4867 = vmatpush2.msra.mxu0 0.0
    %4868 = vmatprep.subr.mxu0 0.0
    %4869 = vmatpush2.msra.mxu0 0.0
    %4870 = vmatprep.subr.mxu0 0.0
    %4871 = vmatpush2.msra.mxu0 0.0
    %4872 = vmatprep.mubr.f32.mxu0 0.0
    %4873 = vmatmul.mubr.f32.gmra.mxu0 %v4803
    %v4874 = vpop.f32.mrf.mxu0
    %v4875 = vadd.f32 0.0, %v4874
    %v4876 = vpop.f32.mrf.mxu0
    %4877 = vmatprep.mubr.f32.mxu0 0.0
    %4878 = vmatmul.mubr.f32.gmra.mxu0 %v4806
    %v4879 = vpop.f32.mrf.mxu0
    %v4880 = vadd.f32 0.0, %v4879
    %v4881 = vpop.f32.mrf.mxu0
    %4882 = vdwg.mxu0
    %4883 = vrot.lane.b32.xlu0 %v687, 64
    %v4884 = vpop.permute.xlu0 %4883
    %4885 = vrot.lane.b32.xlu0 %v692, 64
    %v4886 = vpop.permute.xlu0 %4885
    %v4890 = vsel %vm52, %v4341, 0
    %v4893 = vsel %vm52, %v4343, 0
    %4895 = vmatprep.subr.mxu0 0.0
    %4896 = vmatpush1.msra.mxu0 0.0
    %4897 = vmatprep.subr.mxu0 0.0
    %4898 = vmatpush1.msra.mxu0 0.0
    %4899 = vmatprep.subr.mxu0 0.0
    %4900 = vmatpush1.msra.mxu0 0.0
    %4901 = vmatprep.subr.mxu0 0.0
    %4902 = vmatpush1.msra.mxu0 0.0
    %4903 = vmatprep.subr.mxu0 0.0
    %4904 = vmatpush1.msra.mxu0 0.0
    %4905 = vmatprep.subr.mxu0 0.0
    %4906 = vmatpush1.msra.mxu0 0.0
    %4907 = vmatprep.subr.mxu0 0.0
    %4908 = vmatpush1.msra.mxu0 0.0
    %4909 = vmatprep.subr.mxu0 0.0
    %4910 = vmatpush1.msra.mxu0 0.0
    %4911 = vmatprep.subr.mxu0 0.0
    %4912 = vmatpush1.msra.mxu0 0.0
    %4913 = vmatprep.subr.mxu0 0.0
    %4914 = vmatpush1.msra.mxu0 0.0
    %4915 = vmatprep.subr.mxu0 0.0
    %4916 = vmatpush1.msra.mxu0 0.0
    %4917 = vmatprep.subr.mxu0 0.0
    %4918 = vmatpush1.msra.mxu0 0.0
    %4919 = vmatprep.subr.mxu0 0.0
    %4920 = vmatpush1.msra.mxu0 0.0
    %4921 = vmatprep.subr.mxu0 0.0
    %4922 = vmatpush1.msra.mxu0 0.0
    %4923 = vmatprep.subr.mxu0 0.0
    %4924 = vmatpush1.msra.mxu0 %v4886
    %4925 = vmatprep.subr.mxu0 0.0
    %4926 = vmatpush1.msra.mxu0 %v4884
    %4927 = vmatprep.subr.mxu0 0.0
    %4928 = vmatpush2.msra.mxu0 0.0
    %4929 = vmatprep.subr.mxu0 0.0
    %4930 = vmatpush2.msra.mxu0 0.0
    %4931 = vmatprep.subr.mxu0 0.0
    %4932 = vmatpush2.msra.mxu0 0.0
    %4933 = vmatprep.subr.mxu0 0.0
    %4934 = vmatpush2.msra.mxu0 0.0
    %4935 = vmatprep.subr.mxu0 0.0
    %4936 = vmatpush2.msra.mxu0 0.0
    %4937 = vmatprep.subr.mxu0 0.0
    %4938 = vmatpush2.msra.mxu0 0.0
    %4939 = vmatprep.subr.mxu0 0.0
    %4940 = vmatpush2.msra.mxu0 0.0
    %4941 = vmatprep.subr.mxu0 0.0
    %4942 = vmatpush2.msra.mxu0 0.0
    %4943 = vmatprep.subr.mxu0 0.0
    %4944 = vmatpush2.msra.mxu0 0.0
    %4945 = vmatprep.subr.mxu0 0.0
    %4946 = vmatpush2.msra.mxu0 0.0
    %4947 = vmatprep.subr.mxu0 0.0
    %4948 = vmatpush2.msra.mxu0 0.0
    %4949 = vmatprep.subr.mxu0 0.0
    %4950 = vmatpush2.msra.mxu0 0.0
    %4951 = vmatprep.subr.mxu0 0.0
    %4952 = vmatpush2.msra.mxu0 0.0
    %4953 = vmatprep.subr.mxu0 0.0
    %4954 = vmatpush2.msra.mxu0 0.0
    %4955 = vmatprep.subr.mxu0 0.0
    %4956 = vmatpush2.msra.mxu0 0.0
    %4957 = vmatprep.subr.mxu0 0.0
    %4958 = vmatpush2.msra.mxu0 0.0
    %4959 = vmatprep.mubr.f32.mxu0 0.0
    %4960 = vmatmul.mubr.f32.gmra.mxu0 %v4890
    %v4961 = vpop.f32.mrf.mxu0
    %v4962 = vadd.f32 0.0, %v4961
    %v4963 = vpop.f32.mrf.mxu0
    %4964 = vmatprep.mubr.f32.mxu0 0.0
    %4965 = vmatmul.mubr.f32.gmra.mxu0 %v4893
    %v4966 = vpop.f32.mrf.mxu0
    %v4967 = vadd.f32 0.0, %v4966
    %v4968 = vpop.f32.mrf.mxu0
    %4969 = vdwg.mxu0
    %4970 = vrot.lane.b32.xlu0 %v697, 64
    %v4971 = vpop.permute.xlu0 %4970
    %4972 = vrot.lane.b32.xlu0 %v702, 64
    %v4973 = vpop.permute.xlu0 %4972
    %v4977 = vsel %vm52, %v4345, 0
    %v4980 = vsel %vm52, %v4347, 0
    %4982 = vmatprep.subr.mxu0 0.0
    %4983 = vmatpush1.msra.mxu0 0.0
    %4984 = vmatprep.subr.mxu0 0.0
    %4985 = vmatpush1.msra.mxu0 0.0
    %4986 = vmatprep.subr.mxu0 0.0
    %4987 = vmatpush1.msra.mxu0 0.0
    %4988 = vmatprep.subr.mxu0 0.0
    %4989 = vmatpush1.msra.mxu0 0.0
    %4990 = vmatprep.subr.mxu0 0.0
    %4991 = vmatpush1.msra.mxu0 0.0
    %4992 = vmatprep.subr.mxu0 0.0
    %4993 = vmatpush1.msra.mxu0 0.0
    %4994 = vmatprep.subr.mxu0 0.0
    %4995 = vmatpush1.msra.mxu0 0.0
    %4996 = vmatprep.subr.mxu0 0.0
    %4997 = vmatpush1.msra.mxu0 0.0
    %4998 = vmatprep.subr.mxu0 0.0
    %4999 = vmatpush1.msra.mxu0 0.0
    %5000 = vmatprep.subr.mxu0 0.0
    %5001 = vmatpush1.msra.mxu0 0.0
    %5002 = vmatprep.subr.mxu0 0.0
    %5003 = vmatpush1.msra.mxu0 0.0
    %5004 = vmatprep.subr.mxu0 0.0
    %5005 = vmatpush1.msra.mxu0 0.0
    %5006 = vmatprep.subr.mxu0 0.0
    %5007 = vmatpush1.msra.mxu0 0.0
    %5008 = vmatprep.subr.mxu0 0.0
    %5009 = vmatpush1.msra.mxu0 0.0
    %5010 = vmatprep.subr.mxu0 0.0
    %5011 = vmatpush1.msra.mxu0 %v4973
    %5012 = vmatprep.subr.mxu0 0.0
    %5013 = vmatpush1.msra.mxu0 %v4971
    %5014 = vmatprep.subr.mxu0 0.0
    %5015 = vmatpush2.msra.mxu0 0.0
    %5016 = vmatprep.subr.mxu0 0.0
    %5017 = vmatpush2.msra.mxu0 0.0
    %5018 = vmatprep.subr.mxu0 0.0
    %5019 = vmatpush2.msra.mxu0 0.0
    %5020 = vmatprep.subr.mxu0 0.0
    %5021 = vmatpush2.msra.mxu0 0.0
    %5022 = vmatprep.subr.mxu0 0.0
    %5023 = vmatpush2.msra.mxu0 0.0
    %5024 = vmatprep.subr.mxu0 0.0
    %5025 = vmatpush2.msra.mxu0 0.0
    %5026 = vmatprep.subr.mxu0 0.0
    %5027 = vmatpush2.msra.mxu0 0.0
    %5028 = vmatprep.subr.mxu0 0.0
    %5029 = vmatpush2.msra.mxu0 0.0
    %5030 = vmatprep.subr.mxu0 0.0
    %5031 = vmatpush2.msra.mxu0 0.0
    %5032 = vmatprep.subr.mxu0 0.0
    %5033 = vmatpush2.msra.mxu0 0.0
    %5034 = vmatprep.subr.mxu0 0.0
    %5035 = vmatpush2.msra.mxu0 0.0
    %5036 = vmatprep.subr.mxu0 0.0
    %5037 = vmatpush2.msra.mxu0 0.0
    %5038 = vmatprep.subr.mxu0 0.0
    %5039 = vmatpush2.msra.mxu0 0.0
    %5040 = vmatprep.subr.mxu0 0.0
    %5041 = vmatpush2.msra.mxu0 0.0
    %5042 = vmatprep.subr.mxu0 0.0
    %5043 = vmatpush2.msra.mxu0 0.0
    %5044 = vmatprep.subr.mxu0 0.0
    %5045 = vmatpush2.msra.mxu0 0.0
    %5046 = vmatprep.mubr.f32.mxu0 0.0
    %5047 = vmatmul.mubr.f32.gmra.mxu0 %v4977
    %v5048 = vpop.f32.mrf.mxu0
    %v5049 = vadd.f32 0.0, %v5048
    %v5050 = vpop.f32.mrf.mxu0
    %5051 = vmatprep.mubr.f32.mxu0 0.0
    %5052 = vmatmul.mubr.f32.gmra.mxu0 %v4980
    %v5053 = vpop.f32.mrf.mxu0
    %v5054 = vadd.f32 0.0, %v5053
    %v5055 = vpop.f32.mrf.mxu0
    %5056 = vdwg.mxu0
    %5057 = vrot.lane.b32.xlu0 %v707, 64
    %v5058 = vpop.permute.xlu0 %5057
    %5059 = vrot.lane.b32.xlu0 %v712, 64
    %v5060 = vpop.permute.xlu0 %5059
    %v5064 = vsel %vm52, %v4349, 0
    %v5067 = vsel %vm52, %v4351, 0
    %5069 = vmatprep.subr.mxu0 0.0
    %5070 = vmatpush1.msra.mxu0 0.0
    %5071 = vmatprep.subr.mxu0 0.0
    %5072 = vmatpush1.msra.mxu0 0.0
    %5073 = vmatprep.subr.mxu0 0.0
    %5074 = vmatpush1.msra.mxu0 0.0
    %5075 = vmatprep.subr.mxu0 0.0
    %5076 = vmatpush1.msra.mxu0 0.0
    %5077 = vmatprep.subr.mxu0 0.0
    %5078 = vmatpush1.msra.mxu0 0.0
    %5079 = vmatprep.subr.mxu0 0.0
    %5080 = vmatpush1.msra.mxu0 0.0
    %5081 = vmatprep.subr.mxu0 0.0
    %5082 = vmatpush1.msra.mxu0 0.0
    %5083 = vmatprep.subr.mxu0 0.0
    %5084 = vmatpush1.msra.mxu0 0.0
    %5085 = vmatprep.subr.mxu0 0.0
    %5086 = vmatpush1.msra.mxu0 0.0
    %5087 = vmatprep.subr.mxu0 0.0
    %5088 = vmatpush1.msra.mxu0 0.0
    %5089 = vmatprep.subr.mxu0 0.0
    %5090 = vmatpush1.msra.mxu0 0.0
    %5091 = vmatprep.subr.mxu0 0.0
    %5092 = vmatpush1.msra.mxu0 0.0
    %5093 = vmatprep.subr.mxu0 0.0
    %5094 = vmatpush1.msra.mxu0 0.0
    %5095 = vmatprep.subr.mxu0 0.0
    %5096 = vmatpush1.msra.mxu0 0.0
    %5097 = vmatprep.subr.mxu0 0.0
    %5098 = vmatpush1.msra.mxu0 %v5060
    %5099 = vmatprep.subr.mxu0 0.0
    %5100 = vmatpush1.msra.mxu0 %v5058
    %5101 = vmatprep.subr.mxu0 0.0
    %5102 = vmatpush2.msra.mxu0 0.0
    %5103 = vmatprep.subr.mxu0 0.0
    %5104 = vmatpush2.msra.mxu0 0.0
    %5105 = vmatprep.subr.mxu0 0.0
    %5106 = vmatpush2.msra.mxu0 0.0
    %5107 = vmatprep.subr.mxu0 0.0
    %5108 = vmatpush2.msra.mxu0 0.0
    %5109 = vmatprep.subr.mxu0 0.0
    %5110 = vmatpush2.msra.mxu0 0.0
    %5111 = vmatprep.subr.mxu0 0.0
    %5112 = vmatpush2.msra.mxu0 0.0
    %5113 = vmatprep.subr.mxu0 0.0
    %5114 = vmatpush2.msra.mxu0 0.0
    %5115 = vmatprep.subr.mxu0 0.0
    %5116 = vmatpush2.msra.mxu0 0.0
    %5117 = vmatprep.subr.mxu0 0.0
    %5118 = vmatpush2.msra.mxu0 0.0
    %5119 = vmatprep.subr.mxu0 0.0
    %5120 = vmatpush2.msra.mxu0 0.0
    %5121 = vmatprep.subr.mxu0 0.0
    %5122 = vmatpush2.msra.mxu0 0.0
    %5123 = vmatprep.subr.mxu0 0.0
    %5124 = vmatpush2.msra.mxu0 0.0
    %5125 = vmatprep.subr.mxu0 0.0
    %5126 = vmatpush2.msra.mxu0 0.0
    %5127 = vmatprep.subr.mxu0 0.0
    %5128 = vmatpush2.msra.mxu0 0.0
    %5129 = vmatprep.subr.mxu0 0.0
    %5130 = vmatpush2.msra.mxu0 0.0
    %5131 = vmatprep.subr.mxu0 0.0
    %5132 = vmatpush2.msra.mxu0 0.0
    %5133 = vmatprep.mubr.f32.mxu0 0.0
    %5134 = vmatmul.mubr.f32.gmra.mxu0 %v5064
    %v5135 = vpop.f32.mrf.mxu0
    %v5136 = vadd.f32 0.0, %v5135
    %v5137 = vpop.f32.mrf.mxu0
    %5138 = vmatprep.mubr.f32.mxu0 0.0
    %5139 = vmatmul.mubr.f32.gmra.mxu0 %v5067
    %v5140 = vpop.f32.mrf.mxu0
    %v5141 = vadd.f32 0.0, %v5140
    %v5142 = vpop.f32.mrf.mxu0
    %5143 = vdwg.mxu0
    %5144 = vrot.lane.b32.xlu0 %v732, 64
    %v5145 = vpop.permute.xlu0 %5144
    %5146 = vrot.lane.b32.xlu0 %v734, 64
    %v5147 = vpop.permute.xlu0 %5146
    %v5151 = vsel %vm52, %v4353, 0
    %v5154 = vsel %vm52, %v4355, 0
    %5156 = vmatprep.subr.mxu0 0.0
    %5157 = vmatpush1.msra.mxu0 0.0
    %5158 = vmatprep.subr.mxu0 0.0
    %5159 = vmatpush1.msra.mxu0 0.0
    %5160 = vmatprep.subr.mxu0 0.0
    %5161 = vmatpush1.msra.mxu0 0.0
    %5162 = vmatprep.subr.mxu0 0.0
    %5163 = vmatpush1.msra.mxu0 0.0
    %5164 = vmatprep.subr.mxu0 0.0
    %5165 = vmatpush1.msra.mxu0 0.0
    %5166 = vmatprep.subr.mxu0 0.0
    %5167 = vmatpush1.msra.mxu0 0.0
    %5168 = vmatprep.subr.mxu0 0.0
    %5169 = vmatpush1.msra.mxu0 0.0
    %5170 = vmatprep.subr.mxu0 0.0
    %5171 = vmatpush1.msra.mxu0 0.0
    %5172 = vmatprep.subr.mxu0 0.0
    %5173 = vmatpush1.msra.mxu0 0.0
    %5174 = vmatprep.subr.mxu0 0.0
    %5175 = vmatpush1.msra.mxu0 0.0
    %5176 = vmatprep.subr.mxu0 0.0
    %5177 = vmatpush1.msra.mxu0 0.0
    %5178 = vmatprep.subr.mxu0 0.0
    %5179 = vmatpush1.msra.mxu0 0.0
    %5180 = vmatprep.subr.mxu0 0.0
    %5181 = vmatpush1.msra.mxu0 0.0
    %5182 = vmatprep.subr.mxu0 0.0
    %5183 = vmatpush1.msra.mxu0 0.0
    %5184 = vmatprep.subr.mxu0 0.0
    %5185 = vmatpush1.msra.mxu0 %v5147
    %5186 = vmatprep.subr.mxu0 0.0
    %5187 = vmatpush1.msra.mxu0 %v5145
    %5188 = vmatprep.subr.mxu0 0.0
    %5189 = vmatpush2.msra.mxu0 0.0
    %5190 = vmatprep.subr.mxu0 0.0
    %5191 = vmatpush2.msra.mxu0 0.0
    %5192 = vmatprep.subr.mxu0 0.0
    %5193 = vmatpush2.msra.mxu0 0.0
    %5194 = vmatprep.subr.mxu0 0.0
    %5195 = vmatpush2.msra.mxu0 0.0
    %5196 = vmatprep.subr.mxu0 0.0
    %5197 = vmatpush2.msra.mxu0 0.0
    %5198 = vmatprep.subr.mxu0 0.0
    %5199 = vmatpush2.msra.mxu0 0.0
    %5200 = vmatprep.subr.mxu0 0.0
    %5201 = vmatpush2.msra.mxu0 0.0
    %5202 = vmatprep.subr.mxu0 0.0
    %5203 = vmatpush2.msra.mxu0 0.0
    %5204 = vmatprep.subr.mxu0 0.0
    %5205 = vmatpush2.msra.mxu0 0.0
    %5206 = vmatprep.subr.mxu0 0.0
    %5207 = vmatpush2.msra.mxu0 0.0
    %5208 = vmatprep.subr.mxu0 0.0
    %5209 = vmatpush2.msra.mxu0 0.0
    %5210 = vmatprep.subr.mxu0 0.0
    %5211 = vmatpush2.msra.mxu0 0.0
    %5212 = vmatprep.subr.mxu0 0.0
    %5213 = vmatpush2.msra.mxu0 0.0
    %5214 = vmatprep.subr.mxu0 0.0
    %5215 = vmatpush2.msra.mxu0 0.0
    %5216 = vmatprep.subr.mxu0 0.0
    %5217 = vmatpush2.msra.mxu0 0.0
    %5218 = vmatprep.subr.mxu0 0.0
    %5219 = vmatpush2.msra.mxu0 0.0
    %5220 = vmatprep.mubr.f32.mxu0 0.0
    %5221 = vmatmul.mubr.f32.gmra.mxu0 %v5151
    %v5222 = vpop.f32.mrf.mxu0
    %v5223 = vadd.f32 0.0, %v5222
    %v5224 = vpop.f32.mrf.mxu0
    %5225 = vmatprep.mubr.f32.mxu0 0.0
    %5226 = vmatmul.mubr.f32.gmra.mxu0 %v5154
    %v5227 = vpop.f32.mrf.mxu0
    %v5228 = vadd.f32 0.0, %v5227
    %v5229 = vpop.f32.mrf.mxu0
    %5230 = vdwg.mxu0
    %5231 = vrot.lane.b32.xlu0 %v736, 64
    %v5232 = vpop.permute.xlu0 %5231
    %5233 = vrot.lane.b32.xlu0 %v738, 64
    %v5234 = vpop.permute.xlu0 %5233
    %v5238 = vsel %vm52, %v4357, 0
    %v5241 = vsel %vm52, %v4359, 0
    %5243 = vmatprep.subr.mxu0 0.0
    %5244 = vmatpush1.msra.mxu0 0.0
    %5245 = vmatprep.subr.mxu0 0.0
    %5246 = vmatpush1.msra.mxu0 0.0
    %5247 = vmatprep.subr.mxu0 0.0
    %5248 = vmatpush1.msra.mxu0 0.0
    %5249 = vmatprep.subr.mxu0 0.0
    %5250 = vmatpush1.msra.mxu0 0.0
    %5251 = vmatprep.subr.mxu0 0.0
    %5252 = vmatpush1.msra.mxu0 0.0
    %5253 = vmatprep.subr.mxu0 0.0
    %5254 = vmatpush1.msra.mxu0 0.0
    %5255 = vmatprep.subr.mxu0 0.0
    %5256 = vmatpush1.msra.mxu0 0.0
    %5257 = vmatprep.subr.mxu0 0.0
    %5258 = vmatpush1.msra.mxu0 0.0
    %5259 = vmatprep.subr.mxu0 0.0
    %5260 = vmatpush1.msra.mxu0 0.0
    %5261 = vmatprep.subr.mxu0 0.0
    %5262 = vmatpush1.msra.mxu0 0.0
    %5263 = vmatprep.subr.mxu0 0.0
    %5264 = vmatpush1.msra.mxu0 0.0
    %5265 = vmatprep.subr.mxu0 0.0
    %5266 = vmatpush1.msra.mxu0 0.0
    %5267 = vmatprep.subr.mxu0 0.0
    %5268 = vmatpush1.msra.mxu0 0.0
    %5269 = vmatprep.subr.mxu0 0.0
    %5270 = vmatpush1.msra.mxu0 0.0
    %5271 = vmatprep.subr.mxu0 0.0
    %5272 = vmatpush1.msra.mxu0 %v5234
    %5273 = vmatprep.subr.mxu0 0.0
    %5274 = vmatpush1.msra.mxu0 %v5232
    %5275 = vmatprep.subr.mxu0 0.0
    %5276 = vmatpush2.msra.mxu0 0.0
    %5277 = vmatprep.subr.mxu0 0.0
    %5278 = vmatpush2.msra.mxu0 0.0
    %5279 = vmatprep.subr.mxu0 0.0
    %5280 = vmatpush2.msra.mxu0 0.0
    %5281 = vmatprep.subr.mxu0 0.0
    %5282 = vmatpush2.msra.mxu0 0.0
    %5283 = vmatprep.subr.mxu0 0.0
    %5284 = vmatpush2.msra.mxu0 0.0
    %5285 = vmatprep.subr.mxu0 0.0
    %5286 = vmatpush2.msra.mxu0 0.0
    %5287 = vmatprep.subr.mxu0 0.0
    %5288 = vmatpush2.msra.mxu0 0.0
    %5289 = vmatprep.subr.mxu0 0.0
    %5290 = vmatpush2.msra.mxu0 0.0
    %5291 = vmatprep.subr.mxu0 0.0
    %5292 = vmatpush2.msra.mxu0 0.0
    %5293 = vmatprep.subr.mxu0 0.0
    %5294 = vmatpush2.msra.mxu0 0.0
    %5295 = vmatprep.subr.mxu0 0.0
    %5296 = vmatpush2.msra.mxu0 0.0
    %5297 = vmatprep.subr.mxu0 0.0
    %5298 = vmatpush2.msra.mxu0 0.0
    %5299 = vmatprep.subr.mxu0 0.0
    %5300 = vmatpush2.msra.mxu0 0.0
    %5301 = vmatprep.subr.mxu0 0.0
    %5302 = vmatpush2.msra.mxu0 0.0
    %5303 = vmatprep.subr.mxu0 0.0
    %5304 = vmatpush2.msra.mxu0 0.0
    %5305 = vmatprep.subr.mxu0 0.0
    %5306 = vmatpush2.msra.mxu0 0.0
    %5307 = vmatprep.mubr.f32.mxu0 0.0
    %5308 = vmatmul.mubr.f32.gmra.mxu0 %v5238
    %v5309 = vpop.f32.mrf.mxu0
    %v5310 = vadd.f32 0.0, %v5309
    %v5311 = vpop.f32.mrf.mxu0
    %5312 = vmatprep.mubr.f32.mxu0 0.0
    %5313 = vmatmul.mubr.f32.gmra.mxu0 %v5241
    %v5314 = vpop.f32.mrf.mxu0
    %v5315 = vadd.f32 0.0, %v5314
    %v5316 = vpop.f32.mrf.mxu0
    %5317 = vdwg.mxu0
    %5318 = vrot.lane.b32.xlu0 %v740, 64
    %v5319 = vpop.permute.xlu0 %5318
    %5320 = vrot.lane.b32.xlu0 %v742, 64
    %v5321 = vpop.permute.xlu0 %5320
    %v5325 = vsel %vm52, %v4361, 0
    %v5328 = vsel %vm52, %v4363, 0
    %5330 = vmatprep.subr.mxu0 0.0
    %5331 = vmatpush1.msra.mxu0 0.0
    %5332 = vmatprep.subr.mxu0 0.0
    %5333 = vmatpush1.msra.mxu0 0.0
    %5334 = vmatprep.subr.mxu0 0.0
    %5335 = vmatpush1.msra.mxu0 0.0
    %5336 = vmatprep.subr.mxu0 0.0
    %5337 = vmatpush1.msra.mxu0 0.0
    %5338 = vmatprep.subr.mxu0 0.0
    %5339 = vmatpush1.msra.mxu0 0.0
    %5340 = vmatprep.subr.mxu0 0.0
    %5341 = vmatpush1.msra.mxu0 0.0
    %5342 = vmatprep.subr.mxu0 0.0
    %5343 = vmatpush1.msra.mxu0 0.0
    %5344 = vmatprep.subr.mxu0 0.0
    %5345 = vmatpush1.msra.mxu0 0.0
    %5346 = vmatprep.subr.mxu0 0.0
    %5347 = vmatpush1.msra.mxu0 0.0
    %5348 = vmatprep.subr.mxu0 0.0
    %5349 = vmatpush1.msra.mxu0 0.0
    %5350 = vmatprep.subr.mxu0 0.0
    %5351 = vmatpush1.msra.mxu0 0.0
    %5352 = vmatprep.subr.mxu0 0.0
    %5353 = vmatpush1.msra.mxu0 0.0
    %5354 = vmatprep.subr.mxu0 0.0
    %5355 = vmatpush1.msra.mxu0 0.0
    %5356 = vmatprep.subr.mxu0 0.0
    %5357 = vmatpush1.msra.mxu0 0.0
    %5358 = vmatprep.subr.mxu0 0.0
    %5359 = vmatpush1.msra.mxu0 %v5321
    %5360 = vmatprep.subr.mxu0 0.0
    %5361 = vmatpush1.msra.mxu0 %v5319
    %5362 = vmatprep.subr.mxu0 0.0
    %5363 = vmatpush2.msra.mxu0 0.0
    %5364 = vmatprep.subr.mxu0 0.0
    %5365 = vmatpush2.msra.mxu0 0.0
    %5366 = vmatprep.subr.mxu0 0.0
    %5367 = vmatpush2.msra.mxu0 0.0
    %5368 = vmatprep.subr.mxu0 0.0
    %5369 = vmatpush2.msra.mxu0 0.0
    %5370 = vmatprep.subr.mxu0 0.0
    %5371 = vmatpush2.msra.mxu0 0.0
    %5372 = vmatprep.subr.mxu0 0.0
    %5373 = vmatpush2.msra.mxu0 0.0
    %5374 = vmatprep.subr.mxu0 0.0
    %5375 = vmatpush2.msra.mxu0 0.0
    %5376 = vmatprep.subr.mxu0 0.0
    %5377 = vmatpush2.msra.mxu0 0.0
    %5378 = vmatprep.subr.mxu0 0.0
    %5379 = vmatpush2.msra.mxu0 0.0
    %5380 = vmatprep.subr.mxu0 0.0
    %5381 = vmatpush2.msra.mxu0 0.0
    %5382 = vmatprep.subr.mxu0 0.0
    %5383 = vmatpush2.msra.mxu0 0.0
    %5384 = vmatprep.subr.mxu0 0.0
    %5385 = vmatpush2.msra.mxu0 0.0
    %5386 = vmatprep.subr.mxu0 0.0
    %5387 = vmatpush2.msra.mxu0 0.0
    %5388 = vmatprep.subr.mxu0 0.0
    %5389 = vmatpush2.msra.mxu0 0.0
    %5390 = vmatprep.subr.mxu0 0.0
    %5391 = vmatpush2.msra.mxu0 0.0
    %5392 = vmatprep.subr.mxu0 0.0
    %5393 = vmatpush2.msra.mxu0 0.0
    %5394 = vmatprep.mubr.f32.mxu0 0.0
    %5395 = vmatmul.mubr.f32.gmra.mxu0 %v5325
    %v5396 = vpop.f32.mrf.mxu0
    %v5397 = vadd.f32 0.0, %v5396
    %v5398 = vpop.f32.mrf.mxu0
    %5399 = vmatprep.mubr.f32.mxu0 0.0
    %5400 = vmatmul.mubr.f32.gmra.mxu0 %v5328
    %v5401 = vpop.f32.mrf.mxu0
    %v5402 = vadd.f32 0.0, %v5401
    %v5403 = vpop.f32.mrf.mxu0
    %5404 = vdwg.mxu0
    %5405 = vrot.lane.b32.xlu0 %v744, 64
    %v5406 = vpop.permute.xlu0 %5405
    %5407 = vrot.lane.b32.xlu0 %v746, 64
    %v5408 = vpop.permute.xlu0 %5407
    %v5412 = vsel %vm52, %v4365, 0
    %v5415 = vsel %vm52, %v4367, 0
    %5417 = vmatprep.subr.mxu0 0.0
    %5418 = vmatpush1.msra.mxu0 0.0
    %5419 = vmatprep.subr.mxu0 0.0
    %5420 = vmatpush1.msra.mxu0 0.0
    %5421 = vmatprep.subr.mxu0 0.0
    %5422 = vmatpush1.msra.mxu0 0.0
    %5423 = vmatprep.subr.mxu0 0.0
    %5424 = vmatpush1.msra.mxu0 0.0
    %5425 = vmatprep.subr.mxu0 0.0
    %5426 = vmatpush1.msra.mxu0 0.0
    %5427 = vmatprep.subr.mxu0 0.0
    %5428 = vmatpush1.msra.mxu0 0.0
    %5429 = vmatprep.subr.mxu0 0.0
    %5430 = vmatpush1.msra.mxu0 0.0
    %5431 = vmatprep.subr.mxu0 0.0
    %5432 = vmatpush1.msra.mxu0 0.0
    %5433 = vmatprep.subr.mxu0 0.0
    %5434 = vmatpush1.msra.mxu0 0.0
    %5435 = vmatprep.subr.mxu0 0.0
    %5436 = vmatpush1.msra.mxu0 0.0
    %5437 = vmatprep.subr.mxu0 0.0
    %5438 = vmatpush1.msra.mxu0 0.0
    %5439 = vmatprep.subr.mxu0 0.0
    %5440 = vmatpush1.msra.mxu0 0.0
    %5441 = vmatprep.subr.mxu0 0.0
    %5442 = vmatpush1.msra.mxu0 0.0
    %5443 = vmatprep.subr.mxu0 0.0
    %5444 = vmatpush1.msra.mxu0 0.0
    %5445 = vmatprep.subr.mxu0 0.0
    %5446 = vmatpush1.msra.mxu0 %v5408
    %5447 = vmatprep.subr.mxu0 0.0
    %5448 = vmatpush1.msra.mxu0 %v5406
    %5449 = vmatprep.subr.mxu0 0.0
    %5450 = vmatpush2.msra.mxu0 0.0
    %5451 = vmatprep.subr.mxu0 0.0
    %5452 = vmatpush2.msra.mxu0 0.0
    %5453 = vmatprep.subr.mxu0 0.0
    %5454 = vmatpush2.msra.mxu0 0.0
    %5455 = vmatprep.subr.mxu0 0.0
    %5456 = vmatpush2.msra.mxu0 0.0
    %5457 = vmatprep.subr.mxu0 0.0
    %5458 = vmatpush2.msra.mxu0 0.0
    %5459 = vmatprep.subr.mxu0 0.0
    %5460 = vmatpush2.msra.mxu0 0.0
    %5461 = vmatprep.subr.mxu0 0.0
    %5462 = vmatpush2.msra.mxu0 0.0
    %5463 = vmatprep.subr.mxu0 0.0
    %5464 = vmatpush2.msra.mxu0 0.0
    %5465 = vmatprep.subr.mxu0 0.0
    %5466 = vmatpush2.msra.mxu0 0.0
    %5467 = vmatprep.subr.mxu0 0.0
    %5468 = vmatpush2.msra.mxu0 0.0
    %5469 = vmatprep.subr.mxu0 0.0
    %5470 = vmatpush2.msra.mxu0 0.0
    %5471 = vmatprep.subr.mxu0 0.0
    %5472 = vmatpush2.msra.mxu0 0.0
    %5473 = vmatprep.subr.mxu0 0.0
    %5474 = vmatpush2.msra.mxu0 0.0
    %5475 = vmatprep.subr.mxu0 0.0
    %5476 = vmatpush2.msra.mxu0 0.0
    %5477 = vmatprep.subr.mxu0 0.0
    %5478 = vmatpush2.msra.mxu0 0.0
    %5479 = vmatprep.subr.mxu0 0.0
    %5480 = vmatpush2.msra.mxu0 0.0
    %5481 = vmatprep.mubr.f32.mxu0 0.0
    %5482 = vmatmul.mubr.f32.gmra.mxu0 %v5412
    %v5483 = vpop.f32.mrf.mxu0
    %v5484 = vadd.f32 0.0, %v5483
    %v5485 = vpop.f32.mrf.mxu0
    %5486 = vmatprep.mubr.f32.mxu0 0.0
    %5487 = vmatmul.mubr.f32.gmra.mxu0 %v5415
    %v5488 = vpop.f32.mrf.mxu0
    %v5489 = vadd.f32 0.0, %v5488
    %v5490 = vpop.f32.mrf.mxu0
    %5491 = vdwg.mxu0
    %5492 = vrot.lane.b32.xlu0 %v748, 64
    %v5493 = vpop.permute.xlu0 %5492
    %5494 = vrot.lane.b32.xlu0 %v750, 64
    %v5495 = vpop.permute.xlu0 %5494
    %v5499 = vsel %vm52, %v4369, 0
    %v5502 = vsel %vm52, %v4371, 0
    %5504 = vmatprep.subr.mxu0 0.0
    %5505 = vmatpush1.msra.mxu0 0.0
    %5506 = vmatprep.subr.mxu0 0.0
    %5507 = vmatpush1.msra.mxu0 0.0
    %5508 = vmatprep.subr.mxu0 0.0
    %5509 = vmatpush1.msra.mxu0 0.0
    %5510 = vmatprep.subr.mxu0 0.0
    %5511 = vmatpush1.msra.mxu0 0.0
    %5512 = vmatprep.subr.mxu0 0.0
    %5513 = vmatpush1.msra.mxu0 0.0
    %5514 = vmatprep.subr.mxu0 0.0
    %5515 = vmatpush1.msra.mxu0 0.0
    %5516 = vmatprep.subr.mxu0 0.0
    %5517 = vmatpush1.msra.mxu0 0.0
    %5518 = vmatprep.subr.mxu0 0.0
    %5519 = vmatpush1.msra.mxu0 0.0
    %5520 = vmatprep.subr.mxu0 0.0
    %5521 = vmatpush1.msra.mxu0 0.0
    %5522 = vmatprep.subr.mxu0 0.0
    %5523 = vmatpush1.msra.mxu0 0.0
    %5524 = vmatprep.subr.mxu0 0.0
    %5525 = vmatpush1.msra.mxu0 0.0
    %5526 = vmatprep.subr.mxu0 0.0
    %5527 = vmatpush1.msra.mxu0 0.0
    %5528 = vmatprep.subr.mxu0 0.0
    %5529 = vmatpush1.msra.mxu0 0.0
    %5530 = vmatprep.subr.mxu0 0.0
    %5531 = vmatpush1.msra.mxu0 0.0
    %5532 = vmatprep.subr.mxu0 0.0
    %5533 = vmatpush1.msra.mxu0 %v5495
    %5534 = vmatprep.subr.mxu0 0.0
    %5535 = vmatpush1.msra.mxu0 %v5493
    %5536 = vmatprep.subr.mxu0 0.0
    %5537 = vmatpush2.msra.mxu0 0.0
    %5538 = vmatprep.subr.mxu0 0.0
    %5539 = vmatpush2.msra.mxu0 0.0
    %5540 = vmatprep.subr.mxu0 0.0
    %5541 = vmatpush2.msra.mxu0 0.0
    %5542 = vmatprep.subr.mxu0 0.0
    %5543 = vmatpush2.msra.mxu0 0.0
    %5544 = vmatprep.subr.mxu0 0.0
    %5545 = vmatpush2.msra.mxu0 0.0
    %5546 = vmatprep.subr.mxu0 0.0
    %5547 = vmatpush2.msra.mxu0 0.0
    %5548 = vmatprep.subr.mxu0 0.0
    %5549 = vmatpush2.msra.mxu0 0.0
    %5550 = vmatprep.subr.mxu0 0.0
    %5551 = vmatpush2.msra.mxu0 0.0
    %5552 = vmatprep.subr.mxu0 0.0
    %5553 = vmatpush2.msra.mxu0 0.0
    %5554 = vmatprep.subr.mxu0 0.0
    %5555 = vmatpush2.msra.mxu0 0.0
    %5556 = vmatprep.subr.mxu0 0.0
    %5557 = vmatpush2.msra.mxu0 0.0
    %5558 = vmatprep.subr.mxu0 0.0
    %5559 = vmatpush2.msra.mxu0 0.0
    %5560 = vmatprep.subr.mxu0 0.0
    %5561 = vmatpush2.msra.mxu0 0.0
    %5562 = vmatprep.subr.mxu0 0.0
    %5563 = vmatpush2.msra.mxu0 0.0
    %5564 = vmatprep.subr.mxu0 0.0
    %5565 = vmatpush2.msra.mxu0 0.0
    %5566 = vmatprep.subr.mxu0 0.0
    %5567 = vmatpush2.msra.mxu0 0.0
    %5568 = vmatprep.mubr.f32.mxu0 0.0
    %5569 = vmatmul.mubr.f32.gmra.mxu0 %v5499
    %v5570 = vpop.f32.mrf.mxu0
    %v5571 = vadd.f32 0.0, %v5570
    %v5572 = vpop.f32.mrf.mxu0
    %5573 = vmatprep.mubr.f32.mxu0 0.0
    %5574 = vmatmul.mubr.f32.gmra.mxu0 %v5502
    %v5575 = vpop.f32.mrf.mxu0
    %v5576 = vadd.f32 0.0, %v5575
    %v5577 = vpop.f32.mrf.mxu0
    %5578 = vdwg.mxu0
    %5579 = vrot.lane.b32.xlu0 %v752, 64
    %v5580 = vpop.permute.xlu0 %5579
    %5581 = vrot.lane.b32.xlu0 %v754, 64
    %v5582 = vpop.permute.xlu0 %5581
    %v5586 = vsel %vm52, %v4373, 0
    %v5589 = vsel %vm52, %v4375, 0
    %5591 = vmatprep.subr.mxu0 0.0
    %5592 = vmatpush1.msra.mxu0 0.0
    %5593 = vmatprep.subr.mxu0 0.0
    %5594 = vmatpush1.msra.mxu0 0.0
    %5595 = vmatprep.subr.mxu0 0.0
    %5596 = vmatpush1.msra.mxu0 0.0
    %5597 = vmatprep.subr.mxu0 0.0
    %5598 = vmatpush1.msra.mxu0 0.0
    %5599 = vmatprep.subr.mxu0 0.0
    %5600 = vmatpush1.msra.mxu0 0.0
    %5601 = vmatprep.subr.mxu0 0.0
    %5602 = vmatpush1.msra.mxu0 0.0
    %5603 = vmatprep.subr.mxu0 0.0
    %5604 = vmatpush1.msra.mxu0 0.0
    %5605 = vmatprep.subr.mxu0 0.0
    %5606 = vmatpush1.msra.mxu0 0.0
    %5607 = vmatprep.subr.mxu0 0.0
    %5608 = vmatpush1.msra.mxu0 0.0
    %5609 = vmatprep.subr.mxu0 0.0
    %5610 = vmatpush1.msra.mxu0 0.0
    %5611 = vmatprep.subr.mxu0 0.0
    %5612 = vmatpush1.msra.mxu0 0.0
    %5613 = vmatprep.subr.mxu0 0.0
    %5614 = vmatpush1.msra.mxu0 0.0
    %5615 = vmatprep.subr.mxu0 0.0
    %5616 = vmatpush1.msra.mxu0 0.0
    %5617 = vmatprep.subr.mxu0 0.0
    %5618 = vmatpush1.msra.mxu0 0.0
    %5619 = vmatprep.subr.mxu0 0.0
    %5620 = vmatpush1.msra.mxu0 %v5582
    %5621 = vmatprep.subr.mxu0 0.0
    %5622 = vmatpush1.msra.mxu0 %v5580
    %5623 = vmatprep.subr.mxu0 0.0
    %5624 = vmatpush2.msra.mxu0 0.0
    %5625 = vmatprep.subr.mxu0 0.0
    %5626 = vmatpush2.msra.mxu0 0.0
    %5627 = vmatprep.subr.mxu0 0.0
    %5628 = vmatpush2.msra.mxu0 0.0
    %5629 = vmatprep.subr.mxu0 0.0
    %5630 = vmatpush2.msra.mxu0 0.0
    %5631 = vmatprep.subr.mxu0 0.0
    %5632 = vmatpush2.msra.mxu0 0.0
    %5633 = vmatprep.subr.mxu0 0.0
    %5634 = vmatpush2.msra.mxu0 0.0
    %5635 = vmatprep.subr.mxu0 0.0
    %5636 = vmatpush2.msra.mxu0 0.0
    %5637 = vmatprep.subr.mxu0 0.0
    %5638 = vmatpush2.msra.mxu0 0.0
    %5639 = vmatprep.subr.mxu0 0.0
    %5640 = vmatpush2.msra.mxu0 0.0
    %5641 = vmatprep.subr.mxu0 0.0
    %5642 = vmatpush2.msra.mxu0 0.0
    %5643 = vmatprep.subr.mxu0 0.0
    %5644 = vmatpush2.msra.mxu0 0.0
    %5645 = vmatprep.subr.mxu0 0.0
    %5646 = vmatpush2.msra.mxu0 0.0
    %5647 = vmatprep.subr.mxu0 0.0
    %5648 = vmatpush2.msra.mxu0 0.0
    %5649 = vmatprep.subr.mxu0 0.0
    %5650 = vmatpush2.msra.mxu0 0.0
    %5651 = vmatprep.subr.mxu0 0.0
    %5652 = vmatpush2.msra.mxu0 0.0
    %5653 = vmatprep.subr.mxu0 0.0
    %5654 = vmatpush2.msra.mxu0 0.0
    %5655 = vmatprep.mubr.f32.mxu0 0.0
    %5656 = vmatmul.mubr.f32.gmra.mxu0 %v5586
    %v5657 = vpop.f32.mrf.mxu0
    %v5658 = vadd.f32 0.0, %v5657
    %v5659 = vpop.f32.mrf.mxu0
    %5660 = vmatprep.mubr.f32.mxu0 0.0
    %5661 = vmatmul.mubr.f32.gmra.mxu0 %v5589
    %v5662 = vpop.f32.mrf.mxu0
    %v5663 = vadd.f32 0.0, %v5662
    %v5664 = vpop.f32.mrf.mxu0
    %5665 = vdwg.mxu0
    %5666 = vrot.lane.b32.xlu0 %v756, 64
    %v5667 = vpop.permute.xlu0 %5666
    %5668 = vrot.lane.b32.xlu0 %v758, 64
    %v5669 = vpop.permute.xlu0 %5668
    %v5673 = vsel %vm52, %v4377, 0
    %v5676 = vsel %vm52, %v4379, 0
    %5678 = vmatprep.subr.mxu0 0.0
    %5679 = vmatpush1.msra.mxu0 0.0
    %5680 = vmatprep.subr.mxu0 0.0
    %5681 = vmatpush1.msra.mxu0 0.0
    %5682 = vmatprep.subr.mxu0 0.0
    %5683 = vmatpush1.msra.mxu0 0.0
    %5684 = vmatprep.subr.mxu0 0.0
    %5685 = vmatpush1.msra.mxu0 0.0
    %5686 = vmatprep.subr.mxu0 0.0
    %5687 = vmatpush1.msra.mxu0 0.0
    %5688 = vmatprep.subr.mxu0 0.0
    %5689 = vmatpush1.msra.mxu0 0.0
    %5690 = vmatprep.subr.mxu0 0.0
    %5691 = vmatpush1.msra.mxu0 0.0
    %5692 = vmatprep.subr.mxu0 0.0
    %5693 = vmatpush1.msra.mxu0 0.0
    %5694 = vmatprep.subr.mxu0 0.0
    %5695 = vmatpush1.msra.mxu0 0.0
    %5696 = vmatprep.subr.mxu0 0.0
    %5697 = vmatpush1.msra.mxu0 0.0
    %5698 = vmatprep.subr.mxu0 0.0
    %5699 = vmatpush1.msra.mxu0 0.0
    %5700 = vmatprep.subr.mxu0 0.0
    %5701 = vmatpush1.msra.mxu0 0.0
    %5702 = vmatprep.subr.mxu0 0.0
    %5703 = vmatpush1.msra.mxu0 0.0
    %5704 = vmatprep.subr.mxu0 0.0
    %5705 = vmatpush1.msra.mxu0 0.0
    %5706 = vmatprep.subr.mxu0 0.0
    %5707 = vmatpush1.msra.mxu0 %v5669
    %5708 = vmatprep.subr.mxu0 0.0
    %5709 = vmatpush1.msra.mxu0 %v5667
    %5710 = vmatprep.subr.mxu0 0.0
    %5711 = vmatpush2.msra.mxu0 0.0
    %5712 = vmatprep.subr.mxu0 0.0
    %5713 = vmatpush2.msra.mxu0 0.0
    %5714 = vmatprep.subr.mxu0 0.0
    %5715 = vmatpush2.msra.mxu0 0.0
    %5716 = vmatprep.subr.mxu0 0.0
    %5717 = vmatpush2.msra.mxu0 0.0
    %5718 = vmatprep.subr.mxu0 0.0
    %5719 = vmatpush2.msra.mxu0 0.0
    %5720 = vmatprep.subr.mxu0 0.0
    %5721 = vmatpush2.msra.mxu0 0.0
    %5722 = vmatprep.subr.mxu0 0.0
    %5723 = vmatpush2.msra.mxu0 0.0
    %5724 = vmatprep.subr.mxu0 0.0
    %5725 = vmatpush2.msra.mxu0 0.0
    %5726 = vmatprep.subr.mxu0 0.0
    %5727 = vmatpush2.msra.mxu0 0.0
    %5728 = vmatprep.subr.mxu0 0.0
    %5729 = vmatpush2.msra.mxu0 0.0
    %5730 = vmatprep.subr.mxu0 0.0
    %5731 = vmatpush2.msra.mxu0 0.0
    %5732 = vmatprep.subr.mxu0 0.0
    %5733 = vmatpush2.msra.mxu0 0.0
    %5734 = vmatprep.subr.mxu0 0.0
    %5735 = vmatpush2.msra.mxu0 0.0
    %5736 = vmatprep.subr.mxu0 0.0
    %5737 = vmatpush2.msra.mxu0 0.0
    %5738 = vmatprep.subr.mxu0 0.0
    %5739 = vmatpush2.msra.mxu0 0.0
    %5740 = vmatprep.subr.mxu0 0.0
    %5741 = vmatpush2.msra.mxu0 0.0
    %5742 = vmatprep.mubr.f32.mxu0 0.0
    %5743 = vmatmul.mubr.f32.gmra.mxu0 %v5673
    %v5744 = vpop.f32.mrf.mxu0
    %v5745 = vadd.f32 0.0, %v5744
    %v5746 = vpop.f32.mrf.mxu0
    %5747 = vmatprep.mubr.f32.mxu0 0.0
    %5748 = vmatmul.mubr.f32.gmra.mxu0 %v5676
    %v5749 = vpop.f32.mrf.mxu0
    %v5750 = vadd.f32 0.0, %v5749
    %v5751 = vpop.f32.mrf.mxu0
    %5752 = vdwg.mxu0
    %5753 = vrot.lane.b32.xlu0 %v760, 64
    %v5754 = vpop.permute.xlu0 %5753
    %5755 = vrot.lane.b32.xlu0 %v762, 64
    %v5756 = vpop.permute.xlu0 %5755
    %v5760 = vsel %vm52, %v4381, 0
    %v5763 = vsel %vm52, %v4383, 0
    %5765 = vmatprep.subr.mxu0 0.0
    %5766 = vmatpush1.msra.mxu0 0.0
    %5767 = vmatprep.subr.mxu0 0.0
    %5768 = vmatpush1.msra.mxu0 0.0
    %5769 = vmatprep.subr.mxu0 0.0
    %5770 = vmatpush1.msra.mxu0 0.0
    %5771 = vmatprep.subr.mxu0 0.0
    %5772 = vmatpush1.msra.mxu0 0.0
    %5773 = vmatprep.subr.mxu0 0.0
    %5774 = vmatpush1.msra.mxu0 0.0
    %5775 = vmatprep.subr.mxu0 0.0
    %5776 = vmatpush1.msra.mxu0 0.0
    %5777 = vmatprep.subr.mxu0 0.0
    %5778 = vmatpush1.msra.mxu0 0.0
    %5779 = vmatprep.subr.mxu0 0.0
    %5780 = vmatpush1.msra.mxu0 0.0
    %5781 = vmatprep.subr.mxu0 0.0
    %5782 = vmatpush1.msra.mxu0 0.0
    %5783 = vmatprep.subr.mxu0 0.0
    %5784 = vmatpush1.msra.mxu0 0.0
    %5785 = vmatprep.subr.mxu0 0.0
    %5786 = vmatpush1.msra.mxu0 0.0
    %5787 = vmatprep.subr.mxu0 0.0
    %5788 = vmatpush1.msra.mxu0 0.0
    %5789 = vmatprep.subr.mxu0 0.0
    %5790 = vmatpush1.msra.mxu0 0.0
    %5791 = vmatprep.subr.mxu0 0.0
    %5792 = vmatpush1.msra.mxu0 0.0
    %5793 = vmatprep.subr.mxu0 0.0
    %5794 = vmatpush1.msra.mxu0 %v5756
    %5795 = vmatprep.subr.mxu0 0.0
    %5796 = vmatpush1.msra.mxu0 %v5754
    %5797 = vmatprep.subr.mxu0 0.0
    %5798 = vmatpush2.msra.mxu0 0.0
    %5799 = vmatprep.subr.mxu0 0.0
    %5800 = vmatpush2.msra.mxu0 0.0
    %5801 = vmatprep.subr.mxu0 0.0
    %5802 = vmatpush2.msra.mxu0 0.0
    %5803 = vmatprep.subr.mxu0 0.0
    %5804 = vmatpush2.msra.mxu0 0.0
    %5805 = vmatprep.subr.mxu0 0.0
    %5806 = vmatpush2.msra.mxu0 0.0
    %5807 = vmatprep.subr.mxu0 0.0
    %5808 = vmatpush2.msra.mxu0 0.0
    %5809 = vmatprep.subr.mxu0 0.0
    %5810 = vmatpush2.msra.mxu0 0.0
    %5811 = vmatprep.subr.mxu0 0.0
    %5812 = vmatpush2.msra.mxu0 0.0
    %5813 = vmatprep.subr.mxu0 0.0
    %5814 = vmatpush2.msra.mxu0 0.0
    %5815 = vmatprep.subr.mxu0 0.0
    %5816 = vmatpush2.msra.mxu0 0.0
    %5817 = vmatprep.subr.mxu0 0.0
    %5818 = vmatpush2.msra.mxu0 0.0
    %5819 = vmatprep.subr.mxu0 0.0
    %5820 = vmatpush2.msra.mxu0 0.0
    %5821 = vmatprep.subr.mxu0 0.0
    %5822 = vmatpush2.msra.mxu0 0.0
    %5823 = vmatprep.subr.mxu0 0.0
    %5824 = vmatpush2.msra.mxu0 0.0
    %5825 = vmatprep.subr.mxu0 0.0
    %5826 = vmatpush2.msra.mxu0 0.0
    %5827 = vmatprep.subr.mxu0 0.0
    %5828 = vmatpush2.msra.mxu0 0.0
    %5829 = vmatprep.mubr.f32.mxu0 0.0
    %5830 = vmatmul.mubr.f32.gmra.mxu0 %v5760
    %v5831 = vpop.f32.mrf.mxu0
    %v5832 = vadd.f32 0.0, %v5831
    %v5833 = vpop.f32.mrf.mxu0
    %5834 = vmatprep.mubr.f32.mxu0 0.0
    %5835 = vmatmul.mubr.f32.gmra.mxu0 %v5763
    %v5836 = vpop.f32.mrf.mxu0
    %v5837 = vadd.f32 0.0, %v5836
    %v5838 = vpop.f32.mrf.mxu0
    %5839 = vdwg.mxu0
    %5840 = vrot.lane.b32.xlu0 %v764, 64
    %v5841 = vpop.permute.xlu0 %5840
    %5842 = vrot.lane.b32.xlu0 %v766, 64
    %v5843 = vpop.permute.xlu0 %5842
    %v5847 = vsel %vm52, %v4385, 0
    %v5850 = vsel %vm52, %v4387, 0
    %5852 = vmatprep.subr.mxu0 0.0
    %5853 = vmatpush1.msra.mxu0 0.0
    %5854 = vmatprep.subr.mxu0 0.0
    %5855 = vmatpush1.msra.mxu0 0.0
    %5856 = vmatprep.subr.mxu0 0.0
    %5857 = vmatpush1.msra.mxu0 0.0
    %5858 = vmatprep.subr.mxu0 0.0
    %5859 = vmatpush1.msra.mxu0 0.0
    %5860 = vmatprep.subr.mxu0 0.0
    %5861 = vmatpush1.msra.mxu0 0.0
    %5862 = vmatprep.subr.mxu0 0.0
    %5863 = vmatpush1.msra.mxu0 0.0
    %5864 = vmatprep.subr.mxu0 0.0
    %5865 = vmatpush1.msra.mxu0 0.0
    %5866 = vmatprep.subr.mxu0 0.0
    %5867 = vmatpush1.msra.mxu0 0.0
    %5868 = vmatprep.subr.mxu0 0.0
    %5869 = vmatpush1.msra.mxu0 0.0
    %5870 = vmatprep.subr.mxu0 0.0
    %5871 = vmatpush1.msra.mxu0 0.0
    %5872 = vmatprep.subr.mxu0 0.0
    %5873 = vmatpush1.msra.mxu0 0.0
    %5874 = vmatprep.subr.mxu0 0.0
    %5875 = vmatpush1.msra.mxu0 0.0
    %5876 = vmatprep.subr.mxu0 0.0
    %5877 = vmatpush1.msra.mxu0 0.0
    %5878 = vmatprep.subr.mxu0 0.0
    %5879 = vmatpush1.msra.mxu0 0.0
    %5880 = vmatprep.subr.mxu0 0.0
    %5881 = vmatpush1.msra.mxu0 %v5843
    %5882 = vmatprep.subr.mxu0 0.0
    %5883 = vmatpush1.msra.mxu0 %v5841
    %5884 = vmatprep.subr.mxu0 0.0
    %5885 = vmatpush2.msra.mxu0 0.0
    %5886 = vmatprep.subr.mxu0 0.0
    %5887 = vmatpush2.msra.mxu0 0.0
    %5888 = vmatprep.subr.mxu0 0.0
    %5889 = vmatpush2.msra.mxu0 0.0
    %5890 = vmatprep.subr.mxu0 0.0
    %5891 = vmatpush2.msra.mxu0 0.0
    %5892 = vmatprep.subr.mxu0 0.0
    %5893 = vmatpush2.msra.mxu0 0.0
    %5894 = vmatprep.subr.mxu0 0.0
    %5895 = vmatpush2.msra.mxu0 0.0
    %5896 = vmatprep.subr.mxu0 0.0
    %5897 = vmatpush2.msra.mxu0 0.0
    %5898 = vmatprep.subr.mxu0 0.0
    %5899 = vmatpush2.msra.mxu0 0.0
    %5900 = vmatprep.subr.mxu0 0.0
    %5901 = vmatpush2.msra.mxu0 0.0
    %5902 = vmatprep.subr.mxu0 0.0
    %5903 = vmatpush2.msra.mxu0 0.0
    %5904 = vmatprep.subr.mxu0 0.0
    %5905 = vmatpush2.msra.mxu0 0.0
    %5906 = vmatprep.subr.mxu0 0.0
    %5907 = vmatpush2.msra.mxu0 0.0
    %5908 = vmatprep.subr.mxu0 0.0
    %5909 = vmatpush2.msra.mxu0 0.0
    %5910 = vmatprep.subr.mxu0 0.0
    %5911 = vmatpush2.msra.mxu0 0.0
    %5912 = vmatprep.subr.mxu0 0.0
    %5913 = vmatpush2.msra.mxu0 0.0
    %5914 = vmatprep.subr.mxu0 0.0
    %5915 = vmatpush2.msra.mxu0 0.0
    %5916 = vmatprep.mubr.f32.mxu0 0.0
    %5917 = vmatmul.mubr.f32.gmra.mxu0 %v5847
    %v5918 = vpop.f32.mrf.mxu0
    %v5919 = vadd.f32 0.0, %v5918
    %v5920 = vpop.f32.mrf.mxu0
    %5921 = vmatprep.mubr.f32.mxu0 0.0
    %5922 = vmatmul.mubr.f32.gmra.mxu0 %v5850
    %v5923 = vpop.f32.mrf.mxu0
    %v5924 = vadd.f32 0.0, %v5923
    %v5925 = vpop.f32.mrf.mxu0
    %5926 = vdwg.mxu0
    %5927 = vrot.lane.b32.xlu0 %v768, 64
    %v5928 = vpop.permute.xlu0 %5927
    %5929 = vrot.lane.b32.xlu0 %v770, 64
    %v5930 = vpop.permute.xlu0 %5929
    %v5934 = vsel %vm52, %v4389, 0
    %v5937 = vsel %vm52, %v4391, 0
    %5939 = vmatprep.subr.mxu0 0.0
    %5940 = vmatpush1.msra.mxu0 0.0
    %5941 = vmatprep.subr.mxu0 0.0
    %5942 = vmatpush1.msra.mxu0 0.0
    %5943 = vmatprep.subr.mxu0 0.0
    %5944 = vmatpush1.msra.mxu0 0.0
    %5945 = vmatprep.subr.mxu0 0.0
    %5946 = vmatpush1.msra.mxu0 0.0
    %5947 = vmatprep.subr.mxu0 0.0
    %5948 = vmatpush1.msra.mxu0 0.0
    %5949 = vmatprep.subr.mxu0 0.0
    %5950 = vmatpush1.msra.mxu0 0.0
    %5951 = vmatprep.subr.mxu0 0.0
    %5952 = vmatpush1.msra.mxu0 0.0
    %5953 = vmatprep.subr.mxu0 0.0
    %5954 = vmatpush1.msra.mxu0 0.0
    %5955 = vmatprep.subr.mxu0 0.0
    %5956 = vmatpush1.msra.mxu0 0.0
    %5957 = vmatprep.subr.mxu0 0.0
    %5958 = vmatpush1.msra.mxu0 0.0
    %5959 = vmatprep.subr.mxu0 0.0
    %5960 = vmatpush1.msra.mxu0 0.0
    %5961 = vmatprep.subr.mxu0 0.0
    %5962 = vmatpush1.msra.mxu0 0.0
    %5963 = vmatprep.subr.mxu0 0.0
    %5964 = vmatpush1.msra.mxu0 0.0
    %5965 = vmatprep.subr.mxu0 0.0
    %5966 = vmatpush1.msra.mxu0 0.0
    %5967 = vmatprep.subr.mxu0 0.0
    %5968 = vmatpush1.msra.mxu0 %v5930
    %5969 = vmatprep.subr.mxu0 0.0
    %5970 = vmatpush1.msra.mxu0 %v5928
    %5971 = vmatprep.subr.mxu0 0.0
    %5972 = vmatpush2.msra.mxu0 0.0
    %5973 = vmatprep.subr.mxu0 0.0
    %5974 = vmatpush2.msra.mxu0 0.0
    %5975 = vmatprep.subr.mxu0 0.0
    %5976 = vmatpush2.msra.mxu0 0.0
    %5977 = vmatprep.subr.mxu0 0.0
    %5978 = vmatpush2.msra.mxu0 0.0
    %5979 = vmatprep.subr.mxu0 0.0
    %5980 = vmatpush2.msra.mxu0 0.0
    %5981 = vmatprep.subr.mxu0 0.0
    %5982 = vmatpush2.msra.mxu0 0.0
    %5983 = vmatprep.subr.mxu0 0.0
    %5984 = vmatpush2.msra.mxu0 0.0
    %5985 = vmatprep.subr.mxu0 0.0
    %5986 = vmatpush2.msra.mxu0 0.0
    %5987 = vmatprep.subr.mxu0 0.0
    %5988 = vmatpush2.msra.mxu0 0.0
    %5989 = vmatprep.subr.mxu0 0.0
    %5990 = vmatpush2.msra.mxu0 0.0
    %5991 = vmatprep.subr.mxu0 0.0
    %5992 = vmatpush2.msra.mxu0 0.0
    %5993 = vmatprep.subr.mxu0 0.0
    %5994 = vmatpush2.msra.mxu0 0.0
    %5995 = vmatprep.subr.mxu0 0.0
    %5996 = vmatpush2.msra.mxu0 0.0
    %5997 = vmatprep.subr.mxu0 0.0
    %5998 = vmatpush2.msra.mxu0 0.0
    %5999 = vmatprep.subr.mxu0 0.0
    %6000 = vmatpush2.msra.mxu0 0.0
    %6001 = vmatprep.subr.mxu0 0.0
    %6002 = vmatpush2.msra.mxu0 0.0
    %6003 = vmatprep.mubr.f32.mxu0 0.0
    %6004 = vmatmul.mubr.f32.gmra.mxu0 %v5934
    %v6005 = vpop.f32.mrf.mxu0
    %v6006 = vadd.f32 0.0, %v6005
    %v6007 = vpop.f32.mrf.mxu0
    %6008 = vmatprep.mubr.f32.mxu0 0.0
    %6009 = vmatmul.mubr.f32.gmra.mxu0 %v5937
    %v6010 = vpop.f32.mrf.mxu0
    %v6011 = vadd.f32 0.0, %v6010
    %v6012 = vpop.f32.mrf.mxu0
    %6013 = vdwg.mxu0
    %6014 = vrot.lane.b32.xlu0 %v772, 64
    %v6015 = vpop.permute.xlu0 %6014
    %6016 = vrot.lane.b32.xlu0 %v774, 64
    %v6017 = vpop.permute.xlu0 %6016
    %v6021 = vsel %vm52, %v4393, 0
    %v6024 = vsel %vm52, %v4395, 0
    %6026 = vmatprep.subr.mxu0 0.0
    %6027 = vmatpush1.msra.mxu0 0.0
    %6028 = vmatprep.subr.mxu0 0.0
    %6029 = vmatpush1.msra.mxu0 0.0
    %6030 = vmatprep.subr.mxu0 0.0
    %6031 = vmatpush1.msra.mxu0 0.0
    %6032 = vmatprep.subr.mxu0 0.0
    %6033 = vmatpush1.msra.mxu0 0.0
    %6034 = vmatprep.subr.mxu0 0.0
    %6035 = vmatpush1.msra.mxu0 0.0
    %6036 = vmatprep.subr.mxu0 0.0
    %6037 = vmatpush1.msra.mxu0 0.0
    %6038 = vmatprep.subr.mxu0 0.0
    %6039 = vmatpush1.msra.mxu0 0.0
    %6040 = vmatprep.subr.mxu0 0.0
    %6041 = vmatpush1.msra.mxu0 0.0
    %6042 = vmatprep.subr.mxu0 0.0
    %6043 = vmatpush1.msra.mxu0 0.0
    %6044 = vmatprep.subr.mxu0 0.0
    %6045 = vmatpush1.msra.mxu0 0.0
    %6046 = vmatprep.subr.mxu0 0.0
    %6047 = vmatpush1.msra.mxu0 0.0
    %6048 = vmatprep.subr.mxu0 0.0
    %6049 = vmatpush1.msra.mxu0 0.0
    %6050 = vmatprep.subr.mxu0 0.0
    %6051 = vmatpush1.msra.mxu0 0.0
    %6052 = vmatprep.subr.mxu0 0.0
    %6053 = vmatpush1.msra.mxu0 0.0
    %6054 = vmatprep.subr.mxu0 0.0
    %6055 = vmatpush1.msra.mxu0 %v6017
    %6056 = vmatprep.subr.mxu0 0.0
    %6057 = vmatpush1.msra.mxu0 %v6015
    %6058 = vmatprep.subr.mxu0 0.0
    %6059 = vmatpush2.msra.mxu0 0.0
    %6060 = vmatprep.subr.mxu0 0.0
    %6061 = vmatpush2.msra.mxu0 0.0
    %6062 = vmatprep.subr.mxu0 0.0
    %6063 = vmatpush2.msra.mxu0 0.0
    %6064 = vmatprep.subr.mxu0 0.0
    %6065 = vmatpush2.msra.mxu0 0.0
    %6066 = vmatprep.subr.mxu0 0.0
    %6067 = vmatpush2.msra.mxu0 0.0
    %6068 = vmatprep.subr.mxu0 0.0
    %6069 = vmatpush2.msra.mxu0 0.0
    %6070 = vmatprep.subr.mxu0 0.0
    %6071 = vmatpush2.msra.mxu0 0.0
    %6072 = vmatprep.subr.mxu0 0.0
    %6073 = vmatpush2.msra.mxu0 0.0
    %6074 = vmatprep.subr.mxu0 0.0
    %6075 = vmatpush2.msra.mxu0 0.0
    %6076 = vmatprep.subr.mxu0 0.0
    %6077 = vmatpush2.msra.mxu0 0.0
    %6078 = vmatprep.subr.mxu0 0.0
    %6079 = vmatpush2.msra.mxu0 0.0
    %6080 = vmatprep.subr.mxu0 0.0
    %6081 = vmatpush2.msra.mxu0 0.0
    %6082 = vmatprep.subr.mxu0 0.0
    %6083 = vmatpush2.msra.mxu0 0.0
    %6084 = vmatprep.subr.mxu0 0.0
    %6085 = vmatpush2.msra.mxu0 0.0
    %6086 = vmatprep.subr.mxu0 0.0
    %6087 = vmatpush2.msra.mxu0 0.0
    %6088 = vmatprep.subr.mxu0 0.0
    %6089 = vmatpush2.msra.mxu0 0.0
    %6090 = vmatprep.mubr.f32.mxu0 0.0
    %6091 = vmatmul.mubr.f32.gmra.mxu0 %v6021
    %v6092 = vpop.f32.mrf.mxu0
    %v6093 = vadd.f32 0.0, %v6092
    %v6094 = vpop.f32.mrf.mxu0
    %6095 = vmatprep.mubr.f32.mxu0 0.0
    %6096 = vmatmul.mubr.f32.gmra.mxu0 %v6024
    %v6097 = vpop.f32.mrf.mxu0
    %v6098 = vadd.f32 0.0, %v6097
    %v6099 = vpop.f32.mrf.mxu0
    %6100 = vdwg.mxu0
    %6101 = vrot.lane.b32.xlu0 %v776, 64
    %v6102 = vpop.permute.xlu0 %6101
    %6103 = vrot.lane.b32.xlu0 %v778, 64
    %v6104 = vpop.permute.xlu0 %6103
    %v6108 = vsel %vm52, %v4397, 0
    %v6111 = vsel %vm52, %v4399, 0
    %6113 = vmatprep.subr.mxu0 0.0
    %6114 = vmatpush1.msra.mxu0 0.0
    %6115 = vmatprep.subr.mxu0 0.0
    %6116 = vmatpush1.msra.mxu0 0.0
    %6117 = vmatprep.subr.mxu0 0.0
    %6118 = vmatpush1.msra.mxu0 0.0
    %6119 = vmatprep.subr.mxu0 0.0
    %6120 = vmatpush1.msra.mxu0 0.0
    %6121 = vmatprep.subr.mxu0 0.0
    %6122 = vmatpush1.msra.mxu0 0.0
    %6123 = vmatprep.subr.mxu0 0.0
    %6124 = vmatpush1.msra.mxu0 0.0
    %6125 = vmatprep.subr.mxu0 0.0
    %6126 = vmatpush1.msra.mxu0 0.0
    %6127 = vmatprep.subr.mxu0 0.0
    %6128 = vmatpush1.msra.mxu0 0.0
    %6129 = vmatprep.subr.mxu0 0.0
    %6130 = vmatpush1.msra.mxu0 0.0
    %6131 = vmatprep.subr.mxu0 0.0
    %6132 = vmatpush1.msra.mxu0 0.0
    %6133 = vmatprep.subr.mxu0 0.0
    %6134 = vmatpush1.msra.mxu0 0.0
    %6135 = vmatprep.subr.mxu0 0.0
    %6136 = vmatpush1.msra.mxu0 0.0
    %6137 = vmatprep.subr.mxu0 0.0
    %6138 = vmatpush1.msra.mxu0 0.0
    %6139 = vmatprep.subr.mxu0 0.0
    %6140 = vmatpush1.msra.mxu0 0.0
    %6141 = vmatprep.subr.mxu0 0.0
    %6142 = vmatpush1.msra.mxu0 %v6104
    %6143 = vmatprep.subr.mxu0 0.0
    %6144 = vmatpush1.msra.mxu0 %v6102
    %6145 = vmatprep.subr.mxu0 0.0
    %6146 = vmatpush2.msra.mxu0 0.0
    %6147 = vmatprep.subr.mxu0 0.0
    %6148 = vmatpush2.msra.mxu0 0.0
    %6149 = vmatprep.subr.mxu0 0.0
    %6150 = vmatpush2.msra.mxu0 0.0
    %6151 = vmatprep.subr.mxu0 0.0
    %6152 = vmatpush2.msra.mxu0 0.0
    %6153 = vmatprep.subr.mxu0 0.0
    %6154 = vmatpush2.msra.mxu0 0.0
    %6155 = vmatprep.subr.mxu0 0.0
    %6156 = vmatpush2.msra.mxu0 0.0
    %6157 = vmatprep.subr.mxu0 0.0
    %6158 = vmatpush2.msra.mxu0 0.0
    %6159 = vmatprep.subr.mxu0 0.0
    %6160 = vmatpush2.msra.mxu0 0.0
    %6161 = vmatprep.subr.mxu0 0.0
    %6162 = vmatpush2.msra.mxu0 0.0
    %6163 = vmatprep.subr.mxu0 0.0
    %6164 = vmatpush2.msra.mxu0 0.0
    %6165 = vmatprep.subr.mxu0 0.0
    %6166 = vmatpush2.msra.mxu0 0.0
    %6167 = vmatprep.subr.mxu0 0.0
    %6168 = vmatpush2.msra.mxu0 0.0
    %6169 = vmatprep.subr.mxu0 0.0
    %6170 = vmatpush2.msra.mxu0 0.0
    %6171 = vmatprep.subr.mxu0 0.0
    %6172 = vmatpush2.msra.mxu0 0.0
    %6173 = vmatprep.subr.mxu0 0.0
    %6174 = vmatpush2.msra.mxu0 0.0
    %6175 = vmatprep.subr.mxu0 0.0
    %6176 = vmatpush2.msra.mxu0 0.0
    %6177 = vmatprep.mubr.f32.mxu0 0.0
    %6178 = vmatmul.mubr.f32.gmra.mxu0 %v6108
    %v6179 = vpop.f32.mrf.mxu0
    %v6180 = vadd.f32 0.0, %v6179
    %v6181 = vpop.f32.mrf.mxu0
    %6182 = vmatprep.mubr.f32.mxu0 0.0
    %6183 = vmatmul.mubr.f32.gmra.mxu0 %v6111
    %v6184 = vpop.f32.mrf.mxu0
    %v6185 = vadd.f32 0.0, %v6184
    %v6186 = vpop.f32.mrf.mxu0
    %6187 = vdwg.mxu0
    %6188 = vrot.lane.b32.xlu0 %v780, 64
    %v6189 = vpop.permute.xlu0 %6188
    %6190 = vrot.lane.b32.xlu0 %v782, 64
    %v6191 = vpop.permute.xlu0 %6190
    %v6195 = vsel %vm52, %v4401, 0
    %v6198 = vsel %vm52, %v4403, 0
    %6200 = vmatprep.subr.mxu0 0.0
    %6201 = vmatpush1.msra.mxu0 0.0
    %6202 = vmatprep.subr.mxu0 0.0
    %6203 = vmatpush1.msra.mxu0 0.0
    %6204 = vmatprep.subr.mxu0 0.0
    %6205 = vmatpush1.msra.mxu0 0.0
    %6206 = vmatprep.subr.mxu0 0.0
    %6207 = vmatpush1.msra.mxu0 0.0
    %6208 = vmatprep.subr.mxu0 0.0
    %6209 = vmatpush1.msra.mxu0 0.0
    %6210 = vmatprep.subr.mxu0 0.0
    %6211 = vmatpush1.msra.mxu0 0.0
    %6212 = vmatprep.subr.mxu0 0.0
    %6213 = vmatpush1.msra.mxu0 0.0
    %6214 = vmatprep.subr.mxu0 0.0
    %6215 = vmatpush1.msra.mxu0 0.0
    %6216 = vmatprep.subr.mxu0 0.0
    %6217 = vmatpush1.msra.mxu0 0.0
    %6218 = vmatprep.subr.mxu0 0.0
    %6219 = vmatpush1.msra.mxu0 0.0
    %6220 = vmatprep.subr.mxu0 0.0
    %6221 = vmatpush1.msra.mxu0 0.0
    %6222 = vmatprep.subr.mxu0 0.0
    %6223 = vmatpush1.msra.mxu0 0.0
    %6224 = vmatprep.subr.mxu0 0.0
    %6225 = vmatpush1.msra.mxu0 0.0
    %6226 = vmatprep.subr.mxu0 0.0
    %6227 = vmatpush1.msra.mxu0 0.0
    %6228 = vmatprep.subr.mxu0 0.0
    %6229 = vmatpush1.msra.mxu0 %v6191
    %6230 = vmatprep.subr.mxu0 0.0
    %6231 = vmatpush1.msra.mxu0 %v6189
    %6232 = vmatprep.subr.mxu0 0.0
    %6233 = vmatpush2.msra.mxu0 0.0
    %6234 = vmatprep.subr.mxu0 0.0
    %6235 = vmatpush2.msra.mxu0 0.0
    %6236 = vmatprep.subr.mxu0 0.0
    %6237 = vmatpush2.msra.mxu0 0.0
    %6238 = vmatprep.subr.mxu0 0.0
    %6239 = vmatpush2.msra.mxu0 0.0
    %6240 = vmatprep.subr.mxu0 0.0
    %6241 = vmatpush2.msra.mxu0 0.0
    %6242 = vmatprep.subr.mxu0 0.0
    %6243 = vmatpush2.msra.mxu0 0.0
    %6244 = vmatprep.subr.mxu0 0.0
    %6245 = vmatpush2.msra.mxu0 0.0
    %6246 = vmatprep.subr.mxu0 0.0
    %6247 = vmatpush2.msra.mxu0 0.0
    %6248 = vmatprep.subr.mxu0 0.0
    %6249 = vmatpush2.msra.mxu0 0.0
    %6250 = vmatprep.subr.mxu0 0.0
    %6251 = vmatpush2.msra.mxu0 0.0
    %6252 = vmatprep.subr.mxu0 0.0
    %6253 = vmatpush2.msra.mxu0 0.0
    %6254 = vmatprep.subr.mxu0 0.0
    %6255 = vmatpush2.msra.mxu0 0.0
    %6256 = vmatprep.subr.mxu0 0.0
    %6257 = vmatpush2.msra.mxu0 0.0
    %6258 = vmatprep.subr.mxu0 0.0
    %6259 = vmatpush2.msra.mxu0 0.0
    %6260 = vmatprep.subr.mxu0 0.0
    %6261 = vmatpush2.msra.mxu0 0.0
    %6262 = vmatprep.subr.mxu0 0.0
    %6263 = vmatpush2.msra.mxu0 0.0
    %6264 = vmatprep.mubr.f32.mxu0 0.0
    %6265 = vmatmul.mubr.f32.gmra.mxu0 %v6195
    %v6266 = vpop.f32.mrf.mxu0
    %v6267 = vadd.f32 0.0, %v6266
    %v6268 = vpop.f32.mrf.mxu0
    %6269 = vmatprep.mubr.f32.mxu0 0.0
    %6270 = vmatmul.mubr.f32.gmra.mxu0 %v6198
    %v6271 = vpop.f32.mrf.mxu0
    %v6272 = vadd.f32 0.0, %v6271
    %v6273 = vpop.f32.mrf.mxu0
    %6274 = vdwg.mxu0
    %6275 = vrot.lane.b32.xlu0 %v784, 64
    %v6276 = vpop.permute.xlu0 %6275
    %6277 = vrot.lane.b32.xlu0 %v786, 64
    %v6278 = vpop.permute.xlu0 %6277
    %v6282 = vsel %vm52, %v4405, 0
    %v6285 = vsel %vm52, %v4407, 0
    %6287 = vmatprep.subr.mxu0 0.0
    %6288 = vmatpush1.msra.mxu0 0.0
    %6289 = vmatprep.subr.mxu0 0.0
    %6290 = vmatpush1.msra.mxu0 0.0
    %6291 = vmatprep.subr.mxu0 0.0
    %6292 = vmatpush1.msra.mxu0 0.0
    %6293 = vmatprep.subr.mxu0 0.0
    %6294 = vmatpush1.msra.mxu0 0.0
    %6295 = vmatprep.subr.mxu0 0.0
    %6296 = vmatpush1.msra.mxu0 0.0
    %6297 = vmatprep.subr.mxu0 0.0
    %6298 = vmatpush1.msra.mxu0 0.0
    %6299 = vmatprep.subr.mxu0 0.0
    %6300 = vmatpush1.msra.mxu0 0.0
    %6301 = vmatprep.subr.mxu0 0.0
    %6302 = vmatpush1.msra.mxu0 0.0
    %6303 = vmatprep.subr.mxu0 0.0
    %6304 = vmatpush1.msra.mxu0 0.0
    %6305 = vmatprep.subr.mxu0 0.0
    %6306 = vmatpush1.msra.mxu0 0.0
    %6307 = vmatprep.subr.mxu0 0.0
    %6308 = vmatpush1.msra.mxu0 0.0
    %6309 = vmatprep.subr.mxu0 0.0
    %6310 = vmatpush1.msra.mxu0 0.0
    %6311 = vmatprep.subr.mxu0 0.0
    %6312 = vmatpush1.msra.mxu0 0.0
    %6313 = vmatprep.subr.mxu0 0.0
    %6314 = vmatpush1.msra.mxu0 0.0
    %6315 = vmatprep.subr.mxu0 0.0
    %6316 = vmatpush1.msra.mxu0 %v6278
    %6317 = vmatprep.subr.mxu0 0.0
    %6318 = vmatpush1.msra.mxu0 %v6276
    %6319 = vmatprep.subr.mxu0 0.0
    %6320 = vmatpush2.msra.mxu0 0.0
    %6321 = vmatprep.subr.mxu0 0.0
    %6322 = vmatpush2.msra.mxu0 0.0
    %6323 = vmatprep.subr.mxu0 0.0
    %6324 = vmatpush2.msra.mxu0 0.0
    %6325 = vmatprep.subr.mxu0 0.0
    %6326 = vmatpush2.msra.mxu0 0.0
    %6327 = vmatprep.subr.mxu0 0.0
    %6328 = vmatpush2.msra.mxu0 0.0
    %6329 = vmatprep.subr.mxu0 0.0
    %6330 = vmatpush2.msra.mxu0 0.0
    %6331 = vmatprep.subr.mxu0 0.0
    %6332 = vmatpush2.msra.mxu0 0.0
    %6333 = vmatprep.subr.mxu0 0.0
    %6334 = vmatpush2.msra.mxu0 0.0
    %6335 = vmatprep.subr.mxu0 0.0
    %6336 = vmatpush2.msra.mxu0 0.0
    %6337 = vmatprep.subr.mxu0 0.0
    %6338 = vmatpush2.msra.mxu0 0.0
    %6339 = vmatprep.subr.mxu0 0.0
    %6340 = vmatpush2.msra.mxu0 0.0
    %6341 = vmatprep.subr.mxu0 0.0
    %6342 = vmatpush2.msra.mxu0 0.0
    %6343 = vmatprep.subr.mxu0 0.0
    %6344 = vmatpush2.msra.mxu0 0.0
    %6345 = vmatprep.subr.mxu0 0.0
    %6346 = vmatpush2.msra.mxu0 0.0
    %6347 = vmatprep.subr.mxu0 0.0
    %6348 = vmatpush2.msra.mxu0 0.0
    %6349 = vmatprep.subr.mxu0 0.0
    %6350 = vmatpush2.msra.mxu0 0.0
    %6351 = vmatprep.mubr.f32.mxu0 0.0
    %6352 = vmatmul.mubr.f32.gmra.mxu0 %v6282
    %v6353 = vpop.f32.mrf.mxu0
    %v6354 = vadd.f32 0.0, %v6353
    %v6355 = vpop.f32.mrf.mxu0
    %6356 = vmatprep.mubr.f32.mxu0 0.0
    %6357 = vmatmul.mubr.f32.gmra.mxu0 %v6285
    %v6358 = vpop.f32.mrf.mxu0
    %v6359 = vadd.f32 0.0, %v6358
    %v6360 = vpop.f32.mrf.mxu0
    %6361 = vdwg.mxu0
    %6362 = vrot.lane.b32.xlu0 %v788, 64
    %v6363 = vpop.permute.xlu0 %6362
    %6364 = vrot.lane.b32.xlu0 %v790, 64
    %v6365 = vpop.permute.xlu0 %6364
    %v6369 = vsel %vm52, %v4409, 0
    %v6372 = vsel %vm52, %v4411, 0
    %6374 = vmatprep.subr.mxu0 0.0
    %6375 = vmatpush1.msra.mxu0 0.0
    %6376 = vmatprep.subr.mxu0 0.0
    %6377 = vmatpush1.msra.mxu0 0.0
    %6378 = vmatprep.subr.mxu0 0.0
    %6379 = vmatpush1.msra.mxu0 0.0
    %6380 = vmatprep.subr.mxu0 0.0
    %6381 = vmatpush1.msra.mxu0 0.0
    %6382 = vmatprep.subr.mxu0 0.0
    %6383 = vmatpush1.msra.mxu0 0.0
    %6384 = vmatprep.subr.mxu0 0.0
    %6385 = vmatpush1.msra.mxu0 0.0
    %6386 = vmatprep.subr.mxu0 0.0
    %6387 = vmatpush1.msra.mxu0 0.0
    %6388 = vmatprep.subr.mxu0 0.0
    %6389 = vmatpush1.msra.mxu0 0.0
    %6390 = vmatprep.subr.mxu0 0.0
    %6391 = vmatpush1.msra.mxu0 0.0
    %6392 = vmatprep.subr.mxu0 0.0
    %6393 = vmatpush1.msra.mxu0 0.0
    %6394 = vmatprep.subr.mxu0 0.0
    %6395 = vmatpush1.msra.mxu0 0.0
    %6396 = vmatprep.subr.mxu0 0.0
    %6397 = vmatpush1.msra.mxu0 0.0
    %6398 = vmatprep.subr.mxu0 0.0
    %6399 = vmatpush1.msra.mxu0 0.0
    %6400 = vmatprep.subr.mxu0 0.0
    %6401 = vmatpush1.msra.mxu0 0.0
    %6402 = vmatprep.subr.mxu0 0.0
    %6403 = vmatpush1.msra.mxu0 %v6365
    %6404 = vmatprep.subr.mxu0 0.0
    %6405 = vmatpush1.msra.mxu0 %v6363
    %6406 = vmatprep.subr.mxu0 0.0
    %6407 = vmatpush2.msra.mxu0 0.0
    %6408 = vmatprep.subr.mxu0 0.0
    %6409 = vmatpush2.msra.mxu0 0.0
    %6410 = vmatprep.subr.mxu0 0.0
    %6411 = vmatpush2.msra.mxu0 0.0
    %6412 = vmatprep.subr.mxu0 0.0
    %6413 = vmatpush2.msra.mxu0 0.0
    %6414 = vmatprep.subr.mxu0 0.0
    %6415 = vmatpush2.msra.mxu0 0.0
    %6416 = vmatprep.subr.mxu0 0.0
    %6417 = vmatpush2.msra.mxu0 0.0
    %6418 = vmatprep.subr.mxu0 0.0
    %6419 = vmatpush2.msra.mxu0 0.0
    %6420 = vmatprep.subr.mxu0 0.0
    %6421 = vmatpush2.msra.mxu0 0.0
    %6422 = vmatprep.subr.mxu0 0.0
    %6423 = vmatpush2.msra.mxu0 0.0
    %6424 = vmatprep.subr.mxu0 0.0
    %6425 = vmatpush2.msra.mxu0 0.0
    %6426 = vmatprep.subr.mxu0 0.0
    %6427 = vmatpush2.msra.mxu0 0.0
    %6428 = vmatprep.subr.mxu0 0.0
    %6429 = vmatpush2.msra.mxu0 0.0
    %6430 = vmatprep.subr.mxu0 0.0
    %6431 = vmatpush2.msra.mxu0 0.0
    %6432 = vmatprep.subr.mxu0 0.0
    %6433 = vmatpush2.msra.mxu0 0.0
    %6434 = vmatprep.subr.mxu0 0.0
    %6435 = vmatpush2.msra.mxu0 0.0
    %6436 = vmatprep.subr.mxu0 0.0
    %6437 = vmatpush2.msra.mxu0 0.0
    %6438 = vmatprep.mubr.f32.mxu0 0.0
    %6439 = vmatmul.mubr.f32.gmra.mxu0 %v6369
    %v6440 = vpop.f32.mrf.mxu0
    %v6441 = vadd.f32 0.0, %v6440
    %v6442 = vpop.f32.mrf.mxu0
    %6443 = vmatprep.mubr.f32.mxu0 0.0
    %6444 = vmatmul.mubr.f32.gmra.mxu0 %v6372
    %v6445 = vpop.f32.mrf.mxu0
    %v6446 = vadd.f32 0.0, %v6445
    %v6447 = vpop.f32.mrf.mxu0
    %6448 = vdwg.mxu0
    %6449 = vrot.lane.b32.xlu0 %v792, 64
    %v6450 = vpop.permute.xlu0 %6449
    %6451 = vrot.lane.b32.xlu0 %v794, 64
    %v6452 = vpop.permute.xlu0 %6451
    %v6456 = vsel %vm52, %v4413, 0
    %v6459 = vsel %vm52, %v4415, 0
    %6461 = vmatprep.subr.mxu0 0.0
    %6462 = vmatpush1.msra.mxu0 0.0
    %6463 = vmatprep.subr.mxu0 0.0
    %6464 = vmatpush1.msra.mxu0 0.0
    %6465 = vmatprep.subr.mxu0 0.0
    %6466 = vmatpush1.msra.mxu0 0.0
    %6467 = vmatprep.subr.mxu0 0.0
    %6468 = vmatpush1.msra.mxu0 0.0
    %6469 = vmatprep.subr.mxu0 0.0
    %6470 = vmatpush1.msra.mxu0 0.0
    %6471 = vmatprep.subr.mxu0 0.0
    %6472 = vmatpush1.msra.mxu0 0.0
    %6473 = vmatprep.subr.mxu0 0.0
    %6474 = vmatpush1.msra.mxu0 0.0
    %6475 = vmatprep.subr.mxu0 0.0
    %6476 = vmatpush1.msra.mxu0 0.0
    %6477 = vmatprep.subr.mxu0 0.0
    %6478 = vmatpush1.msra.mxu0 0.0
    %6479 = vmatprep.subr.mxu0 0.0
    %6480 = vmatpush1.msra.mxu0 0.0
    %6481 = vmatprep.subr.mxu0 0.0
    %6482 = vmatpush1.msra.mxu0 0.0
    %6483 = vmatprep.subr.mxu0 0.0
    %6484 = vmatpush1.msra.mxu0 0.0
    %6485 = vmatprep.subr.mxu0 0.0
    %6486 = vmatpush1.msra.mxu0 0.0
    %6487 = vmatprep.subr.mxu0 0.0
    %6488 = vmatpush1.msra.mxu0 0.0
    %6489 = vmatprep.subr.mxu0 0.0
    %6490 = vmatpush1.msra.mxu0 %v6452
    %6491 = vmatprep.subr.mxu0 0.0
    %6492 = vmatpush1.msra.mxu0 %v6450
    %6493 = vmatprep.subr.mxu0 0.0
    %6494 = vmatpush2.msra.mxu0 0.0
    %6495 = vmatprep.subr.mxu0 0.0
    %6496 = vmatpush2.msra.mxu0 0.0
    %6497 = vmatprep.subr.mxu0 0.0
    %6498 = vmatpush2.msra.mxu0 0.0
    %6499 = vmatprep.subr.mxu0 0.0
    %6500 = vmatpush2.msra.mxu0 0.0
    %6501 = vmatprep.subr.mxu0 0.0
    %6502 = vmatpush2.msra.mxu0 0.0
    %6503 = vmatprep.subr.mxu0 0.0
    %6504 = vmatpush2.msra.mxu0 0.0
    %6505 = vmatprep.subr.mxu0 0.0
    %6506 = vmatpush2.msra.mxu0 0.0
    %6507 = vmatprep.subr.mxu0 0.0
    %6508 = vmatpush2.msra.mxu0 0.0
    %6509 = vmatprep.subr.mxu0 0.0
    %6510 = vmatpush2.msra.mxu0 0.0
    %6511 = vmatprep.subr.mxu0 0.0
    %6512 = vmatpush2.msra.mxu0 0.0
    %6513 = vmatprep.subr.mxu0 0.0
    %6514 = vmatpush2.msra.mxu0 0.0
    %6515 = vmatprep.subr.mxu0 0.0
    %6516 = vmatpush2.msra.mxu0 0.0
    %6517 = vmatprep.subr.mxu0 0.0
    %6518 = vmatpush2.msra.mxu0 0.0
    %6519 = vmatprep.subr.mxu0 0.0
    %6520 = vmatpush2.msra.mxu0 0.0
    %6521 = vmatprep.subr.mxu0 0.0
    %6522 = vmatpush2.msra.mxu0 0.0
    %6523 = vmatprep.subr.mxu0 0.0
    %6524 = vmatpush2.msra.mxu0 0.0
    %6525 = vmatprep.mubr.f32.mxu0 0.0
    %6526 = vmatmul.mubr.f32.gmra.mxu0 %v6456
    %v6527 = vpop.f32.mrf.mxu0
    %v6528 = vadd.f32 0.0, %v6527
    %v6529 = vpop.f32.mrf.mxu0
    %6530 = vmatprep.mubr.f32.mxu0 0.0
    %6531 = vmatmul.mubr.f32.gmra.mxu0 %v6459
    %v6532 = vpop.f32.mrf.mxu0
    %v6533 = vadd.f32 0.0, %v6532
    %v6534 = vpop.f32.mrf.mxu0
    %6535 = vdwg.mxu0
    %6536 = vrot.lane.b32.xlu0 %v796, 64
    %v6537 = vpop.permute.xlu0 %6536
    %6538 = vrot.lane.b32.xlu0 %v798, 64
    %v6539 = vpop.permute.xlu0 %6538
    %v6543 = vsel %vm52, %v4417, 0
    %v6546 = vsel %vm52, %v4419, 0
    %6548 = vmatprep.subr.mxu0 0.0
    %6549 = vmatpush1.msra.mxu0 0.0
    %6550 = vmatprep.subr.mxu0 0.0
    %6551 = vmatpush1.msra.mxu0 0.0
    %6552 = vmatprep.subr.mxu0 0.0
    %6553 = vmatpush1.msra.mxu0 0.0
    %6554 = vmatprep.subr.mxu0 0.0
    %6555 = vmatpush1.msra.mxu0 0.0
    %6556 = vmatprep.subr.mxu0 0.0
    %6557 = vmatpush1.msra.mxu0 0.0
    %6558 = vmatprep.subr.mxu0 0.0
    %6559 = vmatpush1.msra.mxu0 0.0
    %6560 = vmatprep.subr.mxu0 0.0
    %6561 = vmatpush1.msra.mxu0 0.0
    %6562 = vmatprep.subr.mxu0 0.0
    %6563 = vmatpush1.msra.mxu0 0.0
    %6564 = vmatprep.subr.mxu0 0.0
    %6565 = vmatpush1.msra.mxu0 0.0
    %6566 = vmatprep.subr.mxu0 0.0
    %6567 = vmatpush1.msra.mxu0 0.0
    %6568 = vmatprep.subr.mxu0 0.0
    %6569 = vmatpush1.msra.mxu0 0.0
    %6570 = vmatprep.subr.mxu0 0.0
    %6571 = vmatpush1.msra.mxu0 0.0
    %6572 = vmatprep.subr.mxu0 0.0
    %6573 = vmatpush1.msra.mxu0 0.0
    %6574 = vmatprep.subr.mxu0 0.0
    %6575 = vmatpush1.msra.mxu0 0.0
    %6576 = vmatprep.subr.mxu0 0.0
    %6577 = vmatpush1.msra.mxu0 %v6539
    %6578 = vmatprep.subr.mxu0 0.0
    %6579 = vmatpush1.msra.mxu0 %v6537
    %6580 = vmatprep.subr.mxu0 0.0
    %6581 = vmatpush2.msra.mxu0 0.0
    %6582 = vmatprep.subr.mxu0 0.0
    %6583 = vmatpush2.msra.mxu0 0.0
    %6584 = vmatprep.subr.mxu0 0.0
    %6585 = vmatpush2.msra.mxu0 0.0
    %6586 = vmatprep.subr.mxu0 0.0
    %6587 = vmatpush2.msra.mxu0 0.0
    %6588 = vmatprep.subr.mxu0 0.0
    %6589 = vmatpush2.msra.mxu0 0.0
    %6590 = vmatprep.subr.mxu0 0.0
    %6591 = vmatpush2.msra.mxu0 0.0
    %6592 = vmatprep.subr.mxu0 0.0
    %6593 = vmatpush2.msra.mxu0 0.0
    %6594 = vmatprep.subr.mxu0 0.0
    %6595 = vmatpush2.msra.mxu0 0.0
    %6596 = vmatprep.subr.mxu0 0.0
    %6597 = vmatpush2.msra.mxu0 0.0
    %6598 = vmatprep.subr.mxu0 0.0
    %6599 = vmatpush2.msra.mxu0 0.0
    %6600 = vmatprep.subr.mxu0 0.0
    %6601 = vmatpush2.msra.mxu0 0.0
    %6602 = vmatprep.subr.mxu0 0.0
    %6603 = vmatpush2.msra.mxu0 0.0
    %6604 = vmatprep.subr.mxu0 0.0
    %6605 = vmatpush2.msra.mxu0 0.0
    %6606 = vmatprep.subr.mxu0 0.0
    %6607 = vmatpush2.msra.mxu0 0.0
    %6608 = vmatprep.subr.mxu0 0.0
    %6609 = vmatpush2.msra.mxu0 0.0
    %6610 = vmatprep.subr.mxu0 0.0
    %6611 = vmatpush2.msra.mxu0 0.0
    %6612 = vmatprep.mubr.f32.mxu0 0.0
    %6613 = vmatmul.mubr.f32.gmra.mxu0 %v6543
    %v6614 = vpop.f32.mrf.mxu0
    %v6615 = vadd.f32 0.0, %v6614
    %v6616 = vpop.f32.mrf.mxu0
    %6617 = vmatprep.mubr.f32.mxu0 0.0
    %6618 = vmatmul.mubr.f32.gmra.mxu0 %v6546
    %v6619 = vpop.f32.mrf.mxu0
    %v6620 = vadd.f32 0.0, %v6619
    %v6621 = vpop.f32.mrf.mxu0
    %6622 = vdwg.mxu0
    %6623 = vrot.lane.b32.xlu0 %v800, 64
    %v6624 = vpop.permute.xlu0 %6623
    %6625 = vrot.lane.b32.xlu0 %v802, 64
    %v6626 = vpop.permute.xlu0 %6625
    %v6630 = vsel %vm52, %v4421, 0
    %v6633 = vsel %vm52, %v4423, 0
    %6635 = vmatprep.subr.mxu0 0.0
    %6636 = vmatpush1.msra.mxu0 0.0
    %6637 = vmatprep.subr.mxu0 0.0
    %6638 = vmatpush1.msra.mxu0 0.0
    %6639 = vmatprep.subr.mxu0 0.0
    %6640 = vmatpush1.msra.mxu0 0.0
    %6641 = vmatprep.subr.mxu0 0.0
    %6642 = vmatpush1.msra.mxu0 0.0
    %6643 = vmatprep.subr.mxu0 0.0
    %6644 = vmatpush1.msra.mxu0 0.0
    %6645 = vmatprep.subr.mxu0 0.0
    %6646 = vmatpush1.msra.mxu0 0.0
    %6647 = vmatprep.subr.mxu0 0.0
    %6648 = vmatpush1.msra.mxu0 0.0
    %6649 = vmatprep.subr.mxu0 0.0
    %6650 = vmatpush1.msra.mxu0 0.0
    %6651 = vmatprep.subr.mxu0 0.0
    %6652 = vmatpush1.msra.mxu0 0.0
    %6653 = vmatprep.subr.mxu0 0.0
    %6654 = vmatpush1.msra.mxu0 0.0
    %6655 = vmatprep.subr.mxu0 0.0
    %6656 = vmatpush1.msra.mxu0 0.0
    %6657 = vmatprep.subr.mxu0 0.0
    %6658 = vmatpush1.msra.mxu0 0.0
    %6659 = vmatprep.subr.mxu0 0.0
    %6660 = vmatpush1.msra.mxu0 0.0
    %6661 = vmatprep.subr.mxu0 0.0
    %6662 = vmatpush1.msra.mxu0 0.0
    %6663 = vmatprep.subr.mxu0 0.0
    %6664 = vmatpush1.msra.mxu0 %v6626
    %6665 = vmatprep.subr.mxu0 0.0
    %6666 = vmatpush1.msra.mxu0 %v6624
    %6667 = vmatprep.subr.mxu0 0.0
    %6668 = vmatpush2.msra.mxu0 0.0
    %6669 = vmatprep.subr.mxu0 0.0
    %6670 = vmatpush2.msra.mxu0 0.0
    %6671 = vmatprep.subr.mxu0 0.0
    %6672 = vmatpush2.msra.mxu0 0.0
    %6673 = vmatprep.subr.mxu0 0.0
    %6674 = vmatpush2.msra.mxu0 0.0
    %6675 = vmatprep.subr.mxu0 0.0
    %6676 = vmatpush2.msra.mxu0 0.0
    %6677 = vmatprep.subr.mxu0 0.0
    %6678 = vmatpush2.msra.mxu0 0.0
    %6679 = vmatprep.subr.mxu0 0.0
    %6680 = vmatpush2.msra.mxu0 0.0
    %6681 = vmatprep.subr.mxu0 0.0
    %6682 = vmatpush2.msra.mxu0 0.0
    %6683 = vmatprep.subr.mxu0 0.0
    %6684 = vmatpush2.msra.mxu0 0.0
    %6685 = vmatprep.subr.mxu0 0.0
    %6686 = vmatpush2.msra.mxu0 0.0
    %6687 = vmatprep.subr.mxu0 0.0
    %6688 = vmatpush2.msra.mxu0 0.0
    %6689 = vmatprep.subr.mxu0 0.0
    %6690 = vmatpush2.msra.mxu0 0.0
    %6691 = vmatprep.subr.mxu0 0.0
    %6692 = vmatpush2.msra.mxu0 0.0
    %6693 = vmatprep.subr.mxu0 0.0
    %6694 = vmatpush2.msra.mxu0 0.0
    %6695 = vmatprep.subr.mxu0 0.0
    %6696 = vmatpush2.msra.mxu0 0.0
    %6697 = vmatprep.subr.mxu0 0.0
    %6698 = vmatpush2.msra.mxu0 0.0
    %6699 = vmatprep.mubr.f32.mxu0 0.0
    %6700 = vmatmul.mubr.f32.gmra.mxu0 %v6630
    %v6701 = vpop.f32.mrf.mxu0
    %v6702 = vadd.f32 0.0, %v6701
    %v6703 = vpop.f32.mrf.mxu0
    %6704 = vmatprep.mubr.f32.mxu0 0.0
    %6705 = vmatmul.mubr.f32.gmra.mxu0 %v6633
    %v6706 = vpop.f32.mrf.mxu0
    %v6707 = vadd.f32 0.0, %v6706
    %v6708 = vpop.f32.mrf.mxu0
    %6709 = vdwg.mxu0
    %6710 = vrot.lane.b32.xlu0 %v804, 64
    %v6711 = vpop.permute.xlu0 %6710
    %6712 = vrot.lane.b32.xlu0 %v806, 64
    %v6713 = vpop.permute.xlu0 %6712
    %v6717 = vsel %vm52, %v4425, 0
    %v6720 = vsel %vm52, %v4427, 0
    %6722 = vmatprep.subr.mxu0 0.0
    %6723 = vmatpush1.msra.mxu0 0.0
    %6724 = vmatprep.subr.mxu0 0.0
    %6725 = vmatpush1.msra.mxu0 0.0
    %6726 = vmatprep.subr.mxu0 0.0
    %6727 = vmatpush1.msra.mxu0 0.0
    %6728 = vmatprep.subr.mxu0 0.0
    %6729 = vmatpush1.msra.mxu0 0.0
    %6730 = vmatprep.subr.mxu0 0.0
    %6731 = vmatpush1.msra.mxu0 0.0
    %6732 = vmatprep.subr.mxu0 0.0
    %6733 = vmatpush1.msra.mxu0 0.0
    %6734 = vmatprep.subr.mxu0 0.0
    %6735 = vmatpush1.msra.mxu0 0.0
    %6736 = vmatprep.subr.mxu0 0.0
    %6737 = vmatpush1.msra.mxu0 0.0
    %6738 = vmatprep.subr.mxu0 0.0
    %6739 = vmatpush1.msra.mxu0 0.0
    %6740 = vmatprep.subr.mxu0 0.0
    %6741 = vmatpush1.msra.mxu0 0.0
    %6742 = vmatprep.subr.mxu0 0.0
    %6743 = vmatpush1.msra.mxu0 0.0
    %6744 = vmatprep.subr.mxu0 0.0
    %6745 = vmatpush1.msra.mxu0 0.0
    %6746 = vmatprep.subr.mxu0 0.0
    %6747 = vmatpush1.msra.mxu0 0.0
    %6748 = vmatprep.subr.mxu0 0.0
    %6749 = vmatpush1.msra.mxu0 0.0
    %6750 = vmatprep.subr.mxu0 0.0
    %6751 = vmatpush1.msra.mxu0 %v6713
    %6752 = vmatprep.subr.mxu0 0.0
    %6753 = vmatpush1.msra.mxu0 %v6711
    %6754 = vmatprep.subr.mxu0 0.0
    %6755 = vmatpush2.msra.mxu0 0.0
    %6756 = vmatprep.subr.mxu0 0.0
    %6757 = vmatpush2.msra.mxu0 0.0
    %6758 = vmatprep.subr.mxu0 0.0
    %6759 = vmatpush2.msra.mxu0 0.0
    %6760 = vmatprep.subr.mxu0 0.0
    %6761 = vmatpush2.msra.mxu0 0.0
    %6762 = vmatprep.subr.mxu0 0.0
    %6763 = vmatpush2.msra.mxu0 0.0
    %6764 = vmatprep.subr.mxu0 0.0
    %6765 = vmatpush2.msra.mxu0 0.0
    %6766 = vmatprep.subr.mxu0 0.0
    %6767 = vmatpush2.msra.mxu0 0.0
    %6768 = vmatprep.subr.mxu0 0.0
    %6769 = vmatpush2.msra.mxu0 0.0
    %6770 = vmatprep.subr.mxu0 0.0
    %6771 = vmatpush2.msra.mxu0 0.0
    %6772 = vmatprep.subr.mxu0 0.0
    %6773 = vmatpush2.msra.mxu0 0.0
    %6774 = vmatprep.subr.mxu0 0.0
    %6775 = vmatpush2.msra.mxu0 0.0
    %6776 = vmatprep.subr.mxu0 0.0
    %6777 = vmatpush2.msra.mxu0 0.0
    %6778 = vmatprep.subr.mxu0 0.0
    %6779 = vmatpush2.msra.mxu0 0.0
    %6780 = vmatprep.subr.mxu0 0.0
    %6781 = vmatpush2.msra.mxu0 0.0
    %6782 = vmatprep.subr.mxu0 0.0
    %6783 = vmatpush2.msra.mxu0 0.0
    %6784 = vmatprep.subr.mxu0 0.0
    %6785 = vmatpush2.msra.mxu0 0.0
    %6786 = vmatprep.mubr.f32.mxu0 0.0
    %6787 = vmatmul.mubr.f32.gmra.mxu0 %v6717
    %v6788 = vpop.f32.mrf.mxu0
    %v6789 = vadd.f32 0.0, %v6788
    %v6790 = vpop.f32.mrf.mxu0
    %6791 = vmatprep.mubr.f32.mxu0 0.0
    %6792 = vmatmul.mubr.f32.gmra.mxu0 %v6720
    %v6793 = vpop.f32.mrf.mxu0
    %v6794 = vadd.f32 0.0, %v6793
    %v6795 = vpop.f32.mrf.mxu0
    %6796 = vdwg.mxu0
    %6797 = vrot.lane.b32.xlu0 %v808, 64
    %v6798 = vpop.permute.xlu0 %6797
    %6799 = vrot.lane.b32.xlu0 %v810, 64
    %v6800 = vpop.permute.xlu0 %6799
    %v6804 = vsel %vm52, %v4429, 0
    %v6807 = vsel %vm52, %v4431, 0
    %6809 = vmatprep.subr.mxu0 0.0
    %6810 = vmatpush1.msra.mxu0 0.0
    %6811 = vmatprep.subr.mxu0 0.0
    %6812 = vmatpush1.msra.mxu0 0.0
    %6813 = vmatprep.subr.mxu0 0.0
    %6814 = vmatpush1.msra.mxu0 0.0
    %6815 = vmatprep.subr.mxu0 0.0
    %6816 = vmatpush1.msra.mxu0 0.0
    %6817 = vmatprep.subr.mxu0 0.0
    %6818 = vmatpush1.msra.mxu0 0.0
    %6819 = vmatprep.subr.mxu0 0.0
    %6820 = vmatpush1.msra.mxu0 0.0
    %6821 = vmatprep.subr.mxu0 0.0
    %6822 = vmatpush1.msra.mxu0 0.0
    %6823 = vmatprep.subr.mxu0 0.0
    %6824 = vmatpush1.msra.mxu0 0.0
    %6825 = vmatprep.subr.mxu0 0.0
    %6826 = vmatpush1.msra.mxu0 0.0
    %6827 = vmatprep.subr.mxu0 0.0
    %6828 = vmatpush1.msra.mxu0 0.0
    %6829 = vmatprep.subr.mxu0 0.0
    %6830 = vmatpush1.msra.mxu0 0.0
    %6831 = vmatprep.subr.mxu0 0.0
    %6832 = vmatpush1.msra.mxu0 0.0
    %6833 = vmatprep.subr.mxu0 0.0
    %6834 = vmatpush1.msra.mxu0 0.0
    %6835 = vmatprep.subr.mxu0 0.0
    %6836 = vmatpush1.msra.mxu0 0.0
    %6837 = vmatprep.subr.mxu0 0.0
    %6838 = vmatpush1.msra.mxu0 %v6800
    %6839 = vmatprep.subr.mxu0 0.0
    %6840 = vmatpush1.msra.mxu0 %v6798
    %6841 = vmatprep.subr.mxu0 0.0
    %6842 = vmatpush2.msra.mxu0 0.0
    %6843 = vmatprep.subr.mxu0 0.0
    %6844 = vmatpush2.msra.mxu0 0.0
    %6845 = vmatprep.subr.mxu0 0.0
    %6846 = vmatpush2.msra.mxu0 0.0
    %6847 = vmatprep.subr.mxu0 0.0
    %6848 = vmatpush2.msra.mxu0 0.0
    %6849 = vmatprep.subr.mxu0 0.0
    %6850 = vmatpush2.msra.mxu0 0.0
    %6851 = vmatprep.subr.mxu0 0.0
    %6852 = vmatpush2.msra.mxu0 0.0
    %6853 = vmatprep.subr.mxu0 0.0
    %6854 = vmatpush2.msra.mxu0 0.0
    %6855 = vmatprep.subr.mxu0 0.0
    %6856 = vmatpush2.msra.mxu0 0.0
    %6857 = vmatprep.subr.mxu0 0.0
    %6858 = vmatpush2.msra.mxu0 0.0
    %6859 = vmatprep.subr.mxu0 0.0
    %6860 = vmatpush2.msra.mxu0 0.0
    %6861 = vmatprep.subr.mxu0 0.0
    %6862 = vmatpush2.msra.mxu0 0.0
    %6863 = vmatprep.subr.mxu0 0.0
    %6864 = vmatpush2.msra.mxu0 0.0
    %6865 = vmatprep.subr.mxu0 0.0
    %6866 = vmatpush2.msra.mxu0 0.0
    %6867 = vmatprep.subr.mxu0 0.0
    %6868 = vmatpush2.msra.mxu0 0.0
    %6869 = vmatprep.subr.mxu0 0.0
    %6870 = vmatpush2.msra.mxu0 0.0
    %6871 = vmatprep.subr.mxu0 0.0
    %6872 = vmatpush2.msra.mxu0 0.0
    %6873 = vmatprep.mubr.f32.mxu0 0.0
    %6874 = vmatmul.mubr.f32.gmra.mxu0 %v6804
    %v6875 = vpop.f32.mrf.mxu0
    %v6876 = vadd.f32 0.0, %v6875
    %v6877 = vpop.f32.mrf.mxu0
    %6878 = vmatprep.mubr.f32.mxu0 0.0
    %6879 = vmatmul.mubr.f32.gmra.mxu0 %v6807
    %v6880 = vpop.f32.mrf.mxu0
    %v6881 = vadd.f32 0.0, %v6880
    %v6882 = vpop.f32.mrf.mxu0
    %6883 = vdwg.mxu0
    %6884 = vrot.lane.b32.xlu0 %v812, 64
    %v6885 = vpop.permute.xlu0 %6884
    %6886 = vrot.lane.b32.xlu0 %v814, 64
    %v6887 = vpop.permute.xlu0 %6886
    %v6891 = vsel %vm52, %v4433, 0
    %v6894 = vsel %vm52, %v4435, 0
    %6896 = vmatprep.subr.mxu0 0.0
    %6897 = vmatpush1.msra.mxu0 0.0
    %6898 = vmatprep.subr.mxu0 0.0
    %6899 = vmatpush1.msra.mxu0 0.0
    %6900 = vmatprep.subr.mxu0 0.0
    %6901 = vmatpush1.msra.mxu0 0.0
    %6902 = vmatprep.subr.mxu0 0.0
    %6903 = vmatpush1.msra.mxu0 0.0
    %6904 = vmatprep.subr.mxu0 0.0
    %6905 = vmatpush1.msra.mxu0 0.0
    %6906 = vmatprep.subr.mxu0 0.0
    %6907 = vmatpush1.msra.mxu0 0.0
    %6908 = vmatprep.subr.mxu0 0.0
    %6909 = vmatpush1.msra.mxu0 0.0
    %6910 = vmatprep.subr.mxu0 0.0
    %6911 = vmatpush1.msra.mxu0 0.0
    %6912 = vmatprep.subr.mxu0 0.0
    %6913 = vmatpush1.msra.mxu0 0.0
    %6914 = vmatprep.subr.mxu0 0.0
    %6915 = vmatpush1.msra.mxu0 0.0
    %6916 = vmatprep.subr.mxu0 0.0
    %6917 = vmatpush1.msra.mxu0 0.0
    %6918 = vmatprep.subr.mxu0 0.0
    %6919 = vmatpush1.msra.mxu0 0.0
    %6920 = vmatprep.subr.mxu0 0.0
    %6921 = vmatpush1.msra.mxu0 0.0
    %6922 = vmatprep.subr.mxu0 0.0
    %6923 = vmatpush1.msra.mxu0 0.0
    %6924 = vmatprep.subr.mxu0 0.0
    %6925 = vmatpush1.msra.mxu0 %v6887
    %6926 = vmatprep.subr.mxu0 0.0
    %6927 = vmatpush1.msra.mxu0 %v6885
    %6928 = vmatprep.subr.mxu0 0.0
    %6929 = vmatpush2.msra.mxu0 0.0
    %6930 = vmatprep.subr.mxu0 0.0
    %6931 = vmatpush2.msra.mxu0 0.0
    %6932 = vmatprep.subr.mxu0 0.0
    %6933 = vmatpush2.msra.mxu0 0.0
    %6934 = vmatprep.subr.mxu0 0.0
    %6935 = vmatpush2.msra.mxu0 0.0
    %6936 = vmatprep.subr.mxu0 0.0
    %6937 = vmatpush2.msra.mxu0 0.0
    %6938 = vmatprep.subr.mxu0 0.0
    %6939 = vmatpush2.msra.mxu0 0.0
    %6940 = vmatprep.subr.mxu0 0.0
    %6941 = vmatpush2.msra.mxu0 0.0
    %6942 = vmatprep.subr.mxu0 0.0
    %6943 = vmatpush2.msra.mxu0 0.0
    %6944 = vmatprep.subr.mxu0 0.0
    %6945 = vmatpush2.msra.mxu0 0.0
    %6946 = vmatprep.subr.mxu0 0.0
    %6947 = vmatpush2.msra.mxu0 0.0
    %6948 = vmatprep.subr.mxu0 0.0
    %6949 = vmatpush2.msra.mxu0 0.0
    %6950 = vmatprep.subr.mxu0 0.0
    %6951 = vmatpush2.msra.mxu0 0.0
    %6952 = vmatprep.subr.mxu0 0.0
    %6953 = vmatpush2.msra.mxu0 0.0
    %6954 = vmatprep.subr.mxu0 0.0
    %6955 = vmatpush2.msra.mxu0 0.0
    %6956 = vmatprep.subr.mxu0 0.0
    %6957 = vmatpush2.msra.mxu0 0.0
    %6958 = vmatprep.subr.mxu0 0.0
    %6959 = vmatpush2.msra.mxu0 0.0
    %6960 = vmatprep.mubr.f32.mxu0 0.0
    %6961 = vmatmul.mubr.f32.gmra.mxu0 %v6891
    %v6962 = vpop.f32.mrf.mxu0
    %v6963 = vadd.f32 0.0, %v6962
    %v6964 = vpop.f32.mrf.mxu0
    %6965 = vmatprep.mubr.f32.mxu0 0.0
    %6966 = vmatmul.mubr.f32.gmra.mxu0 %v6894
    %v6967 = vpop.f32.mrf.mxu0
    %v6968 = vadd.f32 0.0, %v6967
    %v6969 = vpop.f32.mrf.mxu0
    %6970 = vdwg.mxu0
    %6971 = vrot.lane.b32.xlu0 %v816, 64
    %v6972 = vpop.permute.xlu0 %6971
    %6973 = vrot.lane.b32.xlu0 %v818, 64
    %v6974 = vpop.permute.xlu0 %6973
    %v6978 = vsel %vm52, %v4437, 0
    %v6981 = vsel %vm52, %v4439, 0
    %6983 = vmatprep.subr.mxu0 0.0
    %6984 = vmatpush1.msra.mxu0 0.0
    %6985 = vmatprep.subr.mxu0 0.0
    %6986 = vmatpush1.msra.mxu0 0.0
    %6987 = vmatprep.subr.mxu0 0.0
    %6988 = vmatpush1.msra.mxu0 0.0
    %6989 = vmatprep.subr.mxu0 0.0
    %6990 = vmatpush1.msra.mxu0 0.0
    %6991 = vmatprep.subr.mxu0 0.0
    %6992 = vmatpush1.msra.mxu0 0.0
    %6993 = vmatprep.subr.mxu0 0.0
    %6994 = vmatpush1.msra.mxu0 0.0
    %6995 = vmatprep.subr.mxu0 0.0
    %6996 = vmatpush1.msra.mxu0 0.0
    %6997 = vmatprep.subr.mxu0 0.0
    %6998 = vmatpush1.msra.mxu0 0.0
    %6999 = vmatprep.subr.mxu0 0.0
    %7000 = vmatpush1.msra.mxu0 0.0
    %7001 = vmatprep.subr.mxu0 0.0
    %7002 = vmatpush1.msra.mxu0 0.0
    %7003 = vmatprep.subr.mxu0 0.0
    %7004 = vmatpush1.msra.mxu0 0.0
    %7005 = vmatprep.subr.mxu0 0.0
    %7006 = vmatpush1.msra.mxu0 0.0
    %7007 = vmatprep.subr.mxu0 0.0
    %7008 = vmatpush1.msra.mxu0 0.0
    %7009 = vmatprep.subr.mxu0 0.0
    %7010 = vmatpush1.msra.mxu0 0.0
    %7011 = vmatprep.subr.mxu0 0.0
    %7012 = vmatpush1.msra.mxu0 %v6974
    %7013 = vmatprep.subr.mxu0 0.0
    %7014 = vmatpush1.msra.mxu0 %v6972
    %7015 = vmatprep.subr.mxu0 0.0
    %7016 = vmatpush2.msra.mxu0 0.0
    %7017 = vmatprep.subr.mxu0 0.0
    %7018 = vmatpush2.msra.mxu0 0.0
    %7019 = vmatprep.subr.mxu0 0.0
    %7020 = vmatpush2.msra.mxu0 0.0
    %7021 = vmatprep.subr.mxu0 0.0
    %7022 = vmatpush2.msra.mxu0 0.0
    %7023 = vmatprep.subr.mxu0 0.0
    %7024 = vmatpush2.msra.mxu0 0.0
    %7025 = vmatprep.subr.mxu0 0.0
    %7026 = vmatpush2.msra.mxu0 0.0
    %7027 = vmatprep.subr.mxu0 0.0
    %7028 = vmatpush2.msra.mxu0 0.0
    %7029 = vmatprep.subr.mxu0 0.0
    %7030 = vmatpush2.msra.mxu0 0.0
    %7031 = vmatprep.subr.mxu0 0.0
    %7032 = vmatpush2.msra.mxu0 0.0
    %7033 = vmatprep.subr.mxu0 0.0
    %7034 = vmatpush2.msra.mxu0 0.0
    %7035 = vmatprep.subr.mxu0 0.0
    %7036 = vmatpush2.msra.mxu0 0.0
    %7037 = vmatprep.subr.mxu0 0.0
    %7038 = vmatpush2.msra.mxu0 0.0
    %7039 = vmatprep.subr.mxu0 0.0
    %7040 = vmatpush2.msra.mxu0 0.0
    %7041 = vmatprep.subr.mxu0 0.0
    %7042 = vmatpush2.msra.mxu0 0.0
    %7043 = vmatprep.subr.mxu0 0.0
    %7044 = vmatpush2.msra.mxu0 0.0
    %7045 = vmatprep.subr.mxu0 0.0
    %7046 = vmatpush2.msra.mxu0 0.0
    %7047 = vmatprep.mubr.f32.mxu0 0.0
    %7048 = vmatmul.mubr.f32.gmra.mxu0 %v6978
    %v7049 = vpop.f32.mrf.mxu0
    %v7050 = vadd.f32 0.0, %v7049
    %v7051 = vpop.f32.mrf.mxu0
    %7052 = vmatprep.mubr.f32.mxu0 0.0
    %7053 = vmatmul.mubr.f32.gmra.mxu0 %v6981
    %v7054 = vpop.f32.mrf.mxu0
    %v7055 = vadd.f32 0.0, %v7054
    %v7056 = vpop.f32.mrf.mxu0
    %7057 = vdwg.mxu0
    %7058 = vrot.lane.b32.xlu0 %v820, 64
    %v7059 = vpop.permute.xlu0 %7058
    %7060 = vrot.lane.b32.xlu0 %v822, 64
    %v7061 = vpop.permute.xlu0 %7060
    %v7065 = vsel %vm52, %v4441, 0
    %v7068 = vsel %vm52, %v4443, 0
    %7070 = vmatprep.subr.mxu0 0.0
    %7071 = vmatpush1.msra.mxu0 0.0
    %7072 = vmatprep.subr.mxu0 0.0
    %7073 = vmatpush1.msra.mxu0 0.0
    %7074 = vmatprep.subr.mxu0 0.0
    %7075 = vmatpush1.msra.mxu0 0.0
    %7076 = vmatprep.subr.mxu0 0.0
    %7077 = vmatpush1.msra.mxu0 0.0
    %7078 = vmatprep.subr.mxu0 0.0
    %7079 = vmatpush1.msra.mxu0 0.0
    %7080 = vmatprep.subr.mxu0 0.0
    %7081 = vmatpush1.msra.mxu0 0.0
    %7082 = vmatprep.subr.mxu0 0.0
    %7083 = vmatpush1.msra.mxu0 0.0
    %7084 = vmatprep.subr.mxu0 0.0
    %7085 = vmatpush1.msra.mxu0 0.0
    %7086 = vmatprep.subr.mxu0 0.0
    %7087 = vmatpush1.msra.mxu0 0.0
    %7088 = vmatprep.subr.mxu0 0.0
    %7089 = vmatpush1.msra.mxu0 0.0
    %7090 = vmatprep.subr.mxu0 0.0
    %7091 = vmatpush1.msra.mxu0 0.0
    %7092 = vmatprep.subr.mxu0 0.0
    %7093 = vmatpush1.msra.mxu0 0.0
    %7094 = vmatprep.subr.mxu0 0.0
    %7095 = vmatpush1.msra.mxu0 0.0
    %7096 = vmatprep.subr.mxu0 0.0
    %7097 = vmatpush1.msra.mxu0 0.0
    %7098 = vmatprep.subr.mxu0 0.0
    %7099 = vmatpush1.msra.mxu0 %v7061
    %7100 = vmatprep.subr.mxu0 0.0
    %7101 = vmatpush1.msra.mxu0 %v7059
    %7102 = vmatprep.subr.mxu0 0.0
    %7103 = vmatpush2.msra.mxu0 0.0
    %7104 = vmatprep.subr.mxu0 0.0
    %7105 = vmatpush2.msra.mxu0 0.0
    %7106 = vmatprep.subr.mxu0 0.0
    %7107 = vmatpush2.msra.mxu0 0.0
    %7108 = vmatprep.subr.mxu0 0.0
    %7109 = vmatpush2.msra.mxu0 0.0
    %7110 = vmatprep.subr.mxu0 0.0
    %7111 = vmatpush2.msra.mxu0 0.0
    %7112 = vmatprep.subr.mxu0 0.0
    %7113 = vmatpush2.msra.mxu0 0.0
    %7114 = vmatprep.subr.mxu0 0.0
    %7115 = vmatpush2.msra.mxu0 0.0
    %7116 = vmatprep.subr.mxu0 0.0
    %7117 = vmatpush2.msra.mxu0 0.0
    %7118 = vmatprep.subr.mxu0 0.0
    %7119 = vmatpush2.msra.mxu0 0.0
    %7120 = vmatprep.subr.mxu0 0.0
    %7121 = vmatpush2.msra.mxu0 0.0
    %7122 = vmatprep.subr.mxu0 0.0
    %7123 = vmatpush2.msra.mxu0 0.0
    %7124 = vmatprep.subr.mxu0 0.0
    %7125 = vmatpush2.msra.mxu0 0.0
    %7126 = vmatprep.subr.mxu0 0.0
    %7127 = vmatpush2.msra.mxu0 0.0
    %7128 = vmatprep.subr.mxu0 0.0
    %7129 = vmatpush2.msra.mxu0 0.0
    %7130 = vmatprep.subr.mxu0 0.0
    %7131 = vmatpush2.msra.mxu0 0.0
    %7132 = vmatprep.subr.mxu0 0.0
    %7133 = vmatpush2.msra.mxu0 0.0
    %7134 = vmatprep.mubr.f32.mxu0 0.0
    %7135 = vmatmul.mubr.f32.gmra.mxu0 %v7065
    %v7136 = vpop.f32.mrf.mxu0
    %v7137 = vadd.f32 0.0, %v7136
    %v7138 = vpop.f32.mrf.mxu0
    %7139 = vmatprep.mubr.f32.mxu0 0.0
    %7140 = vmatmul.mubr.f32.gmra.mxu0 %v7068
    %v7141 = vpop.f32.mrf.mxu0
    %v7142 = vadd.f32 0.0, %v7141
    %v7143 = vpop.f32.mrf.mxu0
    %7144 = vdwg.mxu0
    %7145 = vrot.lane.b32.xlu0 %v824, 64
    %v7146 = vpop.permute.xlu0 %7145
    %7147 = vrot.lane.b32.xlu0 %v826, 64
    %v7148 = vpop.permute.xlu0 %7147
    %v7152 = vsel %vm52, %v4445, 0
    %v7155 = vsel %vm52, %v4447, 0
    %7157 = vmatprep.subr.mxu0 0.0
    %7158 = vmatpush1.msra.mxu0 0.0
    %7159 = vmatprep.subr.mxu0 0.0
    %7160 = vmatpush1.msra.mxu0 0.0
    %7161 = vmatprep.subr.mxu0 0.0
    %7162 = vmatpush1.msra.mxu0 0.0
    %7163 = vmatprep.subr.mxu0 0.0
    %7164 = vmatpush1.msra.mxu0 0.0
    %7165 = vmatprep.subr.mxu0 0.0
    %7166 = vmatpush1.msra.mxu0 0.0
    %7167 = vmatprep.subr.mxu0 0.0
    %7168 = vmatpush1.msra.mxu0 0.0
    %7169 = vmatprep.subr.mxu0 0.0
    %7170 = vmatpush1.msra.mxu0 0.0
    %7171 = vmatprep.subr.mxu0 0.0
    %7172 = vmatpush1.msra.mxu0 0.0
    %7173 = vmatprep.subr.mxu0 0.0
    %7174 = vmatpush1.msra.mxu0 0.0
    %7175 = vmatprep.subr.mxu0 0.0
    %7176 = vmatpush1.msra.mxu0 0.0
    %7177 = vmatprep.subr.mxu0 0.0
    %7178 = vmatpush1.msra.mxu0 0.0
    %7179 = vmatprep.subr.mxu0 0.0
    %7180 = vmatpush1.msra.mxu0 0.0
    %7181 = vmatprep.subr.mxu0 0.0
    %7182 = vmatpush1.msra.mxu0 0.0
    %7183 = vmatprep.subr.mxu0 0.0
    %7184 = vmatpush1.msra.mxu0 0.0
    %7185 = vmatprep.subr.mxu0 0.0
    %7186 = vmatpush1.msra.mxu0 %v7148
    %7187 = vmatprep.subr.mxu0 0.0
    %7188 = vmatpush1.msra.mxu0 %v7146
    %7189 = vmatprep.subr.mxu0 0.0
    %7190 = vmatpush2.msra.mxu0 0.0
    %7191 = vmatprep.subr.mxu0 0.0
    %7192 = vmatpush2.msra.mxu0 0.0
    %7193 = vmatprep.subr.mxu0 0.0
    %7194 = vmatpush2.msra.mxu0 0.0
    %7195 = vmatprep.subr.mxu0 0.0
    %7196 = vmatpush2.msra.mxu0 0.0
    %7197 = vmatprep.subr.mxu0 0.0
    %7198 = vmatpush2.msra.mxu0 0.0
    %7199 = vmatprep.subr.mxu0 0.0
    %7200 = vmatpush2.msra.mxu0 0.0
    %7201 = vmatprep.subr.mxu0 0.0
    %7202 = vmatpush2.msra.mxu0 0.0
    %7203 = vmatprep.subr.mxu0 0.0
    %7204 = vmatpush2.msra.mxu0 0.0
    %7205 = vmatprep.subr.mxu0 0.0
    %7206 = vmatpush2.msra.mxu0 0.0
    %7207 = vmatprep.subr.mxu0 0.0
    %7208 = vmatpush2.msra.mxu0 0.0
    %7209 = vmatprep.subr.mxu0 0.0
    %7210 = vmatpush2.msra.mxu0 0.0
    %7211 = vmatprep.subr.mxu0 0.0
    %7212 = vmatpush2.msra.mxu0 0.0
    %7213 = vmatprep.subr.mxu0 0.0
    %7214 = vmatpush2.msra.mxu0 0.0
    %7215 = vmatprep.subr.mxu0 0.0
    %7216 = vmatpush2.msra.mxu0 0.0
    %7217 = vmatprep.subr.mxu0 0.0
    %7218 = vmatpush2.msra.mxu0 0.0
    %7219 = vmatprep.subr.mxu0 0.0
    %7220 = vmatpush2.msra.mxu0 0.0
    %7221 = vmatprep.mubr.f32.mxu0 0.0
    %7222 = vmatmul.mubr.f32.gmra.mxu0 %v7152
    %v7223 = vpop.f32.mrf.mxu0
    %v7224 = vadd.f32 0.0, %v7223
    %v7225 = vpop.f32.mrf.mxu0
    %7226 = vmatprep.mubr.f32.mxu0 0.0
    %7227 = vmatmul.mubr.f32.gmra.mxu0 %v7155
    %v7228 = vpop.f32.mrf.mxu0
    %v7229 = vadd.f32 0.0, %v7228
    %v7230 = vpop.f32.mrf.mxu0
    %7231 = vdwg.mxu0
    %7248 = vrot.lane.b32.xlu0 %v5223, 8
    %v7249 = vpop.permute.xlu0 %7248
    %7250 = vrot.lane.b32.xlu0 %v5228, 8
    %v7251 = vpop.permute.xlu0 %7250
    %7252 = vrot.lane.b32.xlu0 %v5310, 8
    %v7253 = vpop.permute.xlu0 %7252
    %7254 = vrot.lane.b32.xlu0 %v5315, 8
    %v7255 = vpop.permute.xlu0 %7254
    %7256 = vrot.lane.b32.xlu0 %v5397, 8
    %v7257 = vpop.permute.xlu0 %7256
    %7258 = vrot.lane.b32.xlu0 %v5402, 8
    %v7259 = vpop.permute.xlu0 %7258
    %7260 = vrot.lane.b32.xlu0 %v5484, 8
    %v7261 = vpop.permute.xlu0 %7260
    %7262 = vrot.lane.b32.xlu0 %v5489, 8
    %v7263 = vpop.permute.xlu0 %7262
    %7264 = vrot.lane.b32.xlu0 %v5571, 8
    %v7265 = vpop.permute.xlu0 %7264
    %7266 = vrot.lane.b32.xlu0 %v5576, 8
    %v7267 = vpop.permute.xlu0 %7266
    %7268 = vrot.lane.b32.xlu0 %v5658, 8
    %v7269 = vpop.permute.xlu0 %7268
    %7270 = vrot.lane.b32.xlu0 %v5663, 8
    %v7271 = vpop.permute.xlu0 %7270
    %7272 = vrot.lane.b32.xlu0 %v5745, 8
    %v7273 = vpop.permute.xlu0 %7272
    %7274 = vrot.lane.b32.xlu0 %v5750, 8
    %v7275 = vpop.permute.xlu0 %7274
    %7276 = vrot.lane.b32.xlu0 %v5832, 8
    %v7277 = vpop.permute.xlu0 %7276
    %7278 = vrot.lane.b32.xlu0 %v5837, 8
    %v7279 = vpop.permute.xlu0 %7278
    %7312 = vrot.lane.b32.xlu0 %v5919, 16
    %v7313 = vpop.permute.xlu0 %7312
    %7314 = vrot.lane.b32.xlu0 %v5924, 16
    %v7315 = vpop.permute.xlu0 %7314
    %7316 = vrot.lane.b32.xlu0 %v6006, 16
    %v7317 = vpop.permute.xlu0 %7316
    %7318 = vrot.lane.b32.xlu0 %v6011, 16
    %v7319 = vpop.permute.xlu0 %7318
    %7320 = vrot.lane.b32.xlu0 %v6093, 16
    %v7321 = vpop.permute.xlu0 %7320
    %7322 = vrot.lane.b32.xlu0 %v6098, 16
    %v7323 = vpop.permute.xlu0 %7322
    %7324 = vrot.lane.b32.xlu0 %v6180, 16
    %v7325 = vpop.permute.xlu0 %7324
    %7326 = vrot.lane.b32.xlu0 %v6185, 16
    %v7327 = vpop.permute.xlu0 %7326
    %7328 = vrot.lane.b32.xlu0 %v6267, 16
    %v7329 = vpop.permute.xlu0 %7328
    %7330 = vrot.lane.b32.xlu0 %v6272, 16
    %v7331 = vpop.permute.xlu0 %7330
    %7332 = vrot.lane.b32.xlu0 %v6354, 16
    %v7333 = vpop.permute.xlu0 %7332
    %7334 = vrot.lane.b32.xlu0 %v6359, 16
    %v7335 = vpop.permute.xlu0 %7334
    %7336 = vrot.lane.b32.xlu0 %v6441, 16
    %v7337 = vpop.permute.xlu0 %7336
    %7338 = vrot.lane.b32.xlu0 %v6446, 16
    %v7339 = vpop.permute.xlu0 %7338
    %7340 = vrot.lane.b32.xlu0 %v6528, 16
    %v7341 = vpop.permute.xlu0 %7340
    %7342 = vrot.lane.b32.xlu0 %v6533, 16
    %v7343 = vpop.permute.xlu0 %7342
    %7376 = vrot.lane.b32.xlu0 %v6615, 24
    %v7377 = vpop.permute.xlu0 %7376
    %7378 = vrot.lane.b32.xlu0 %v6620, 24
    %v7379 = vpop.permute.xlu0 %7378
    %7380 = vrot.lane.b32.xlu0 %v6702, 24
    %v7381 = vpop.permute.xlu0 %7380
    %7382 = vrot.lane.b32.xlu0 %v6707, 24
    %v7383 = vpop.permute.xlu0 %7382
    %7384 = vrot.lane.b32.xlu0 %v6789, 24
    %v7385 = vpop.permute.xlu0 %7384
    %7386 = vrot.lane.b32.xlu0 %v6794, 24
    %v7387 = vpop.permute.xlu0 %7386
    %7388 = vrot.lane.b32.xlu0 %v6876, 24
    %v7389 = vpop.permute.xlu0 %7388
    %7390 = vrot.lane.b32.xlu0 %v6881, 24
    %v7391 = vpop.permute.xlu0 %7390
    %7392 = vrot.lane.b32.xlu0 %v6963, 24
    %v7393 = vpop.permute.xlu0 %7392
    %7394 = vrot.lane.b32.xlu0 %v6968, 24
    %v7395 = vpop.permute.xlu0 %7394
    %7396 = vrot.lane.b32.xlu0 %v7050, 24
    %v7397 = vpop.permute.xlu0 %7396
    %7398 = vrot.lane.b32.xlu0 %v7055, 24
    %v7399 = vpop.permute.xlu0 %7398
    %7400 = vrot.lane.b32.xlu0 %v7137, 24
    %v7401 = vpop.permute.xlu0 %7400
    %7402 = vrot.lane.b32.xlu0 %v7142, 24
    %v7403 = vpop.permute.xlu0 %7402
    %7404 = vrot.lane.b32.xlu0 %v7224, 24
    %v7405 = vpop.permute.xlu0 %7404
    %7406 = vrot.lane.b32.xlu0 %v7229, 24
    %v7407 = vpop.permute.xlu0 %7406
    %v7424 = vsel %vm835, %v4527, %v7249
    %v7425 = vsel %vm835, %v4532, %v7251
    %v7426 = vsel %vm835, %v4614, %v7253
    %v7427 = vsel %vm835, %v4619, %v7255
    %v7428 = vsel %vm835, %v4701, %v7257
    %v7429 = vsel %vm835, %v4706, %v7259
    %v7430 = vsel %vm835, %v4788, %v7261
    %v7431 = vsel %vm835, %v4793, %v7263
    %v7432 = vsel %vm835, %v4875, %v7265
    %v7433 = vsel %vm835, %v4880, %v7267
    %v7434 = vsel %vm835, %v4962, %v7269
    %v7435 = vsel %vm835, %v4967, %v7271
    %v7436 = vsel %vm835, %v5049, %v7273
    %v7437 = vsel %vm835, %v5054, %v7275
    %v7438 = vsel %vm835, %v5136, %v7277
    %v7439 = vsel %vm835, %v5141, %v7279
    %v7440 = vsel %vm52, %v7424, %v7313
    %v7441 = vsel %vm52, %v7425, %v7315
    %v7442 = vsel %vm52, %v7426, %v7317
    %v7443 = vsel %vm52, %v7427, %v7319
    %v7444 = vsel %vm52, %v7428, %v7321
    %v7445 = vsel %vm52, %v7429, %v7323
    %v7446 = vsel %vm52, %v7430, %v7325
    %v7447 = vsel %vm52, %v7431, %v7327
    %v7448 = vsel %vm52, %v7432, %v7329
    %v7449 = vsel %vm52, %v7433, %v7331
    %v7450 = vsel %vm52, %v7434, %v7333
    %v7451 = vsel %vm52, %v7435, %v7335
    %v7452 = vsel %vm52, %v7436, %v7337
    %v7453 = vsel %vm52, %v7437, %v7339
    %v7454 = vsel %vm52, %v7438, %v7341
    %v7455 = vsel %vm52, %v7439, %v7343
    %vm7456 = vcmask 195584
    %v7457 = vsel %vm7456, %v7440, %v7377
    %v7458 = vsel %vm7456, %v7441, %v7379
    %v7459 = vsel %vm7456, %v7442, %v7381
    %v7460 = vsel %vm7456, %v7443, %v7383
    %v7461 = vsel %vm7456, %v7444, %v7385
    %v7462 = vsel %vm7456, %v7445, %v7387
    %v7463 = vsel %vm7456, %v7446, %v7389
    %v7464 = vsel %vm7456, %v7447, %v7391
    %v7465 = vsel %vm7456, %v7448, %v7393
    %v7466 = vsel %vm7456, %v7449, %v7395
    %v7467 = vsel %vm7456, %v7450, %v7397
    %v7468 = vsel %vm7456, %v7451, %v7399
    %v7469 = vsel %vm7456, %v7452, %v7401
    %v7470 = vsel %vm7456, %v7453, %v7403
    %v7471 = vsel %vm7456, %v7454, %v7405
    %v7472 = vsel %vm7456, %v7455, %v7407
    %v7473 = vld [vmem:[#allocation2 + $0x50] sm:$0xff]
    %v7474 = vld [vmem:[#allocation2 + $0x58] sm:$0xff]
    %v7475 = vld [vmem:[#allocation2 + $0x60] sm:$0xff]
    %v7476 = vld [vmem:[#allocation2 + $0x68] sm:$0xff]
    %v7477 = vld [vmem:[#allocation2 + $0x70] sm:$0x1]
    %v7478 = vlaneseq
    %v7479 = vshrl.u32 %v7478, 7
    %v7480 = vsub.s32 0, %v7479
    %v7481 = vrot.slane %v7477, %v7480
    %vm7482 = vcmask 261120
    %v7484 = vsel %vm7482, %v7457, 0
    %v7487 = vsel %vm7482, %v7458, 0
    %v7490 = vsel %vm7482, %v7459, 0
    %v7493 = vsel %vm7482, %v7460, 0
    %v7496 = vsel %vm7482, %v7461, 0
    %v7499 = vsel %vm7482, %v7462, 0
    %v7502 = vsel %vm7482, %v7463, 0
    %v7505 = vsel %vm7482, %v7464, 0
    %v7508 = vsel %vm7482, %v7465, 0
    %v7511 = vsel %vm7482, %v7466, 0
    %v7514 = vsel %vm7482, %v7467, 0
    %v7517 = vsel %vm7482, %v7468, 0
    %v7520 = vsel %vm7482, %v7469, 0
    %v7523 = vsel %vm7482, %v7470, 0
    %v7526 = vsel %vm7482, %v7471, 0
    %v7529 = vsel %vm7482, %v7472, 0
    %7531 = vmatprep.subr.mxu0 0.0
    %7532 = vmatpush1.msra.mxu0 0.0
    %7533 = vmatprep.subr.mxu0 0.0
    %7534 = vmatpush1.msra.mxu0 0.0
    %7535 = vmatprep.subr.mxu0 0.0
    %7536 = vmatpush1.msra.mxu0 0.0
    %7537 = vmatprep.subr.mxu0 0.0
    %7538 = vmatpush1.msra.mxu0 0.0
    %7539 = vmatprep.subr.mxu0 0.0
    %7540 = vmatpush1.msra.mxu0 0.0
    %7541 = vmatprep.subr.mxu0 0.0
    %7542 = vmatpush1.msra.mxu0 0.0
    %7543 = vmatprep.subr.mxu0 0.0
    %7544 = vmatpush1.msra.mxu0 0.0
    %7545 = vmatprep.subr.mxu0 0.0
    %7546 = vmatpush1.msra.mxu0 0.0
    %7547 = vmatprep.subr.mxu0 0.0
    %7548 = vmatpush1.msra.mxu0 0.0
    %7549 = vmatprep.subr.mxu0 0.0
    %7550 = vmatpush1.msra.mxu0 0.0
    %7551 = vmatprep.subr.mxu0 0.0
    %7552 = vmatpush1.msra.mxu0 0.0
    %7553 = vmatprep.subr.mxu0 0.0
    %7554 = vmatpush1.msra.mxu0 0.0
    %7555 = vmatprep.subr.mxu0 0.0
    %7556 = vmatpush1.msra.mxu0 %v7476
    %7557 = vmatprep.subr.mxu0 0.0
    %7558 = vmatpush1.msra.mxu0 %v7475
    %7559 = vmatprep.subr.mxu0 0.0
    %7560 = vmatpush1.msra.mxu0 %v7474
    %7561 = vmatprep.subr.mxu0 0.0
    %7562 = vmatpush1.msra.mxu0 %v7473
    %7563 = vmatprep.subr.mxu0 0.0
    %7564 = vmatpush2.msra.mxu0 0.0
    %7565 = vmatprep.subr.mxu0 0.0
    %7566 = vmatpush2.msra.mxu0 0.0
    %7567 = vmatprep.subr.mxu0 0.0
    %7568 = vmatpush2.msra.mxu0 0.0
    %7569 = vmatprep.subr.mxu0 0.0
    %7570 = vmatpush2.msra.mxu0 0.0
    %7571 = vmatprep.subr.mxu0 0.0
    %7572 = vmatpush2.msra.mxu0 0.0
    %7573 = vmatprep.subr.mxu0 0.0
    %7574 = vmatpush2.msra.mxu0 0.0
    %7575 = vmatprep.subr.mxu0 0.0
    %7576 = vmatpush2.msra.mxu0 0.0
    %7577 = vmatprep.subr.mxu0 0.0
    %7578 = vmatpush2.msra.mxu0 0.0
    %7579 = vmatprep.subr.mxu0 0.0
    %7580 = vmatpush2.msra.mxu0 0.0
    %7581 = vmatprep.subr.mxu0 0.0
    %7582 = vmatpush2.msra.mxu0 0.0
    %7583 = vmatprep.subr.mxu0 0.0
    %7584 = vmatpush2.msra.mxu0 0.0
    %7585 = vmatprep.subr.mxu0 0.0
    %7586 = vmatpush2.msra.mxu0 0.0
    %7587 = vmatprep.subr.mxu0 0.0
    %7588 = vmatpush2.msra.mxu0 0.0
    %7589 = vmatprep.subr.mxu0 0.0
    %7590 = vmatpush2.msra.mxu0 0.0
    %7591 = vmatprep.subr.mxu0 0.0
    %7592 = vmatpush2.msra.mxu0 0.0
    %7593 = vmatprep.subr.mxu0 0.0
    %7594 = vmatpush2.msra.mxu0 0.0
    %7595 = vmatprep.mubr.f32.mxu0 0.0
    %7596 = vmatmul.mubr.f32.gmra.mxu0 %v7484
    %v7597 = vpop.f32.mrf.mxu0
    %v7598 = vadd.f32 %v7481, %v7597
    %v7599 = vpop.f32.mrf.mxu0
    %7600 = vmatprep.mubr.f32.mxu0 0.0
    %7601 = vmatmul.mubr.f32.gmra.mxu0 %v7487
    %v7602 = vpop.f32.mrf.mxu0
    %v7603 = vadd.f32 %v7481, %v7602
    %v7604 = vpop.f32.mrf.mxu0
    %7605 = vmatprep.mubr.f32.mxu0 0.0
    %7606 = vmatmul.mubr.f32.gmra.mxu0 %v7490
    %v7607 = vpop.f32.mrf.mxu0
    %v7608 = vadd.f32 %v7481, %v7607
    %v7609 = vpop.f32.mrf.mxu0
    %7610 = vmatprep.mubr.f32.mxu0 0.0
    %7611 = vmatmul.mubr.f32.gmra.mxu0 %v7493
    %v7612 = vpop.f32.mrf.mxu0
    %v7613 = vadd.f32 %v7481, %v7612
    %v7614 = vpop.f32.mrf.mxu0
    %7615 = vmatprep.mubr.f32.mxu0 0.0
    %7616 = vmatmul.mubr.f32.gmra.mxu0 %v7496
    %v7617 = vpop.f32.mrf.mxu0
    %v7618 = vadd.f32 %v7481, %v7617
    %v7619 = vpop.f32.mrf.mxu0
    %7620 = vmatprep.mubr.f32.mxu0 0.0
    %7621 = vmatmul.mubr.f32.gmra.mxu0 %v7499
    %v7622 = vpop.f32.mrf.mxu0
    %v7623 = vadd.f32 %v7481, %v7622
    %v7624 = vpop.f32.mrf.mxu0
    %7625 = vmatprep.mubr.f32.mxu0 0.0
    %7626 = vmatmul.mubr.f32.gmra.mxu0 %v7502
    %v7627 = vpop.f32.mrf.mxu0
    %v7628 = vadd.f32 %v7481, %v7627
    %v7629 = vpop.f32.mrf.mxu0
    %7630 = vmatprep.mubr.f32.mxu0 0.0
    %7631 = vmatmul.mubr.f32.gmra.mxu0 %v7505
    %v7632 = vpop.f32.mrf.mxu0
    %v7633 = vadd.f32 %v7481, %v7632
    %v7634 = vpop.f32.mrf.mxu0
    %7635 = vmatprep.mubr.f32.mxu0 0.0
    %7636 = vmatmul.mubr.f32.gmra.mxu0 %v7508
    %v7637 = vpop.f32.mrf.mxu0
    %v7638 = vadd.f32 %v7481, %v7637
    %v7639 = vpop.f32.mrf.mxu0
    %7640 = vmatprep.mubr.f32.mxu0 0.0
    %7641 = vmatmul.mubr.f32.gmra.mxu0 %v7511
    %v7642 = vpop.f32.mrf.mxu0
    %v7643 = vadd.f32 %v7481, %v7642
    %v7644 = vpop.f32.mrf.mxu0
    %7645 = vmatprep.mubr.f32.mxu0 0.0
    %7646 = vmatmul.mubr.f32.gmra.mxu0 %v7514
    %v7647 = vpop.f32.mrf.mxu0
    %v7648 = vadd.f32 %v7481, %v7647
    %v7649 = vpop.f32.mrf.mxu0
    %7650 = vmatprep.mubr.f32.mxu0 0.0
    %7651 = vmatmul.mubr.f32.gmra.mxu0 %v7517
    %v7652 = vpop.f32.mrf.mxu0
    %v7653 = vadd.f32 %v7481, %v7652
    %v7654 = vpop.f32.mrf.mxu0
    %7655 = vmatprep.mubr.f32.mxu0 0.0
    %7656 = vmatmul.mubr.f32.gmra.mxu0 %v7520
    %v7657 = vpop.f32.mrf.mxu0
    %v7658 = vadd.f32 %v7481, %v7657
    %v7659 = vpop.f32.mrf.mxu0
    %7660 = vmatprep.mubr.f32.mxu0 0.0
    %7661 = vmatmul.mubr.f32.gmra.mxu0 %v7523
    %v7662 = vpop.f32.mrf.mxu0
    %v7663 = vadd.f32 %v7481, %v7662
    %v7664 = vpop.f32.mrf.mxu0
    %7665 = vmatprep.mubr.f32.mxu0 0.0
    %7666 = vmatmul.mubr.f32.gmra.mxu0 %v7526
    %v7667 = vpop.f32.mrf.mxu0
    %v7668 = vadd.f32 %v7481, %v7667
    %v7669 = vpop.f32.mrf.mxu0
    %7670 = vmatprep.mubr.f32.mxu0 0.0
    %7671 = vmatmul.mubr.f32.gmra.mxu0 %v7529
    %v7672 = vpop.f32.mrf.mxu0
    %v7673 = vadd.f32 %v7481, %v7672
    %v7674 = vpop.f32.mrf.mxu0
    %7675 = vdwg.mxu0
    %v7676 = vadd.f32 %v248, %v7598
    %v7677 = vadd.f32 %v249, %v7603
    %v7678 = vadd.f32 %v250, %v7608
    %v7679 = vadd.f32 %v251, %v7613
    %v7680 = vadd.f32 %v252, %v7618
    %v7681 = vadd.f32 %v253, %v7623
    %v7682 = vadd.f32 %v254, %v7628
    %v7683 = vadd.f32 %v255, %v7633
    %v7684 = vadd.f32 %v256, %v7638
    %v7685 = vadd.f32 %v257, %v7643
    %v7686 = vadd.f32 %v258, %v7648
    %v7687 = vadd.f32 %v259, %v7653
    %v7688 = vadd.f32 %v260, %v7658
    %v7689 = vadd.f32 %v261, %v7663
    %v7690 = vadd.f32 %v262, %v7668
    %v7691 = vadd.f32 %v263, %v7673
    %v7692 = vld [vmem:[#allocation2 + $0x78] sm:$0x1]
    %v7693 = vld [vmem:[#allocation2 + $0x80] sm:$0x1]
    %v7694 = vsel %vm52, %v7676, 0.0
    %7695 = vadd.xlane.f32.xlu0 %v7694
    %v7696 = vpop.xlane.xlu0 %7695
    %v7697 = vsel %vm52, %v7677, 0.0
    %7698 = vadd.xlane.f32.xlu0 %v7697
    %v7699 = vpop.xlane.xlu0 %7698
    %v7700 = vsel %vm52, %v7678, 0.0
    %7701 = vadd.xlane.f32.xlu0 %v7700
    %v7702 = vpop.xlane.xlu0 %7701
    %v7703 = vsel %vm52, %v7679, 0.0
    %7704 = vadd.xlane.f32.xlu0 %v7703
    %v7705 = vpop.xlane.xlu0 %7704
    %v7706 = vsel %vm52, %v7680, 0.0
    %7707 = vadd.xlane.f32.xlu0 %v7706
    %v7708 = vpop.xlane.xlu0 %7707
    %v7709 = vsel %vm52, %v7681, 0.0
    %7710 = vadd.xlane.f32.xlu0 %v7709
    %v7711 = vpop.xlane.xlu0 %7710
    %v7712 = vsel %vm52, %v7682, 0.0
    %7713 = vadd.xlane.f32.xlu0 %v7712
    %v7714 = vpop.xlane.xlu0 %7713
    %v7715 = vsel %vm52, %v7683, 0.0
    %7716 = vadd.xlane.f32.xlu0 %v7715
    %v7717 = vpop.xlane.xlu0 %7716
    %v7718 = vsel %vm52, %v7684, 0.0
    %7719 = vadd.xlane.f32.xlu0 %v7718
    %v7720 = vpop.xlane.xlu0 %7719
    %v7721 = vsel %vm52, %v7685, 0.0
    %7722 = vadd.xlane.f32.xlu0 %v7721
    %v7723 = vpop.xlane.xlu0 %7722
    %v7724 = vsel %vm52, %v7686, 0.0
    %7725 = vadd.xlane.f32.xlu0 %v7724
    %v7726 = vpop.xlane.xlu0 %7725
    %v7727 = vsel %vm52, %v7687, 0.0
    %7728 = vadd.xlane.f32.xlu0 %v7727
    %v7729 = vpop.xlane.xlu0 %7728
    %v7730 = vsel %vm52, %v7688, 0.0
    %7731 = vadd.xlane.f32.xlu0 %v7730
    %v7732 = vpop.xlane.xlu0 %7731
    %v7733 = vsel %vm52, %v7689, 0.0
    %7734 = vadd.xlane.f32.xlu0 %v7733
    %v7735 = vpop.xlane.xlu0 %7734
    %v7736 = vsel %vm52, %v7690, 0.0
    %7737 = vadd.xlane.f32.xlu0 %v7736
    %v7738 = vpop.xlane.xlu0 %7737
    %v7739 = vsel %vm52, %v7691, 0.0
    %7740 = vadd.xlane.f32.xlu0 %v7739
    %v7741 = vpop.xlane.xlu0 %7740
    %v7742 = vmul.f32 %v7696, %v314
    %v7743 = vmul.f32 %v7699, %v314
    %v7744 = vmul.f32 %v7702, %v314
    %v7745 = vmul.f32 %v7705, %v314
    %v7746 = vmul.f32 %v7708, %v314
    %v7747 = vmul.f32 %v7711, %v314
    %v7748 = vmul.f32 %v7714, %v314
    %v7749 = vmul.f32 %v7717, %v314
    %v7750 = vmul.f32 %v7720, %v314
    %v7751 = vmul.f32 %v7723, %v314
    %v7752 = vmul.f32 %v7726, %v314
    %v7753 = vmul.f32 %v7729, %v314
    %v7754 = vmul.f32 %v7732, %v314
    %v7755 = vmul.f32 %v7735, %v314
    %v7756 = vmul.f32 %v7738, %v314
    %v7757 = vmul.f32 %v7741, %v314
    %v7758 = vsub.f32 %v7676, %v7742
    %v7759 = vsub.f32 %v7677, %v7743
    %v7760 = vsub.f32 %v7678, %v7744
    %v7761 = vsub.f32 %v7679, %v7745
    %v7762 = vsub.f32 %v7680, %v7746
    %v7763 = vsub.f32 %v7681, %v7747
    %v7764 = vsub.f32 %v7682, %v7748
    %v7765 = vsub.f32 %v7683, %v7749
    %v7766 = vsub.f32 %v7684, %v7750
    %v7767 = vsub.f32 %v7685, %v7751
    %v7768 = vsub.f32 %v7686, %v7752
    %v7769 = vsub.f32 %v7687, %v7753
    %v7770 = vsub.f32 %v7688, %v7754
    %v7771 = vsub.f32 %v7689, %v7755
    %v7772 = vsub.f32 %v7690, %v7756
    %v7773 = vsub.f32 %v7691, %v7757
    %v7774 = vmul.f32 %v7758, %v7758
    %v7775 = vmul.f32 %v7759, %v7759
    %v7776 = vmul.f32 %v7760, %v7760
    %v7777 = vmul.f32 %v7761, %v7761
    %v7778 = vmul.f32 %v7762, %v7762
    %v7779 = vmul.f32 %v7763, %v7763
    %v7780 = vmul.f32 %v7764, %v7764
    %v7781 = vmul.f32 %v7765, %v7765
    %v7782 = vmul.f32 %v7766, %v7766
    %v7783 = vmul.f32 %v7767, %v7767
    %v7784 = vmul.f32 %v7768, %v7768
    %v7785 = vmul.f32 %v7769, %v7769
    %v7786 = vmul.f32 %v7770, %v7770
    %v7787 = vmul.f32 %v7771, %v7771
    %v7788 = vmul.f32 %v7772, %v7772
    %v7789 = vmul.f32 %v7773, %v7773
    %v7790 = vsel %vm52, %v7774, 0.0
    %7791 = vadd.xlane.f32.xlu0 %v7790
    %v7792 = vpop.xlane.xlu0 %7791
    %v7793 = vsel %vm52, %v7775, 0.0
    %7794 = vadd.xlane.f32.xlu0 %v7793
    %v7795 = vpop.xlane.xlu0 %7794
    %v7796 = vsel %vm52, %v7776, 0.0
    %7797 = vadd.xlane.f32.xlu0 %v7796
    %v7798 = vpop.xlane.xlu0 %7797
    %v7799 = vsel %vm52, %v7777, 0.0
    %7800 = vadd.xlane.f32.xlu0 %v7799
    %v7801 = vpop.xlane.xlu0 %7800
    %v7802 = vsel %vm52, %v7778, 0.0
    %7803 = vadd.xlane.f32.xlu0 %v7802
    %v7804 = vpop.xlane.xlu0 %7803
    %v7805 = vsel %vm52, %v7779, 0.0
    %7806 = vadd.xlane.f32.xlu0 %v7805
    %v7807 = vpop.xlane.xlu0 %7806
    %v7808 = vsel %vm52, %v7780, 0.0
    %7809 = vadd.xlane.f32.xlu0 %v7808
    %v7810 = vpop.xlane.xlu0 %7809
    %v7811 = vsel %vm52, %v7781, 0.0
    %7812 = vadd.xlane.f32.xlu0 %v7811
    %v7813 = vpop.xlane.xlu0 %7812
    %v7814 = vsel %vm52, %v7782, 0.0
    %7815 = vadd.xlane.f32.xlu0 %v7814
    %v7816 = vpop.xlane.xlu0 %7815
    %v7817 = vsel %vm52, %v7783, 0.0
    %7818 = vadd.xlane.f32.xlu0 %v7817
    %v7819 = vpop.xlane.xlu0 %7818
    %v7820 = vsel %vm52, %v7784, 0.0
    %7821 = vadd.xlane.f32.xlu0 %v7820
    %v7822 = vpop.xlane.xlu0 %7821
    %v7823 = vsel %vm52, %v7785, 0.0
    %7824 = vadd.xlane.f32.xlu0 %v7823
    %v7825 = vpop.xlane.xlu0 %7824
    %v7826 = vsel %vm52, %v7786, 0.0
    %7827 = vadd.xlane.f32.xlu0 %v7826
    %v7828 = vpop.xlane.xlu0 %7827
    %v7829 = vsel %vm52, %v7787, 0.0
    %7830 = vadd.xlane.f32.xlu0 %v7829
    %v7831 = vpop.xlane.xlu0 %7830
    %v7832 = vsel %vm52, %v7788, 0.0
    %7833 = vadd.xlane.f32.xlu0 %v7832
    %v7834 = vpop.xlane.xlu0 %7833
    %v7835 = vsel %vm52, %v7789, 0.0
    %7836 = vadd.xlane.f32.xlu0 %v7835
    %v7837 = vpop.xlane.xlu0 %7836
    %v7838 = vmul.f32 %v7792, %v314
    %v7839 = vmul.f32 %v7795, %v314
    %v7840 = vmul.f32 %v7798, %v314
    %v7841 = vmul.f32 %v7801, %v314
    %v7842 = vmul.f32 %v7804, %v314
    %v7843 = vmul.f32 %v7807, %v314
    %v7844 = vmul.f32 %v7810, %v314
    %v7845 = vmul.f32 %v7813, %v314
    %v7846 = vmul.f32 %v7816, %v314
    %v7847 = vmul.f32 %v7819, %v314
    %v7848 = vmul.f32 %v7822, %v314
    %v7849 = vmul.f32 %v7825, %v314
    %v7850 = vmul.f32 %v7828, %v314
    %v7851 = vmul.f32 %v7831, %v314
    %v7852 = vmul.f32 %v7834, %v314
    %v7853 = vmul.f32 %v7837, %v314
    %v7854 = vadd.f32 %v7838, 1e-05
    %v7855 = vadd.f32 %v7839, 1e-05
    %v7856 = vadd.f32 %v7840, 1e-05
    %v7857 = vadd.f32 %v7841, 1e-05
    %v7858 = vadd.f32 %v7842, 1e-05
    %v7859 = vadd.f32 %v7843, 1e-05
    %v7860 = vadd.f32 %v7844, 1e-05
    %v7861 = vadd.f32 %v7845, 1e-05
    %v7862 = vadd.f32 %v7846, 1e-05
    %v7863 = vadd.f32 %v7847, 1e-05
    %v7864 = vadd.f32 %v7848, 1e-05
    %v7865 = vadd.f32 %v7849, 1e-05
    %v7866 = vadd.f32 %v7850, 1e-05
    %v7867 = vadd.f32 %v7851, 1e-05
    %v7868 = vadd.f32 %v7852, 1e-05
    %v7869 = vadd.f32 %v7853, 1e-05
    %v7870 = vrsqrt.pop %v7854
    %v7871 = vrsqrt.pop %v7855
    %v7872 = vrsqrt.pop %v7856
    %v7873 = vrsqrt.pop %v7857
    %v7874 = vrsqrt.pop %v7858
    %v7875 = vrsqrt.pop %v7859
    %v7876 = vrsqrt.pop %v7860
    %v7877 = vrsqrt.pop %v7861
    %v7878 = vrsqrt.pop %v7862
    %v7879 = vrsqrt.pop %v7863
    %v7880 = vrsqrt.pop %v7864
    %v7881 = vrsqrt.pop %v7865
    %v7882 = vrsqrt.pop %v7866
    %v7883 = vrsqrt.pop %v7867
    %v7884 = vrsqrt.pop %v7868
    %v7885 = vrsqrt.pop %v7869
    %v7886 = vmul.f32 %v7758, %v7870
    %v7887 = vmul.f32 %v7759, %v7871
    %v7888 = vmul.f32 %v7760, %v7872
    %v7889 = vmul.f32 %v7761, %v7873
    %v7890 = vmul.f32 %v7762, %v7874
    %v7891 = vmul.f32 %v7763, %v7875
    %v7892 = vmul.f32 %v7764, %v7876
    %v7893 = vmul.f32 %v7765, %v7877
    %v7894 = vmul.f32 %v7766, %v7878
    %v7895 = vmul.f32 %v7767, %v7879
    %v7896 = vmul.f32 %v7768, %v7880
    %v7897 = vmul.f32 %v7769, %v7881
    %v7898 = vmul.f32 %v7770, %v7882
    %v7899 = vmul.f32 %v7771, %v7883
    %v7900 = vmul.f32 %v7772, %v7884
    %v7901 = vmul.f32 %v7773, %v7885
    %v7902 = vlaneseq
    %v7903 = vshrl.u32 %v7902, 7
    %v7904 = vsub.s32 0, %v7903
    %v7905 = vrot.slane %v7692, %v7904
    %v7906 = vmul.f32 %v7905, %v7886
    %v7907 = vmul.f32 %v7905, %v7887
    %v7908 = vmul.f32 %v7905, %v7888
    %v7909 = vmul.f32 %v7905, %v7889
    %v7910 = vmul.f32 %v7905, %v7890
    %v7911 = vmul.f32 %v7905, %v7891
    %v7912 = vmul.f32 %v7905, %v7892
    %v7913 = vmul.f32 %v7905, %v7893
    %v7914 = vmul.f32 %v7905, %v7894
    %v7915 = vmul.f32 %v7905, %v7895
    %v7916 = vmul.f32 %v7905, %v7896
    %v7917 = vmul.f32 %v7905, %v7897
    %v7918 = vmul.f32 %v7905, %v7898
    %v7919 = vmul.f32 %v7905, %v7899
    %v7920 = vmul.f32 %v7905, %v7900
    %v7921 = vmul.f32 %v7905, %v7901
    %v7922 = vlaneseq
    %v7923 = vshrl.u32 %v7922, 7
    %v7924 = vsub.s32 0, %v7923
    %v7925 = vrot.slane %v7693, %v7924
    %v7926 = vadd.f32 %v7906, %v7925
    %v7927 = vadd.f32 %v7907, %v7925
    %v7928 = vadd.f32 %v7908, %v7925
    %v7929 = vadd.f32 %v7909, %v7925
    %v7930 = vadd.f32 %v7910, %v7925
    %v7931 = vadd.f32 %v7911, %v7925
    %v7932 = vadd.f32 %v7912, %v7925
    %v7933 = vadd.f32 %v7913, %v7925
    %v7934 = vadd.f32 %v7914, %v7925
    %v7935 = vadd.f32 %v7915, %v7925
    %v7936 = vadd.f32 %v7916, %v7925
    %v7937 = vadd.f32 %v7917, %v7925
    %v7938 = vadd.f32 %v7918, %v7925
    %v7939 = vadd.f32 %v7919, %v7925
    %v7940 = vadd.f32 %v7920, %v7925
    %v7941 = vadd.f32 %v7921, %v7925
    %v7942 = vld [vmem:[#allocation2 + $0x88] sm:$0xff]
    %v7943 = vld [vmem:[#allocation2 + $0x90] sm:$0xff]
    %v7944 = vld [vmem:[#allocation2 + $0x98] sm:$0x1]
    %v7945 = vlaneseq
    %v7946 = vshrl.u32 %v7945, 7
    %v7947 = vsub.s32 0, %v7946
    %v7948 = vrot.slane %v7944, %v7947
    %v7950 = vsel %vm52, %v7926, 0
    %v7953 = vsel %vm52, %v7927, 0
    %v7956 = vsel %vm52, %v7928, 0
    %v7959 = vsel %vm52, %v7929, 0
    %v7962 = vsel %vm52, %v7930, 0
    %v7965 = vsel %vm52, %v7931, 0
    %v7968 = vsel %vm52, %v7932, 0
    %v7971 = vsel %vm52, %v7933, 0
    %v7974 = vsel %vm52, %v7934, 0
    %v7977 = vsel %vm52, %v7935, 0
    %v7980 = vsel %vm52, %v7936, 0
    %v7983 = vsel %vm52, %v7937, 0
    %v7986 = vsel %vm52, %v7938, 0
    %v7989 = vsel %vm52, %v7939, 0
    %v7992 = vsel %vm52, %v7940, 0
    %v7995 = vsel %vm52, %v7941, 0
    %7997 = vmatprep.subr.mxu0 0.0
    %7998 = vmatpush1.msra.mxu0 0.0
    %7999 = vmatprep.subr.mxu0 0.0
    %8000 = vmatpush1.msra.mxu0 0.0
    %8001 = vmatprep.subr.mxu0 0.0
    %8002 = vmatpush1.msra.mxu0 0.0
    %8003 = vmatprep.subr.mxu0 0.0
    %8004 = vmatpush1.msra.mxu0 0.0
    %8005 = vmatprep.subr.mxu0 0.0
    %8006 = vmatpush1.msra.mxu0 0.0
    %8007 = vmatprep.subr.mxu0 0.0
    %8008 = vmatpush1.msra.mxu0 0.0
    %8009 = vmatprep.subr.mxu0 0.0
    %8010 = vmatpush1.msra.mxu0 0.0
    %8011 = vmatprep.subr.mxu0 0.0
    %8012 = vmatpush1.msra.mxu0 0.0
    %8013 = vmatprep.subr.mxu0 0.0
    %8014 = vmatpush1.msra.mxu0 0.0
    %8015 = vmatprep.subr.mxu0 0.0
    %8016 = vmatpush1.msra.mxu0 0.0
    %8017 = vmatprep.subr.mxu0 0.0
    %8018 = vmatpush1.msra.mxu0 0.0
    %8019 = vmatprep.subr.mxu0 0.0
    %8020 = vmatpush1.msra.mxu0 0.0
    %8021 = vmatprep.subr.mxu0 0.0
    %8022 = vmatpush1.msra.mxu0 0.0
    %8023 = vmatprep.subr.mxu0 0.0
    %8024 = vmatpush1.msra.mxu0 0.0
    %8025 = vmatprep.subr.mxu0 0.0
    %8026 = vmatpush1.msra.mxu0 %v7943
    %8027 = vmatprep.subr.mxu0 0.0
    %8028 = vmatpush1.msra.mxu0 %v7942
    %8029 = vmatprep.subr.mxu0 0.0
    %8030 = vmatpush2.msra.mxu0 0.0
    %8031 = vmatprep.subr.mxu0 0.0
    %8032 = vmatpush2.msra.mxu0 0.0
    %8033 = vmatprep.subr.mxu0 0.0
    %8034 = vmatpush2.msra.mxu0 0.0
    %8035 = vmatprep.subr.mxu0 0.0
    %8036 = vmatpush2.msra.mxu0 0.0
    %8037 = vmatprep.subr.mxu0 0.0
    %8038 = vmatpush2.msra.mxu0 0.0
    %8039 = vmatprep.subr.mxu0 0.0
    %8040 = vmatpush2.msra.mxu0 0.0
    %8041 = vmatprep.subr.mxu0 0.0
    %8042 = vmatpush2.msra.mxu0 0.0
    %8043 = vmatprep.subr.mxu0 0.0
    %8044 = vmatpush2.msra.mxu0 0.0
    %8045 = vmatprep.subr.mxu0 0.0
    %8046 = vmatpush2.msra.mxu0 0.0
    %8047 = vmatprep.subr.mxu0 0.0
    %8048 = vmatpush2.msra.mxu0 0.0
    %8049 = vmatprep.subr.mxu0 0.0
    %8050 = vmatpush2.msra.mxu0 0.0
    %8051 = vmatprep.subr.mxu0 0.0
    %8052 = vmatpush2.msra.mxu0 0.0
    %8053 = vmatprep.subr.mxu0 0.0
    %8054 = vmatpush2.msra.mxu0 0.0
    %8055 = vmatprep.subr.mxu0 0.0
    %8056 = vmatpush2.msra.mxu0 0.0
    %8057 = vmatprep.subr.mxu0 0.0
    %8058 = vmatpush2.msra.mxu0 0.0
    %8059 = vmatprep.subr.mxu0 0.0
    %8060 = vmatpush2.msra.mxu0 0.0
    %8061 = vmatprep.mubr.f32.mxu0 0.0
    %8062 = vmatmul.mubr.f32.gmra.mxu0 %v7950
    %v8063 = vpop.f32.mrf.mxu0
    %v8064 = vadd.f32 %v7948, %v8063
    %v8065 = vpop.f32.mrf.mxu0
    %8066 = vmatprep.mubr.f32.mxu0 0.0
    %8067 = vmatmul.mubr.f32.gmra.mxu0 %v7953
    %v8068 = vpop.f32.mrf.mxu0
    %v8069 = vadd.f32 %v7948, %v8068
    %v8070 = vpop.f32.mrf.mxu0
    %8071 = vmatprep.mubr.f32.mxu0 0.0
    %8072 = vmatmul.mubr.f32.gmra.mxu0 %v7956
    %v8073 = vpop.f32.mrf.mxu0
    %v8074 = vadd.f32 %v7948, %v8073
    %v8075 = vpop.f32.mrf.mxu0
    %8076 = vmatprep.mubr.f32.mxu0 0.0
    %8077 = vmatmul.mubr.f32.gmra.mxu0 %v7959
    %v8078 = vpop.f32.mrf.mxu0
    %v8079 = vadd.f32 %v7948, %v8078
    %v8080 = vpop.f32.mrf.mxu0
    %8081 = vmatprep.mubr.f32.mxu0 0.0
    %8082 = vmatmul.mubr.f32.gmra.mxu0 %v7962
    %v8083 = vpop.f32.mrf.mxu0
    %v8084 = vadd.f32 %v7948, %v8083
    %v8085 = vpop.f32.mrf.mxu0
    %8086 = vmatprep.mubr.f32.mxu0 0.0
    %8087 = vmatmul.mubr.f32.gmra.mxu0 %v7965
    %v8088 = vpop.f32.mrf.mxu0
    %v8089 = vadd.f32 %v7948, %v8088
    %v8090 = vpop.f32.mrf.mxu0
    %8091 = vmatprep.mubr.f32.mxu0 0.0
    %8092 = vmatmul.mubr.f32.gmra.mxu0 %v7968
    %v8093 = vpop.f32.mrf.mxu0
    %v8094 = vadd.f32 %v7948, %v8093
    %v8095 = vpop.f32.mrf.mxu0
    %8096 = vmatprep.mubr.f32.mxu0 0.0
    %8097 = vmatmul.mubr.f32.gmra.mxu0 %v7971
    %v8098 = vpop.f32.mrf.mxu0
    %v8099 = vadd.f32 %v7948, %v8098
    %v8100 = vpop.f32.mrf.mxu0
    %8101 = vmatprep.mubr.f32.mxu0 0.0
    %8102 = vmatmul.mubr.f32.gmra.mxu0 %v7974
    %v8103 = vpop.f32.mrf.mxu0
    %v8104 = vadd.f32 %v7948, %v8103
    %v8105 = vpop.f32.mrf.mxu0
    %8106 = vmatprep.mubr.f32.mxu0 0.0
    %8107 = vmatmul.mubr.f32.gmra.mxu0 %v7977
    %v8108 = vpop.f32.mrf.mxu0
    %v8109 = vadd.f32 %v7948, %v8108
    %v8110 = vpop.f32.mrf.mxu0
    %8111 = vmatprep.mubr.f32.mxu0 0.0
    %8112 = vmatmul.mubr.f32.gmra.mxu0 %v7980
    %v8113 = vpop.f32.mrf.mxu0
    %v8114 = vadd.f32 %v7948, %v8113
    %v8115 = vpop.f32.mrf.mxu0
    %8116 = vmatprep.mubr.f32.mxu0 0.0
    %8117 = vmatmul.mubr.f32.gmra.mxu0 %v7983
    %v8118 = vpop.f32.mrf.mxu0
    %v8119 = vadd.f32 %v7948, %v8118
    %v8120 = vpop.f32.mrf.mxu0
    %8121 = vmatprep.mubr.f32.mxu0 0.0
    %8122 = vmatmul.mubr.f32.gmra.mxu0 %v7986
    %v8123 = vpop.f32.mrf.mxu0
    %v8124 = vadd.f32 %v7948, %v8123
    %v8125 = vpop.f32.mrf.mxu0
    %8126 = vmatprep.mubr.f32.mxu0 0.0
    %8127 = vmatmul.mubr.f32.gmra.mxu0 %v7989
    %v8128 = vpop.f32.mrf.mxu0
    %v8129 = vadd.f32 %v7948, %v8128
    %v8130 = vpop.f32.mrf.mxu0
    %8131 = vmatprep.mubr.f32.mxu0 0.0
    %8132 = vmatmul.mubr.f32.gmra.mxu0 %v7992
    %v8133 = vpop.f32.mrf.mxu0
    %v8134 = vadd.f32 %v7948, %v8133
    %v8135 = vpop.f32.mrf.mxu0
    %8136 = vmatprep.mubr.f32.mxu0 0.0
    %8137 = vmatmul.mubr.f32.gmra.mxu0 %v7995
    %v8138 = vpop.f32.mrf.mxu0
    %v8139 = vadd.f32 %v7948, %v8138
    %v8140 = vpop.f32.mrf.mxu0
    %8141 = vdwg.mxu0
    %v8142 = vmax.f32 %v8064, 0.0
    %v8143 = vmax.f32 %v8069, 0.0
    %v8144 = vmax.f32 %v8074, 0.0
    %v8145 = vmax.f32 %v8079, 0.0
    %v8146 = vmax.f32 %v8084, 0.0
    %v8147 = vmax.f32 %v8089, 0.0
    %v8148 = vmax.f32 %v8094, 0.0
    %v8149 = vmax.f32 %v8099, 0.0
    %v8150 = vmax.f32 %v8104, 0.0
    %v8151 = vmax.f32 %v8109, 0.0
    %v8152 = vmax.f32 %v8114, 0.0
    %v8153 = vmax.f32 %v8119, 0.0
    %v8154 = vmax.f32 %v8124, 0.0
    %v8155 = vmax.f32 %v8129, 0.0
    %v8156 = vmax.f32 %v8134, 0.0
    %v8157 = vmax.f32 %v8139, 0.0
    %v8158 = vld [vmem:[#allocation2 + $0xa0] sm:$0xff]
    %v8159 = vld [vmem:[#allocation2 + $0xa8] sm:$0xff]
    %v8160 = vld [vmem:[#allocation2 + $0xb0] sm:$0xff]
    %v8161 = vld [vmem:[#allocation2 + $0xb8] sm:$0xff]
    %v8162 = vld [vmem:[#allocation2 + $0xc0] sm:$0xff]
    %v8163 = vld [vmem:[#allocation2 + $0xc8] sm:$0xff]
    %v8164 = vld [vmem:[#allocation2 + $0xd0] sm:$0xff]
    %v8165 = vld [vmem:[#allocation2 + $0xd8] sm:$0xff]
    %v8166 = vld [vmem:[#allocation2 + $0xe0] sm:$0x1]
    %v8167 = vlaneseq
    %v8168 = vshrl.u32 %v8167, 7
    %v8169 = vsub.s32 0, %v8168
    %v8170 = vrot.slane %v8166, %v8169
    %vm8171 = vcmask 523264
    %v8173 = vsel %vm8171, %v8142, 0
    %v8176 = vsel %vm8171, %v8143, 0
    %v8179 = vsel %vm8171, %v8144, 0
    %v8182 = vsel %vm8171, %v8145, 0
    %v8185 = vsel %vm8171, %v8146, 0
    %v8188 = vsel %vm8171, %v8147, 0
    %v8191 = vsel %vm8171, %v8148, 0
    %v8194 = vsel %vm8171, %v8149, 0
    %v8197 = vsel %vm8171, %v8150, 0
    %v8200 = vsel %vm8171, %v8151, 0
    %v8203 = vsel %vm8171, %v8152, 0
    %v8206 = vsel %vm8171, %v8153, 0
    %v8209 = vsel %vm8171, %v8154, 0
    %v8212 = vsel %vm8171, %v8155, 0
    %v8215 = vsel %vm8171, %v8156, 0
    %v8218 = vsel %vm8171, %v8157, 0
    %8220 = vmatprep.subr.mxu0 0.0
    %8221 = vmatpush1.msra.mxu0 0.0
    %8222 = vmatprep.subr.mxu0 0.0
    %8223 = vmatpush1.msra.mxu0 0.0
    %8224 = vmatprep.subr.mxu0 0.0
    %8225 = vmatpush1.msra.mxu0 0.0
    %8226 = vmatprep.subr.mxu0 0.0
    %8227 = vmatpush1.msra.mxu0 0.0
    %8228 = vmatprep.subr.mxu0 0.0
    %8229 = vmatpush1.msra.mxu0 0.0
    %8230 = vmatprep.subr.mxu0 0.0
    %8231 = vmatpush1.msra.mxu0 0.0
    %8232 = vmatprep.subr.mxu0 0.0
    %8233 = vmatpush1.msra.mxu0 0.0
    %8234 = vmatprep.subr.mxu0 0.0
    %8235 = vmatpush1.msra.mxu0 0.0
    %8236 = vmatprep.subr.mxu0 0.0
    %8237 = vmatpush1.msra.mxu0 %v8165
    %8238 = vmatprep.subr.mxu0 0.0
    %8239 = vmatpush1.msra.mxu0 %v8164
    %8240 = vmatprep.subr.mxu0 0.0
    %8241 = vmatpush1.msra.mxu0 %v8163
    %8242 = vmatprep.subr.mxu0 0.0
    %8243 = vmatpush1.msra.mxu0 %v8162
    %8244 = vmatprep.subr.mxu0 0.0
    %8245 = vmatpush1.msra.mxu0 %v8161
    %8246 = vmatprep.subr.mxu0 0.0
    %8247 = vmatpush1.msra.mxu0 %v8160
    %8248 = vmatprep.subr.mxu0 0.0
    %8249 = vmatpush1.msra.mxu0 %v8159
    %8250 = vmatprep.subr.mxu0 0.0
    %8251 = vmatpush1.msra.mxu0 %v8158
    %8252 = vmatprep.subr.mxu0 0.0
    %8253 = vmatpush2.msra.mxu0 0.0
    %8254 = vmatprep.subr.mxu0 0.0
    %8255 = vmatpush2.msra.mxu0 0.0
    %8256 = vmatprep.subr.mxu0 0.0
    %8257 = vmatpush2.msra.mxu0 0.0
    %8258 = vmatprep.subr.mxu0 0.0
    %8259 = vmatpush2.msra.mxu0 0.0
    %8260 = vmatprep.subr.mxu0 0.0
    %8261 = vmatpush2.msra.mxu0 0.0
    %8262 = vmatprep.subr.mxu0 0.0
    %8263 = vmatpush2.msra.mxu0 0.0
    %8264 = vmatprep.subr.mxu0 0.0
    %8265 = vmatpush2.msra.mxu0 0.0
    %8266 = vmatprep.subr.mxu0 0.0
    %8267 = vmatpush2.msra.mxu0 0.0
    %8268 = vmatprep.subr.mxu0 0.0
    %8269 = vmatpush2.msra.mxu0 0.0
    %8270 = vmatprep.subr.mxu0 0.0
    %8271 = vmatpush2.msra.mxu0 0.0
    %8272 = vmatprep.subr.mxu0 0.0
    %8273 = vmatpush2.msra.mxu0 0.0
    %8274 = vmatprep.subr.mxu0 0.0
    %8275 = vmatpush2.msra.mxu0 0.0
    %8276 = vmatprep.subr.mxu0 0.0
    %8277 = vmatpush2.msra.mxu0 0.0
    %8278 = vmatprep.subr.mxu0 0.0
    %8279 = vmatpush2.msra.mxu0 0.0
    %8280 = vmatprep.subr.mxu0 0.0
    %8281 = vmatpush2.msra.mxu0 0.0
    %8282 = vmatprep.subr.mxu0 0.0
    %8283 = vmatpush2.msra.mxu0 0.0
    %8284 = vmatprep.mubr.f32.mxu0 0.0
    %8285 = vmatmul.mubr.f32.gmra.mxu0 %v8173
    %v8286 = vpop.f32.mrf.mxu0
    %v8287 = vadd.f32 %v8170, %v8286
    %v8288 = vpop.f32.mrf.mxu0
    %8289 = vmatprep.mubr.f32.mxu0 0.0
    %8290 = vmatmul.mubr.f32.gmra.mxu0 %v8176
    %v8291 = vpop.f32.mrf.mxu0
    %v8292 = vadd.f32 %v8170, %v8291
    %v8293 = vpop.f32.mrf.mxu0
    %8294 = vmatprep.mubr.f32.mxu0 0.0
    %8295 = vmatmul.mubr.f32.gmra.mxu0 %v8179
    %v8296 = vpop.f32.mrf.mxu0
    %v8297 = vadd.f32 %v8170, %v8296
    %v8298 = vpop.f32.mrf.mxu0
    %8299 = vmatprep.mubr.f32.mxu0 0.0
    %8300 = vmatmul.mubr.f32.gmra.mxu0 %v8182
    %v8301 = vpop.f32.mrf.mxu0
    %v8302 = vadd.f32 %v8170, %v8301
    %v8303 = vpop.f32.mrf.mxu0
    %8304 = vmatprep.mubr.f32.mxu0 0.0
    %8305 = vmatmul.mubr.f32.gmra.mxu0 %v8185
    %v8306 = vpop.f32.mrf.mxu0
    %v8307 = vadd.f32 %v8170, %v8306
    %v8308 = vpop.f32.mrf.mxu0
    %8309 = vmatprep.mubr.f32.mxu0 0.0
    %8310 = vmatmul.mubr.f32.gmra.mxu0 %v8188
    %v8311 = vpop.f32.mrf.mxu0
    %v8312 = vadd.f32 %v8170, %v8311
    %v8313 = vpop.f32.mrf.mxu0
    %8314 = vmatprep.mubr.f32.mxu0 0.0
    %8315 = vmatmul.mubr.f32.gmra.mxu0 %v8191
    %v8316 = vpop.f32.mrf.mxu0
    %v8317 = vadd.f32 %v8170, %v8316
    %v8318 = vpop.f32.mrf.mxu0
    %8319 = vmatprep.mubr.f32.mxu0 0.0
    %8320 = vmatmul.mubr.f32.gmra.mxu0 %v8194
    %v8321 = vpop.f32.mrf.mxu0
    %v8322 = vadd.f32 %v8170, %v8321
    %v8323 = vpop.f32.mrf.mxu0
    %8324 = vmatprep.mubr.f32.mxu0 0.0
    %8325 = vmatmul.mubr.f32.gmra.mxu0 %v8197
    %v8326 = vpop.f32.mrf.mxu0
    %v8327 = vadd.f32 %v8170, %v8326
    %v8328 = vpop.f32.mrf.mxu0
    %8329 = vmatprep.mubr.f32.mxu0 0.0
    %8330 = vmatmul.mubr.f32.gmra.mxu0 %v8200
    %v8331 = vpop.f32.mrf.mxu0
    %v8332 = vadd.f32 %v8170, %v8331
    %v8333 = vpop.f32.mrf.mxu0
    %8334 = vmatprep.mubr.f32.mxu0 0.0
    %8335 = vmatmul.mubr.f32.gmra.mxu0 %v8203
    %v8336 = vpop.f32.mrf.mxu0
    %v8337 = vadd.f32 %v8170, %v8336
    %v8338 = vpop.f32.mrf.mxu0
    %8339 = vmatprep.mubr.f32.mxu0 0.0
    %8340 = vmatmul.mubr.f32.gmra.mxu0 %v8206
    %v8341 = vpop.f32.mrf.mxu0
    %v8342 = vadd.f32 %v8170, %v8341
    %v8343 = vpop.f32.mrf.mxu0
    %8344 = vmatprep.mubr.f32.mxu0 0.0
    %8345 = vmatmul.mubr.f32.gmra.mxu0 %v8209
    %v8346 = vpop.f32.mrf.mxu0
    %v8347 = vadd.f32 %v8170, %v8346
    %v8348 = vpop.f32.mrf.mxu0
    %8349 = vmatprep.mubr.f32.mxu0 0.0
    %8350 = vmatmul.mubr.f32.gmra.mxu0 %v8212
    %v8351 = vpop.f32.mrf.mxu0
    %v8352 = vadd.f32 %v8170, %v8351
    %v8353 = vpop.f32.mrf.mxu0
    %8354 = vmatprep.mubr.f32.mxu0 0.0
    %8355 = vmatmul.mubr.f32.gmra.mxu0 %v8215
    %v8356 = vpop.f32.mrf.mxu0
    %v8357 = vadd.f32 %v8170, %v8356
    %v8358 = vpop.f32.mrf.mxu0
    %8359 = vmatprep.mubr.f32.mxu0 0.0
    %8360 = vmatmul.mubr.f32.gmra.mxu0 %v8218
    %v8361 = vpop.f32.mrf.mxu0
    %v8362 = vadd.f32 %v8170, %v8361
    %v8363 = vpop.f32.mrf.mxu0
    %8364 = vdwg.mxu0
    %v8365 = vadd.f32 %v7676, %v8287
    %v8366 = vadd.f32 %v7677, %v8292
    %v8367 = vadd.f32 %v7678, %v8297
    %v8368 = vadd.f32 %v7679, %v8302
    %v8369 = vadd.f32 %v7680, %v8307
    %v8370 = vadd.f32 %v7681, %v8312
    %v8371 = vadd.f32 %v7682, %v8317
    %v8372 = vadd.f32 %v7683, %v8322
    %v8373 = vadd.f32 %v7684, %v8327
    %v8374 = vadd.f32 %v7685, %v8332
    %v8375 = vadd.f32 %v7686, %v8337
    %v8376 = vadd.f32 %v7687, %v8342
    %v8377 = vadd.f32 %v7688, %v8347
    %v8378 = vadd.f32 %v7689, %v8352
    %v8379 = vadd.f32 %v7690, %v8357
    %v8380 = vadd.f32 %v7691, %v8362
    %v8381 = vlaneseq
    %v8382 = vshrl.u32 %v8381, 7
    %v8383 = vadd.s32 %v8382, 8
    %vm8384 = vcmp.lt.s32.totalorder %v8382, 13
    %vm8385 = vcmp.lt.s32.totalorder %v8383, 13
    %v8386 = vsel %vm8384, 1.0, 0.0
    %v8387 = vsel %vm8385, 1.0, 0.0
    %v8388 = vmul.f32 %v8365, %v8386
    %v8389 = vmul.f32 %v8366, %v8387
    %v8390 = vmul.f32 %v8367, %v8386
    %v8391 = vmul.f32 %v8368, %v8387
    %v8392 = vmul.f32 %v8369, %v8386
    %v8393 = vmul.f32 %v8370, %v8387
    %v8394 = vmul.f32 %v8371, %v8386
    %v8395 = vmul.f32 %v8372, %v8387
    %v8396 = vmul.f32 %v8373, %v8386
    %v8397 = vmul.f32 %v8374, %v8387
    %v8398 = vmul.f32 %v8375, %v8386
    %v8399 = vmul.f32 %v8376, %v8387
    %v8400 = vmul.f32 %v8377, %v8386
    %v8401 = vmul.f32 %v8378, %v8387
    %v8402 = vmul.f32 %v8379, %v8386
    %v8403 = vmul.f32 %v8380, %v8387
    %v8404 = vsel %vm52, %v8388, 0.0
    %v8405 = vsel %vm52, %v8389, 0.0
    %v8406 = vadd.f32 %v8404, %v8405
    %v8407 = vrot.slane %v8406, 4
    %v8408 = vadd.f32 %v8406, %v8407
    %v8409 = vrot.slane %v8408, 2
    %v8410 = vadd.f32 %v8408, %v8409
    %v8411 = vrot.slane %v8410, 1
    %v8412 = vadd.f32 %v8410, %v8411
    %v8413 = vsel %vm52, %v8390, 0.0
    %v8414 = vsel %vm52, %v8391, 0.0
    %v8415 = vadd.f32 %v8413, %v8414
    %v8416 = vrot.slane %v8415, 4
    %v8417 = vadd.f32 %v8415, %v8416
    %v8418 = vrot.slane %v8417, 2
    %v8419 = vadd.f32 %v8417, %v8418
    %v8420 = vrot.slane %v8419, 1
    %v8421 = vadd.f32 %v8419, %v8420
    %v8422 = vsel %vm52, %v8392, 0.0
    %v8423 = vsel %vm52, %v8393, 0.0
    %v8424 = vadd.f32 %v8422, %v8423
    %v8425 = vrot.slane %v8424, 4
    %v8426 = vadd.f32 %v8424, %v8425
    %v8427 = vrot.slane %v8426, 2
    %v8428 = vadd.f32 %v8426, %v8427
    %v8429 = vrot.slane %v8428, 1
    %v8430 = vadd.f32 %v8428, %v8429
    %v8431 = vsel %vm52, %v8394, 0.0
    %v8432 = vsel %vm52, %v8395, 0.0
    %v8433 = vadd.f32 %v8431, %v8432
    %v8434 = vrot.slane %v8433, 4
    %v8435 = vadd.f32 %v8433, %v8434
    %v8436 = vrot.slane %v8435, 2
    %v8437 = vadd.f32 %v8435, %v8436
    %v8438 = vrot.slane %v8437, 1
    %v8439 = vadd.f32 %v8437, %v8438
    %v8440 = vsel %vm52, %v8396, 0.0
    %v8441 = vsel %vm52, %v8397, 0.0
    %v8442 = vadd.f32 %v8440, %v8441
    %v8443 = vrot.slane %v8442, 4
    %v8444 = vadd.f32 %v8442, %v8443
    %v8445 = vrot.slane %v8444, 2
    %v8446 = vadd.f32 %v8444, %v8445
    %v8447 = vrot.slane %v8446, 1
    %v8448 = vadd.f32 %v8446, %v8447
    %v8449 = vsel %vm52, %v8398, 0.0
    %v8450 = vsel %vm52, %v8399, 0.0
    %v8451 = vadd.f32 %v8449, %v8450
    %v8452 = vrot.slane %v8451, 4
    %v8453 = vadd.f32 %v8451, %v8452
    %v8454 = vrot.slane %v8453, 2
    %v8455 = vadd.f32 %v8453, %v8454
    %v8456 = vrot.slane %v8455, 1
    %v8457 = vadd.f32 %v8455, %v8456
    %v8458 = vsel %vm52, %v8400, 0.0
    %v8459 = vsel %vm52, %v8401, 0.0
    %v8460 = vadd.f32 %v8458, %v8459
    %v8461 = vrot.slane %v8460, 4
    %v8462 = vadd.f32 %v8460, %v8461
    %v8463 = vrot.slane %v8462, 2
    %v8464 = vadd.f32 %v8462, %v8463
    %v8465 = vrot.slane %v8464, 1
    %v8466 = vadd.f32 %v8464, %v8465
    %v8467 = vsel %vm52, %v8402, 0.0
    %v8468 = vsel %vm52, %v8403, 0.0
    %v8469 = vadd.f32 %v8467, %v8468
    %v8470 = vrot.slane %v8469, 4
    %v8471 = vadd.f32 %v8469, %v8470
    %v8472 = vrot.slane %v8471, 2
    %v8473 = vadd.f32 %v8471, %v8472
    %v8474 = vrot.slane %v8473, 1
    %v8475 = vadd.f32 %v8473, %v8474
    %v8476 = vmul.f32 %v8412, 0.07692308
    %v8477 = vmul.f32 %v8421, 0.07692308
    %v8478 = vmul.f32 %v8430, 0.07692308
    %v8479 = vmul.f32 %v8439, 0.07692308
    %v8480 = vmul.f32 %v8448, 0.07692308
    %v8481 = vmul.f32 %v8457, 0.07692308
    %v8482 = vmul.f32 %v8466, 0.07692308
    %v8483 = vmul.f32 %v8475, 0.07692308
    %v8484 = vld [vmem:[#allocation2 + $0xe8] sm:$0x1]
    %v8485 = vld [vmem:[#allocation2 + $0xf0] sm:$0x1]
    %vm8494 = vcmask 1041409
    %v8495 = vsel %vm8494, %v8477, %v8476
    %vm8496 = vcmask 1042434
    %v8497 = vsel %vm8496, %v8478, %v8495
    %vm8498 = vcmask 1043459
    %v8499 = vsel %vm8498, %v8479, %v8497
    %vm8500 = vcmask 1044484
    %v8501 = vsel %vm8500, %v8480, %v8499
    %vm8502 = vcmask 1045509
    %v8503 = vsel %vm8502, %v8481, %v8501
    %vm8504 = vcmask 1046534
    %v8505 = vsel %vm8504, %v8482, %v8503
    %vm8506 = vcmask 1047559
    %v8507 = vsel %vm8506, %v8483, %v8505
    %v8509 = vsel %vm52, %v8507, 0.0
    %8510 = vadd.xlane.f32.xlu0 %v8509
    %v8511 = vpop.xlane.xlu0 %8510
    %v8512 = vmul.f32 %v8511, %v314
    %v8514 = vrot.slane %v8512, 1
    %v8515 = vrot.slane %v8512, 2
    %v8516 = vrot.slane %v8512, 3
    %v8517 = vrot.slane %v8512, 4
    %v8518 = vrot.slane %v8512, 5
    %v8519 = vrot.slane %v8512, 6
    %v8520 = vrot.slane %v8512, 7
    %v8529 = vsub.f32 %v8476, %v8512
    %v8530 = vsub.f32 %v8477, %v8514
    %v8531 = vsub.f32 %v8478, %v8515
    %v8532 = vsub.f32 %v8479, %v8516
    %v8533 = vsub.f32 %v8480, %v8517
    %v8534 = vsub.f32 %v8481, %v8518
    %v8535 = vsub.f32 %v8482, %v8519
    %v8536 = vsub.f32 %v8483, %v8520
    %v8537 = vmul.f32 %v8529, %v8529
    %v8538 = vmul.f32 %v8530, %v8530
    %v8539 = vmul.f32 %v8531, %v8531
    %v8540 = vmul.f32 %v8532, %v8532
    %v8541 = vmul.f32 %v8533, %v8533
    %v8542 = vmul.f32 %v8534, %v8534
    %v8543 = vmul.f32 %v8535, %v8535
    %v8544 = vmul.f32 %v8536, %v8536
    %v8553 = vrot.slane %v8538, 7
    %v8554 = vsel %vm8494, %v8553, %v8537
    %v8555 = vrot.slane %v8539, 6
    %v8556 = vsel %vm8496, %v8555, %v8554
    %v8557 = vrot.slane %v8540, 5
    %v8558 = vsel %vm8498, %v8557, %v8556
    %v8559 = vrot.slane %v8541, 4
    %v8560 = vsel %vm8500, %v8559, %v8558
    %v8561 = vrot.slane %v8542, 3
    %v8562 = vsel %vm8502, %v8561, %v8560
    %v8563 = vrot.slane %v8543, 2
    %v8564 = vsel %vm8504, %v8563, %v8562
    %v8565 = vrot.slane %v8544, 1
    %v8566 = vsel %vm8506, %v8565, %v8564
    %v8568 = vsel %vm52, %v8566, 0.0
    %8569 = vadd.xlane.f32.xlu0 %v8568
    %v8570 = vpop.xlane.xlu0 %8569
    %v8571 = vmul.f32 %v8570, %v314
    %v8572 = vadd.f32 %v8571, 1e-05
    %v8573 = vrsqrt.pop %v8572
    %v8575 = vrot.slane %v8573, 1
    %v8576 = vrot.slane %v8573, 2
    %v8577 = vrot.slane %v8573, 3
    %v8578 = vrot.slane %v8573, 4
    %v8579 = vrot.slane %v8573, 5
    %v8580 = vrot.slane %v8573, 6
    %v8581 = vrot.slane %v8573, 7
    %v8590 = vmul.f32 %v8529, %v8573
    %v8591 = vmul.f32 %v8530, %v8575
    %v8592 = vmul.f32 %v8531, %v8576
    %v8593 = vmul.f32 %v8532, %v8577
    %v8594 = vmul.f32 %v8533, %v8578
    %v8595 = vmul.f32 %v8534, %v8579
    %v8596 = vmul.f32 %v8535, %v8580
    %v8597 = vmul.f32 %v8536, %v8581
    %v8598 = vlaneseq
    %v8599 = vshrl.u32 %v8598, 7
    %v8600 = vsub.s32 0, %v8599
    %v8601 = vrot.slane %v8484, %v8600
    %v8610 = vrot.slane %v8591, 7
    %v8611 = vsel %vm8494, %v8610, %v8590
    %v8612 = vrot.slane %v8592, 6
    %v8613 = vsel %vm8496, %v8612, %v8611
    %v8614 = vrot.slane %v8593, 5
    %v8615 = vsel %vm8498, %v8614, %v8613
    %v8616 = vrot.slane %v8594, 4
    %v8617 = vsel %vm8500, %v8616, %v8615
    %v8618 = vrot.slane %v8595, 3
    %v8619 = vsel %vm8502, %v8618, %v8617
    %v8620 = vrot.slane %v8596, 2
    %v8621 = vsel %vm8504, %v8620, %v8619
    %v8622 = vrot.slane %v8597, 1
    %v8623 = vsel %vm8506, %v8622, %v8621
    %v8625 = vmul.f32 %v8601, %v8623
    %v8626 = vlaneseq
    %v8627 = vshrl.u32 %v8626, 7
    %v8628 = vsub.s32 0, %v8627
    %v8629 = vrot.slane %v8485, %v8628
    %v8630 = vadd.f32 %v8625, %v8629
    %v8631 = vld [vmem:[#allocation2 + $0xf8] sm:$0xff]
    %v8632 = vld [vmem:[#allocation2 + $0x100] sm:$0xff]
    %v8633 = vld [vmem:[#allocation2 + $0x108] sm:$0x1]
    %v8634 = vlaneseq
    %v8635 = vshrl.u32 %v8634, 7
    %v8636 = vsub.s32 0, %v8635
    %v8637 = vrot.slane %v8633, %v8636
    %v8639 = vsel %vm52, %v8630, 0
    %8641 = vmatprep.subr.mxu0 0.0
    %8642 = vmatpush1.msra.mxu0 0.0
    %8643 = vmatprep.subr.mxu0 0.0
    %8644 = vmatpush1.msra.mxu0 0.0
    %8645 = vmatprep.subr.mxu0 0.0
    %8646 = vmatpush1.msra.mxu0 0.0
    %8647 = vmatprep.subr.mxu0 0.0
    %8648 = vmatpush1.msra.mxu0 0.0
    %8649 = vmatprep.subr.mxu0 0.0
    %8650 = vmatpush1.msra.mxu0 0.0
    %8651 = vmatprep.subr.mxu0 0.0
    %8652 = vmatpush1.msra.mxu0 0.0
    %8653 = vmatprep.subr.mxu0 0.0
    %8654 = vmatpush1.msra.mxu0 0.0
    %8655 = vmatprep.subr.mxu0 0.0
    %8656 = vmatpush1.msra.mxu0 0.0
    %8657 = vmatprep.subr.mxu0 0.0
    %8658 = vmatpush1.msra.mxu0 0.0
    %8659 = vmatprep.subr.mxu0 0.0
    %8660 = vmatpush1.msra.mxu0 0.0
    %8661 = vmatprep.subr.mxu0 0.0
    %8662 = vmatpush1.msra.mxu0 0.0
    %8663 = vmatprep.subr.mxu0 0.0
    %8664 = vmatpush1.msra.mxu0 0.0
    %8665 = vmatprep.subr.mxu0 0.0
    %8666 = vmatpush1.msra.mxu0 0.0
    %8667 = vmatprep.subr.mxu0 0.0
    %8668 = vmatpush1.msra.mxu0 0.0
    %8669 = vmatprep.subr.mxu0 0.0
    %8670 = vmatpush1.msra.mxu0 %v8632
    %8671 = vmatprep.subr.mxu0 0.0
    %8672 = vmatpush1.msra.mxu0 %v8631
    %8673 = vmatprep.subr.mxu0 0.0
    %8674 = vmatpush2.msra.mxu0 0.0
    %8675 = vmatprep.subr.mxu0 0.0
    %8676 = vmatpush2.msra.mxu0 0.0
    %8677 = vmatprep.subr.mxu0 0.0
    %8678 = vmatpush2.msra.mxu0 0.0
    %8679 = vmatprep.subr.mxu0 0.0
    %8680 = vmatpush2.msra.mxu0 0.0
    %8681 = vmatprep.subr.mxu0 0.0
    %8682 = vmatpush2.msra.mxu0 0.0
    %8683 = vmatprep.subr.mxu0 0.0
    %8684 = vmatpush2.msra.mxu0 0.0
    %8685 = vmatprep.subr.mxu0 0.0
    %8686 = vmatpush2.msra.mxu0 0.0
    %8687 = vmatprep.subr.mxu0 0.0
    %8688 = vmatpush2.msra.mxu0 0.0
    %8689 = vmatprep.subr.mxu0 0.0
    %8690 = vmatpush2.msra.mxu0 0.0
    %8691 = vmatprep.subr.mxu0 0.0
    %8692 = vmatpush2.msra.mxu0 0.0
    %8693 = vmatprep.subr.mxu0 0.0
    %8694 = vmatpush2.msra.mxu0 0.0
    %8695 = vmatprep.subr.mxu0 0.0
    %8696 = vmatpush2.msra.mxu0 0.0
    %8697 = vmatprep.subr.mxu0 0.0
    %8698 = vmatpush2.msra.mxu0 0.0
    %8699 = vmatprep.subr.mxu0 0.0
    %8700 = vmatpush2.msra.mxu0 0.0
    %8701 = vmatprep.subr.mxu0 0.0
    %8702 = vmatpush2.msra.mxu0 0.0
    %8703 = vmatprep.subr.mxu0 0.0
    %8704 = vmatpush2.msra.mxu0 0.0
    %8705 = vmatprep.mubr.f32.mxu0 0.0
    %8706 = vmatmul.mubr.f32.gmra.mxu0 %v8639
    %v8707 = vpop.f32.mrf.mxu0
    %v8708 = vadd.f32 %v8637, %v8707
    %v8709 = vpop.f32.mrf.mxu0
    %8710 = vdwg.mxu0
    %v8711 = vmax.f32 %v8708, 0.0
    %v8712 = vld [vmem:[%s1] sm:$0xff]
    %v8713 = vld [vmem:[#allocation2 + $0x110] sm:$0xff]
    %v8714 = vld [vmem:[#allocation2 + $0x118] sm:$0x1]
    %v8715 = vlaneseq
    %v8716 = vshrl.u32 %v8715, 7
    %v8717 = vsub.s32 0, %v8716
    %v8718 = vrot.slane %v8714, %v8717
    %v8720 = vsel %vm835, %v8712, 0
    %8722 = vmatprep.subr.mxu0 0.0
    %8723 = vmatpush1.msra.mxu0 0.0
    %8724 = vmatprep.subr.mxu0 0.0
    %8725 = vmatpush1.msra.mxu0 0.0
    %8726 = vmatprep.subr.mxu0 0.0
    %8727 = vmatpush1.msra.mxu0 0.0
    %8728 = vmatprep.subr.mxu0 0.0
    %8729 = vmatpush1.msra.mxu0 0.0
    %8730 = vmatprep.subr.mxu0 0.0
    %8731 = vmatpush1.msra.mxu0 0.0
    %8732 = vmatprep.subr.mxu0 0.0
    %8733 = vmatpush1.msra.mxu0 0.0
    %8734 = vmatprep.subr.mxu0 0.0
    %8735 = vmatpush1.msra.mxu0 0.0
    %8736 = vmatprep.subr.mxu0 0.0
    %8737 = vmatpush1.msra.mxu0 0.0
    %8738 = vmatprep.subr.mxu0 0.0
    %8739 = vmatpush1.msra.mxu0 0.0
    %8740 = vmatprep.subr.mxu0 0.0
    %8741 = vmatpush1.msra.mxu0 0.0
    %8742 = vmatprep.subr.mxu0 0.0
    %8743 = vmatpush1.msra.mxu0 0.0
    %8744 = vmatprep.subr.mxu0 0.0
    %8745 = vmatpush1.msra.mxu0 0.0
    %8746 = vmatprep.subr.mxu0 0.0
    %8747 = vmatpush1.msra.mxu0 0.0
    %8748 = vmatprep.subr.mxu0 0.0
    %8749 = vmatpush1.msra.mxu0 0.0
    %8750 = vmatprep.subr.mxu0 0.0
    %8751 = vmatpush1.msra.mxu0 0.0
    %8752 = vmatprep.subr.mxu0 0.0
    %8753 = vmatpush1.msra.mxu0 %v8713
    %8754 = vmatprep.subr.mxu0 0.0
    %8755 = vmatpush2.msra.mxu0 0.0
    %8756 = vmatprep.subr.mxu0 0.0
    %8757 = vmatpush2.msra.mxu0 0.0
    %8758 = vmatprep.subr.mxu0 0.0
    %8759 = vmatpush2.msra.mxu0 0.0
    %8760 = vmatprep.subr.mxu0 0.0
    %8761 = vmatpush2.msra.mxu0 0.0
    %8762 = vmatprep.subr.mxu0 0.0
    %8763 = vmatpush2.msra.mxu0 0.0
    %8764 = vmatprep.subr.mxu0 0.0
    %8765 = vmatpush2.msra.mxu0 0.0
    %8766 = vmatprep.subr.mxu0 0.0
    %8767 = vmatpush2.msra.mxu0 0.0
    %8768 = vmatprep.subr.mxu0 0.0
    %8769 = vmatpush2.msra.mxu0 0.0
    %8770 = vmatprep.subr.mxu0 0.0
    %8771 = vmatpush2.msra.mxu0 0.0
    %8772 = vmatprep.subr.mxu0 0.0
    %8773 = vmatpush2.msra.mxu0 0.0
    %8774 = vmatprep.subr.mxu0 0.0
    %8775 = vmatpush2.msra.mxu0 0.0
    %8776 = vmatprep.subr.mxu0 0.0
    %8777 = vmatpush2.msra.mxu0 0.0
    %8778 = vmatprep.subr.mxu0 0.0
    %8779 = vmatpush2.msra.mxu0 0.0
    %8780 = vmatprep.subr.mxu0 0.0
    %8781 = vmatpush2.msra.mxu0 0.0
    %8782 = vmatprep.subr.mxu0 0.0
    %8783 = vmatpush2.msra.mxu0 0.0
    %8784 = vmatprep.subr.mxu0 0.0
    %8785 = vmatpush2.msra.mxu0 0.0
    %8786 = vmatprep.mubr.f32.mxu0 0.0
    %8787 = vmatmul.mubr.f32.gmra.mxu0 %v8720
    %v8788 = vpop.f32.mrf.mxu0
    %v8789 = vadd.f32 %v8718, %v8788
    %v8790 = vpop.f32.mrf.mxu0
    %8791 = vdwg.mxu0
    %v8792 = vmax.f32 %v8789, 0.0
    %v8793 = vld [vmem:[#allocation2 + $0x120] sm:$0xff]
    %v8794 = vld [vmem:[#allocation2 + $0x128] sm:$0xff]
    %v8795 = vld [vmem:[#allocation2 + $0x130] sm:$0xff]
    %v8796 = vld [vmem:[#allocation2 + $0x138] sm:$0xff]
    %v8797 = vld [vmem:[#allocation2 + $0x140] sm:$0x1]
    %v8798 = vlaneseq
    %v8799 = vshrl.u32 %v8798, 7
    %v8800 = vsub.s32 0, %v8799
    %v8801 = vrot.slane %v8797, %v8800
    %v8803 = vsel %vm7482, %v8792, 0
    %8805 = vmatprep.subr.mxu0 0.0
    %8806 = vmatpush1.msra.mxu0 0.0
    %8807 = vmatprep.subr.mxu0 0.0
    %8808 = vmatpush1.msra.mxu0 0.0
    %8809 = vmatprep.subr.mxu0 0.0
    %8810 = vmatpush1.msra.mxu0 0.0
    %8811 = vmatprep.subr.mxu0 0.0
    %8812 = vmatpush1.msra.mxu0 0.0
    %8813 = vmatprep.subr.mxu0 0.0
    %8814 = vmatpush1.msra.mxu0 0.0
    %8815 = vmatprep.subr.mxu0 0.0
    %8816 = vmatpush1.msra.mxu0 0.0
    %8817 = vmatprep.subr.mxu0 0.0
    %8818 = vmatpush1.msra.mxu0 0.0
    %8819 = vmatprep.subr.mxu0 0.0
    %8820 = vmatpush1.msra.mxu0 0.0
    %8821 = vmatprep.subr.mxu0 0.0
    %8822 = vmatpush1.msra.mxu0 0.0
    %8823 = vmatprep.subr.mxu0 0.0
    %8824 = vmatpush1.msra.mxu0 0.0
    %8825 = vmatprep.subr.mxu0 0.0
    %8826 = vmatpush1.msra.mxu0 0.0
    %8827 = vmatprep.subr.mxu0 0.0
    %8828 = vmatpush1.msra.mxu0 0.0
    %8829 = vmatprep.subr.mxu0 0.0
    %8830 = vmatpush1.msra.mxu0 %v8796
    %8831 = vmatprep.subr.mxu0 0.0
    %8832 = vmatpush1.msra.mxu0 %v8795
    %8833 = vmatprep.subr.mxu0 0.0
    %8834 = vmatpush1.msra.mxu0 %v8794
    %8835 = vmatprep.subr.mxu0 0.0
    %8836 = vmatpush1.msra.mxu0 %v8793
    %8837 = vmatprep.subr.mxu0 0.0
    %8838 = vmatpush2.msra.mxu0 0.0
    %8839 = vmatprep.subr.mxu0 0.0
    %8840 = vmatpush2.msra.mxu0 0.0
    %8841 = vmatprep.subr.mxu0 0.0
    %8842 = vmatpush2.msra.mxu0 0.0
    %8843 = vmatprep.subr.mxu0 0.0
    %8844 = vmatpush2.msra.mxu0 0.0
    %8845 = vmatprep.subr.mxu0 0.0
    %8846 = vmatpush2.msra.mxu0 0.0
    %8847 = vmatprep.subr.mxu0 0.0
    %8848 = vmatpush2.msra.mxu0 0.0
    %8849 = vmatprep.subr.mxu0 0.0
    %8850 = vmatpush2.msra.mxu0 0.0
    %8851 = vmatprep.subr.mxu0 0.0
    %8852 = vmatpush2.msra.mxu0 0.0
    %8853 = vmatprep.subr.mxu0 0.0
    %8854 = vmatpush2.msra.mxu0 0.0
    %8855 = vmatprep.subr.mxu0 0.0
    %8856 = vmatpush2.msra.mxu0 0.0
    %8857 = vmatprep.subr.mxu0 0.0
    %8858 = vmatpush2.msra.mxu0 0.0
    %8859 = vmatprep.subr.mxu0 0.0
    %8860 = vmatpush2.msra.mxu0 0.0
    %8861 = vmatprep.subr.mxu0 0.0
    %8862 = vmatpush2.msra.mxu0 0.0
    %8863 = vmatprep.subr.mxu0 0.0
    %8864 = vmatpush2.msra.mxu0 0.0
    %8865 = vmatprep.subr.mxu0 0.0
    %8866 = vmatpush2.msra.mxu0 0.0
    %8867 = vmatprep.subr.mxu0 0.0
    %8868 = vmatpush2.msra.mxu0 0.0
    %8869 = vmatprep.mubr.f32.mxu0 0.0
    %8870 = vmatmul.mubr.f32.gmra.mxu0 %v8803
    %v8871 = vpop.f32.mrf.mxu0
    %v8872 = vadd.f32 %v8801, %v8871
    %v8873 = vpop.f32.mrf.mxu0
    %8874 = vdwg.mxu0
    %v8875 = vmax.f32 %v8872, 0.0
    %v8876 = vld [vmem:[#allocation2 + $0x148] sm:$0xff]
    %v8877 = vld [vmem:[#allocation2 + $0x150] sm:$0xff]
    %v8878 = vld [vmem:[#allocation2 + $0x158] sm:$0xff]
    %v8879 = vld [vmem:[#allocation2 + $0x160] sm:$0xff]
    %v8880 = vld [vmem:[#allocation2 + $0x168] sm:$0xff]
    %v8881 = vld [vmem:[#allocation2 + $0x170] sm:$0xff]
    %v8883 = vsel %vm7482, %v8875, 0
    %8885 = vmatprep.subr.mxu0 0.0
    %8886 = vmatpush1.msra.mxu0 0.0
    %8887 = vmatprep.subr.mxu0 0.0
    %8888 = vmatpush1.msra.mxu0 0.0
    %8889 = vmatprep.subr.mxu0 0.0
    %8890 = vmatpush1.msra.mxu0 0.0
    %8891 = vmatprep.subr.mxu0 0.0
    %8892 = vmatpush1.msra.mxu0 0.0
    %8893 = vmatprep.subr.mxu0 0.0
    %8894 = vmatpush1.msra.mxu0 0.0
    %8895 = vmatprep.subr.mxu0 0.0
    %8896 = vmatpush1.msra.mxu0 0.0
    %8897 = vmatprep.subr.mxu0 0.0
    %8898 = vmatpush1.msra.mxu0 0.0
    %8899 = vmatprep.subr.mxu0 0.0
    %8900 = vmatpush1.msra.mxu0 0.0
    %8901 = vmatprep.subr.mxu0 0.0
    %8902 = vmatpush1.msra.mxu0 0.0
    %8903 = vmatprep.subr.mxu0 0.0
    %8904 = vmatpush1.msra.mxu0 0.0
    %8905 = vmatprep.subr.mxu0 0.0
    %8906 = vmatpush1.msra.mxu0 0.0
    %8907 = vmatprep.subr.mxu0 0.0
    %8908 = vmatpush1.msra.mxu0 0.0
    %8909 = vmatprep.subr.mxu0 0.0
    %8910 = vmatpush1.msra.mxu0 %v8881
    %8911 = vmatprep.subr.mxu0 0.0
    %8912 = vmatpush1.msra.mxu0 %v8880
    %8913 = vmatprep.subr.mxu0 0.0
    %8914 = vmatpush1.msra.mxu0 %v8879
    %8915 = vmatprep.subr.mxu0 0.0
    %8916 = vmatpush1.msra.mxu0 %v8878
    %8917 = vmatprep.subr.mxu0 0.0
    %8918 = vmatpush2.msra.mxu0 0.0
    %8919 = vmatprep.subr.mxu0 0.0
    %8920 = vmatpush2.msra.mxu0 0.0
    %8921 = vmatprep.subr.mxu0 0.0
    %8922 = vmatpush2.msra.mxu0 0.0
    %8923 = vmatprep.subr.mxu0 0.0
    %8924 = vmatpush2.msra.mxu0 0.0
    %8925 = vmatprep.subr.mxu0 0.0
    %8926 = vmatpush2.msra.mxu0 0.0
    %8927 = vmatprep.subr.mxu0 0.0
    %8928 = vmatpush2.msra.mxu0 0.0
    %8929 = vmatprep.subr.mxu0 0.0
    %8930 = vmatpush2.msra.mxu0 0.0
    %8931 = vmatprep.subr.mxu0 0.0
    %8932 = vmatpush2.msra.mxu0 0.0
    %8933 = vmatprep.subr.mxu0 0.0
    %8934 = vmatpush2.msra.mxu0 0.0
    %8935 = vmatprep.subr.mxu0 0.0
    %8936 = vmatpush2.msra.mxu0 0.0
    %8937 = vmatprep.subr.mxu0 0.0
    %8938 = vmatpush2.msra.mxu0 0.0
    %8939 = vmatprep.subr.mxu0 0.0
    %8940 = vmatpush2.msra.mxu0 0.0
    %8941 = vmatprep.subr.mxu0 0.0
    %8942 = vmatpush2.msra.mxu0 0.0
    %8943 = vmatprep.subr.mxu0 0.0
    %8944 = vmatpush2.msra.mxu0 0.0
    %8945 = vmatprep.subr.mxu0 0.0
    %8946 = vmatpush2.msra.mxu0 0.0
    %8947 = vmatprep.subr.mxu0 0.0
    %8948 = vmatpush2.msra.mxu0 0.0
    %8949 = vmatprep.mubr.f32.mxu0 0.0
    %8950 = vmatmul.mubr.f32.gmra.mxu0 %v8883
    %v8951 = vpop.f32.mrf.mxu0
    %v8952 = vadd.f32 0.0, %v8951
    %v8953 = vpop.f32.mrf.mxu0
    %8954 = vdwg.mxu0
    %v8956 = vsel %vm52, %v8711, 0
    %8958 = vmatprep.subr.mxu0 0.0
    %8959 = vmatpush1.msra.mxu0 0.0
    %8960 = vmatprep.subr.mxu0 0.0
    %8961 = vmatpush1.msra.mxu0 0.0
    %8962 = vmatprep.subr.mxu0 0.0
    %8963 = vmatpush1.msra.mxu0 0.0
    %8964 = vmatprep.subr.mxu0 0.0
    %8965 = vmatpush1.msra.mxu0 0.0
    %8966 = vmatprep.subr.mxu0 0.0
    %8967 = vmatpush1.msra.mxu0 0.0
    %8968 = vmatprep.subr.mxu0 0.0
    %8969 = vmatpush1.msra.mxu0 0.0
    %8970 = vmatprep.subr.mxu0 0.0
    %8971 = vmatpush1.msra.mxu0 0.0
    %8972 = vmatprep.subr.mxu0 0.0
    %8973 = vmatpush1.msra.mxu0 0.0
    %8974 = vmatprep.subr.mxu0 0.0
    %8975 = vmatpush1.msra.mxu0 0.0
    %8976 = vmatprep.subr.mxu0 0.0
    %8977 = vmatpush1.msra.mxu0 0.0
    %8978 = vmatprep.subr.mxu0 0.0
    %8979 = vmatpush1.msra.mxu0 0.0
    %8980 = vmatprep.subr.mxu0 0.0
    %8981 = vmatpush1.msra.mxu0 0.0
    %8982 = vmatprep.subr.mxu0 0.0
    %8983 = vmatpush1.msra.mxu0 0.0
    %8984 = vmatprep.subr.mxu0 0.0
    %8985 = vmatpush1.msra.mxu0 0.0
    %8986 = vmatprep.subr.mxu0 0.0
    %8987 = vmatpush1.msra.mxu0 %v8877
    %8988 = vmatprep.subr.mxu0 0.0
    %8989 = vmatpush1.msra.mxu0 %v8876
    %8990 = vmatprep.subr.mxu0 0.0
    %8991 = vmatpush2.msra.mxu0 0.0
    %8992 = vmatprep.subr.mxu0 0.0
    %8993 = vmatpush2.msra.mxu0 0.0
    %8994 = vmatprep.subr.mxu0 0.0
    %8995 = vmatpush2.msra.mxu0 0.0
    %8996 = vmatprep.subr.mxu0 0.0
    %8997 = vmatpush2.msra.mxu0 0.0
    %8998 = vmatprep.subr.mxu0 0.0
    %8999 = vmatpush2.msra.mxu0 0.0
    %9000 = vmatprep.subr.mxu0 0.0
    %9001 = vmatpush2.msra.mxu0 0.0
    %9002 = vmatprep.subr.mxu0 0.0
    %9003 = vmatpush2.msra.mxu0 0.0
    %9004 = vmatprep.subr.mxu0 0.0
    %9005 = vmatpush2.msra.mxu0 0.0
    %9006 = vmatprep.subr.mxu0 0.0
    %9007 = vmatpush2.msra.mxu0 0.0
    %9008 = vmatprep.subr.mxu0 0.0
    %9009 = vmatpush2.msra.mxu0 0.0
    %9010 = vmatprep.subr.mxu0 0.0
    %9011 = vmatpush2.msra.mxu0 0.0
    %9012 = vmatprep.subr.mxu0 0.0
    %9013 = vmatpush2.msra.mxu0 0.0
    %9014 = vmatprep.subr.mxu0 0.0
    %9015 = vmatpush2.msra.mxu0 0.0
    %9016 = vmatprep.subr.mxu0 0.0
    %9017 = vmatpush2.msra.mxu0 0.0
    %9018 = vmatprep.subr.mxu0 0.0
    %9019 = vmatpush2.msra.mxu0 0.0
    %9020 = vmatprep.subr.mxu0 0.0
    %9021 = vmatpush2.msra.mxu0 0.0
    %9022 = vmatprep.mubr.f32.mxu0 0.0
    %9023 = vmatmul.mubr.f32.gmra.mxu0 %v8956
    %v9024 = vpop.f32.mrf.mxu0
    %v9025 = vadd.f32 %v8952, %v9024
    %v9026 = vpop.f32.mrf.mxu0
    %9027 = vdwg.mxu0
    %v9028 = vld [vmem:[#allocation2 + $0x178] sm:$0x1]
    %v9029 = vlaneseq
    %v9030 = vshrl.u32 %v9029, 7
    %v9031 = vsub.s32 0, %v9030
    %v9032 = vrot.slane %v9028, %v9031
    %v9033 = vadd.f32 %v9025, %v9032
    %v9034 = vmax.f32 %v9033, 0.0
    %v9035 = vld [vmem:[#allocation2 + $0x180] sm:$0xff]
    %v9036 = vld [vmem:[#allocation2 + $0x188] sm:$0xff]
    %v9037 = vld [vmem:[#allocation2 + $0x190] sm:$0xff]
    %v9038 = vld [vmem:[#allocation2 + $0x198] sm:$0xff]
    %v9039 = vld [vmem:[#allocation2 + $0x1a0] sm:$0xff]
    %v9040 = vld [vmem:[#allocation2 + $0x1a8] sm:$0xff]
    %v9041 = vld [vmem:[#allocation2 + $0x1b0] sm:$0xff]
    %v9042 = vld [vmem:[#allocation2 + $0x1b8] sm:$0xff]
    %v9043 = vld [vmem:[#allocation2 + $0x1c0] sm:$0x1]
    %v9044 = vlaneseq
    %v9045 = vshrl.u32 %v9044, 7
    %v9046 = vsub.s32 0, %v9045
    %v9047 = vrot.slane %v9043, %v9046
    %v9049 = vsel %vm8171, %v9034, 0
    %9051 = vmatprep.subr.mxu0 0.0
    %9052 = vmatpush1.msra.mxu0 0.0
    %9053 = vmatprep.subr.mxu0 0.0
    %9054 = vmatpush1.msra.mxu0 0.0
    %9055 = vmatprep.subr.mxu0 0.0
    %9056 = vmatpush1.msra.mxu0 0.0
    %9057 = vmatprep.subr.mxu0 0.0
    %9058 = vmatpush1.msra.mxu0 0.0
    %9059 = vmatprep.subr.mxu0 0.0
    %9060 = vmatpush1.msra.mxu0 0.0
    %9061 = vmatprep.subr.mxu0 0.0
    %9062 = vmatpush1.msra.mxu0 0.0
    %9063 = vmatprep.subr.mxu0 0.0
    %9064 = vmatpush1.msra.mxu0 0.0
    %9065 = vmatprep.subr.mxu0 0.0
    %9066 = vmatpush1.msra.mxu0 0.0
    %9067 = vmatprep.subr.mxu0 0.0
    %9068 = vmatpush1.msra.mxu0 %v9042
    %9069 = vmatprep.subr.mxu0 0.0
    %9070 = vmatpush1.msra.mxu0 %v9041
    %9071 = vmatprep.subr.mxu0 0.0
    %9072 = vmatpush1.msra.mxu0 %v9040
    %9073 = vmatprep.subr.mxu0 0.0
    %9074 = vmatpush1.msra.mxu0 %v9039
    %9075 = vmatprep.subr.mxu0 0.0
    %9076 = vmatpush1.msra.mxu0 %v9038
    %9077 = vmatprep.subr.mxu0 0.0
    %9078 = vmatpush1.msra.mxu0 %v9037
    %9079 = vmatprep.subr.mxu0 0.0
    %9080 = vmatpush1.msra.mxu0 %v9036
    %9081 = vmatprep.subr.mxu0 0.0
    %9082 = vmatpush1.msra.mxu0 %v9035
    %9083 = vmatprep.subr.mxu0 0.0
    %9084 = vmatpush2.msra.mxu0 0.0
    %9085 = vmatprep.subr.mxu0 0.0
    %9086 = vmatpush2.msra.mxu0 0.0
    %9087 = vmatprep.subr.mxu0 0.0
    %9088 = vmatpush2.msra.mxu0 0.0
    %9089 = vmatprep.subr.mxu0 0.0
    %9090 = vmatpush2.msra.mxu0 0.0
    %9091 = vmatprep.subr.mxu0 0.0
    %9092 = vmatpush2.msra.mxu0 0.0
    %9093 = vmatprep.subr.mxu0 0.0
    %9094 = vmatpush2.msra.mxu0 0.0
    %9095 = vmatprep.subr.mxu0 0.0
    %9096 = vmatpush2.msra.mxu0 0.0
    %9097 = vmatprep.subr.mxu0 0.0
    %9098 = vmatpush2.msra.mxu0 0.0
    %9099 = vmatprep.subr.mxu0 0.0
    %9100 = vmatpush2.msra.mxu0 0.0
    %9101 = vmatprep.subr.mxu0 0.0
    %9102 = vmatpush2.msra.mxu0 0.0
    %9103 = vmatprep.subr.mxu0 0.0
    %9104 = vmatpush2.msra.mxu0 0.0
    %9105 = vmatprep.subr.mxu0 0.0
    %9106 = vmatpush2.msra.mxu0 0.0
    %9107 = vmatprep.subr.mxu0 0.0
    %9108 = vmatpush2.msra.mxu0 0.0
    %9109 = vmatprep.subr.mxu0 0.0
    %9110 = vmatpush2.msra.mxu0 0.0
    %9111 = vmatprep.subr.mxu0 0.0
    %9112 = vmatpush2.msra.mxu0 0.0
    %9113 = vmatprep.subr.mxu0 0.0
    %9114 = vmatpush2.msra.mxu0 0.0
    %9115 = vmatprep.mubr.f32.mxu0 0.0
    %9116 = vmatmul.mubr.f32.gmra.mxu0 %v9049
    %v9117 = vpop.f32.mrf.mxu0
    %v9118 = vadd.f32 %v9047, %v9117
    %v9119 = vpop.f32.mrf.mxu0
    %9120 = vdwg.mxu0
    %v9121 = vld [vmem:[#allocation2 + $0x1c8] sm:$0xff]
    %v9122 = vld [vmem:[#allocation2 + $0x1d0] sm:$0xff]
    %v9123 = vld [vmem:[#allocation2 + $0x1d8] sm:$0xff]
    %v9124 = vld [vmem:[#allocation2 + $0x1e0] sm:$0xff]
    %v9125 = vld [vmem:[#allocation2 + $0x1e8] sm:$0xff]
    %v9126 = vld [vmem:[#allocation2 + $0x1f0] sm:$0xff]
    %v9127 = vld [vmem:[#allocation2 + $0x1f8] sm:$0xff]
    %v9128 = vld [vmem:[#allocation2 + $0x200] sm:$0xff]
    %v9129 = vld [vmem:[#allocation2 + $0x208] sm:$0x1]
    %v9130 = vlaneseq
    %v9131 = vshrl.u32 %v9130, 7
    %v9132 = vsub.s32 0, %v9131
    %v9133 = vrot.slane %v9129, %v9132
    %v9135 = vsel %vm8171, %v9118, 0
    %9137 = vmatprep.subr.mxu0 0.0
    %9138 = vmatpush1.msra.mxu0 0.0
    %9139 = vmatprep.subr.mxu0 0.0
    %9140 = vmatpush1.msra.mxu0 0.0
    %9141 = vmatprep.subr.mxu0 0.0
    %9142 = vmatpush1.msra.mxu0 0.0
    %9143 = vmatprep.subr.mxu0 0.0
    %9144 = vmatpush1.msra.mxu0 0.0
    %9145 = vmatprep.subr.mxu0 0.0
    %9146 = vmatpush1.msra.mxu0 0.0
    %9147 = vmatprep.subr.mxu0 0.0
    %9148 = vmatpush1.msra.mxu0 0.0
    %9149 = vmatprep.subr.mxu0 0.0
    %9150 = vmatpush1.msra.mxu0 0.0
    %9151 = vmatprep.subr.mxu0 0.0
    %9152 = vmatpush1.msra.mxu0 0.0
    %9153 = vmatprep.subr.mxu0 0.0
    %9154 = vmatpush1.msra.mxu0 %v9128
    %9155 = vmatprep.subr.mxu0 0.0
    %9156 = vmatpush1.msra.mxu0 %v9127
    %9157 = vmatprep.subr.mxu0 0.0
    %9158 = vmatpush1.msra.mxu0 %v9126
    %9159 = vmatprep.subr.mxu0 0.0
    %9160 = vmatpush1.msra.mxu0 %v9125
    %9161 = vmatprep.subr.mxu0 0.0
    %9162 = vmatpush1.msra.mxu0 %v9124
    %9163 = vmatprep.subr.mxu0 0.0
    %9164 = vmatpush1.msra.mxu0 %v9123
    %9165 = vmatprep.subr.mxu0 0.0
    %9166 = vmatpush1.msra.mxu0 %v9122
    %9167 = vmatprep.subr.mxu0 0.0
    %9168 = vmatpush1.msra.mxu0 %v9121
    %9169 = vmatprep.subr.mxu0 0.0
    %9170 = vmatpush2.msra.mxu0 0.0
    %9171 = vmatprep.subr.mxu0 0.0
    %9172 = vmatpush2.msra.mxu0 0.0
    %9173 = vmatprep.subr.mxu0 0.0
    %9174 = vmatpush2.msra.mxu0 0.0
    %9175 = vmatprep.subr.mxu0 0.0
    %9176 = vmatpush2.msra.mxu0 0.0
    %9177 = vmatprep.subr.mxu0 0.0
    %9178 = vmatpush2.msra.mxu0 0.0
    %9179 = vmatprep.subr.mxu0 0.0
    %9180 = vmatpush2.msra.mxu0 0.0
    %9181 = vmatprep.subr.mxu0 0.0
    %9182 = vmatpush2.msra.mxu0 0.0
    %9183 = vmatprep.subr.mxu0 0.0
    %9184 = vmatpush2.msra.mxu0 0.0
    %9185 = vmatprep.subr.mxu0 0.0
    %9186 = vmatpush2.msra.mxu0 0.0
    %9187 = vmatprep.subr.mxu0 0.0
    %9188 = vmatpush2.msra.mxu0 0.0
    %9189 = vmatprep.subr.mxu0 0.0
    %9190 = vmatpush2.msra.mxu0 0.0
    %9191 = vmatprep.subr.mxu0 0.0
    %9192 = vmatpush2.msra.mxu0 0.0
    %9193 = vmatprep.subr.mxu0 0.0
    %9194 = vmatpush2.msra.mxu0 0.0
    %9195 = vmatprep.subr.mxu0 0.0
    %9196 = vmatpush2.msra.mxu0 0.0
    %9197 = vmatprep.subr.mxu0 0.0
    %9198 = vmatpush2.msra.mxu0 0.0
    %9199 = vmatprep.subr.mxu0 0.0
    %9200 = vmatpush2.msra.mxu0 0.0
    %9201 = vmatprep.mubr.f32.mxu0 0.0
    %9202 = vmatmul.mubr.f32.gmra.mxu0 %v9135
    %v9203 = vpop.f32.mrf.mxu0
    %v9204 = vadd.f32 %v9133, %v9203
    %v9205 = vpop.f32.mrf.mxu0
    %9206 = vdwg.mxu0
    %v9207 = vtanh.pop %v9204
    %v9208 = vld [vmem:[#allocation2 + $0x210] sm:$0xff]
    %v9209 = vld [vmem:[#allocation2 + $0x218] sm:$0xff]
    %v9210 = vld [vmem:[#allocation2 + $0x220] sm:$0xff]
    %v9211 = vld [vmem:[#allocation2 + $0x228] sm:$0xff]
    %v9212 = vld [vmem:[#allocation2 + $0x230] sm:$0xff]
    %v9213 = vld [vmem:[#allocation2 + $0x238] sm:$0xff]
    %v9214 = vld [vmem:[#allocation2 + $0x240] sm:$0xff]
    %v9215 = vld [vmem:[#allocation2 + $0x248] sm:$0xff]
    %v9216 = vld [vmem:[#allocation2 + $0x250] sm:$0xff]
    %v9217 = vld [vmem:[#allocation2 + $0x258] sm:$0xff]
    %v9218 = vld [vmem:[#allocation2 + $0x260] sm:$0xff]
    %v9219 = vld [vmem:[#allocation2 + $0x268] sm:$0xff]
    %v9220 = vld [vmem:[#allocation2 + $0x270] sm:$0xff]
    %v9221 = vld [vmem:[#allocation2 + $0x278] sm:$0xff]
    %v9222 = vld [vmem:[#allocation2 + $0x280] sm:$0xff]
    %v9223 = vld [vmem:[#allocation2 + $0x288] sm:$0xff]
    %v9224 = vld [vmem:[#allocation2 + $0x290] sm:$0x1]
    %v9225 = vlaneseq
    %v9226 = vshrl.u32 %v9225, 7
    %v9227 = vsub.s32 0, %v9226
    %v9228 = vrot.slane %v9224, %v9227
    %9229 = vmatprep.subr.mxu0 0.0
    %9230 = vmatpush1.msra.mxu0 %v9223
    %9231 = vmatprep.subr.mxu0 0.0
    %9232 = vmatpush1.msra.mxu0 %v9222
    %9233 = vmatprep.subr.mxu0 0.0
    %9234 = vmatpush1.msra.mxu0 %v9221
    %9235 = vmatprep.subr.mxu0 0.0
    %9236 = vmatpush1.msra.mxu0 %v9220
    %9237 = vmatprep.subr.mxu0 0.0
    %9238 = vmatpush1.msra.mxu0 %v9219
    %9239 = vmatprep.subr.mxu0 0.0
    %9240 = vmatpush1.msra.mxu0 %v9218
    %9241 = vmatprep.subr.mxu0 0.0
    %9242 = vmatpush1.msra.mxu0 %v9217
    %9243 = vmatprep.subr.mxu0 0.0
    %9244 = vmatpush1.msra.mxu0 %v9216
    %9245 = vmatprep.subr.mxu0 0.0
    %9246 = vmatpush1.msra.mxu0 %v9215
    %9247 = vmatprep.subr.mxu0 0.0
    %9248 = vmatpush1.msra.mxu0 %v9214
    %9249 = vmatprep.subr.mxu0 0.0
    %9250 = vmatpush1.msra.mxu0 %v9213
    %9251 = vmatprep.subr.mxu0 0.0
    %9252 = vmatpush1.msra.mxu0 %v9212
    %9253 = vmatprep.subr.mxu0 0.0
    %9254 = vmatpush1.msra.mxu0 %v9211
    %9255 = vmatprep.subr.mxu0 0.0
    %9256 = vmatpush1.msra.mxu0 %v9210
    %9257 = vmatprep.subr.mxu0 0.0
    %9258 = vmatpush1.msra.mxu0 %v9209
    %9259 = vmatprep.subr.mxu0 0.0
    %9260 = vmatpush1.msra.mxu0 %v9208
    %9261 = vmatprep.subr.mxu0 0.0
    %9262 = vmatpush2.msra.mxu0 0.0
    %9263 = vmatprep.subr.mxu0 0.0
    %9264 = vmatpush2.msra.mxu0 0.0
    %9265 = vmatprep.subr.mxu0 0.0
    %9266 = vmatpush2.msra.mxu0 0.0
    %9267 = vmatprep.subr.mxu0 0.0
    %9268 = vmatpush2.msra.mxu0 0.0
    %9269 = vmatprep.subr.mxu0 0.0
    %9270 = vmatpush2.msra.mxu0 0.0
    %9271 = vmatprep.subr.mxu0 0.0
    %9272 = vmatpush2.msra.mxu0 0.0
    %9273 = vmatprep.subr.mxu0 0.0
    %9274 = vmatpush2.msra.mxu0 0.0
    %9275 = vmatprep.subr.mxu0 0.0
    %9276 = vmatpush2.msra.mxu0 0.0
    %9277 = vmatprep.subr.mxu0 0.0
    %9278 = vmatpush2.msra.mxu0 0.0
    %9279 = vmatprep.subr.mxu0 0.0
    %9280 = vmatpush2.msra.mxu0 0.0
    %9281 = vmatprep.subr.mxu0 0.0
    %9282 = vmatpush2.msra.mxu0 0.0
    %9283 = vmatprep.subr.mxu0 0.0
    %9284 = vmatpush2.msra.mxu0 0.0
    %9285 = vmatprep.subr.mxu0 0.0
    %9286 = vmatpush2.msra.mxu0 0.0
    %9287 = vmatprep.subr.mxu0 0.0
    %9288 = vmatpush2.msra.mxu0 0.0
    %9289 = vmatprep.subr.mxu0 0.0
    %9290 = vmatpush2.msra.mxu0 0.0
    %9291 = vmatprep.subr.mxu0 0.0
    %9292 = vmatpush2.msra.mxu0 0.0
    %9293 = vmatprep.mubr.f32.mxu0 0.0
    %9294 = vmatmul.mubr.f32.gmra.mxu0 %v9207
    %v9295 = vpop.f32.mrf.mxu0
    %v9296 = vadd.f32 %v9228, %v9295
    %v9297 = vpop.f32.mrf.mxu0
    %9298 = vdwg.mxu0
    %9299 = vst [vmem:[#allocation5] sm:$0xff] %v9296
    // Predicated region
    $region18: #{tpu_custom_call.1} parent=1 // pred_check
      _
    $region19: #{tpu_custom_call.1} parent=1 // pred_check_branch
      %9301 = sbr.rel (0) target = $region21
    $region20: #{tpu_custom_call.1} parent=1 // pred_region
      %s9303 = ssub.s32 128, 128
      %9304 = vsyncadd [#allocation4], %s9303
      %s9306 = sshll.u32 [#allocation5], 4
      %s9307 = int_to_ptr.vmem [resolvable:$true] %s9306
      %9309 = dma.vmem_to_hbm [thread:$0]  %s9307, 128, %s3, [#allocation4]
    $region21: #{tpu_custom_call.1} parent=1 // pred_fallthru
      _
    // Predicated region
    $region22: #{tpu_custom_call.1} parent=1 // pred_check
      _
    $region23: #{tpu_custom_call.1} parent=1 // pred_check_branch
      %9311 = sbr.rel (0) target = $region25
    $region24: #{tpu_custom_call.1} parent=1 // pred_region
      %9312 = dma.done [#allocation4], 128
    $region25: #{tpu_custom_call.1} parent=1 // pred_fallthru
      _
    %9313 = vsyncpa [#allocation3], 1
    %9314 = vsyncpa [#allocation4], 1

</llo_original>
